<compile_context>
chip_gen: v5e
topology: v5e:2x2
jax: 0.10.0
libtpu: 0.0.40
codegen_flags: <defaults>
</compile_context>

<pallas_src>
import functools

import jax
import jax.numpy as jnp
from jax.experimental import pallas as pl
from jax.experimental.pallas import tpu as pltpu

K1 = 9   # layer-1 kernel size (stride 1)
K2 = 4   # layer-2 / layer-3 kernel size (stride == kernel)


# ---------------------------------------------------------------------------
# Pallas matmul kernels: single K step, optional fused bias + ReLU epilogue
# ---------------------------------------------------------------------------
def _mm_kernel(a_ref, b_ref, o_ref):
    o_ref[...] = jnp.dot(a_ref[...], b_ref[...],
                         preferred_element_type=jnp.float32)


def _mm_bias_kernel(a_ref, b_ref, bias_ref, o_ref, *, apply_relu):
    acc = jnp.dot(a_ref[...], b_ref[...], preferred_element_type=jnp.float32)
    acc = acc + bias_ref[...]                    # bias broadcast over rows
    if apply_relu:
        acc = jnp.maximum(acc, 0.0)
    o_ref[...] = acc


def _pick_tn(n, cap=4096):
    """Largest multiple-of-128 divisor of n that is <= cap (else full n)."""
    best, d = None, 128
    while d <= min(n, cap):
        if n % d == 0:
            best = d
        d += 128
    return best if best is not None else n


def pallas_matmul(a, b, bias=None, *, apply_relu=False, tn=None):
    """out = relu?(a @ b (+ bias[None, :])) with f32 MXU accumulation.

    K fits in a single block; the grid runs only over output columns, so each
    operand is streamed from HBM exactly once and no padded copies are made.
    """
    M, K = a.shape
    K2_, N = b.shape
    assert K == K2_, (K, K2_)
    if tn is None:
        tn = _pick_tn(N)
    assert N % tn == 0, (N, tn)

    in_specs = [
        pl.BlockSpec((M, K), lambda j: (0, 0)),     # A block (tiny) reused
        pl.BlockSpec((K, tn), lambda j: (0, j)),    # stream B once
    ]
    operands = [a, b]
    if bias is None:
        kernel = _mm_kernel
    else:
        kernel = functools.partial(_mm_bias_kernel, apply_relu=apply_relu)
        in_specs.append(pl.BlockSpec((1, tn), lambda j: (0, j)))
        operands.append(bias.reshape(1, N).astype(jnp.float32))

    return pl.pallas_call(
        kernel,
        out_shape=jax.ShapeDtypeStruct((M, N), jnp.float32),
        grid_spec=pltpu.PrefetchScalarGridSpec(
            num_scalar_prefetch=0,
            grid=(N // tn,),
            in_specs=in_specs,
            out_specs=pl.BlockSpec((M, tn), lambda j: (0, j)),
        ),
        compiler_params=pltpu.CompilerParams(
            dimension_semantics=("parallel",)),     # v7x: split N over 2 TCs
    )(*operands)


# ---------------------------------------------------------------------------
# Layer 1: ConvTranspose2d(768 -> 384, k=9, s=1) as small matmul + overlap-add
# (its bias b1 is folded into the composed layer-2/3 bias downstream)
# ---------------------------------------------------------------------------
def convtranspose_s1(x_nchw, w1_packed, k):
    N, C, H, W = x_nchw.shape
    ckk = w1_packed.shape[1]
    cout = ckk // (k * k)
    a = x_nchw.transpose(0, 2, 3, 1).reshape(N * H * W, C).astype(jnp.bfloat16)
    y = pallas_matmul(a, w1_packed)                       # (N*H*W, cout*k*k) f32
    y = y.reshape(N, H, W, cout, k, k)                    # cols = (co, di, dj)
    Ho, Wo = H + k - 1, W + k - 1
    out = jnp.zeros((N, Ho, Wo, cout), jnp.float32)
    for di in range(k):                                   # tiny 10x10 overlap-add
        for dj in range(k):
            out = out.at[:, di:di + H, dj:dj + W, :].add(y[:, :, :, :, di, dj])
    return out                                            # (N, Ho, Wo, 384), no bias


# ---------------------------------------------------------------------------
# Layers 2+3 composed: ConvTranspose2d(384->96,4,4) o ConvTranspose2d(96->1,4,4)
# (+ ReLU).  Both are per-pixel linear maps, so one (384 -> 256) matmul.
# ---------------------------------------------------------------------------
def upsample_head(y1_nhwc, wc_packed, bias_total, k2):
    N, Ho, Wo, C = y1_nhwc.shape
    a = y1_nhwc.reshape(N * Ho * Wo, C).astype(jnp.bfloat16)
    z = pallas_matmul(a, wc_packed, bias_total, apply_relu=True)  # (N*Ho*Wo, 256)
    s = k2 * k2                                           # total upsample = 16
    z = z.reshape(N, Ho, Wo, k2, k2, k2, k2)              # (n, i, j, p, q, r, s)
    z = z.transpose(0, 1, 3, 5, 2, 4, 6)                  # (n, i, p, r, j, q, s)
    out = z.reshape(N, Ho * s, Wo * s)                    # row = 16i+4p+r, col = 16j+4q+s
    return out[:, None, :, :]                             # NCHW, Cout = 1


def net_forward(x_nchw, packed):
    w1_packed, wc_packed, bias_total = packed
    y1 = convtranspose_s1(x_nchw, w1_packed, K1)          # (N, H+8, W+8, 384)
    return upsample_head(y1, wc_packed, bias_total, K2)   # (N, 1, 16*(H+8), 16*(W+8))


# ---------------------------------------------------------------------------
# One-time weight pre-packing (f32 math, then cast to bf16)
# ---------------------------------------------------------------------------
def pack_params(raw):
    W1, b1, W2, b2, W3, b3 = raw
    cin1 = W1.shape[0]
    # layer 1: matmul columns ordered (co, di, dj)
    w1_packed = W1.reshape(cin1, -1).astype(jnp.bfloat16)          # (768, 31104)
    # composed layer-2/3 weight: Wc[c384, p, q, r, s] = sum_c96 W2*W3
    w3 = W3[:, 0].astype(jnp.float32)                              # (96, 4, 4)
    wc = jnp.einsum('icpq,crs->ipqrs', W2.astype(jnp.float32), w3)
    wc2d = wc.reshape(W2.shape[0], -1)                             # (384, 256)
    k2 = W2.shape[2]
    # composed bias: b2 through W3, plus b3, plus b1 pushed through Wc
    bc_rs = jnp.einsum('c,crs->rs', b2.astype(jnp.float32), w3) + b3[0]
    bc = jnp.broadcast_to(bc_rs[None, None], (k2, k2, k2, k2)).reshape(-1)
    bias_total = b1.astype(jnp.float32) @ wc2d + bc                # (256,)
    return (w1_packed, wc2d.astype(jnp.bfloat16), bias_total)


# ---------------------------------------------------------------------------
# Deterministic parameter init (shapes from Net.__init__)
# ---------------------------------------------------------------------------
def init_params(key):
    def tconv(key, cin, cout, k):
        kw, kb = jax.random.split(key)
        scale = 1.0 / jnp.sqrt(jnp.float32(cin * k * k))
        w = jax.random.uniform(kw, (cin, cout, k, k), jnp.float32, -scale, scale)
        b = jax.random.uniform(kb, (cout,), jnp.float32, -scale, scale)
        return w, b

    k1, k2, k3 = jax.random.split(key, 3)
    W1, b1 = tconv(k1, 768, 384, 9)
    W2, b2 = tconv(k2, 384, 96, 4)
    W3, b3 = tconv(k3, 96, 1, 4)
    return (W1, b1, W2, b2, W3, b3)


# ---------------------------------------------------------------------------
# Pure-JAX f32 reference (direct ConvTranspose2d definition) for validation
# ---------------------------------------------------------------------------
def conv_transpose_ref(x, w, b, stride):
    N, C, H, W = x.shape
    cout, k = w.shape[1], w.shape[2]
    Ho, Wo = (H - 1) * stride + k, (W - 1) * stride + k
    contrib = jnp.einsum('nchw,couv->nohwuv', x, w)
    out = jnp.zeros((N, cout, Ho, Wo), jnp.float32)
    for u in range(k):
        for v in range(k):
            out = out.at[:, :, u:u + (H - 1) * stride + 1:stride,
                         v:v + (W - 1) * stride + 1:stride].add(contrib[..., u, v])
    return out + b[None, :, None, None]


def net_ref(x, raw):
    W1, b1, W2, b2, W3, b3 = raw
    y = conv_transpose_ref(x, W1, b1, 1)
    y = conv_transpose_ref(y, W2, b2, 4)
    y = conv_transpose_ref(y, W3, b3, 4)
    return jnp.maximum(y, 0.0)


if __name__ == "__main__":
    key = jax.random.PRNGKey(0)
    pkey, xkey = jax.random.split(key)

    raw = init_params(pkey)
    packed = pack_params(raw)          # one-time weight re-layout (not per call)

    # Small spatial input consistent with the module's 768 input channels.
    x = jax.random.normal(xkey, (2, 768, 2, 2), jnp.float32)

    fwd = jax.jit(net_forward)
    out = jax.block_until_ready(fwd(x, packed))
    assert out.shape == (2, 1, 160, 160), out.shape
    assert bool(jnp.all(out >= 0.0))   # ReLU output

    # Validate against the f32 ConvTranspose2d reference (bf16 operands in the
    # Pallas path -> loose tolerance).
    ref = jax.jit(net_ref)(x, raw)
    assert jnp.allclose(out, ref, atol=5e-3, rtol=5e-2), (
        float(jnp.max(jnp.abs(out - ref))))

    print("KERNEL_OK")
</pallas_src>

<mosaic_0001>
module attributes {stable_mosaic.version = 11 : i64} {
  func.func @_mm_kernel(%arg0: i32, %arg1: memref<8x768xbf16, #tpu.memory_space<vmem>>, %arg2: memref<768x3456xbf16, #tpu.memory_space<vmem>>, %arg3: memref<8x3456xf32, #tpu.memory_space<vmem>>) attributes {dimension_semantics = [#tpu.dimension_semantics<parallel>], iteration_bounds = array<i64: 9>, scalar_prefetch = 0 : i64, scratch_operands = 0 : i64, tpu.core_type = #tpu.core_type<tc>, window_params = [{pipeline_mode = #tpu.pipeline_mode<synchronous>, transform_indices = @transform_0, window_bounds = array<i64: 8, 768>}, {transform_indices = @transform_1, window_bounds = array<i64: 768, 3456>}, {transform_indices = @transform_2, window_bounds = array<i64: 8, 3456>}]} {
    %c0 = arith.constant 0 : index
    %c0_0 = arith.constant 0 : index
    %0 = vector.load %arg1[%c0, %c0_0] : memref<8x768xbf16, #tpu.memory_space<vmem>>, vector<8x768xbf16>
    %c0_1 = arith.constant 0 : index
    %c0_2 = arith.constant 0 : index
    %1 = vector.load %arg2[%c0_1, %c0_2] : memref<768x3456xbf16, #tpu.memory_space<vmem>>, vector<768x3456xbf16>
    %cst = arith.constant dense<0.000000e+00> : vector<8x3456xf32>
    %2 = tpu.matmul %0, %1, %cst {dimension_numbers = #tpu.dot_dimension_numbers<[1], [0], [0], [1], [0, 0, 1, 1], [], []>} : vector<8x768xbf16>, vector<768x3456xbf16>, vector<8x3456xf32> -> vector<8x3456xf32>
    %c0_3 = arith.constant 0 : index
    %c0_4 = arith.constant 0 : index
    %3 = vector.load %arg3[%c0_3, %c0_4] : memref<8x3456xf32, #tpu.memory_space<vmem>>, vector<8x3456xf32>
    tpu.vector_store %arg3[%c0_3, %c0_4], %2 {strides = array<i32>} : memref<8x3456xf32, #tpu.memory_space<vmem>>, vector<8x3456xf32>,
    return
  }
  func.func @transform_0(%arg0: i32) -> (i32, i32) {
    %c0_i32 = arith.constant 0 : i32
    %c0_i32_0 = arith.constant 0 : i32
    %c0_i32_1 = arith.constant 0 : i32
    return %c0_i32, %c0_i32_0 : i32, i32
  }
  func.func @transform_1(%arg0: i32) -> (i32, i32) {
    %c0_i32 = arith.constant 0 : i32
    %c0_i32_0 = arith.constant 0 : i32
    return %c0_i32, %arg0 : i32, i32
  }
  func.func @transform_2(%arg0: i32) -> (i32, i32) {
    %c0_i32 = arith.constant 0 : i32
    %c0_i32_0 = arith.constant 0 : i32
    return %c0_i32, %arg0 : i32, i32
  }
}

module attributes {stable_mosaic.version = 11 : i64} {
  func.func @_mm_bias_kernel(%arg0: i32, %arg1: memref<200x384xbf16, #tpu.memory_space<vmem>>, %arg2: memref<384x256xbf16, #tpu.memory_space<vmem>>, %arg3: memref<1x256xf32, #tpu.memory_space<vmem>>, %arg4: memref<200x256xf32, #tpu.memory_space<vmem>>) attributes {dimension_semantics = [#tpu.dimension_semantics<parallel>], iteration_bounds = array<i64: 1>, scalar_prefetch = 0 : i64, scratch_operands = 0 : i64, tpu.core_type = #tpu.core_type<tc>, window_params = [{pipeline_mode = #tpu.pipeline_mode<synchronous>, transform_indices = @transform_0, window_bounds = array<i64: 200, 384>}, {transform_indices = @transform_1, window_bounds = array<i64: 384, 256>}, {transform_indices = @transform_2, window_bounds = array<i64: 1, 256>}, {transform_indices = @transform_3, window_bounds = array<i64: 200, 256>}]} {
    %c0 = arith.constant 0 : index
    %c0_0 = arith.constant 0 : index
    %0 = vector.load %arg1[%c0, %c0_0] : memref<200x384xbf16, #tpu.memory_space<vmem>>, vector<200x384xbf16>
    %c0_1 = arith.constant 0 : index
    %c0_2 = arith.constant 0 : index
    %1 = vector.load %arg2[%c0_1, %c0_2] : memref<384x256xbf16, #tpu.memory_space<vmem>>, vector<384x256xbf16>
    %cst = arith.constant dense<0.000000e+00> : vector<200x256xf32>
    %2 = tpu.matmul %0, %1, %cst {dimension_numbers = #tpu.dot_dimension_numbers<[1], [0], [0], [1], [0, 0, 1, 1], [], []>} : vector<200x384xbf16>, vector<384x256xbf16>, vector<200x256xf32> -> vector<200x256xf32>
    %c0_3 = arith.constant 0 : index
    %c0_4 = arith.constant 0 : index
    %3 = vector.load %arg3[%c0_3, %c0_4] : memref<1x256xf32, #tpu.memory_space<vmem>>, vector<1x256xf32>
    %4 = vector.broadcast %3 : vector<1x256xf32> to vector<200x256xf32>
    %5 = arith.addf %2, %4 : vector<200x256xf32>
    %cst_5 = arith.constant 0.000000e+00 : f32
    %6 = vector.broadcast %cst_5 : f32 to vector<200x256xf32>
    %7 = arith.maximumf %5, %6 : vector<200x256xf32>
    %c0_6 = arith.constant 0 : index
    %c0_7 = arith.constant 0 : index
    %8 = vector.load %arg4[%c0_6, %c0_7] : memref<200x256xf32, #tpu.memory_space<vmem>>, vector<200x256xf32>
    tpu.vector_store %arg4[%c0_6, %c0_7], %7 {strides = array<i32>} : memref<200x256xf32, #tpu.memory_space<vmem>>, vector<200x256xf32>,
    return
  }
  func.func @transform_0(%arg0: i32) -> (i32, i32) {
    %c0_i32 = arith.constant 0 : i32
    %c0_i32_0 = arith.constant 0 : i32
    %c0_i32_1 = arith.constant 0 : i32
    return %c0_i32, %c0_i32_0 : i32, i32
  }
  func.func @transform_1(%arg0: i32) -> (i32, i32) {
    %c0_i32 = arith.constant 0 : i32
    %c0_i32_0 = arith.constant 0 : i32
    return %c0_i32, %arg0 : i32, i32
  }
  func.func @transform_2(%arg0: i32) -> (i32, i32) {
    %c0_i32 = arith.constant 0 : i32
    %c0_i32_0 = arith.constant 0 : i32
    return %c0_i32, %arg0 : i32, i32
  }
  func.func @transform_3(%arg0: i32) -> (i32, i32) {
    %c0_i32 = arith.constant 0 : i32
    %c0_i32_0 = arith.constant 0 : i32
    return %c0_i32, %arg0 : i32, i32
  }
}

</mosaic_0001>

<llo_original>
// kernel: net_forward.2
$region0: #{net_forward.2}
  #allocation0 [shape = 'u32[]', space=smem, size = 0x4, offset = 0x4, fixed_abs, tag = 'smem constant byte address 0x4 - core index']
  #allocation1 [shape = 'u32[72,128]{1,0:T(1,128)}', space=vmem, size = 0x9000, scoped, tag = 'internal scratch']
  %s0 = inlined_call_operand.vmem [shape: bf16[8,768], index: 0, kind: input, shape index: {}]
  %s1 = inlined_call_operand.hbm [shape: bf16[768,31104], index: 1, kind: input, shape index: {}]
  %s2 = inlined_call_operand.vmem [shape: f32[8,31104], index: 2, kind: output, shape index: {}]
  %s3 = sld [smem:[#allocation0]]
  $region45: #{net_forward.2} parent=0
    _
  %s5 = ssub.s32 1, %s3
  %s6 = scalar_select 0, %s5, %s3
  $region1: #{net_forward.2} parent=0
    #allocation2 [shape = 'u8[10616832]{0}', space=vmem, size = 0xa20000, scoped, tag = 'input window, operand 1']
    #allocation3 [shape = 's32[2]{0}', space=sflag, size = 0x8, scoped, tag = 'scoped memory for net_forward.2']
    %7 = vsyncpa [#allocation3], 0
    %s8 = scalar_lea.sflag [#allocation3], 1
    %9 = vsyncpa %s8, 0
    loop: start=0, step=1, limit=11
    $region2: #{net_forward.2} parent=1 // loop_pre_header
      _
    $region3: #{net_forward.2} parent=1 // loop_header
      %s11 = sphi 0, %s15
      %p12 = scmp.ge.s32.totalorder %s11, 11
      %s19 = sphi 0, %s19
      %s21 = sphi 0, %s19
      %s22 = sphi 0, %s21
      %s36 = sphi 0, %s22
      %s42 = sphi 0, %s44
      %s45 = sphi 0, %s42
      %s46 = sphi 0, %s45
      %s62 = sphi 0, %s46
      %s68 = sphi 0, %s70
      %s71 = sphi 0, %s68
      %s72 = sphi 0, %s71
      %s88 = sphi 0, %s72
    $region4: #{net_forward.2} parent=1 // loop_header_branch
      %14 = sbr.rel (%p12) target = $region8
    $region5: #{net_forward.2} parent=1 // loop_body
      %s16 = ssub.s32 %s11, 1
      %s17 = ssub.s32 %s11, 2
      %s18 = sadd.s32 %s11, 1
      %s20 = sadd.s32 %s19, 1
      %p23 = scmp.eq.s32.totalorder %s11, 8
      %p24 = scmp.ne.s32.totalorder %s19, %s21
      %p25 = scmp.eq.s32.totalorder %s11, 0
      %p26 = por %p24, %p25
      %p27 = scmp.ne.s32.totalorder %s19, %s21
      %p28 = scmp.eq.s32.totalorder %s16, 8
      %p29 = por %p27, %p28
      %p30 = scmp.ne.s32.totalorder %s21, %s22
      %p31 = scmp.eq.s32.totalorder %s16, 0
      %p32 = por %p30, %p31
      %p33 = scmp.ne.s32.totalorder %s21, %s22
      %p34 = scmp.eq.s32.totalorder %s17, 8
      %p35 = por %p33, %p34
      %p37 = scmp.ne.s32.totalorder %s22, %s36
      %p38 = scmp.eq.s32.totalorder %s17, 0
      %p39 = por %p37, %p38
      %s40 = ssub.s32 %s11, %s18
      %p41 = scmp.eq.s32.totalorder %s40, 0
      %s43 = sadd.s32 %s42, 1
      %s44 = scalar_select %p41, %s42, %s43
      %p47 = pneg %p41
      %p48 = scmp.eq.s32.totalorder %s11, 8
      %p49 = por %p47, %p48
      %p50 = scmp.ne.s32.totalorder %s42, %s45
      %p51 = scmp.eq.s32.totalorder %s11, 0
      %p52 = por %p50, %p51
      %p53 = scmp.ne.s32.totalorder %s42, %s45
      %p54 = scmp.eq.s32.totalorder %s16, 8
      %p55 = por %p53, %p54
      %p56 = scmp.ne.s32.totalorder %s45, %s46
      %p57 = scmp.eq.s32.totalorder %s16, 0
      %p58 = por %p56, %p57
      %p59 = scmp.ne.s32.totalorder %s45, %s46
      %p60 = scmp.eq.s32.totalorder %s17, 8
      %p61 = por %p59, %p60
      %p63 = scmp.ne.s32.totalorder %s46, %s62
      %p64 = scmp.eq.s32.totalorder %s17, 0
      %p65 = por %p63, %p64
      %s66 = ssub.s32 %s11, %s18
      %p67 = scmp.eq.s32.totalorder %s66, 0
      %s69 = sadd.s32 %s68, 1
      %s70 = scalar_select %p67, %s68, %s69
      %p73 = pneg %p67
      %p74 = scmp.eq.s32.totalorder %s11, 8
      %p75 = por %p73, %p74
      %p76 = scmp.ne.s32.totalorder %s68, %s71
      %p77 = scmp.eq.s32.totalorder %s11, 0
      %p78 = por %p76, %p77
      %p79 = scmp.ne.s32.totalorder %s68, %s71
      %p80 = scmp.eq.s32.totalorder %s16, 8
      %p81 = por %p79, %p80
      %p82 = scmp.ne.s32.totalorder %s71, %s72
      %p83 = scmp.eq.s32.totalorder %s16, 0
      %p84 = por %p82, %p83
      %p85 = scmp.ne.s32.totalorder %s71, %s72
      %p86 = scmp.eq.s32.totalorder %s17, 8
      %p87 = por %p85, %p86
      %p89 = scmp.ne.s32.totalorder %s72, %s88
      %p90 = scmp.eq.s32.totalorder %s17, 0
      %p91 = por %p89, %p90
      %p92 = scmp.le.s32.totalorder 1, %s11
      %p93 = scmp.lt.s32.totalorder %s11, 10
      %p94 = pnand %p92, %p93
      %p95 = pneg %p94
      // Predicated region
      $region9: #{net_forward.2} parent=5 // pred_check
        _
      $region10: #{net_forward.2} parent=5 // pred_check_branch
        %97 = sbr.rel (%p94) target = $region12
      $region11: #{net_forward.2} parent=5 // pred_region
        %s98 = ssub.s32 %s11, 1
        // Predicated region
        $region13: #{net_forward.2} parent=11 // pred_check
          %p99 = pneg %p32
        $region14: #{net_forward.2} parent=11 // pred_check_branch
          %101 = sbr.rel (%p99) target = $region16
        $region15: #{net_forward.2} parent=11 // pred_region
          _
        $region16: #{net_forward.2} parent=11 // pred_fallthru
          _
      $region12: #{net_forward.2} parent=5 // pred_fallthru
        _
      %p102 = scmp.lt.s32.totalorder %s11, 9
      // Predicated region
      $region17: #{net_forward.2} parent=5 // pred_check
        %p103 = pneg %p102
      $region18: #{net_forward.2} parent=5 // pred_check_branch
        %105 = sbr.rel (%p103) target = $region20
      $region19: #{net_forward.2} parent=5 // pred_region
        // Predicated region
        $region21: #{net_forward.2} parent=19 // pred_check
          %p106 = pneg %p52
        $region22: #{net_forward.2} parent=19 // pred_check_branch
          %108 = sbr.rel (%p106) target = $region24
        $region23: #{net_forward.2} parent=19 // pred_region
          %s109 = sand.u32 %s42, 1
          %s110 = scalar_lea.sflag [#allocation3], %s109
          %s111 = sand.u32 %s42, 1
          %s112 = smul.addr %s111, 10368
          %s113 = scalar_lea.vmem [#allocation2], %s112
          %s114 = smul.u32 27, %s11
          %116 = vsyncadd %s110, 0
          %s117 = smul.addr %s114, 4
          %s118 = scalar_lea.hbm %s1, %s117
          %s119 = sshll.u32 %s118, 4
          %s120 = int_to_ptr.hbm [resolvable:$true] %s119
          %s121 = sshll.u32 %s113, 4
          %s122 = int_to_ptr.vmem [resolvable:$true] %s121
          %127 = dma.hbm_to_vmem [thread:$0]  %s120, 165888, %s122, %s110, 15552, 1728, 108
        $region24: #{net_forward.2} parent=19 // pred_fallthru
          _
      $region20: #{net_forward.2} parent=5 // pred_fallthru
        _
      %p128 = scmp.le.s32.totalorder 1, %s11
      %p129 = scmp.lt.s32.totalorder %s11, 10
      %p130 = pnand %p128, %p129
      %p131 = pneg %p130
      // Predicated region
      $region25: #{net_forward.2} parent=5 // pred_check
        _
      $region26: #{net_forward.2} parent=5 // pred_check_branch
        %133 = sbr.rel (%p130) target = $region28
      $region27: #{net_forward.2} parent=5 // pred_region
        %s134 = ssub.s32 %s11, 1
        %s135 = sand.u32 %s45, 1
        %s136 = scalar_lea.sflag [#allocation3], %s135
        %s137 = sand.u32 %s45, 1
        %s138 = smul.addr %s137, 10368
        %s139 = scalar_lea.vmem [#allocation2], %s138
        // Predicated region
        $region29: #{net_forward.2} parent=27 // pred_check
          %p140 = pneg %p58
        $region30: #{net_forward.2} parent=27 // pred_check_branch
          %142 = sbr.rel (%p140) target = $region32
        $region31: #{net_forward.2} parent=27 // pred_region
          %144 = dma.done %s136, 165888
        $region32: #{net_forward.2} parent=27 // pred_fallthru
          _
        %p145 = pneg %p32
        %p146 = pneg %p29
        %s147 = sand.u32 %s45, 1
        %s148 = scalar_lea.sflag [#allocation3], %s147
        %s149 = sand.u32 %s45, 1
        %s150 = smul.addr %s149, 10368
        %s151 = scalar_lea.vmem [#allocation2], %s150
        %p152 = pneg %p58
        %p153 = pneg %p55
        %p154 = pneg %p84
        %p155 = pneg %p81
        %s156 = smul.u32 27, %s16
        %p157 = scmp.lt.s32.totalorder %s156, 242
        %s158 = scalar_select %p157, %s156, 242
        %s159 = smul.addr %s158, 8
        %s160 = scalar_lea.vmem %s2, %s159
        %s161 = smul.u32 27, %s16
        %s162 = smul.u32 27, %s16
        %p163 = scmp.lt.s32.totalorder %s162, 242
        %s164 = scalar_select %p163, %s162, 242
        %s165 = smul.addr %s164, 8
        %s166 = scalar_lea.vmem %s2, %s165
        %s167 = smul.u32 27, %s16
        %v168 = vld [vmem:[%s0] sm:$0xff]
        %v169 = vld [vmem:[%s0 + $0x8] sm:$0xff]
        %v170 = vld [vmem:[%s0 + $0x10] sm:$0xff]
        %v171 = vld [vmem:[%s139] sm:$0xff]
        %v172 = vld [vmem:[%s139 + $0x8] sm:$0xff]
        %v173 = vld [vmem:[%s139 + $0x10] sm:$0xff]
        %v174 = vld [vmem:[%s139 + $0x18] sm:$0xff]
        %v175 = vld [vmem:[%s139 + $0x20] sm:$0xff]
        %v176 = vld [vmem:[%s139 + $0x28] sm:$0xff]
        %v177 = vld [vmem:[%s139 + $0x30] sm:$0xff]
        %v178 = vld [vmem:[%s139 + $0x38] sm:$0xff]
        %v179 = vld [vmem:[%s139 + $0x40] sm:$0xff]
        %v180 = vld [vmem:[%s139 + $0x48] sm:$0xff]
        %v181 = vld [vmem:[%s139 + $0x50] sm:$0xff]
        %v182 = vld [vmem:[%s139 + $0x58] sm:$0xff]
        %v183 = vld [vmem:[%s139 + $0x60] sm:$0xff]
        %v184 = vld [vmem:[%s139 + $0x68] sm:$0xf]
        %v185 = vld [vmem:[%s139 + $0x6c] sm:$0xff]
        %v186 = vld [vmem:[%s139 + $0x74] sm:$0xff]
        %v187 = vld [vmem:[%s139 + $0x7c] sm:$0xff]
        %v188 = vld [vmem:[%s139 + $0x84] sm:$0xff]
        %v189 = vld [vmem:[%s139 + $0x8c] sm:$0xff]
        %v190 = vld [vmem:[%s139 + $0x94] sm:$0xff]
        %v191 = vld [vmem:[%s139 + $0x9c] sm:$0xff]
        %v192 = vld [vmem:[%s139 + $0xa4] sm:$0xff]
        %v193 = vld [vmem:[%s139 + $0xac] sm:$0xff]
        %v194 = vld [vmem:[%s139 + $0xb4] sm:$0xff]
        %v195 = vld [vmem:[%s139 + $0xbc] sm:$0xff]
        %v196 = vld [vmem:[%s139 + $0xc4] sm:$0xff]
        %v197 = vld [vmem:[%s139 + $0xcc] sm:$0xff]
        %v198 = vld [vmem:[%s139 + $0xd4] sm:$0xf]
        %v199 = vld [vmem:[%s139 + $0xd8] sm:$0xff]
        %v200 = vld [vmem:[%s139 + $0xe0] sm:$0xff]
        %v201 = vld [vmem:[%s139 + $0xe8] sm:$0xff]
        %v202 = vld [vmem:[%s139 + $0xf0] sm:$0xff]
        %v203 = vld [vmem:[%s139 + $0xf8] sm:$0xff]
        %v204 = vld [vmem:[%s139 + $0x100] sm:$0xff]
        %v205 = vld [vmem:[%s139 + $0x108] sm:$0xff]
        %v206 = vld [vmem:[%s139 + $0x110] sm:$0xff]
        %v207 = vld [vmem:[%s139 + $0x118] sm:$0xff]
        %v208 = vld [vmem:[%s139 + $0x120] sm:$0xff]
        %v209 = vld [vmem:[%s139 + $0x128] sm:$0xff]
        %v210 = vld [vmem:[%s139 + $0x130] sm:$0xff]
        %v211 = vld [vmem:[%s139 + $0x138] sm:$0xff]
        %v212 = vld [vmem:[%s139 + $0x140] sm:$0xf]
        %v213 = vld [vmem:[%s139 + $0x144] sm:$0xff]
        %v214 = vld [vmem:[%s139 + $0x14c] sm:$0xff]
        %v215 = vld [vmem:[%s139 + $0x154] sm:$0xff]
        %v216 = vld [vmem:[%s139 + $0x15c] sm:$0xff]
        %v217 = vld [vmem:[%s139 + $0x164] sm:$0xff]
        %v218 = vld [vmem:[%s139 + $0x16c] sm:$0xff]
        %v219 = vld [vmem:[%s139 + $0x174] sm:$0xff]
        %v220 = vld [vmem:[%s139 + $0x17c] sm:$0xff]
        %v221 = vld [vmem:[%s139 + $0x184] sm:$0xff]
        %v222 = vld [vmem:[%s139 + $0x18c] sm:$0xff]
        %v223 = vld [vmem:[%s139 + $0x194] sm:$0xff]
        %v224 = vld [vmem:[%s139 + $0x19c] sm:$0xff]
        %v225 = vld [vmem:[%s139 + $0x1a4] sm:$0xff]
        %v226 = vld [vmem:[%s139 + $0x1ac] sm:$0xf]
        %v227 = vld [vmem:[%s139 + $0x1b0] sm:$0xff]
        %v228 = vld [vmem:[%s139 + $0x1b8] sm:$0xff]
        %v229 = vld [vmem:[%s139 + $0x1c0] sm:$0xff]
        %v230 = vld [vmem:[%s139 + $0x1c8] sm:$0xff]
        %v231 = vld [vmem:[%s139 + $0x1d0] sm:$0xff]
        %v232 = vld [vmem:[%s139 + $0x1d8] sm:$0xff]
        %v233 = vld [vmem:[%s139 + $0x1e0] sm:$0xff]
        %v234 = vld [vmem:[%s139 + $0x1e8] sm:$0xff]
        %v235 = vld [vmem:[%s139 + $0x1f0] sm:$0xff]
        %v236 = vld [vmem:[%s139 + $0x1f8] sm:$0xff]
        %v237 = vld [vmem:[%s139 + $0x200] sm:$0xff]
        %v238 = vld [vmem:[%s139 + $0x208] sm:$0xff]
        %v239 = vld [vmem:[%s139 + $0x210] sm:$0xff]
        %v240 = vld [vmem:[%s139 + $0x218] sm:$0xf]
        %v241 = vld [vmem:[%s139 + $0x21c] sm:$0xff]
        %v242 = vld [vmem:[%s139 + $0x224] sm:$0xff]
        %v243 = vld [vmem:[%s139 + $0x22c] sm:$0xff]
        %v244 = vld [vmem:[%s139 + $0x234] sm:$0xff]
        %v245 = vld [vmem:[%s139 + $0x23c] sm:$0xff]
        %v246 = vld [vmem:[%s139 + $0x244] sm:$0xff]
        %v247 = vld [vmem:[%s139 + $0x24c] sm:$0xff]
        %v248 = vld [vmem:[%s139 + $0x254] sm:$0xff]
        %v249 = vld [vmem:[%s139 + $0x25c] sm:$0xff]
        %v250 = vld [vmem:[%s139 + $0x264] sm:$0xff]
        %v251 = vld [vmem:[%s139 + $0x26c] sm:$0xff]
        %v252 = vld [vmem:[%s139 + $0x274] sm:$0xff]
        %v253 = vld [vmem:[%s139 + $0x27c] sm:$0xff]
        %v254 = vld [vmem:[%s139 + $0x284] sm:$0xf]
        %v255 = vld [vmem:[%s139 + $0x288] sm:$0xff]
        %v256 = vld [vmem:[%s139 + $0x290] sm:$0xff]
        %v257 = vld [vmem:[%s139 + $0x298] sm:$0xff]
        %v258 = vld [vmem:[%s139 + $0x2a0] sm:$0xff]
        %v259 = vld [vmem:[%s139 + $0x2a8] sm:$0xff]
        %v260 = vld [vmem:[%s139 + $0x2b0] sm:$0xff]
        %v261 = vld [vmem:[%s139 + $0x2b8] sm:$0xff]
        %v262 = vld [vmem:[%s139 + $0x2c0] sm:$0xff]
        %v263 = vld [vmem:[%s139 + $0x2c8] sm:$0xff]
        %v264 = vld [vmem:[%s139 + $0x2d0] sm:$0xff]
        %v265 = vld [vmem:[%s139 + $0x2d8] sm:$0xff]
        %v266 = vld [vmem:[%s139 + $0x2e0] sm:$0xff]
        %v267 = vld [vmem:[%s139 + $0x2e8] sm:$0xff]
        %v268 = vld [vmem:[%s139 + $0x2f0] sm:$0xf]
        %v269 = vld [vmem:[%s139 + $0x2f4] sm:$0xff]
        %v270 = vld [vmem:[%s139 + $0x2fc] sm:$0xff]
        %v271 = vld [vmem:[%s139 + $0x304] sm:$0xff]
        %v272 = vld [vmem:[%s139 + $0x30c] sm:$0xff]
        %v273 = vld [vmem:[%s139 + $0x314] sm:$0xff]
        %v274 = vld [vmem:[%s139 + $0x31c] sm:$0xff]
        %v275 = vld [vmem:[%s139 + $0x324] sm:$0xff]
        %v276 = vld [vmem:[%s139 + $0x32c] sm:$0xff]
        %v277 = vld [vmem:[%s139 + $0x334] sm:$0xff]
        %v278 = vld [vmem:[%s139 + $0x33c] sm:$0xff]
        %v279 = vld [vmem:[%s139 + $0x344] sm:$0xff]
        %v280 = vld [vmem:[%s139 + $0x34c] sm:$0xff]
        %v281 = vld [vmem:[%s139 + $0x354] sm:$0xff]
        %v282 = vld [vmem:[%s139 + $0x35c] sm:$0xf]
        %v283 = vld [vmem:[%s139 + $0x360] sm:$0xff]
        %v284 = vld [vmem:[%s139 + $0x368] sm:$0xff]
        %v285 = vld [vmem:[%s139 + $0x370] sm:$0xff]
        %v286 = vld [vmem:[%s139 + $0x378] sm:$0xff]
        %v287 = vld [vmem:[%s139 + $0x380] sm:$0xff]
        %v288 = vld [vmem:[%s139 + $0x388] sm:$0xff]
        %v289 = vld [vmem:[%s139 + $0x390] sm:$0xff]
        %v290 = vld [vmem:[%s139 + $0x398] sm:$0xff]
        %v291 = vld [vmem:[%s139 + $0x3a0] sm:$0xff]
        %v292 = vld [vmem:[%s139 + $0x3a8] sm:$0xff]
        %v293 = vld [vmem:[%s139 + $0x3b0] sm:$0xff]
        %v294 = vld [vmem:[%s139 + $0x3b8] sm:$0xff]
        %v295 = vld [vmem:[%s139 + $0x3c0] sm:$0xff]
        %v296 = vld [vmem:[%s139 + $0x3c8] sm:$0xf]
        %v297 = vld [vmem:[%s139 + $0x3cc] sm:$0xff]
        %v298 = vld [vmem:[%s139 + $0x3d4] sm:$0xff]
        %v299 = vld [vmem:[%s139 + $0x3dc] sm:$0xff]
        %v300 = vld [vmem:[%s139 + $0x3e4] sm:$0xff]
        %v301 = vld [vmem:[%s139 + $0x3ec] sm:$0xff]
        %v302 = vld [vmem:[%s139 + $0x3f4] sm:$0xff]
        %v303 = vld [vmem:[%s139 + $0x3fc] sm:$0xff]
        %v304 = vld [vmem:[%s139 + $0x404] sm:$0xff]
        %v305 = vld [vmem:[%s139 + $0x40c] sm:$0xff]
        %v306 = vld [vmem:[%s139 + $0x414] sm:$0xff]
        %v307 = vld [vmem:[%s139 + $0x41c] sm:$0xff]
        %v308 = vld [vmem:[%s139 + $0x424] sm:$0xff]
        %v309 = vld [vmem:[%s139 + $0x42c] sm:$0xff]
        %v310 = vld [vmem:[%s139 + $0x434] sm:$0xf]
        %v311 = vld [vmem:[%s139 + $0x438] sm:$0xff]
        %v312 = vld [vmem:[%s139 + $0x440] sm:$0xff]
        %v313 = vld [vmem:[%s139 + $0x448] sm:$0xff]
        %v314 = vld [vmem:[%s139 + $0x450] sm:$0xff]
        %v315 = vld [vmem:[%s139 + $0x458] sm:$0xff]
        %v316 = vld [vmem:[%s139 + $0x460] sm:$0xff]
        %v317 = vld [vmem:[%s139 + $0x468] sm:$0xff]
        %v318 = vld [vmem:[%s139 + $0x470] sm:$0xff]
        %v319 = vld [vmem:[%s139 + $0x478] sm:$0xff]
        %v320 = vld [vmem:[%s139 + $0x480] sm:$0xff]
        %v321 = vld [vmem:[%s139 + $0x488] sm:$0xff]
        %v322 = vld [vmem:[%s139 + $0x490] sm:$0xff]
        %v323 = vld [vmem:[%s139 + $0x498] sm:$0xff]
        %v324 = vld [vmem:[%s139 + $0x4a0] sm:$0xf]
        %v325 = vld [vmem:[%s139 + $0x4a4] sm:$0xff]
        %v326 = vld [vmem:[%s139 + $0x4ac] sm:$0xff]
        %v327 = vld [vmem:[%s139 + $0x4b4] sm:$0xff]
        %v328 = vld [vmem:[%s139 + $0x4bc] sm:$0xff]
        %v329 = vld [vmem:[%s139 + $0x4c4] sm:$0xff]
        %v330 = vld [vmem:[%s139 + $0x4cc] sm:$0xff]
        %v331 = vld [vmem:[%s139 + $0x4d4] sm:$0xff]
        %v332 = vld [vmem:[%s139 + $0x4dc] sm:$0xff]
        %v333 = vld [vmem:[%s139 + $0x4e4] sm:$0xff]
        %v334 = vld [vmem:[%s139 + $0x4ec] sm:$0xff]
        %v335 = vld [vmem:[%s139 + $0x4f4] sm:$0xff]
        %v336 = vld [vmem:[%s139 + $0x4fc] sm:$0xff]
        %v337 = vld [vmem:[%s139 + $0x504] sm:$0xff]
        %v338 = vld [vmem:[%s139 + $0x50c] sm:$0xf]
        %v339 = vld [vmem:[%s139 + $0x510] sm:$0xff]
        %v340 = vld [vmem:[%s139 + $0x518] sm:$0xff]
        %v341 = vld [vmem:[%s139 + $0x520] sm:$0xff]
        %v342 = vld [vmem:[%s139 + $0x528] sm:$0xff]
        %v343 = vld [vmem:[%s139 + $0x530] sm:$0xff]
        %v344 = vld [vmem:[%s139 + $0x538] sm:$0xff]
        %v345 = vld [vmem:[%s139 + $0x540] sm:$0xff]
        %v346 = vld [vmem:[%s139 + $0x548] sm:$0xff]
        %v347 = vld [vmem:[%s139 + $0x550] sm:$0xff]
        %v348 = vld [vmem:[%s139 + $0x558] sm:$0xff]
        %v349 = vld [vmem:[%s139 + $0x560] sm:$0xff]
        %v350 = vld [vmem:[%s139 + $0x568] sm:$0xff]
        %v351 = vld [vmem:[%s139 + $0x570] sm:$0xff]
        %v352 = vld [vmem:[%s139 + $0x578] sm:$0xf]
        %v353 = vld [vmem:[%s139 + $0x57c] sm:$0xff]
        %v354 = vld [vmem:[%s139 + $0x584] sm:$0xff]
        %v355 = vld [vmem:[%s139 + $0x58c] sm:$0xff]
        %v356 = vld [vmem:[%s139 + $0x594] sm:$0xff]
        %v357 = vld [vmem:[%s139 + $0x59c] sm:$0xff]
        %v358 = vld [vmem:[%s139 + $0x5a4] sm:$0xff]
        %v359 = vld [vmem:[%s139 + $0x5ac] sm:$0xff]
        %v360 = vld [vmem:[%s139 + $0x5b4] sm:$0xff]
        %v361 = vld [vmem:[%s139 + $0x5bc] sm:$0xff]
        %v362 = vld [vmem:[%s139 + $0x5c4] sm:$0xff]
        %v363 = vld [vmem:[%s139 + $0x5cc] sm:$0xff]
        %v364 = vld [vmem:[%s139 + $0x5d4] sm:$0xff]
        %v365 = vld [vmem:[%s139 + $0x5dc] sm:$0xff]
        %v366 = vld [vmem:[%s139 + $0x5e4] sm:$0xf]
        %v367 = vld [vmem:[%s139 + $0x5e8] sm:$0xff]
        %v368 = vld [vmem:[%s139 + $0x5f0] sm:$0xff]
        %v369 = vld [vmem:[%s139 + $0x5f8] sm:$0xff]
        %v370 = vld [vmem:[%s139 + $0x600] sm:$0xff]
        %v371 = vld [vmem:[%s139 + $0x608] sm:$0xff]
        %v372 = vld [vmem:[%s139 + $0x610] sm:$0xff]
        %v373 = vld [vmem:[%s139 + $0x618] sm:$0xff]
        %v374 = vld [vmem:[%s139 + $0x620] sm:$0xff]
        %v375 = vld [vmem:[%s139 + $0x628] sm:$0xff]
        %v376 = vld [vmem:[%s139 + $0x630] sm:$0xff]
        %v377 = vld [vmem:[%s139 + $0x638] sm:$0xff]
        %v378 = vld [vmem:[%s139 + $0x640] sm:$0xff]
        %v379 = vld [vmem:[%s139 + $0x648] sm:$0xff]
        %v380 = vld [vmem:[%s139 + $0x650] sm:$0xf]
        %v381 = vld [vmem:[%s139 + $0x654] sm:$0xff]
        %v382 = vld [vmem:[%s139 + $0x65c] sm:$0xff]
        %v383 = vld [vmem:[%s139 + $0x664] sm:$0xff]
        %v384 = vld [vmem:[%s139 + $0x66c] sm:$0xff]
        %v385 = vld [vmem:[%s139 + $0x674] sm:$0xff]
        %v386 = vld [vmem:[%s139 + $0x67c] sm:$0xff]
        %v387 = vld [vmem:[%s139 + $0x684] sm:$0xff]
        %v388 = vld [vmem:[%s139 + $0x68c] sm:$0xff]
        %v389 = vld [vmem:[%s139 + $0x694] sm:$0xff]
        %v390 = vld [vmem:[%s139 + $0x69c] sm:$0xff]
        %v391 = vld [vmem:[%s139 + $0x6a4] sm:$0xff]
        %v392 = vld [vmem:[%s139 + $0x6ac] sm:$0xff]
        %v393 = vld [vmem:[%s139 + $0x6b4] sm:$0xff]
        %v394 = vld [vmem:[%s139 + $0x6bc] sm:$0xf]
        %v395 = vld [vmem:[%s139 + $0x6c0] sm:$0xff]
        %v396 = vld [vmem:[%s139 + $0x6c8] sm:$0xff]
        %v397 = vld [vmem:[%s139 + $0x6d0] sm:$0xff]
        %v398 = vld [vmem:[%s139 + $0x6d8] sm:$0xff]
        %v399 = vld [vmem:[%s139 + $0x6e0] sm:$0xff]
        %v400 = vld [vmem:[%s139 + $0x6e8] sm:$0xff]
        %v401 = vld [vmem:[%s139 + $0x6f0] sm:$0xff]
        %v402 = vld [vmem:[%s139 + $0x6f8] sm:$0xff]
        %v403 = vld [vmem:[%s139 + $0x700] sm:$0xff]
        %v404 = vld [vmem:[%s139 + $0x708] sm:$0xff]
        %v405 = vld [vmem:[%s139 + $0x710] sm:$0xff]
        %v406 = vld [vmem:[%s139 + $0x718] sm:$0xff]
        %v407 = vld [vmem:[%s139 + $0x720] sm:$0xff]
        %v408 = vld [vmem:[%s139 + $0x728] sm:$0xf]
        %v409 = vld [vmem:[%s139 + $0x72c] sm:$0xff]
        %v410 = vld [vmem:[%s139 + $0x734] sm:$0xff]
        %v411 = vld [vmem:[%s139 + $0x73c] sm:$0xff]
        %v412 = vld [vmem:[%s139 + $0x744] sm:$0xff]
        %v413 = vld [vmem:[%s139 + $0x74c] sm:$0xff]
        %v414 = vld [vmem:[%s139 + $0x754] sm:$0xff]
        %v415 = vld [vmem:[%s139 + $0x75c] sm:$0xff]
        %v416 = vld [vmem:[%s139 + $0x764] sm:$0xff]
        %v417 = vld [vmem:[%s139 + $0x76c] sm:$0xff]
        %v418 = vld [vmem:[%s139 + $0x774] sm:$0xff]
        %v419 = vld [vmem:[%s139 + $0x77c] sm:$0xff]
        %v420 = vld [vmem:[%s139 + $0x784] sm:$0xff]
        %v421 = vld [vmem:[%s139 + $0x78c] sm:$0xff]
        %v422 = vld [vmem:[%s139 + $0x794] sm:$0xf]
        %v423 = vld [vmem:[%s139 + $0x798] sm:$0xff]
        %v424 = vld [vmem:[%s139 + $0x7a0] sm:$0xff]
        %v425 = vld [vmem:[%s139 + $0x7a8] sm:$0xff]
        %v426 = vld [vmem:[%s139 + $0x7b0] sm:$0xff]
        %v427 = vld [vmem:[%s139 + $0x7b8] sm:$0xff]
        %v428 = vld [vmem:[%s139 + $0x7c0] sm:$0xff]
        %v429 = vld [vmem:[%s139 + $0x7c8] sm:$0xff]
        %v430 = vld [vmem:[%s139 + $0x7d0] sm:$0xff]
        %v431 = vld [vmem:[%s139 + $0x7d8] sm:$0xff]
        %v432 = vld [vmem:[%s139 + $0x7e0] sm:$0xff]
        %v433 = vld [vmem:[%s139 + $0x7e8] sm:$0xff]
        %v434 = vld [vmem:[%s139 + $0x7f0] sm:$0xff]
        %v435 = vld [vmem:[%s139 + $0x7f8] sm:$0xff]
        %v436 = vld [vmem:[%s139 + $0x800] sm:$0xf]
        %v437 = vld [vmem:[%s139 + $0x804] sm:$0xff]
        %v438 = vld [vmem:[%s139 + $0x80c] sm:$0xff]
        %v439 = vld [vmem:[%s139 + $0x814] sm:$0xff]
        %v440 = vld [vmem:[%s139 + $0x81c] sm:$0xff]
        %v441 = vld [vmem:[%s139 + $0x824] sm:$0xff]
        %v442 = vld [vmem:[%s139 + $0x82c] sm:$0xff]
        %v443 = vld [vmem:[%s139 + $0x834] sm:$0xff]
        %v444 = vld [vmem:[%s139 + $0x83c] sm:$0xff]
        %v445 = vld [vmem:[%s139 + $0x844] sm:$0xff]
        %v446 = vld [vmem:[%s139 + $0x84c] sm:$0xff]
        %v447 = vld [vmem:[%s139 + $0x854] sm:$0xff]
        %v448 = vld [vmem:[%s139 + $0x85c] sm:$0xff]
        %v449 = vld [vmem:[%s139 + $0x864] sm:$0xff]
        %v450 = vld [vmem:[%s139 + $0x86c] sm:$0xf]
        %v451 = vld [vmem:[%s139 + $0x870] sm:$0xff]
        %v452 = vld [vmem:[%s139 + $0x878] sm:$0xff]
        %v453 = vld [vmem:[%s139 + $0x880] sm:$0xff]
        %v454 = vld [vmem:[%s139 + $0x888] sm:$0xff]
        %v455 = vld [vmem:[%s139 + $0x890] sm:$0xff]
        %v456 = vld [vmem:[%s139 + $0x898] sm:$0xff]
        %v457 = vld [vmem:[%s139 + $0x8a0] sm:$0xff]
        %v458 = vld [vmem:[%s139 + $0x8a8] sm:$0xff]
        %v459 = vld [vmem:[%s139 + $0x8b0] sm:$0xff]
        %v460 = vld [vmem:[%s139 + $0x8b8] sm:$0xff]
        %v461 = vld [vmem:[%s139 + $0x8c0] sm:$0xff]
        %v462 = vld [vmem:[%s139 + $0x8c8] sm:$0xff]
        %v463 = vld [vmem:[%s139 + $0x8d0] sm:$0xff]
        %v464 = vld [vmem:[%s139 + $0x8d8] sm:$0xf]
        %v465 = vld [vmem:[%s139 + $0x8dc] sm:$0xff]
        %v466 = vld [vmem:[%s139 + $0x8e4] sm:$0xff]
        %v467 = vld [vmem:[%s139 + $0x8ec] sm:$0xff]
        %v468 = vld [vmem:[%s139 + $0x8f4] sm:$0xff]
        %v469 = vld [vmem:[%s139 + $0x8fc] sm:$0xff]
        %v470 = vld [vmem:[%s139 + $0x904] sm:$0xff]
        %v471 = vld [vmem:[%s139 + $0x90c] sm:$0xff]
        %v472 = vld [vmem:[%s139 + $0x914] sm:$0xff]
        %v473 = vld [vmem:[%s139 + $0x91c] sm:$0xff]
        %v474 = vld [vmem:[%s139 + $0x924] sm:$0xff]
        %v475 = vld [vmem:[%s139 + $0x92c] sm:$0xff]
        %v476 = vld [vmem:[%s139 + $0x934] sm:$0xff]
        %v477 = vld [vmem:[%s139 + $0x93c] sm:$0xff]
        %v478 = vld [vmem:[%s139 + $0x944] sm:$0xf]
        %v479 = vld [vmem:[%s139 + $0x948] sm:$0xff]
        %v480 = vld [vmem:[%s139 + $0x950] sm:$0xff]
        %v481 = vld [vmem:[%s139 + $0x958] sm:$0xff]
        %v482 = vld [vmem:[%s139 + $0x960] sm:$0xff]
        %v483 = vld [vmem:[%s139 + $0x968] sm:$0xff]
        %v484 = vld [vmem:[%s139 + $0x970] sm:$0xff]
        %v485 = vld [vmem:[%s139 + $0x978] sm:$0xff]
        %v486 = vld [vmem:[%s139 + $0x980] sm:$0xff]
        %v487 = vld [vmem:[%s139 + $0x988] sm:$0xff]
        %v488 = vld [vmem:[%s139 + $0x990] sm:$0xff]
        %v489 = vld [vmem:[%s139 + $0x998] sm:$0xff]
        %v490 = vld [vmem:[%s139 + $0x9a0] sm:$0xff]
        %v491 = vld [vmem:[%s139 + $0x9a8] sm:$0xff]
        %v492 = vld [vmem:[%s139 + $0x9b0] sm:$0xf]
        %v493 = vld [vmem:[%s139 + $0x9b4] sm:$0xff]
        %v494 = vld [vmem:[%s139 + $0x9bc] sm:$0xff]
        %v495 = vld [vmem:[%s139 + $0x9c4] sm:$0xff]
        %v496 = vld [vmem:[%s139 + $0x9cc] sm:$0xff]
        %v497 = vld [vmem:[%s139 + $0x9d4] sm:$0xff]
        %v498 = vld [vmem:[%s139 + $0x9dc] sm:$0xff]
        %v499 = vld [vmem:[%s139 + $0x9e4] sm:$0xff]
        %v500 = vld [vmem:[%s139 + $0x9ec] sm:$0xff]
        %v501 = vld [vmem:[%s139 + $0x9f4] sm:$0xff]
        %v502 = vld [vmem:[%s139 + $0x9fc] sm:$0xff]
        %v503 = vld [vmem:[%s139 + $0xa04] sm:$0xff]
        %v504 = vld [vmem:[%s139 + $0xa0c] sm:$0xff]
        %v505 = vld [vmem:[%s139 + $0xa14] sm:$0xff]
        %v506 = vld [vmem:[%s139 + $0xa1c] sm:$0xf]
        %v507 = vld [vmem:[%s139 + $0xa20] sm:$0xff]
        %v508 = vld [vmem:[%s139 + $0xa28] sm:$0xff]
        %v509 = vld [vmem:[%s139 + $0xa30] sm:$0xff]
        %v510 = vld [vmem:[%s139 + $0xa38] sm:$0xff]
        %v511 = vld [vmem:[%s139 + $0xa40] sm:$0xff]
        %v512 = vld [vmem:[%s139 + $0xa48] sm:$0xff]
        %v513 = vld [vmem:[%s139 + $0xa50] sm:$0xff]
        %v514 = vld [vmem:[%s139 + $0xa58] sm:$0xff]
        %v515 = vld [vmem:[%s139 + $0xa60] sm:$0xff]
        %v516 = vld [vmem:[%s139 + $0xa68] sm:$0xff]
        %v517 = vld [vmem:[%s139 + $0xa70] sm:$0xff]
        %v518 = vld [vmem:[%s139 + $0xa78] sm:$0xff]
        %v519 = vld [vmem:[%s139 + $0xa80] sm:$0xff]
        %v520 = vld [vmem:[%s139 + $0xa88] sm:$0xf]
        %v521 = vld [vmem:[%s139 + $0xa8c] sm:$0xff]
        %v522 = vld [vmem:[%s139 + $0xa94] sm:$0xff]
        %v523 = vld [vmem:[%s139 + $0xa9c] sm:$0xff]
        %v524 = vld [vmem:[%s139 + $0xaa4] sm:$0xff]
        %v525 = vld [vmem:[%s139 + $0xaac] sm:$0xff]
        %v526 = vld [vmem:[%s139 + $0xab4] sm:$0xff]
        %v527 = vld [vmem:[%s139 + $0xabc] sm:$0xff]
        %v528 = vld [vmem:[%s139 + $0xac4] sm:$0xff]
        %v529 = vld [vmem:[%s139 + $0xacc] sm:$0xff]
        %v530 = vld [vmem:[%s139 + $0xad4] sm:$0xff]
        %v531 = vld [vmem:[%s139 + $0xadc] sm:$0xff]
        %v532 = vld [vmem:[%s139 + $0xae4] sm:$0xff]
        %v533 = vld [vmem:[%s139 + $0xaec] sm:$0xff]
        %v534 = vld [vmem:[%s139 + $0xaf4] sm:$0xf]
        %v535 = vld [vmem:[%s139 + $0xaf8] sm:$0xff]
        %v536 = vld [vmem:[%s139 + $0xb00] sm:$0xff]
        %v537 = vld [vmem:[%s139 + $0xb08] sm:$0xff]
        %v538 = vld [vmem:[%s139 + $0xb10] sm:$0xff]
        %v539 = vld [vmem:[%s139 + $0xb18] sm:$0xff]
        %v540 = vld [vmem:[%s139 + $0xb20] sm:$0xff]
        %v541 = vld [vmem:[%s139 + $0xb28] sm:$0xff]
        %v542 = vld [vmem:[%s139 + $0xb30] sm:$0xff]
        %v543 = vld [vmem:[%s139 + $0xb38] sm:$0xff]
        %v544 = vld [vmem:[%s139 + $0xb40] sm:$0xff]
        %v545 = vld [vmem:[%s139 + $0xb48] sm:$0xff]
        %v546 = vld [vmem:[%s139 + $0xb50] sm:$0xff]
        %v547 = vld [vmem:[%s139 + $0xb58] sm:$0xff]
        %v548 = vld [vmem:[%s139 + $0xb60] sm:$0xf]
        %v549 = vld [vmem:[%s139 + $0xb64] sm:$0xff]
        %v550 = vld [vmem:[%s139 + $0xb6c] sm:$0xff]
        %v551 = vld [vmem:[%s139 + $0xb74] sm:$0xff]
        %v552 = vld [vmem:[%s139 + $0xb7c] sm:$0xff]
        %v553 = vld [vmem:[%s139 + $0xb84] sm:$0xff]
        %v554 = vld [vmem:[%s139 + $0xb8c] sm:$0xff]
        %v555 = vld [vmem:[%s139 + $0xb94] sm:$0xff]
        %v556 = vld [vmem:[%s139 + $0xb9c] sm:$0xff]
        %v557 = vld [vmem:[%s139 + $0xba4] sm:$0xff]
        %v558 = vld [vmem:[%s139 + $0xbac] sm:$0xff]
        %v559 = vld [vmem:[%s139 + $0xbb4] sm:$0xff]
        %v560 = vld [vmem:[%s139 + $0xbbc] sm:$0xff]
        %v561 = vld [vmem:[%s139 + $0xbc4] sm:$0xff]
        %v562 = vld [vmem:[%s139 + $0xbcc] sm:$0xf]
        %v563 = vld [vmem:[%s139 + $0xbd0] sm:$0xff]
        %v564 = vld [vmem:[%s139 + $0xbd8] sm:$0xff]
        %v565 = vld [vmem:[%s139 + $0xbe0] sm:$0xff]
        %v566 = vld [vmem:[%s139 + $0xbe8] sm:$0xff]
        %v567 = vld [vmem:[%s139 + $0xbf0] sm:$0xff]
        %v568 = vld [vmem:[%s139 + $0xbf8] sm:$0xff]
        %v569 = vld [vmem:[%s139 + $0xc00] sm:$0xff]
        %v570 = vld [vmem:[%s139 + $0xc08] sm:$0xff]
        %v571 = vld [vmem:[%s139 + $0xc10] sm:$0xff]
        %v572 = vld [vmem:[%s139 + $0xc18] sm:$0xff]
        %v573 = vld [vmem:[%s139 + $0xc20] sm:$0xff]
        %v574 = vld [vmem:[%s139 + $0xc28] sm:$0xff]
        %v575 = vld [vmem:[%s139 + $0xc30] sm:$0xff]
        %v576 = vld [vmem:[%s139 + $0xc38] sm:$0xf]
        %v577 = vld [vmem:[%s139 + $0xc3c] sm:$0xff]
        %v578 = vld [vmem:[%s139 + $0xc44] sm:$0xff]
        %v579 = vld [vmem:[%s139 + $0xc4c] sm:$0xff]
        %v580 = vld [vmem:[%s139 + $0xc54] sm:$0xff]
        %v581 = vld [vmem:[%s139 + $0xc5c] sm:$0xff]
        %v582 = vld [vmem:[%s139 + $0xc64] sm:$0xff]
        %v583 = vld [vmem:[%s139 + $0xc6c] sm:$0xff]
        %v584 = vld [vmem:[%s139 + $0xc74] sm:$0xff]
        %v585 = vld [vmem:[%s139 + $0xc7c] sm:$0xff]
        %v586 = vld [vmem:[%s139 + $0xc84] sm:$0xff]
        %v587 = vld [vmem:[%s139 + $0xc8c] sm:$0xff]
        %v588 = vld [vmem:[%s139 + $0xc94] sm:$0xff]
        %v589 = vld [vmem:[%s139 + $0xc9c] sm:$0xff]
        %v590 = vld [vmem:[%s139 + $0xca4] sm:$0xf]
        %v591 = vld [vmem:[%s139 + $0xca8] sm:$0xff]
        %v592 = vld [vmem:[%s139 + $0xcb0] sm:$0xff]
        %v593 = vld [vmem:[%s139 + $0xcb8] sm:$0xff]
        %v594 = vld [vmem:[%s139 + $0xcc0] sm:$0xff]
        %v595 = vld [vmem:[%s139 + $0xcc8] sm:$0xff]
        %v596 = vld [vmem:[%s139 + $0xcd0] sm:$0xff]
        %v597 = vld [vmem:[%s139 + $0xcd8] sm:$0xff]
        %v598 = vld [vmem:[%s139 + $0xce0] sm:$0xff]
        %v599 = vld [vmem:[%s139 + $0xce8] sm:$0xff]
        %v600 = vld [vmem:[%s139 + $0xcf0] sm:$0xff]
        %v601 = vld [vmem:[%s139 + $0xcf8] sm:$0xff]
        %v602 = vld [vmem:[%s139 + $0xd00] sm:$0xff]
        %v603 = vld [vmem:[%s139 + $0xd08] sm:$0xff]
        %v604 = vld [vmem:[%s139 + $0xd10] sm:$0xf]
        %v605 = vld [vmem:[%s139 + $0xd14] sm:$0xff]
        %v606 = vld [vmem:[%s139 + $0xd1c] sm:$0xff]
        %v607 = vld [vmem:[%s139 + $0xd24] sm:$0xff]
        %v608 = vld [vmem:[%s139 + $0xd2c] sm:$0xff]
        %v609 = vld [vmem:[%s139 + $0xd34] sm:$0xff]
        %v610 = vld [vmem:[%s139 + $0xd3c] sm:$0xff]
        %v611 = vld [vmem:[%s139 + $0xd44] sm:$0xff]
        %v612 = vld [vmem:[%s139 + $0xd4c] sm:$0xff]
        %v613 = vld [vmem:[%s139 + $0xd54] sm:$0xff]
        %v614 = vld [vmem:[%s139 + $0xd5c] sm:$0xff]
        %v615 = vld [vmem:[%s139 + $0xd64] sm:$0xff]
        %v616 = vld [vmem:[%s139 + $0xd6c] sm:$0xff]
        %v617 = vld [vmem:[%s139 + $0xd74] sm:$0xff]
        %v618 = vld [vmem:[%s139 + $0xd7c] sm:$0xf]
        %v619 = vld [vmem:[%s139 + $0xd80] sm:$0xff]
        %v620 = vld [vmem:[%s139 + $0xd88] sm:$0xff]
        %v621 = vld [vmem:[%s139 + $0xd90] sm:$0xff]
        %v622 = vld [vmem:[%s139 + $0xd98] sm:$0xff]
        %v623 = vld [vmem:[%s139 + $0xda0] sm:$0xff]
        %v624 = vld [vmem:[%s139 + $0xda8] sm:$0xff]
        %v625 = vld [vmem:[%s139 + $0xdb0] sm:$0xff]
        %v626 = vld [vmem:[%s139 + $0xdb8] sm:$0xff]
        %v627 = vld [vmem:[%s139 + $0xdc0] sm:$0xff]
        %v628 = vld [vmem:[%s139 + $0xdc8] sm:$0xff]
        %v629 = vld [vmem:[%s139 + $0xdd0] sm:$0xff]
        %v630 = vld [vmem:[%s139 + $0xdd8] sm:$0xff]
        %v631 = vld [vmem:[%s139 + $0xde0] sm:$0xff]
        %v632 = vld [vmem:[%s139 + $0xde8] sm:$0xf]
        %v633 = vld [vmem:[%s139 + $0xdec] sm:$0xff]
        %v634 = vld [vmem:[%s139 + $0xdf4] sm:$0xff]
        %v635 = vld [vmem:[%s139 + $0xdfc] sm:$0xff]
        %v636 = vld [vmem:[%s139 + $0xe04] sm:$0xff]
        %v637 = vld [vmem:[%s139 + $0xe0c] sm:$0xff]
        %v638 = vld [vmem:[%s139 + $0xe14] sm:$0xff]
        %v639 = vld [vmem:[%s139 + $0xe1c] sm:$0xff]
        %v640 = vld [vmem:[%s139 + $0xe24] sm:$0xff]
        %v641 = vld [vmem:[%s139 + $0xe2c] sm:$0xff]
        %v642 = vld [vmem:[%s139 + $0xe34] sm:$0xff]
        %v643 = vld [vmem:[%s139 + $0xe3c] sm:$0xff]
        %v644 = vld [vmem:[%s139 + $0xe44] sm:$0xff]
        %v645 = vld [vmem:[%s139 + $0xe4c] sm:$0xff]
        %v646 = vld [vmem:[%s139 + $0xe54] sm:$0xf]
        %v647 = vld [vmem:[%s139 + $0xe58] sm:$0xff]
        %v648 = vld [vmem:[%s139 + $0xe60] sm:$0xff]
        %v649 = vld [vmem:[%s139 + $0xe68] sm:$0xff]
        %v650 = vld [vmem:[%s139 + $0xe70] sm:$0xff]
        %v651 = vld [vmem:[%s139 + $0xe78] sm:$0xff]
        %v652 = vld [vmem:[%s139 + $0xe80] sm:$0xff]
        %v653 = vld [vmem:[%s139 + $0xe88] sm:$0xff]
        %v654 = vld [vmem:[%s139 + $0xe90] sm:$0xff]
        %v655 = vld [vmem:[%s139 + $0xe98] sm:$0xff]
        %v656 = vld [vmem:[%s139 + $0xea0] sm:$0xff]
        %v657 = vld [vmem:[%s139 + $0xea8] sm:$0xff]
        %v658 = vld [vmem:[%s139 + $0xeb0] sm:$0xff]
        %v659 = vld [vmem:[%s139 + $0xeb8] sm:$0xff]
        %v660 = vld [vmem:[%s139 + $0xec0] sm:$0xf]
        %v661 = vld [vmem:[%s139 + $0xec4] sm:$0xff]
        %v662 = vld [vmem:[%s139 + $0xecc] sm:$0xff]
        %v663 = vld [vmem:[%s139 + $0xed4] sm:$0xff]
        %v664 = vld [vmem:[%s139 + $0xedc] sm:$0xff]
        %v665 = vld [vmem:[%s139 + $0xee4] sm:$0xff]
        %v666 = vld [vmem:[%s139 + $0xeec] sm:$0xff]
        %v667 = vld [vmem:[%s139 + $0xef4] sm:$0xff]
        %v668 = vld [vmem:[%s139 + $0xefc] sm:$0xff]
        %v669 = vld [vmem:[%s139 + $0xf04] sm:$0xff]
        %v670 = vld [vmem:[%s139 + $0xf0c] sm:$0xff]
        %v671 = vld [vmem:[%s139 + $0xf14] sm:$0xff]
        %v672 = vld [vmem:[%s139 + $0xf1c] sm:$0xff]
        %v673 = vld [vmem:[%s139 + $0xf24] sm:$0xff]
        %v674 = vld [vmem:[%s139 + $0xf2c] sm:$0xf]
        %v675 = vld [vmem:[%s139 + $0xf30] sm:$0xff]
        %v676 = vld [vmem:[%s139 + $0xf38] sm:$0xff]
        %v677 = vld [vmem:[%s139 + $0xf40] sm:$0xff]
        %v678 = vld [vmem:[%s139 + $0xf48] sm:$0xff]
        %v679 = vld [vmem:[%s139 + $0xf50] sm:$0xff]
        %v680 = vld [vmem:[%s139 + $0xf58] sm:$0xff]
        %v681 = vld [vmem:[%s139 + $0xf60] sm:$0xff]
        %v682 = vld [vmem:[%s139 + $0xf68] sm:$0xff]
        %v683 = vld [vmem:[%s139 + $0xf70] sm:$0xff]
        %v684 = vld [vmem:[%s139 + $0xf78] sm:$0xff]
        %v685 = vld [vmem:[%s139 + $0xf80] sm:$0xff]
        %v686 = vld [vmem:[%s139 + $0xf88] sm:$0xff]
        %v687 = vld [vmem:[%s139 + $0xf90] sm:$0xff]
        %v688 = vld [vmem:[%s139 + $0xf98] sm:$0xf]
        %v689 = vld [vmem:[%s139 + $0xf9c] sm:$0xff]
        %v690 = vld [vmem:[%s139 + $0xfa4] sm:$0xff]
        %v691 = vld [vmem:[%s139 + $0xfac] sm:$0xff]
        %v692 = vld [vmem:[%s139 + $0xfb4] sm:$0xff]
        %v693 = vld [vmem:[%s139 + $0xfbc] sm:$0xff]
        %v694 = vld [vmem:[%s139 + $0xfc4] sm:$0xff]
        %v695 = vld [vmem:[%s139 + $0xfcc] sm:$0xff]
        %v696 = vld [vmem:[%s139 + $0xfd4] sm:$0xff]
        %v697 = vld [vmem:[%s139 + $0xfdc] sm:$0xff]
        %v698 = vld [vmem:[%s139 + $0xfe4] sm:$0xff]
        %v699 = vld [vmem:[%s139 + $0xfec] sm:$0xff]
        %v700 = vld [vmem:[%s139 + $0xff4] sm:$0xff]
        %v701 = vld [vmem:[%s139 + $0xffc] sm:$0xff]
        %v702 = vld [vmem:[%s139 + $0x1004] sm:$0xf]
        %v703 = vld [vmem:[%s139 + $0x1008] sm:$0xff]
        %v704 = vld [vmem:[%s139 + $0x1010] sm:$0xff]
        %v705 = vld [vmem:[%s139 + $0x1018] sm:$0xff]
        %v706 = vld [vmem:[%s139 + $0x1020] sm:$0xff]
        %v707 = vld [vmem:[%s139 + $0x1028] sm:$0xff]
        %v708 = vld [vmem:[%s139 + $0x1030] sm:$0xff]
        %v709 = vld [vmem:[%s139 + $0x1038] sm:$0xff]
        %v710 = vld [vmem:[%s139 + $0x1040] sm:$0xff]
        %v711 = vld [vmem:[%s139 + $0x1048] sm:$0xff]
        %v712 = vld [vmem:[%s139 + $0x1050] sm:$0xff]
        %v713 = vld [vmem:[%s139 + $0x1058] sm:$0xff]
        %v714 = vld [vmem:[%s139 + $0x1060] sm:$0xff]
        %v715 = vld [vmem:[%s139 + $0x1068] sm:$0xff]
        %v716 = vld [vmem:[%s139 + $0x1070] sm:$0xf]
        %v717 = vld [vmem:[%s139 + $0x1074] sm:$0xff]
        %v718 = vld [vmem:[%s139 + $0x107c] sm:$0xff]
        %v719 = vld [vmem:[%s139 + $0x1084] sm:$0xff]
        %v720 = vld [vmem:[%s139 + $0x108c] sm:$0xff]
        %v721 = vld [vmem:[%s139 + $0x1094] sm:$0xff]
        %v722 = vld [vmem:[%s139 + $0x109c] sm:$0xff]
        %v723 = vld [vmem:[%s139 + $0x10a4] sm:$0xff]
        %v724 = vld [vmem:[%s139 + $0x10ac] sm:$0xff]
        %v725 = vld [vmem:[%s139 + $0x10b4] sm:$0xff]
        %v726 = vld [vmem:[%s139 + $0x10bc] sm:$0xff]
        %v727 = vld [vmem:[%s139 + $0x10c4] sm:$0xff]
        %v728 = vld [vmem:[%s139 + $0x10cc] sm:$0xff]
        %v729 = vld [vmem:[%s139 + $0x10d4] sm:$0xff]
        %v730 = vld [vmem:[%s139 + $0x10dc] sm:$0xf]
        %v731 = vld [vmem:[%s139 + $0x10e0] sm:$0xff]
        %v732 = vld [vmem:[%s139 + $0x10e8] sm:$0xff]
        %v733 = vld [vmem:[%s139 + $0x10f0] sm:$0xff]
        %v734 = vld [vmem:[%s139 + $0x10f8] sm:$0xff]
        %v735 = vld [vmem:[%s139 + $0x1100] sm:$0xff]
        %v736 = vld [vmem:[%s139 + $0x1108] sm:$0xff]
        %v737 = vld [vmem:[%s139 + $0x1110] sm:$0xff]
        %v738 = vld [vmem:[%s139 + $0x1118] sm:$0xff]
        %v739 = vld [vmem:[%s139 + $0x1120] sm:$0xff]
        %v740 = vld [vmem:[%s139 + $0x1128] sm:$0xff]
        %v741 = vld [vmem:[%s139 + $0x1130] sm:$0xff]
        %v742 = vld [vmem:[%s139 + $0x1138] sm:$0xff]
        %v743 = vld [vmem:[%s139 + $0x1140] sm:$0xff]
        %v744 = vld [vmem:[%s139 + $0x1148] sm:$0xf]
        %v745 = vld [vmem:[%s139 + $0x114c] sm:$0xff]
        %v746 = vld [vmem:[%s139 + $0x1154] sm:$0xff]
        %v747 = vld [vmem:[%s139 + $0x115c] sm:$0xff]
        %v748 = vld [vmem:[%s139 + $0x1164] sm:$0xff]
        %v749 = vld [vmem:[%s139 + $0x116c] sm:$0xff]
        %v750 = vld [vmem:[%s139 + $0x1174] sm:$0xff]
        %v751 = vld [vmem:[%s139 + $0x117c] sm:$0xff]
        %v752 = vld [vmem:[%s139 + $0x1184] sm:$0xff]
        %v753 = vld [vmem:[%s139 + $0x118c] sm:$0xff]
        %v754 = vld [vmem:[%s139 + $0x1194] sm:$0xff]
        %v755 = vld [vmem:[%s139 + $0x119c] sm:$0xff]
        %v756 = vld [vmem:[%s139 + $0x11a4] sm:$0xff]
        %v757 = vld [vmem:[%s139 + $0x11ac] sm:$0xff]
        %v758 = vld [vmem:[%s139 + $0x11b4] sm:$0xf]
        %v759 = vld [vmem:[%s139 + $0x11b8] sm:$0xff]
        %v760 = vld [vmem:[%s139 + $0x11c0] sm:$0xff]
        %v761 = vld [vmem:[%s139 + $0x11c8] sm:$0xff]
        %v762 = vld [vmem:[%s139 + $0x11d0] sm:$0xff]
        %v763 = vld [vmem:[%s139 + $0x11d8] sm:$0xff]
        %v764 = vld [vmem:[%s139 + $0x11e0] sm:$0xff]
        %v765 = vld [vmem:[%s139 + $0x11e8] sm:$0xff]
        %v766 = vld [vmem:[%s139 + $0x11f0] sm:$0xff]
        %v767 = vld [vmem:[%s139 + $0x11f8] sm:$0xff]
        %v768 = vld [vmem:[%s139 + $0x1200] sm:$0xff]
        %v769 = vld [vmem:[%s139 + $0x1208] sm:$0xff]
        %v770 = vld [vmem:[%s139 + $0x1210] sm:$0xff]
        %v771 = vld [vmem:[%s139 + $0x1218] sm:$0xff]
        %v772 = vld [vmem:[%s139 + $0x1220] sm:$0xf]
        %v773 = vld [vmem:[%s139 + $0x1224] sm:$0xff]
        %v774 = vld [vmem:[%s139 + $0x122c] sm:$0xff]
        %v775 = vld [vmem:[%s139 + $0x1234] sm:$0xff]
        %v776 = vld [vmem:[%s139 + $0x123c] sm:$0xff]
        %v777 = vld [vmem:[%s139 + $0x1244] sm:$0xff]
        %v778 = vld [vmem:[%s139 + $0x124c] sm:$0xff]
        %v779 = vld [vmem:[%s139 + $0x1254] sm:$0xff]
        %v780 = vld [vmem:[%s139 + $0x125c] sm:$0xff]
        %v781 = vld [vmem:[%s139 + $0x1264] sm:$0xff]
        %v782 = vld [vmem:[%s139 + $0x126c] sm:$0xff]
        %v783 = vld [vmem:[%s139 + $0x1274] sm:$0xff]
        %v784 = vld [vmem:[%s139 + $0x127c] sm:$0xff]
        %v785 = vld [vmem:[%s139 + $0x1284] sm:$0xff]
        %v786 = vld [vmem:[%s139 + $0x128c] sm:$0xf]
        %v787 = vld [vmem:[%s139 + $0x1290] sm:$0xff]
        %v788 = vld [vmem:[%s139 + $0x1298] sm:$0xff]
        %v789 = vld [vmem:[%s139 + $0x12a0] sm:$0xff]
        %v790 = vld [vmem:[%s139 + $0x12a8] sm:$0xff]
        %v791 = vld [vmem:[%s139 + $0x12b0] sm:$0xff]
        %v792 = vld [vmem:[%s139 + $0x12b8] sm:$0xff]
        %v793 = vld [vmem:[%s139 + $0x12c0] sm:$0xff]
        %v794 = vld [vmem:[%s139 + $0x12c8] sm:$0xff]
        %v795 = vld [vmem:[%s139 + $0x12d0] sm:$0xff]
        %v796 = vld [vmem:[%s139 + $0x12d8] sm:$0xff]
        %v797 = vld [vmem:[%s139 + $0x12e0] sm:$0xff]
        %v798 = vld [vmem:[%s139 + $0x12e8] sm:$0xff]
        %v799 = vld [vmem:[%s139 + $0x12f0] sm:$0xff]
        %v800 = vld [vmem:[%s139 + $0x12f8] sm:$0xf]
        %v801 = vld [vmem:[%s139 + $0x12fc] sm:$0xff]
        %v802 = vld [vmem:[%s139 + $0x1304] sm:$0xff]
        %v803 = vld [vmem:[%s139 + $0x130c] sm:$0xff]
        %v804 = vld [vmem:[%s139 + $0x1314] sm:$0xff]
        %v805 = vld [vmem:[%s139 + $0x131c] sm:$0xff]
        %v806 = vld [vmem:[%s139 + $0x1324] sm:$0xff]
        %v807 = vld [vmem:[%s139 + $0x132c] sm:$0xff]
        %v808 = vld [vmem:[%s139 + $0x1334] sm:$0xff]
        %v809 = vld [vmem:[%s139 + $0x133c] sm:$0xff]
        %v810 = vld [vmem:[%s139 + $0x1344] sm:$0xff]
        %v811 = vld [vmem:[%s139 + $0x134c] sm:$0xff]
        %v812 = vld [vmem:[%s139 + $0x1354] sm:$0xff]
        %v813 = vld [vmem:[%s139 + $0x135c] sm:$0xff]
        %v814 = vld [vmem:[%s139 + $0x1364] sm:$0xf]
        %v815 = vld [vmem:[%s139 + $0x1368] sm:$0xff]
        %v816 = vld [vmem:[%s139 + $0x1370] sm:$0xff]
        %v817 = vld [vmem:[%s139 + $0x1378] sm:$0xff]
        %v818 = vld [vmem:[%s139 + $0x1380] sm:$0xff]
        %v819 = vld [vmem:[%s139 + $0x1388] sm:$0xff]
        %v820 = vld [vmem:[%s139 + $0x1390] sm:$0xff]
        %v821 = vld [vmem:[%s139 + $0x1398] sm:$0xff]
        %v822 = vld [vmem:[%s139 + $0x13a0] sm:$0xff]
        %v823 = vld [vmem:[%s139 + $0x13a8] sm:$0xff]
        %v824 = vld [vmem:[%s139 + $0x13b0] sm:$0xff]
        %v825 = vld [vmem:[%s139 + $0x13b8] sm:$0xff]
        %v826 = vld [vmem:[%s139 + $0x13c0] sm:$0xff]
        %v827 = vld [vmem:[%s139 + $0x13c8] sm:$0xff]
        %v828 = vld [vmem:[%s139 + $0x13d0] sm:$0xf]
        %v829 = vld [vmem:[%s139 + $0x13d4] sm:$0xff]
        %v830 = vld [vmem:[%s139 + $0x13dc] sm:$0xff]
        %v831 = vld [vmem:[%s139 + $0x13e4] sm:$0xff]
        %v832 = vld [vmem:[%s139 + $0x13ec] sm:$0xff]
        %v833 = vld [vmem:[%s139 + $0x13f4] sm:$0xff]
        %v834 = vld [vmem:[%s139 + $0x13fc] sm:$0xff]
        %v835 = vld [vmem:[%s139 + $0x1404] sm:$0xff]
        %v836 = vld [vmem:[%s139 + $0x140c] sm:$0xff]
        %v837 = vld [vmem:[%s139 + $0x1414] sm:$0xff]
        %v838 = vld [vmem:[%s139 + $0x141c] sm:$0xff]
        %v839 = vld [vmem:[%s139 + $0x1424] sm:$0xff]
        %v840 = vld [vmem:[%s139 + $0x142c] sm:$0xff]
        %v841 = vld [vmem:[%s139 + $0x1434] sm:$0xff]
        %v842 = vld [vmem:[%s139 + $0x143c] sm:$0xf]
        %v843 = vld [vmem:[%s139 + $0x1440] sm:$0xff]
        %v844 = vld [vmem:[%s139 + $0x1448] sm:$0xff]
        %v845 = vld [vmem:[%s139 + $0x1450] sm:$0xff]
        %v846 = vld [vmem:[%s139 + $0x1458] sm:$0xff]
        %v847 = vld [vmem:[%s139 + $0x1460] sm:$0xff]
        %v848 = vld [vmem:[%s139 + $0x1468] sm:$0xff]
        %v849 = vld [vmem:[%s139 + $0x1470] sm:$0xff]
        %v850 = vld [vmem:[%s139 + $0x1478] sm:$0xff]
        %v851 = vld [vmem:[%s139 + $0x1480] sm:$0xff]
        %v852 = vld [vmem:[%s139 + $0x1488] sm:$0xff]
        %v853 = vld [vmem:[%s139 + $0x1490] sm:$0xff]
        %v854 = vld [vmem:[%s139 + $0x1498] sm:$0xff]
        %v855 = vld [vmem:[%s139 + $0x14a0] sm:$0xff]
        %v856 = vld [vmem:[%s139 + $0x14a8] sm:$0xf]
        %v857 = vld [vmem:[%s139 + $0x14ac] sm:$0xff]
        %v858 = vld [vmem:[%s139 + $0x14b4] sm:$0xff]
        %v859 = vld [vmem:[%s139 + $0x14bc] sm:$0xff]
        %v860 = vld [vmem:[%s139 + $0x14c4] sm:$0xff]
        %v861 = vld [vmem:[%s139 + $0x14cc] sm:$0xff]
        %v862 = vld [vmem:[%s139 + $0x14d4] sm:$0xff]
        %v863 = vld [vmem:[%s139 + $0x14dc] sm:$0xff]
        %v864 = vld [vmem:[%s139 + $0x14e4] sm:$0xff]
        %v865 = vld [vmem:[%s139 + $0x14ec] sm:$0xff]
        %v866 = vld [vmem:[%s139 + $0x14f4] sm:$0xff]
        %v867 = vld [vmem:[%s139 + $0x14fc] sm:$0xff]
        %v868 = vld [vmem:[%s139 + $0x1504] sm:$0xff]
        %v869 = vld [vmem:[%s139 + $0x150c] sm:$0xff]
        %v870 = vld [vmem:[%s139 + $0x1514] sm:$0xf]
        %v871 = vld [vmem:[%s139 + $0x1518] sm:$0xff]
        %v872 = vld [vmem:[%s139 + $0x1520] sm:$0xff]
        %v873 = vld [vmem:[%s139 + $0x1528] sm:$0xff]
        %v874 = vld [vmem:[%s139 + $0x1530] sm:$0xff]
        %v875 = vld [vmem:[%s139 + $0x1538] sm:$0xff]
        %v876 = vld [vmem:[%s139 + $0x1540] sm:$0xff]
        %v877 = vld [vmem:[%s139 + $0x1548] sm:$0xff]
        %v878 = vld [vmem:[%s139 + $0x1550] sm:$0xff]
        %v879 = vld [vmem:[%s139 + $0x1558] sm:$0xff]
        %v880 = vld [vmem:[%s139 + $0x1560] sm:$0xff]
        %v881 = vld [vmem:[%s139 + $0x1568] sm:$0xff]
        %v882 = vld [vmem:[%s139 + $0x1570] sm:$0xff]
        %v883 = vld [vmem:[%s139 + $0x1578] sm:$0xff]
        %v884 = vld [vmem:[%s139 + $0x1580] sm:$0xf]
        %v885 = vld [vmem:[%s139 + $0x1584] sm:$0xff]
        %v886 = vld [vmem:[%s139 + $0x158c] sm:$0xff]
        %v887 = vld [vmem:[%s139 + $0x1594] sm:$0xff]
        %v888 = vld [vmem:[%s139 + $0x159c] sm:$0xff]
        %v889 = vld [vmem:[%s139 + $0x15a4] sm:$0xff]
        %v890 = vld [vmem:[%s139 + $0x15ac] sm:$0xff]
        %v891 = vld [vmem:[%s139 + $0x15b4] sm:$0xff]
        %v892 = vld [vmem:[%s139 + $0x15bc] sm:$0xff]
        %v893 = vld [vmem:[%s139 + $0x15c4] sm:$0xff]
        %v894 = vld [vmem:[%s139 + $0x15cc] sm:$0xff]
        %v895 = vld [vmem:[%s139 + $0x15d4] sm:$0xff]
        %v896 = vld [vmem:[%s139 + $0x15dc] sm:$0xff]
        %v897 = vld [vmem:[%s139 + $0x15e4] sm:$0xff]
        %v898 = vld [vmem:[%s139 + $0x15ec] sm:$0xf]
        %v899 = vld [vmem:[%s139 + $0x15f0] sm:$0xff]
        %v900 = vld [vmem:[%s139 + $0x15f8] sm:$0xff]
        %v901 = vld [vmem:[%s139 + $0x1600] sm:$0xff]
        %v902 = vld [vmem:[%s139 + $0x1608] sm:$0xff]
        %v903 = vld [vmem:[%s139 + $0x1610] sm:$0xff]
        %v904 = vld [vmem:[%s139 + $0x1618] sm:$0xff]
        %v905 = vld [vmem:[%s139 + $0x1620] sm:$0xff]
        %v906 = vld [vmem:[%s139 + $0x1628] sm:$0xff]
        %v907 = vld [vmem:[%s139 + $0x1630] sm:$0xff]
        %v908 = vld [vmem:[%s139 + $0x1638] sm:$0xff]
        %v909 = vld [vmem:[%s139 + $0x1640] sm:$0xff]
        %v910 = vld [vmem:[%s139 + $0x1648] sm:$0xff]
        %v911 = vld [vmem:[%s139 + $0x1650] sm:$0xff]
        %v912 = vld [vmem:[%s139 + $0x1658] sm:$0xf]
        %v913 = vld [vmem:[%s139 + $0x165c] sm:$0xff]
        %v914 = vld [vmem:[%s139 + $0x1664] sm:$0xff]
        %v915 = vld [vmem:[%s139 + $0x166c] sm:$0xff]
        %v916 = vld [vmem:[%s139 + $0x1674] sm:$0xff]
        %v917 = vld [vmem:[%s139 + $0x167c] sm:$0xff]
        %v918 = vld [vmem:[%s139 + $0x1684] sm:$0xff]
        %v919 = vld [vmem:[%s139 + $0x168c] sm:$0xff]
        %v920 = vld [vmem:[%s139 + $0x1694] sm:$0xff]
        %v921 = vld [vmem:[%s139 + $0x169c] sm:$0xff]
        %v922 = vld [vmem:[%s139 + $0x16a4] sm:$0xff]
        %v923 = vld [vmem:[%s139 + $0x16ac] sm:$0xff]
        %v924 = vld [vmem:[%s139 + $0x16b4] sm:$0xff]
        %v925 = vld [vmem:[%s139 + $0x16bc] sm:$0xff]
        %v926 = vld [vmem:[%s139 + $0x16c4] sm:$0xf]
        %v927 = vld [vmem:[%s139 + $0x16c8] sm:$0xff]
        %v928 = vld [vmem:[%s139 + $0x16d0] sm:$0xff]
        %v929 = vld [vmem:[%s139 + $0x16d8] sm:$0xff]
        %v930 = vld [vmem:[%s139 + $0x16e0] sm:$0xff]
        %v931 = vld [vmem:[%s139 + $0x16e8] sm:$0xff]
        %v932 = vld [vmem:[%s139 + $0x16f0] sm:$0xff]
        %v933 = vld [vmem:[%s139 + $0x16f8] sm:$0xff]
        %v934 = vld [vmem:[%s139 + $0x1700] sm:$0xff]
        %v935 = vld [vmem:[%s139 + $0x1708] sm:$0xff]
        %v936 = vld [vmem:[%s139 + $0x1710] sm:$0xff]
        %v937 = vld [vmem:[%s139 + $0x1718] sm:$0xff]
        %v938 = vld [vmem:[%s139 + $0x1720] sm:$0xff]
        %v939 = vld [vmem:[%s139 + $0x1728] sm:$0xff]
        %v940 = vld [vmem:[%s139 + $0x1730] sm:$0xf]
        %v941 = vld [vmem:[%s139 + $0x1734] sm:$0xff]
        %v942 = vld [vmem:[%s139 + $0x173c] sm:$0xff]
        %v943 = vld [vmem:[%s139 + $0x1744] sm:$0xff]
        %v944 = vld [vmem:[%s139 + $0x174c] sm:$0xff]
        %v945 = vld [vmem:[%s139 + $0x1754] sm:$0xff]
        %v946 = vld [vmem:[%s139 + $0x175c] sm:$0xff]
        %v947 = vld [vmem:[%s139 + $0x1764] sm:$0xff]
        %v948 = vld [vmem:[%s139 + $0x176c] sm:$0xff]
        %v949 = vld [vmem:[%s139 + $0x1774] sm:$0xff]
        %v950 = vld [vmem:[%s139 + $0x177c] sm:$0xff]
        %v951 = vld [vmem:[%s139 + $0x1784] sm:$0xff]
        %v952 = vld [vmem:[%s139 + $0x178c] sm:$0xff]
        %v953 = vld [vmem:[%s139 + $0x1794] sm:$0xff]
        %v954 = vld [vmem:[%s139 + $0x179c] sm:$0xf]
        %v955 = vld [vmem:[%s139 + $0x17a0] sm:$0xff]
        %v956 = vld [vmem:[%s139 + $0x17a8] sm:$0xff]
        %v957 = vld [vmem:[%s139 + $0x17b0] sm:$0xff]
        %v958 = vld [vmem:[%s139 + $0x17b8] sm:$0xff]
        %v959 = vld [vmem:[%s139 + $0x17c0] sm:$0xff]
        %v960 = vld [vmem:[%s139 + $0x17c8] sm:$0xff]
        %v961 = vld [vmem:[%s139 + $0x17d0] sm:$0xff]
        %v962 = vld [vmem:[%s139 + $0x17d8] sm:$0xff]
        %v963 = vld [vmem:[%s139 + $0x17e0] sm:$0xff]
        %v964 = vld [vmem:[%s139 + $0x17e8] sm:$0xff]
        %v965 = vld [vmem:[%s139 + $0x17f0] sm:$0xff]
        %v966 = vld [vmem:[%s139 + $0x17f8] sm:$0xff]
        %v967 = vld [vmem:[%s139 + $0x1800] sm:$0xff]
        %v968 = vld [vmem:[%s139 + $0x1808] sm:$0xf]
        %v969 = vld [vmem:[%s139 + $0x180c] sm:$0xff]
        %v970 = vld [vmem:[%s139 + $0x1814] sm:$0xff]
        %v971 = vld [vmem:[%s139 + $0x181c] sm:$0xff]
        %v972 = vld [vmem:[%s139 + $0x1824] sm:$0xff]
        %v973 = vld [vmem:[%s139 + $0x182c] sm:$0xff]
        %v974 = vld [vmem:[%s139 + $0x1834] sm:$0xff]
        %v975 = vld [vmem:[%s139 + $0x183c] sm:$0xff]
        %v976 = vld [vmem:[%s139 + $0x1844] sm:$0xff]
        %v977 = vld [vmem:[%s139 + $0x184c] sm:$0xff]
        %v978 = vld [vmem:[%s139 + $0x1854] sm:$0xff]
        %v979 = vld [vmem:[%s139 + $0x185c] sm:$0xff]
        %v980 = vld [vmem:[%s139 + $0x1864] sm:$0xff]
        %v981 = vld [vmem:[%s139 + $0x186c] sm:$0xff]
        %v982 = vld [vmem:[%s139 + $0x1874] sm:$0xf]
        %v983 = vld [vmem:[%s139 + $0x1878] sm:$0xff]
        %v984 = vld [vmem:[%s139 + $0x1880] sm:$0xff]
        %v985 = vld [vmem:[%s139 + $0x1888] sm:$0xff]
        %v986 = vld [vmem:[%s139 + $0x1890] sm:$0xff]
        %v987 = vld [vmem:[%s139 + $0x1898] sm:$0xff]
        %v988 = vld [vmem:[%s139 + $0x18a0] sm:$0xff]
        %v989 = vld [vmem:[%s139 + $0x18a8] sm:$0xff]
        %v990 = vld [vmem:[%s139 + $0x18b0] sm:$0xff]
        %v991 = vld [vmem:[%s139 + $0x18b8] sm:$0xff]
        %v992 = vld [vmem:[%s139 + $0x18c0] sm:$0xff]
        %v993 = vld [vmem:[%s139 + $0x18c8] sm:$0xff]
        %v994 = vld [vmem:[%s139 + $0x18d0] sm:$0xff]
        %v995 = vld [vmem:[%s139 + $0x18d8] sm:$0xff]
        %v996 = vld [vmem:[%s139 + $0x18e0] sm:$0xf]
        %v997 = vld [vmem:[%s139 + $0x18e4] sm:$0xff]
        %v998 = vld [vmem:[%s139 + $0x18ec] sm:$0xff]
        %v999 = vld [vmem:[%s139 + $0x18f4] sm:$0xff]
        %v1000 = vld [vmem:[%s139 + $0x18fc] sm:$0xff]
        %v1001 = vld [vmem:[%s139 + $0x1904] sm:$0xff]
        %v1002 = vld [vmem:[%s139 + $0x190c] sm:$0xff]
        %v1003 = vld [vmem:[%s139 + $0x1914] sm:$0xff]
        %v1004 = vld [vmem:[%s139 + $0x191c] sm:$0xff]
        %v1005 = vld [vmem:[%s139 + $0x1924] sm:$0xff]
        %v1006 = vld [vmem:[%s139 + $0x192c] sm:$0xff]
        %v1007 = vld [vmem:[%s139 + $0x1934] sm:$0xff]
        %v1008 = vld [vmem:[%s139 + $0x193c] sm:$0xff]
        %v1009 = vld [vmem:[%s139 + $0x1944] sm:$0xff]
        %v1010 = vld [vmem:[%s139 + $0x194c] sm:$0xf]
        %v1011 = vld [vmem:[%s139 + $0x1950] sm:$0xff]
        %v1012 = vld [vmem:[%s139 + $0x1958] sm:$0xff]
        %v1013 = vld [vmem:[%s139 + $0x1960] sm:$0xff]
        %v1014 = vld [vmem:[%s139 + $0x1968] sm:$0xff]
        %v1015 = vld [vmem:[%s139 + $0x1970] sm:$0xff]
        %v1016 = vld [vmem:[%s139 + $0x1978] sm:$0xff]
        %v1017 = vld [vmem:[%s139 + $0x1980] sm:$0xff]
        %v1018 = vld [vmem:[%s139 + $0x1988] sm:$0xff]
        %v1019 = vld [vmem:[%s139 + $0x1990] sm:$0xff]
        %v1020 = vld [vmem:[%s139 + $0x1998] sm:$0xff]
        %v1021 = vld [vmem:[%s139 + $0x19a0] sm:$0xff]
        %v1022 = vld [vmem:[%s139 + $0x19a8] sm:$0xff]
        %v1023 = vld [vmem:[%s139 + $0x19b0] sm:$0xff]
        %v1024 = vld [vmem:[%s139 + $0x19b8] sm:$0xf]
        %v1025 = vld [vmem:[%s139 + $0x19bc] sm:$0xff]
        %v1026 = vld [vmem:[%s139 + $0x19c4] sm:$0xff]
        %v1027 = vld [vmem:[%s139 + $0x19cc] sm:$0xff]
        %v1028 = vld [vmem:[%s139 + $0x19d4] sm:$0xff]
        %v1029 = vld [vmem:[%s139 + $0x19dc] sm:$0xff]
        %v1030 = vld [vmem:[%s139 + $0x19e4] sm:$0xff]
        %v1031 = vld [vmem:[%s139 + $0x19ec] sm:$0xff]
        %v1032 = vld [vmem:[%s139 + $0x19f4] sm:$0xff]
        %v1033 = vld [vmem:[%s139 + $0x19fc] sm:$0xff]
        %v1034 = vld [vmem:[%s139 + $0x1a04] sm:$0xff]
        %v1035 = vld [vmem:[%s139 + $0x1a0c] sm:$0xff]
        %v1036 = vld [vmem:[%s139 + $0x1a14] sm:$0xff]
        %v1037 = vld [vmem:[%s139 + $0x1a1c] sm:$0xff]
        %v1038 = vld [vmem:[%s139 + $0x1a24] sm:$0xf]
        %v1039 = vld [vmem:[%s139 + $0x1a28] sm:$0xff]
        %v1040 = vld [vmem:[%s139 + $0x1a30] sm:$0xff]
        %v1041 = vld [vmem:[%s139 + $0x1a38] sm:$0xff]
        %v1042 = vld [vmem:[%s139 + $0x1a40] sm:$0xff]
        %v1043 = vld [vmem:[%s139 + $0x1a48] sm:$0xff]
        %v1044 = vld [vmem:[%s139 + $0x1a50] sm:$0xff]
        %v1045 = vld [vmem:[%s139 + $0x1a58] sm:$0xff]
        %v1046 = vld [vmem:[%s139 + $0x1a60] sm:$0xff]
        %v1047 = vld [vmem:[%s139 + $0x1a68] sm:$0xff]
        %v1048 = vld [vmem:[%s139 + $0x1a70] sm:$0xff]
        %v1049 = vld [vmem:[%s139 + $0x1a78] sm:$0xff]
        %v1050 = vld [vmem:[%s139 + $0x1a80] sm:$0xff]
        %v1051 = vld [vmem:[%s139 + $0x1a88] sm:$0xff]
        %v1052 = vld [vmem:[%s139 + $0x1a90] sm:$0xf]
        %v1053 = vld [vmem:[%s139 + $0x1a94] sm:$0xff]
        %v1054 = vld [vmem:[%s139 + $0x1a9c] sm:$0xff]
        %v1055 = vld [vmem:[%s139 + $0x1aa4] sm:$0xff]
        %v1056 = vld [vmem:[%s139 + $0x1aac] sm:$0xff]
        %v1057 = vld [vmem:[%s139 + $0x1ab4] sm:$0xff]
        %v1058 = vld [vmem:[%s139 + $0x1abc] sm:$0xff]
        %v1059 = vld [vmem:[%s139 + $0x1ac4] sm:$0xff]
        %v1060 = vld [vmem:[%s139 + $0x1acc] sm:$0xff]
        %v1061 = vld [vmem:[%s139 + $0x1ad4] sm:$0xff]
        %v1062 = vld [vmem:[%s139 + $0x1adc] sm:$0xff]
        %v1063 = vld [vmem:[%s139 + $0x1ae4] sm:$0xff]
        %v1064 = vld [vmem:[%s139 + $0x1aec] sm:$0xff]
        %v1065 = vld [vmem:[%s139 + $0x1af4] sm:$0xff]
        %v1066 = vld [vmem:[%s139 + $0x1afc] sm:$0xf]
        %v1067 = vld [vmem:[%s139 + $0x1b00] sm:$0xff]
        %v1068 = vld [vmem:[%s139 + $0x1b08] sm:$0xff]
        %v1069 = vld [vmem:[%s139 + $0x1b10] sm:$0xff]
        %v1070 = vld [vmem:[%s139 + $0x1b18] sm:$0xff]
        %v1071 = vld [vmem:[%s139 + $0x1b20] sm:$0xff]
        %v1072 = vld [vmem:[%s139 + $0x1b28] sm:$0xff]
        %v1073 = vld [vmem:[%s139 + $0x1b30] sm:$0xff]
        %v1074 = vld [vmem:[%s139 + $0x1b38] sm:$0xff]
        %v1075 = vld [vmem:[%s139 + $0x1b40] sm:$0xff]
        %v1076 = vld [vmem:[%s139 + $0x1b48] sm:$0xff]
        %v1077 = vld [vmem:[%s139 + $0x1b50] sm:$0xff]
        %v1078 = vld [vmem:[%s139 + $0x1b58] sm:$0xff]
        %v1079 = vld [vmem:[%s139 + $0x1b60] sm:$0xff]
        %v1080 = vld [vmem:[%s139 + $0x1b68] sm:$0xf]
        %v1081 = vld [vmem:[%s139 + $0x1b6c] sm:$0xff]
        %v1082 = vld [vmem:[%s139 + $0x1b74] sm:$0xff]
        %v1083 = vld [vmem:[%s139 + $0x1b7c] sm:$0xff]
        %v1084 = vld [vmem:[%s139 + $0x1b84] sm:$0xff]
        %v1085 = vld [vmem:[%s139 + $0x1b8c] sm:$0xff]
        %v1086 = vld [vmem:[%s139 + $0x1b94] sm:$0xff]
        %v1087 = vld [vmem:[%s139 + $0x1b9c] sm:$0xff]
        %v1088 = vld [vmem:[%s139 + $0x1ba4] sm:$0xff]
        %v1089 = vld [vmem:[%s139 + $0x1bac] sm:$0xff]
        %v1090 = vld [vmem:[%s139 + $0x1bb4] sm:$0xff]
        %v1091 = vld [vmem:[%s139 + $0x1bbc] sm:$0xff]
        %v1092 = vld [vmem:[%s139 + $0x1bc4] sm:$0xff]
        %v1093 = vld [vmem:[%s139 + $0x1bcc] sm:$0xff]
        %v1094 = vld [vmem:[%s139 + $0x1bd4] sm:$0xf]
        %v1095 = vld [vmem:[%s139 + $0x1bd8] sm:$0xff]
        %v1096 = vld [vmem:[%s139 + $0x1be0] sm:$0xff]
        %v1097 = vld [vmem:[%s139 + $0x1be8] sm:$0xff]
        %v1098 = vld [vmem:[%s139 + $0x1bf0] sm:$0xff]
        %v1099 = vld [vmem:[%s139 + $0x1bf8] sm:$0xff]
        %v1100 = vld [vmem:[%s139 + $0x1c00] sm:$0xff]
        %v1101 = vld [vmem:[%s139 + $0x1c08] sm:$0xff]
        %v1102 = vld [vmem:[%s139 + $0x1c10] sm:$0xff]
        %v1103 = vld [vmem:[%s139 + $0x1c18] sm:$0xff]
        %v1104 = vld [vmem:[%s139 + $0x1c20] sm:$0xff]
        %v1105 = vld [vmem:[%s139 + $0x1c28] sm:$0xff]
        %v1106 = vld [vmem:[%s139 + $0x1c30] sm:$0xff]
        %v1107 = vld [vmem:[%s139 + $0x1c38] sm:$0xff]
        %v1108 = vld [vmem:[%s139 + $0x1c40] sm:$0xf]
        %v1109 = vld [vmem:[%s139 + $0x1c44] sm:$0xff]
        %v1110 = vld [vmem:[%s139 + $0x1c4c] sm:$0xff]
        %v1111 = vld [vmem:[%s139 + $0x1c54] sm:$0xff]
        %v1112 = vld [vmem:[%s139 + $0x1c5c] sm:$0xff]
        %v1113 = vld [vmem:[%s139 + $0x1c64] sm:$0xff]
        %v1114 = vld [vmem:[%s139 + $0x1c6c] sm:$0xff]
        %v1115 = vld [vmem:[%s139 + $0x1c74] sm:$0xff]
        %v1116 = vld [vmem:[%s139 + $0x1c7c] sm:$0xff]
        %v1117 = vld [vmem:[%s139 + $0x1c84] sm:$0xff]
        %v1118 = vld [vmem:[%s139 + $0x1c8c] sm:$0xff]
        %v1119 = vld [vmem:[%s139 + $0x1c94] sm:$0xff]
        %v1120 = vld [vmem:[%s139 + $0x1c9c] sm:$0xff]
        %v1121 = vld [vmem:[%s139 + $0x1ca4] sm:$0xff]
        %v1122 = vld [vmem:[%s139 + $0x1cac] sm:$0xf]
        %v1123 = vld [vmem:[%s139 + $0x1cb0] sm:$0xff]
        %v1124 = vld [vmem:[%s139 + $0x1cb8] sm:$0xff]
        %v1125 = vld [vmem:[%s139 + $0x1cc0] sm:$0xff]
        %v1126 = vld [vmem:[%s139 + $0x1cc8] sm:$0xff]
        %v1127 = vld [vmem:[%s139 + $0x1cd0] sm:$0xff]
        %v1128 = vld [vmem:[%s139 + $0x1cd8] sm:$0xff]
        %v1129 = vld [vmem:[%s139 + $0x1ce0] sm:$0xff]
        %v1130 = vld [vmem:[%s139 + $0x1ce8] sm:$0xff]
        %v1131 = vld [vmem:[%s139 + $0x1cf0] sm:$0xff]
        %v1132 = vld [vmem:[%s139 + $0x1cf8] sm:$0xff]
        %v1133 = vld [vmem:[%s139 + $0x1d00] sm:$0xff]
        %v1134 = vld [vmem:[%s139 + $0x1d08] sm:$0xff]
        %v1135 = vld [vmem:[%s139 + $0x1d10] sm:$0xff]
        %v1136 = vld [vmem:[%s139 + $0x1d18] sm:$0xf]
        %v1137 = vld [vmem:[%s139 + $0x1d1c] sm:$0xff]
        %v1138 = vld [vmem:[%s139 + $0x1d24] sm:$0xff]
        %v1139 = vld [vmem:[%s139 + $0x1d2c] sm:$0xff]
        %v1140 = vld [vmem:[%s139 + $0x1d34] sm:$0xff]
        %v1141 = vld [vmem:[%s139 + $0x1d3c] sm:$0xff]
        %v1142 = vld [vmem:[%s139 + $0x1d44] sm:$0xff]
        %v1143 = vld [vmem:[%s139 + $0x1d4c] sm:$0xff]
        %v1144 = vld [vmem:[%s139 + $0x1d54] sm:$0xff]
        %v1145 = vld [vmem:[%s139 + $0x1d5c] sm:$0xff]
        %v1146 = vld [vmem:[%s139 + $0x1d64] sm:$0xff]
        %v1147 = vld [vmem:[%s139 + $0x1d6c] sm:$0xff]
        %v1148 = vld [vmem:[%s139 + $0x1d74] sm:$0xff]
        %v1149 = vld [vmem:[%s139 + $0x1d7c] sm:$0xff]
        %v1150 = vld [vmem:[%s139 + $0x1d84] sm:$0xf]
        %v1151 = vld [vmem:[%s139 + $0x1d88] sm:$0xff]
        %v1152 = vld [vmem:[%s139 + $0x1d90] sm:$0xff]
        %v1153 = vld [vmem:[%s139 + $0x1d98] sm:$0xff]
        %v1154 = vld [vmem:[%s139 + $0x1da0] sm:$0xff]
        %v1155 = vld [vmem:[%s139 + $0x1da8] sm:$0xff]
        %v1156 = vld [vmem:[%s139 + $0x1db0] sm:$0xff]
        %v1157 = vld [vmem:[%s139 + $0x1db8] sm:$0xff]
        %v1158 = vld [vmem:[%s139 + $0x1dc0] sm:$0xff]
        %v1159 = vld [vmem:[%s139 + $0x1dc8] sm:$0xff]
        %v1160 = vld [vmem:[%s139 + $0x1dd0] sm:$0xff]
        %v1161 = vld [vmem:[%s139 + $0x1dd8] sm:$0xff]
        %v1162 = vld [vmem:[%s139 + $0x1de0] sm:$0xff]
        %v1163 = vld [vmem:[%s139 + $0x1de8] sm:$0xff]
        %v1164 = vld [vmem:[%s139 + $0x1df0] sm:$0xf]
        %v1165 = vld [vmem:[%s139 + $0x1df4] sm:$0xff]
        %v1166 = vld [vmem:[%s139 + $0x1dfc] sm:$0xff]
        %v1167 = vld [vmem:[%s139 + $0x1e04] sm:$0xff]
        %v1168 = vld [vmem:[%s139 + $0x1e0c] sm:$0xff]
        %v1169 = vld [vmem:[%s139 + $0x1e14] sm:$0xff]
        %v1170 = vld [vmem:[%s139 + $0x1e1c] sm:$0xff]
        %v1171 = vld [vmem:[%s139 + $0x1e24] sm:$0xff]
        %v1172 = vld [vmem:[%s139 + $0x1e2c] sm:$0xff]
        %v1173 = vld [vmem:[%s139 + $0x1e34] sm:$0xff]
        %v1174 = vld [vmem:[%s139 + $0x1e3c] sm:$0xff]
        %v1175 = vld [vmem:[%s139 + $0x1e44] sm:$0xff]
        %v1176 = vld [vmem:[%s139 + $0x1e4c] sm:$0xff]
        %v1177 = vld [vmem:[%s139 + $0x1e54] sm:$0xff]
        %v1178 = vld [vmem:[%s139 + $0x1e5c] sm:$0xf]
        %v1179 = vld [vmem:[%s139 + $0x1e60] sm:$0xff]
        %v1180 = vld [vmem:[%s139 + $0x1e68] sm:$0xff]
        %v1181 = vld [vmem:[%s139 + $0x1e70] sm:$0xff]
        %v1182 = vld [vmem:[%s139 + $0x1e78] sm:$0xff]
        %v1183 = vld [vmem:[%s139 + $0x1e80] sm:$0xff]
        %v1184 = vld [vmem:[%s139 + $0x1e88] sm:$0xff]
        %v1185 = vld [vmem:[%s139 + $0x1e90] sm:$0xff]
        %v1186 = vld [vmem:[%s139 + $0x1e98] sm:$0xff]
        %v1187 = vld [vmem:[%s139 + $0x1ea0] sm:$0xff]
        %v1188 = vld [vmem:[%s139 + $0x1ea8] sm:$0xff]
        %v1189 = vld [vmem:[%s139 + $0x1eb0] sm:$0xff]
        %v1190 = vld [vmem:[%s139 + $0x1eb8] sm:$0xff]
        %v1191 = vld [vmem:[%s139 + $0x1ec0] sm:$0xff]
        %v1192 = vld [vmem:[%s139 + $0x1ec8] sm:$0xf]
        %v1193 = vld [vmem:[%s139 + $0x1ecc] sm:$0xff]
        %v1194 = vld [vmem:[%s139 + $0x1ed4] sm:$0xff]
        %v1195 = vld [vmem:[%s139 + $0x1edc] sm:$0xff]
        %v1196 = vld [vmem:[%s139 + $0x1ee4] sm:$0xff]
        %v1197 = vld [vmem:[%s139 + $0x1eec] sm:$0xff]
        %v1198 = vld [vmem:[%s139 + $0x1ef4] sm:$0xff]
        %v1199 = vld [vmem:[%s139 + $0x1efc] sm:$0xff]
        %v1200 = vld [vmem:[%s139 + $0x1f04] sm:$0xff]
        %v1201 = vld [vmem:[%s139 + $0x1f0c] sm:$0xff]
        %v1202 = vld [vmem:[%s139 + $0x1f14] sm:$0xff]
        %v1203 = vld [vmem:[%s139 + $0x1f1c] sm:$0xff]
        %v1204 = vld [vmem:[%s139 + $0x1f24] sm:$0xff]
        %v1205 = vld [vmem:[%s139 + $0x1f2c] sm:$0xff]
        %v1206 = vld [vmem:[%s139 + $0x1f34] sm:$0xf]
        %v1207 = vld [vmem:[%s139 + $0x1f38] sm:$0xff]
        %v1208 = vld [vmem:[%s139 + $0x1f40] sm:$0xff]
        %v1209 = vld [vmem:[%s139 + $0x1f48] sm:$0xff]
        %v1210 = vld [vmem:[%s139 + $0x1f50] sm:$0xff]
        %v1211 = vld [vmem:[%s139 + $0x1f58] sm:$0xff]
        %v1212 = vld [vmem:[%s139 + $0x1f60] sm:$0xff]
        %v1213 = vld [vmem:[%s139 + $0x1f68] sm:$0xff]
        %v1214 = vld [vmem:[%s139 + $0x1f70] sm:$0xff]
        %v1215 = vld [vmem:[%s139 + $0x1f78] sm:$0xff]
        %v1216 = vld [vmem:[%s139 + $0x1f80] sm:$0xff]
        %v1217 = vld [vmem:[%s139 + $0x1f88] sm:$0xff]
        %v1218 = vld [vmem:[%s139 + $0x1f90] sm:$0xff]
        %v1219 = vld [vmem:[%s139 + $0x1f98] sm:$0xff]
        %v1220 = vld [vmem:[%s139 + $0x1fa0] sm:$0xf]
        %v1221 = vld [vmem:[%s139 + $0x1fa4] sm:$0xff]
        %v1222 = vld [vmem:[%s139 + $0x1fac] sm:$0xff]
        %v1223 = vld [vmem:[%s139 + $0x1fb4] sm:$0xff]
        %v1224 = vld [vmem:[%s139 + $0x1fbc] sm:$0xff]
        %v1225 = vld [vmem:[%s139 + $0x1fc4] sm:$0xff]
        %v1226 = vld [vmem:[%s139 + $0x1fcc] sm:$0xff]
        %v1227 = vld [vmem:[%s139 + $0x1fd4] sm:$0xff]
        %v1228 = vld [vmem:[%s139 + $0x1fdc] sm:$0xff]
        %v1229 = vld [vmem:[%s139 + $0x1fe4] sm:$0xff]
        %v1230 = vld [vmem:[%s139 + $0x1fec] sm:$0xff]
        %v1231 = vld [vmem:[%s139 + $0x1ff4] sm:$0xff]
        %v1232 = vld [vmem:[%s139 + $0x1ffc] sm:$0xff]
        %v1233 = vld [vmem:[%s139 + $0x2004] sm:$0xff]
        %v1234 = vld [vmem:[%s139 + $0x200c] sm:$0xf]
        %v1235 = vld [vmem:[%s139 + $0x2010] sm:$0xff]
        %v1236 = vld [vmem:[%s139 + $0x2018] sm:$0xff]
        %v1237 = vld [vmem:[%s139 + $0x2020] sm:$0xff]
        %v1238 = vld [vmem:[%s139 + $0x2028] sm:$0xff]
        %v1239 = vld [vmem:[%s139 + $0x2030] sm:$0xff]
        %v1240 = vld [vmem:[%s139 + $0x2038] sm:$0xff]
        %v1241 = vld [vmem:[%s139 + $0x2040] sm:$0xff]
        %v1242 = vld [vmem:[%s139 + $0x2048] sm:$0xff]
        %v1243 = vld [vmem:[%s139 + $0x2050] sm:$0xff]
        %v1244 = vld [vmem:[%s139 + $0x2058] sm:$0xff]
        %v1245 = vld [vmem:[%s139 + $0x2060] sm:$0xff]
        %v1246 = vld [vmem:[%s139 + $0x2068] sm:$0xff]
        %v1247 = vld [vmem:[%s139 + $0x2070] sm:$0xff]
        %v1248 = vld [vmem:[%s139 + $0x2078] sm:$0xf]
        %v1249 = vld [vmem:[%s139 + $0x207c] sm:$0xff]
        %v1250 = vld [vmem:[%s139 + $0x2084] sm:$0xff]
        %v1251 = vld [vmem:[%s139 + $0x208c] sm:$0xff]
        %v1252 = vld [vmem:[%s139 + $0x2094] sm:$0xff]
        %v1253 = vld [vmem:[%s139 + $0x209c] sm:$0xff]
        %v1254 = vld [vmem:[%s139 + $0x20a4] sm:$0xff]
        %v1255 = vld [vmem:[%s139 + $0x20ac] sm:$0xff]
        %v1256 = vld [vmem:[%s139 + $0x20b4] sm:$0xff]
        %v1257 = vld [vmem:[%s139 + $0x20bc] sm:$0xff]
        %v1258 = vld [vmem:[%s139 + $0x20c4] sm:$0xff]
        %v1259 = vld [vmem:[%s139 + $0x20cc] sm:$0xff]
        %v1260 = vld [vmem:[%s139 + $0x20d4] sm:$0xff]
        %v1261 = vld [vmem:[%s139 + $0x20dc] sm:$0xff]
        %v1262 = vld [vmem:[%s139 + $0x20e4] sm:$0xf]
        %v1263 = vld [vmem:[%s139 + $0x20e8] sm:$0xff]
        %v1264 = vld [vmem:[%s139 + $0x20f0] sm:$0xff]
        %v1265 = vld [vmem:[%s139 + $0x20f8] sm:$0xff]
        %v1266 = vld [vmem:[%s139 + $0x2100] sm:$0xff]
        %v1267 = vld [vmem:[%s139 + $0x2108] sm:$0xff]
        %v1268 = vld [vmem:[%s139 + $0x2110] sm:$0xff]
        %v1269 = vld [vmem:[%s139 + $0x2118] sm:$0xff]
        %v1270 = vld [vmem:[%s139 + $0x2120] sm:$0xff]
        %v1271 = vld [vmem:[%s139 + $0x2128] sm:$0xff]
        %v1272 = vld [vmem:[%s139 + $0x2130] sm:$0xff]
        %v1273 = vld [vmem:[%s139 + $0x2138] sm:$0xff]
        %v1274 = vld [vmem:[%s139 + $0x2140] sm:$0xff]
        %v1275 = vld [vmem:[%s139 + $0x2148] sm:$0xff]
        %v1276 = vld [vmem:[%s139 + $0x2150] sm:$0xf]
        %v1277 = vld [vmem:[%s139 + $0x2154] sm:$0xff]
        %v1278 = vld [vmem:[%s139 + $0x215c] sm:$0xff]
        %v1279 = vld [vmem:[%s139 + $0x2164] sm:$0xff]
        %v1280 = vld [vmem:[%s139 + $0x216c] sm:$0xff]
        %v1281 = vld [vmem:[%s139 + $0x2174] sm:$0xff]
        %v1282 = vld [vmem:[%s139 + $0x217c] sm:$0xff]
        %v1283 = vld [vmem:[%s139 + $0x2184] sm:$0xff]
        %v1284 = vld [vmem:[%s139 + $0x218c] sm:$0xff]
        %v1285 = vld [vmem:[%s139 + $0x2194] sm:$0xff]
        %v1286 = vld [vmem:[%s139 + $0x219c] sm:$0xff]
        %v1287 = vld [vmem:[%s139 + $0x21a4] sm:$0xff]
        %v1288 = vld [vmem:[%s139 + $0x21ac] sm:$0xff]
        %v1289 = vld [vmem:[%s139 + $0x21b4] sm:$0xff]
        %v1290 = vld [vmem:[%s139 + $0x21bc] sm:$0xf]
        %v1291 = vld [vmem:[%s139 + $0x21c0] sm:$0xff]
        %v1292 = vld [vmem:[%s139 + $0x21c8] sm:$0xff]
        %v1293 = vld [vmem:[%s139 + $0x21d0] sm:$0xff]
        %v1294 = vld [vmem:[%s139 + $0x21d8] sm:$0xff]
        %v1295 = vld [vmem:[%s139 + $0x21e0] sm:$0xff]
        %v1296 = vld [vmem:[%s139 + $0x21e8] sm:$0xff]
        %v1297 = vld [vmem:[%s139 + $0x21f0] sm:$0xff]
        %v1298 = vld [vmem:[%s139 + $0x21f8] sm:$0xff]
        %v1299 = vld [vmem:[%s139 + $0x2200] sm:$0xff]
        %v1300 = vld [vmem:[%s139 + $0x2208] sm:$0xff]
        %v1301 = vld [vmem:[%s139 + $0x2210] sm:$0xff]
        %v1302 = vld [vmem:[%s139 + $0x2218] sm:$0xff]
        %v1303 = vld [vmem:[%s139 + $0x2220] sm:$0xff]
        %v1304 = vld [vmem:[%s139 + $0x2228] sm:$0xf]
        %v1305 = vld [vmem:[%s139 + $0x222c] sm:$0xff]
        %v1306 = vld [vmem:[%s139 + $0x2234] sm:$0xff]
        %v1307 = vld [vmem:[%s139 + $0x223c] sm:$0xff]
        %v1308 = vld [vmem:[%s139 + $0x2244] sm:$0xff]
        %v1309 = vld [vmem:[%s139 + $0x224c] sm:$0xff]
        %v1310 = vld [vmem:[%s139 + $0x2254] sm:$0xff]
        %v1311 = vld [vmem:[%s139 + $0x225c] sm:$0xff]
        %v1312 = vld [vmem:[%s139 + $0x2264] sm:$0xff]
        %v1313 = vld [vmem:[%s139 + $0x226c] sm:$0xff]
        %v1314 = vld [vmem:[%s139 + $0x2274] sm:$0xff]
        %v1315 = vld [vmem:[%s139 + $0x227c] sm:$0xff]
        %v1316 = vld [vmem:[%s139 + $0x2284] sm:$0xff]
        %v1317 = vld [vmem:[%s139 + $0x228c] sm:$0xff]
        %v1318 = vld [vmem:[%s139 + $0x2294] sm:$0xf]
        %v1319 = vld [vmem:[%s139 + $0x2298] sm:$0xff]
        %v1320 = vld [vmem:[%s139 + $0x22a0] sm:$0xff]
        %v1321 = vld [vmem:[%s139 + $0x22a8] sm:$0xff]
        %v1322 = vld [vmem:[%s139 + $0x22b0] sm:$0xff]
        %v1323 = vld [vmem:[%s139 + $0x22b8] sm:$0xff]
        %v1324 = vld [vmem:[%s139 + $0x22c0] sm:$0xff]
        %v1325 = vld [vmem:[%s139 + $0x22c8] sm:$0xff]
        %v1326 = vld [vmem:[%s139 + $0x22d0] sm:$0xff]
        %v1327 = vld [vmem:[%s139 + $0x22d8] sm:$0xff]
        %v1328 = vld [vmem:[%s139 + $0x22e0] sm:$0xff]
        %v1329 = vld [vmem:[%s139 + $0x22e8] sm:$0xff]
        %v1330 = vld [vmem:[%s139 + $0x22f0] sm:$0xff]
        %v1331 = vld [vmem:[%s139 + $0x22f8] sm:$0xff]
        %v1332 = vld [vmem:[%s139 + $0x2300] sm:$0xf]
        %v1333 = vld [vmem:[%s139 + $0x2304] sm:$0xff]
        %v1334 = vld [vmem:[%s139 + $0x230c] sm:$0xff]
        %v1335 = vld [vmem:[%s139 + $0x2314] sm:$0xff]
        %v1336 = vld [vmem:[%s139 + $0x231c] sm:$0xff]
        %v1337 = vld [vmem:[%s139 + $0x2324] sm:$0xff]
        %v1338 = vld [vmem:[%s139 + $0x232c] sm:$0xff]
        %v1339 = vld [vmem:[%s139 + $0x2334] sm:$0xff]
        %v1340 = vld [vmem:[%s139 + $0x233c] sm:$0xff]
        %v1341 = vld [vmem:[%s139 + $0x2344] sm:$0xff]
        %v1342 = vld [vmem:[%s139 + $0x234c] sm:$0xff]
        %v1343 = vld [vmem:[%s139 + $0x2354] sm:$0xff]
        %v1344 = vld [vmem:[%s139 + $0x235c] sm:$0xff]
        %v1345 = vld [vmem:[%s139 + $0x2364] sm:$0xff]
        %v1346 = vld [vmem:[%s139 + $0x236c] sm:$0xf]
        %v1347 = vld [vmem:[%s139 + $0x2370] sm:$0xff]
        %v1348 = vld [vmem:[%s139 + $0x2378] sm:$0xff]
        %v1349 = vld [vmem:[%s139 + $0x2380] sm:$0xff]
        %v1350 = vld [vmem:[%s139 + $0x2388] sm:$0xff]
        %v1351 = vld [vmem:[%s139 + $0x2390] sm:$0xff]
        %v1352 = vld [vmem:[%s139 + $0x2398] sm:$0xff]
        %v1353 = vld [vmem:[%s139 + $0x23a0] sm:$0xff]
        %v1354 = vld [vmem:[%s139 + $0x23a8] sm:$0xff]
        %v1355 = vld [vmem:[%s139 + $0x23b0] sm:$0xff]
        %v1356 = vld [vmem:[%s139 + $0x23b8] sm:$0xff]
        %v1357 = vld [vmem:[%s139 + $0x23c0] sm:$0xff]
        %v1358 = vld [vmem:[%s139 + $0x23c8] sm:$0xff]
        %v1359 = vld [vmem:[%s139 + $0x23d0] sm:$0xff]
        %v1360 = vld [vmem:[%s139 + $0x23d8] sm:$0xf]
        %v1361 = vld [vmem:[%s139 + $0x23dc] sm:$0xff]
        %v1362 = vld [vmem:[%s139 + $0x23e4] sm:$0xff]
        %v1363 = vld [vmem:[%s139 + $0x23ec] sm:$0xff]
        %v1364 = vld [vmem:[%s139 + $0x23f4] sm:$0xff]
        %v1365 = vld [vmem:[%s139 + $0x23fc] sm:$0xff]
        %v1366 = vld [vmem:[%s139 + $0x2404] sm:$0xff]
        %v1367 = vld [vmem:[%s139 + $0x240c] sm:$0xff]
        %v1368 = vld [vmem:[%s139 + $0x2414] sm:$0xff]
        %v1369 = vld [vmem:[%s139 + $0x241c] sm:$0xff]
        %v1370 = vld [vmem:[%s139 + $0x2424] sm:$0xff]
        %v1371 = vld [vmem:[%s139 + $0x242c] sm:$0xff]
        %v1372 = vld [vmem:[%s139 + $0x2434] sm:$0xff]
        %v1373 = vld [vmem:[%s139 + $0x243c] sm:$0xff]
        %v1374 = vld [vmem:[%s139 + $0x2444] sm:$0xf]
        %v1375 = vld [vmem:[%s139 + $0x2448] sm:$0xff]
        %v1376 = vld [vmem:[%s139 + $0x2450] sm:$0xff]
        %v1377 = vld [vmem:[%s139 + $0x2458] sm:$0xff]
        %v1378 = vld [vmem:[%s139 + $0x2460] sm:$0xff]
        %v1379 = vld [vmem:[%s139 + $0x2468] sm:$0xff]
        %v1380 = vld [vmem:[%s139 + $0x2470] sm:$0xff]
        %v1381 = vld [vmem:[%s139 + $0x2478] sm:$0xff]
        %v1382 = vld [vmem:[%s139 + $0x2480] sm:$0xff]
        %v1383 = vld [vmem:[%s139 + $0x2488] sm:$0xff]
        %v1384 = vld [vmem:[%s139 + $0x2490] sm:$0xff]
        %v1385 = vld [vmem:[%s139 + $0x2498] sm:$0xff]
        %v1386 = vld [vmem:[%s139 + $0x24a0] sm:$0xff]
        %v1387 = vld [vmem:[%s139 + $0x24a8] sm:$0xff]
        %v1388 = vld [vmem:[%s139 + $0x24b0] sm:$0xf]
        %v1389 = vld [vmem:[%s139 + $0x24b4] sm:$0xff]
        %v1390 = vld [vmem:[%s139 + $0x24bc] sm:$0xff]
        %v1391 = vld [vmem:[%s139 + $0x24c4] sm:$0xff]
        %v1392 = vld [vmem:[%s139 + $0x24cc] sm:$0xff]
        %v1393 = vld [vmem:[%s139 + $0x24d4] sm:$0xff]
        %v1394 = vld [vmem:[%s139 + $0x24dc] sm:$0xff]
        %v1395 = vld [vmem:[%s139 + $0x24e4] sm:$0xff]
        %v1396 = vld [vmem:[%s139 + $0x24ec] sm:$0xff]
        %v1397 = vld [vmem:[%s139 + $0x24f4] sm:$0xff]
        %v1398 = vld [vmem:[%s139 + $0x24fc] sm:$0xff]
        %v1399 = vld [vmem:[%s139 + $0x2504] sm:$0xff]
        %v1400 = vld [vmem:[%s139 + $0x250c] sm:$0xff]
        %v1401 = vld [vmem:[%s139 + $0x2514] sm:$0xff]
        %v1402 = vld [vmem:[%s139 + $0x251c] sm:$0xf]
        %v1403 = vld [vmem:[%s139 + $0x2520] sm:$0xff]
        %v1404 = vld [vmem:[%s139 + $0x2528] sm:$0xff]
        %v1405 = vld [vmem:[%s139 + $0x2530] sm:$0xff]
        %v1406 = vld [vmem:[%s139 + $0x2538] sm:$0xff]
        %v1407 = vld [vmem:[%s139 + $0x2540] sm:$0xff]
        %v1408 = vld [vmem:[%s139 + $0x2548] sm:$0xff]
        %v1409 = vld [vmem:[%s139 + $0x2550] sm:$0xff]
        %v1410 = vld [vmem:[%s139 + $0x2558] sm:$0xff]
        %v1411 = vld [vmem:[%s139 + $0x2560] sm:$0xff]
        %v1412 = vld [vmem:[%s139 + $0x2568] sm:$0xff]
        %v1413 = vld [vmem:[%s139 + $0x2570] sm:$0xff]
        %v1414 = vld [vmem:[%s139 + $0x2578] sm:$0xff]
        %v1415 = vld [vmem:[%s139 + $0x2580] sm:$0xff]
        %v1416 = vld [vmem:[%s139 + $0x2588] sm:$0xf]
        %v1417 = vld [vmem:[%s139 + $0x258c] sm:$0xff]
        %v1418 = vld [vmem:[%s139 + $0x2594] sm:$0xff]
        %v1419 = vld [vmem:[%s139 + $0x259c] sm:$0xff]
        %v1420 = vld [vmem:[%s139 + $0x25a4] sm:$0xff]
        %v1421 = vld [vmem:[%s139 + $0x25ac] sm:$0xff]
        %v1422 = vld [vmem:[%s139 + $0x25b4] sm:$0xff]
        %v1423 = vld [vmem:[%s139 + $0x25bc] sm:$0xff]
        %v1424 = vld [vmem:[%s139 + $0x25c4] sm:$0xff]
        %v1425 = vld [vmem:[%s139 + $0x25cc] sm:$0xff]
        %v1426 = vld [vmem:[%s139 + $0x25d4] sm:$0xff]
        %v1427 = vld [vmem:[%s139 + $0x25dc] sm:$0xff]
        %v1428 = vld [vmem:[%s139 + $0x25e4] sm:$0xff]
        %v1429 = vld [vmem:[%s139 + $0x25ec] sm:$0xff]
        %v1430 = vld [vmem:[%s139 + $0x25f4] sm:$0xf]
        %v1431 = vld [vmem:[%s139 + $0x25f8] sm:$0xff]
        %v1432 = vld [vmem:[%s139 + $0x2600] sm:$0xff]
        %v1433 = vld [vmem:[%s139 + $0x2608] sm:$0xff]
        %v1434 = vld [vmem:[%s139 + $0x2610] sm:$0xff]
        %v1435 = vld [vmem:[%s139 + $0x2618] sm:$0xff]
        %v1436 = vld [vmem:[%s139 + $0x2620] sm:$0xff]
        %v1437 = vld [vmem:[%s139 + $0x2628] sm:$0xff]
        %v1438 = vld [vmem:[%s139 + $0x2630] sm:$0xff]
        %v1439 = vld [vmem:[%s139 + $0x2638] sm:$0xff]
        %v1440 = vld [vmem:[%s139 + $0x2640] sm:$0xff]
        %v1441 = vld [vmem:[%s139 + $0x2648] sm:$0xff]
        %v1442 = vld [vmem:[%s139 + $0x2650] sm:$0xff]
        %v1443 = vld [vmem:[%s139 + $0x2658] sm:$0xff]
        %v1444 = vld [vmem:[%s139 + $0x2660] sm:$0xf]
        %v1445 = vld [vmem:[%s139 + $0x2664] sm:$0xff]
        %v1446 = vld [vmem:[%s139 + $0x266c] sm:$0xff]
        %v1447 = vld [vmem:[%s139 + $0x2674] sm:$0xff]
        %v1448 = vld [vmem:[%s139 + $0x267c] sm:$0xff]
        %v1449 = vld [vmem:[%s139 + $0x2684] sm:$0xff]
        %v1450 = vld [vmem:[%s139 + $0x268c] sm:$0xff]
        %v1451 = vld [vmem:[%s139 + $0x2694] sm:$0xff]
        %v1452 = vld [vmem:[%s139 + $0x269c] sm:$0xff]
        %v1453 = vld [vmem:[%s139 + $0x26a4] sm:$0xff]
        %v1454 = vld [vmem:[%s139 + $0x26ac] sm:$0xff]
        %v1455 = vld [vmem:[%s139 + $0x26b4] sm:$0xff]
        %v1456 = vld [vmem:[%s139 + $0x26bc] sm:$0xff]
        %v1457 = vld [vmem:[%s139 + $0x26c4] sm:$0xff]
        %v1458 = vld [vmem:[%s139 + $0x26cc] sm:$0xf]
        %v1459 = vld [vmem:[%s139 + $0x26d0] sm:$0xff]
        %v1460 = vld [vmem:[%s139 + $0x26d8] sm:$0xff]
        %v1461 = vld [vmem:[%s139 + $0x26e0] sm:$0xff]
        %v1462 = vld [vmem:[%s139 + $0x26e8] sm:$0xff]
        %v1463 = vld [vmem:[%s139 + $0x26f0] sm:$0xff]
        %v1464 = vld [vmem:[%s139 + $0x26f8] sm:$0xff]
        %v1465 = vld [vmem:[%s139 + $0x2700] sm:$0xff]
        %v1466 = vld [vmem:[%s139 + $0x2708] sm:$0xff]
        %v1467 = vld [vmem:[%s139 + $0x2710] sm:$0xff]
        %v1468 = vld [vmem:[%s139 + $0x2718] sm:$0xff]
        %v1469 = vld [vmem:[%s139 + $0x2720] sm:$0xff]
        %v1470 = vld [vmem:[%s139 + $0x2728] sm:$0xff]
        %v1471 = vld [vmem:[%s139 + $0x2730] sm:$0xff]
        %v1472 = vld [vmem:[%s139 + $0x2738] sm:$0xf]
        %v1473 = vld [vmem:[%s139 + $0x273c] sm:$0xff]
        %v1474 = vld [vmem:[%s139 + $0x2744] sm:$0xff]
        %v1475 = vld [vmem:[%s139 + $0x274c] sm:$0xff]
        %v1476 = vld [vmem:[%s139 + $0x2754] sm:$0xff]
        %v1477 = vld [vmem:[%s139 + $0x275c] sm:$0xff]
        %v1478 = vld [vmem:[%s139 + $0x2764] sm:$0xff]
        %v1479 = vld [vmem:[%s139 + $0x276c] sm:$0xff]
        %v1480 = vld [vmem:[%s139 + $0x2774] sm:$0xff]
        %v1481 = vld [vmem:[%s139 + $0x277c] sm:$0xff]
        %v1482 = vld [vmem:[%s139 + $0x2784] sm:$0xff]
        %v1483 = vld [vmem:[%s139 + $0x278c] sm:$0xff]
        %v1484 = vld [vmem:[%s139 + $0x2794] sm:$0xff]
        %v1485 = vld [vmem:[%s139 + $0x279c] sm:$0xff]
        %v1486 = vld [vmem:[%s139 + $0x27a4] sm:$0xf]
        %v1487 = vld [vmem:[%s139 + $0x27a8] sm:$0xff]
        %v1488 = vld [vmem:[%s139 + $0x27b0] sm:$0xff]
        %v1489 = vld [vmem:[%s139 + $0x27b8] sm:$0xff]
        %v1490 = vld [vmem:[%s139 + $0x27c0] sm:$0xff]
        %v1491 = vld [vmem:[%s139 + $0x27c8] sm:$0xff]
        %v1492 = vld [vmem:[%s139 + $0x27d0] sm:$0xff]
        %v1493 = vld [vmem:[%s139 + $0x27d8] sm:$0xff]
        %v1494 = vld [vmem:[%s139 + $0x27e0] sm:$0xff]
        %v1495 = vld [vmem:[%s139 + $0x27e8] sm:$0xff]
        %v1496 = vld [vmem:[%s139 + $0x27f0] sm:$0xff]
        %v1497 = vld [vmem:[%s139 + $0x27f8] sm:$0xff]
        %v1498 = vld [vmem:[%s139 + $0x2800] sm:$0xff]
        %v1499 = vld [vmem:[%s139 + $0x2808] sm:$0xff]
        %v1500 = vld [vmem:[%s139 + $0x2810] sm:$0xf]
        %v1501 = vld [vmem:[%s139 + $0x2814] sm:$0xff]
        %v1502 = vld [vmem:[%s139 + $0x281c] sm:$0xff]
        %v1503 = vld [vmem:[%s139 + $0x2824] sm:$0xff]
        %v1504 = vld [vmem:[%s139 + $0x282c] sm:$0xff]
        %v1505 = vld [vmem:[%s139 + $0x2834] sm:$0xff]
        %v1506 = vld [vmem:[%s139 + $0x283c] sm:$0xff]
        %v1507 = vld [vmem:[%s139 + $0x2844] sm:$0xff]
        %v1508 = vld [vmem:[%s139 + $0x284c] sm:$0xff]
        %v1509 = vld [vmem:[%s139 + $0x2854] sm:$0xff]
        %v1510 = vld [vmem:[%s139 + $0x285c] sm:$0xff]
        %v1511 = vld [vmem:[%s139 + $0x2864] sm:$0xff]
        %v1512 = vld [vmem:[%s139 + $0x286c] sm:$0xff]
        %v1513 = vld [vmem:[%s139 + $0x2874] sm:$0xff]
        %v1514 = vld [vmem:[%s139 + $0x287c] sm:$0xf]
        %v1518 = vunpack.c.l.b16 %v168
        %v1519 = vunpack.c.h.b16 %v168
        %v1520 = vunpack.c.l.b16 %v169
        %v1521 = vunpack.c.h.b16 %v169
        %v1522 = vunpack.c.l.b16 %v170
        %v1523 = vunpack.c.h.b16 %v170
        %v1524 = vpack.c.b16 %v1518, %v1518
        %v1525 = vpack.c.b16 %v1519, %v1519
        %v1526 = vpack.c.b16 %v1520, %v1520
        %v1527 = vpack.c.b16 %v1521, %v1521
        %v1528 = vpack.c.b16 %v1522, %v1522
        %v1529 = vpack.c.b16 %v1523, %v1523
        %v2880 = vunpack.c.l.b16 %v171
        %v2881 = vunpack.c.h.b16 %v171
        %v2882 = vunpack.c.l.b16 %v172
        %v2883 = vunpack.c.h.b16 %v172
        %v2884 = vunpack.c.l.b16 %v173
        %v2885 = vunpack.c.h.b16 %v173
        %v2886 = vunpack.c.l.b16 %v174
        %v2887 = vunpack.c.h.b16 %v174
        %v2888 = vunpack.c.l.b16 %v175
        %v2889 = vunpack.c.h.b16 %v175
        %v2890 = vunpack.c.l.b16 %v176
        %v2891 = vunpack.c.h.b16 %v176
        %v2892 = vunpack.c.l.b16 %v177
        %v2893 = vunpack.c.h.b16 %v177
        %v2894 = vunpack.c.l.b16 %v178
        %v2895 = vunpack.c.h.b16 %v178
        %v2896 = vunpack.c.l.b16 %v179
        %v2897 = vunpack.c.h.b16 %v179
        %v2898 = vunpack.c.l.b16 %v180
        %v2899 = vunpack.c.h.b16 %v180
        %v2900 = vunpack.c.l.b16 %v181
        %v2901 = vunpack.c.h.b16 %v181
        %v2902 = vunpack.c.l.b16 %v182
        %v2903 = vunpack.c.h.b16 %v182
        %v2904 = vunpack.c.l.b16 %v183
        %v2905 = vunpack.c.h.b16 %v183
        %v2906 = vunpack.c.l.b16 %v184
        %v2907 = vunpack.c.l.b16 %v185
        %v2908 = vunpack.c.h.b16 %v185
        %v2909 = vunpack.c.l.b16 %v186
        %v2910 = vunpack.c.h.b16 %v186
        %v2911 = vunpack.c.l.b16 %v187
        %v2912 = vunpack.c.h.b16 %v187
        %v2913 = vunpack.c.l.b16 %v188
        %v2914 = vunpack.c.h.b16 %v188
        %v2915 = vunpack.c.l.b16 %v189
        %v2916 = vunpack.c.h.b16 %v189
        %v2917 = vunpack.c.l.b16 %v190
        %v2918 = vunpack.c.h.b16 %v190
        %v2919 = vunpack.c.l.b16 %v191
        %v2920 = vunpack.c.h.b16 %v191
        %v2921 = vunpack.c.l.b16 %v192
        %v2922 = vunpack.c.h.b16 %v192
        %v2923 = vunpack.c.l.b16 %v193
        %v2924 = vunpack.c.h.b16 %v193
        %v2925 = vunpack.c.l.b16 %v194
        %v2926 = vunpack.c.h.b16 %v194
        %v2927 = vunpack.c.l.b16 %v195
        %v2928 = vunpack.c.h.b16 %v195
        %v2929 = vunpack.c.l.b16 %v196
        %v2930 = vunpack.c.h.b16 %v196
        %v2931 = vunpack.c.l.b16 %v197
        %v2932 = vunpack.c.h.b16 %v197
        %v2933 = vunpack.c.l.b16 %v198
        %v2934 = vunpack.c.l.b16 %v199
        %v2935 = vunpack.c.h.b16 %v199
        %v2936 = vunpack.c.l.b16 %v200
        %v2937 = vunpack.c.h.b16 %v200
        %v2938 = vunpack.c.l.b16 %v201
        %v2939 = vunpack.c.h.b16 %v201
        %v2940 = vunpack.c.l.b16 %v202
        %v2941 = vunpack.c.h.b16 %v202
        %v2942 = vunpack.c.l.b16 %v203
        %v2943 = vunpack.c.h.b16 %v203
        %v2944 = vunpack.c.l.b16 %v204
        %v2945 = vunpack.c.h.b16 %v204
        %v2946 = vunpack.c.l.b16 %v205
        %v2947 = vunpack.c.h.b16 %v205
        %v2948 = vunpack.c.l.b16 %v206
        %v2949 = vunpack.c.h.b16 %v206
        %v2950 = vunpack.c.l.b16 %v207
        %v2951 = vunpack.c.h.b16 %v207
        %v2952 = vunpack.c.l.b16 %v208
        %v2953 = vunpack.c.h.b16 %v208
        %v2954 = vunpack.c.l.b16 %v209
        %v2955 = vunpack.c.h.b16 %v209
        %v2956 = vunpack.c.l.b16 %v210
        %v2957 = vunpack.c.h.b16 %v210
        %v2958 = vunpack.c.l.b16 %v211
        %v2959 = vunpack.c.h.b16 %v211
        %v2960 = vunpack.c.l.b16 %v212
        %v2961 = vunpack.c.l.b16 %v213
        %v2962 = vunpack.c.h.b16 %v213
        %v2963 = vunpack.c.l.b16 %v214
        %v2964 = vunpack.c.h.b16 %v214
        %v2965 = vunpack.c.l.b16 %v215
        %v2966 = vunpack.c.h.b16 %v215
        %v2967 = vunpack.c.l.b16 %v216
        %v2968 = vunpack.c.h.b16 %v216
        %v2969 = vunpack.c.l.b16 %v217
        %v2970 = vunpack.c.h.b16 %v217
        %v2971 = vunpack.c.l.b16 %v218
        %v2972 = vunpack.c.h.b16 %v218
        %v2973 = vunpack.c.l.b16 %v219
        %v2974 = vunpack.c.h.b16 %v219
        %v2975 = vunpack.c.l.b16 %v220
        %v2976 = vunpack.c.h.b16 %v220
        %v2977 = vunpack.c.l.b16 %v221
        %v2978 = vunpack.c.h.b16 %v221
        %v2979 = vunpack.c.l.b16 %v222
        %v2980 = vunpack.c.h.b16 %v222
        %v2981 = vunpack.c.l.b16 %v223
        %v2982 = vunpack.c.h.b16 %v223
        %v2983 = vunpack.c.l.b16 %v224
        %v2984 = vunpack.c.h.b16 %v224
        %v2985 = vunpack.c.l.b16 %v225
        %v2986 = vunpack.c.h.b16 %v225
        %v2987 = vunpack.c.l.b16 %v226
        %v2988 = vunpack.c.l.b16 %v227
        %v2989 = vunpack.c.h.b16 %v227
        %v2990 = vunpack.c.l.b16 %v228
        %v2991 = vunpack.c.h.b16 %v228
        %v2992 = vunpack.c.l.b16 %v229
        %v2993 = vunpack.c.h.b16 %v229
        %v2994 = vunpack.c.l.b16 %v230
        %v2995 = vunpack.c.h.b16 %v230
        %v2996 = vunpack.c.l.b16 %v231
        %v2997 = vunpack.c.h.b16 %v231
        %v2998 = vunpack.c.l.b16 %v232
        %v2999 = vunpack.c.h.b16 %v232
        %v3000 = vunpack.c.l.b16 %v233
        %v3001 = vunpack.c.h.b16 %v233
        %v3002 = vunpack.c.l.b16 %v234
        %v3003 = vunpack.c.h.b16 %v234
        %v3004 = vunpack.c.l.b16 %v235
        %v3005 = vunpack.c.h.b16 %v235
        %v3006 = vunpack.c.l.b16 %v236
        %v3007 = vunpack.c.h.b16 %v236
        %v3008 = vunpack.c.l.b16 %v237
        %v3009 = vunpack.c.h.b16 %v237
        %v3010 = vunpack.c.l.b16 %v238
        %v3011 = vunpack.c.h.b16 %v238
        %v3012 = vunpack.c.l.b16 %v239
        %v3013 = vunpack.c.h.b16 %v239
        %v3014 = vunpack.c.l.b16 %v240
        %v3015 = vunpack.c.l.b16 %v241
        %v3016 = vunpack.c.h.b16 %v241
        %v3017 = vunpack.c.l.b16 %v242
        %v3018 = vunpack.c.h.b16 %v242
        %v3019 = vunpack.c.l.b16 %v243
        %v3020 = vunpack.c.h.b16 %v243
        %v3021 = vunpack.c.l.b16 %v244
        %v3022 = vunpack.c.h.b16 %v244
        %v3023 = vunpack.c.l.b16 %v245
        %v3024 = vunpack.c.h.b16 %v245
        %v3025 = vunpack.c.l.b16 %v246
        %v3026 = vunpack.c.h.b16 %v246
        %v3027 = vunpack.c.l.b16 %v247
        %v3028 = vunpack.c.h.b16 %v247
        %v3029 = vunpack.c.l.b16 %v248
        %v3030 = vunpack.c.h.b16 %v248
        %v3031 = vunpack.c.l.b16 %v249
        %v3032 = vunpack.c.h.b16 %v249
        %v3033 = vunpack.c.l.b16 %v250
        %v3034 = vunpack.c.h.b16 %v250
        %v3035 = vunpack.c.l.b16 %v251
        %v3036 = vunpack.c.h.b16 %v251
        %v3037 = vunpack.c.l.b16 %v252
        %v3038 = vunpack.c.h.b16 %v252
        %v3039 = vunpack.c.l.b16 %v253
        %v3040 = vunpack.c.h.b16 %v253
        %v3041 = vunpack.c.l.b16 %v254
        %v3042 = vunpack.c.l.b16 %v255
        %v3043 = vunpack.c.h.b16 %v255
        %v3044 = vunpack.c.l.b16 %v256
        %v3045 = vunpack.c.h.b16 %v256
        %v3046 = vunpack.c.l.b16 %v257
        %v3047 = vunpack.c.h.b16 %v257
        %v3048 = vunpack.c.l.b16 %v258
        %v3049 = vunpack.c.h.b16 %v258
        %v3050 = vunpack.c.l.b16 %v259
        %v3051 = vunpack.c.h.b16 %v259
        %v3052 = vunpack.c.l.b16 %v260
        %v3053 = vunpack.c.h.b16 %v260
        %v3054 = vunpack.c.l.b16 %v261
        %v3055 = vunpack.c.h.b16 %v261
        %v3056 = vunpack.c.l.b16 %v262
        %v3057 = vunpack.c.h.b16 %v262
        %v3058 = vunpack.c.l.b16 %v263
        %v3059 = vunpack.c.h.b16 %v263
        %v3060 = vunpack.c.l.b16 %v264
        %v3061 = vunpack.c.h.b16 %v264
        %v3062 = vunpack.c.l.b16 %v265
        %v3063 = vunpack.c.h.b16 %v265
        %v3064 = vunpack.c.l.b16 %v266
        %v3065 = vunpack.c.h.b16 %v266
        %v3066 = vunpack.c.l.b16 %v267
        %v3067 = vunpack.c.h.b16 %v267
        %v3068 = vunpack.c.l.b16 %v268
        %v3069 = vunpack.c.l.b16 %v269
        %v3070 = vunpack.c.h.b16 %v269
        %v3071 = vunpack.c.l.b16 %v270
        %v3072 = vunpack.c.h.b16 %v270
        %v3073 = vunpack.c.l.b16 %v271
        %v3074 = vunpack.c.h.b16 %v271
        %v3075 = vunpack.c.l.b16 %v272
        %v3076 = vunpack.c.h.b16 %v272
        %v3077 = vunpack.c.l.b16 %v273
        %v3078 = vunpack.c.h.b16 %v273
        %v3079 = vunpack.c.l.b16 %v274
        %v3080 = vunpack.c.h.b16 %v274
        %v3081 = vunpack.c.l.b16 %v275
        %v3082 = vunpack.c.h.b16 %v275
        %v3083 = vunpack.c.l.b16 %v276
        %v3084 = vunpack.c.h.b16 %v276
        %v3085 = vunpack.c.l.b16 %v277
        %v3086 = vunpack.c.h.b16 %v277
        %v3087 = vunpack.c.l.b16 %v278
        %v3088 = vunpack.c.h.b16 %v278
        %v3089 = vunpack.c.l.b16 %v279
        %v3090 = vunpack.c.h.b16 %v279
        %v3091 = vunpack.c.l.b16 %v280
        %v3092 = vunpack.c.h.b16 %v280
        %v3093 = vunpack.c.l.b16 %v281
        %v3094 = vunpack.c.h.b16 %v281
        %v3095 = vunpack.c.l.b16 %v282
        %v3096 = vunpack.c.l.b16 %v283
        %v3097 = vunpack.c.h.b16 %v283
        %v3098 = vunpack.c.l.b16 %v284
        %v3099 = vunpack.c.h.b16 %v284
        %v3100 = vunpack.c.l.b16 %v285
        %v3101 = vunpack.c.h.b16 %v285
        %v3102 = vunpack.c.l.b16 %v286
        %v3103 = vunpack.c.h.b16 %v286
        %v3104 = vunpack.c.l.b16 %v287
        %v3105 = vunpack.c.h.b16 %v287
        %v3106 = vunpack.c.l.b16 %v288
        %v3107 = vunpack.c.h.b16 %v288
        %v3108 = vunpack.c.l.b16 %v289
        %v3109 = vunpack.c.h.b16 %v289
        %v3110 = vunpack.c.l.b16 %v290
        %v3111 = vunpack.c.h.b16 %v290
        %v3112 = vunpack.c.l.b16 %v291
        %v3113 = vunpack.c.h.b16 %v291
        %v3114 = vunpack.c.l.b16 %v292
        %v3115 = vunpack.c.h.b16 %v292
        %v3116 = vunpack.c.l.b16 %v293
        %v3117 = vunpack.c.h.b16 %v293
        %v3118 = vunpack.c.l.b16 %v294
        %v3119 = vunpack.c.h.b16 %v294
        %v3120 = vunpack.c.l.b16 %v295
        %v3121 = vunpack.c.h.b16 %v295
        %v3122 = vunpack.c.l.b16 %v296
        %v3123 = vunpack.c.l.b16 %v297
        %v3124 = vunpack.c.h.b16 %v297
        %v3125 = vunpack.c.l.b16 %v298
        %v3126 = vunpack.c.h.b16 %v298
        %v3127 = vunpack.c.l.b16 %v299
        %v3128 = vunpack.c.h.b16 %v299
        %v3129 = vunpack.c.l.b16 %v300
        %v3130 = vunpack.c.h.b16 %v300
        %v3131 = vunpack.c.l.b16 %v301
        %v3132 = vunpack.c.h.b16 %v301
        %v3133 = vunpack.c.l.b16 %v302
        %v3134 = vunpack.c.h.b16 %v302
        %v3135 = vunpack.c.l.b16 %v303
        %v3136 = vunpack.c.h.b16 %v303
        %v3137 = vunpack.c.l.b16 %v304
        %v3138 = vunpack.c.h.b16 %v304
        %v3139 = vunpack.c.l.b16 %v305
        %v3140 = vunpack.c.h.b16 %v305
        %v3141 = vunpack.c.l.b16 %v306
        %v3142 = vunpack.c.h.b16 %v306
        %v3143 = vunpack.c.l.b16 %v307
        %v3144 = vunpack.c.h.b16 %v307
        %v3145 = vunpack.c.l.b16 %v308
        %v3146 = vunpack.c.h.b16 %v308
        %v3147 = vunpack.c.l.b16 %v309
        %v3148 = vunpack.c.h.b16 %v309
        %v3149 = vunpack.c.l.b16 %v310
        %v3150 = vunpack.c.l.b16 %v311
        %v3151 = vunpack.c.h.b16 %v311
        %v3152 = vunpack.c.l.b16 %v312
        %v3153 = vunpack.c.h.b16 %v312
        %v3154 = vunpack.c.l.b16 %v313
        %v3155 = vunpack.c.h.b16 %v313
        %v3156 = vunpack.c.l.b16 %v314
        %v3157 = vunpack.c.h.b16 %v314
        %v3158 = vunpack.c.l.b16 %v315
        %v3159 = vunpack.c.h.b16 %v315
        %v3160 = vunpack.c.l.b16 %v316
        %v3161 = vunpack.c.h.b16 %v316
        %v3162 = vunpack.c.l.b16 %v317
        %v3163 = vunpack.c.h.b16 %v317
        %v3164 = vunpack.c.l.b16 %v318
        %v3165 = vunpack.c.h.b16 %v318
        %v3166 = vunpack.c.l.b16 %v319
        %v3167 = vunpack.c.h.b16 %v319
        %v3168 = vunpack.c.l.b16 %v320
        %v3169 = vunpack.c.h.b16 %v320
        %v3170 = vunpack.c.l.b16 %v321
        %v3171 = vunpack.c.h.b16 %v321
        %v3172 = vunpack.c.l.b16 %v322
        %v3173 = vunpack.c.h.b16 %v322
        %v3174 = vunpack.c.l.b16 %v323
        %v3175 = vunpack.c.h.b16 %v323
        %v3176 = vunpack.c.l.b16 %v324
        %v3177 = vunpack.c.l.b16 %v325
        %v3178 = vunpack.c.h.b16 %v325
        %v3179 = vunpack.c.l.b16 %v326
        %v3180 = vunpack.c.h.b16 %v326
        %v3181 = vunpack.c.l.b16 %v327
        %v3182 = vunpack.c.h.b16 %v327
        %v3183 = vunpack.c.l.b16 %v328
        %v3184 = vunpack.c.h.b16 %v328
        %v3185 = vunpack.c.l.b16 %v329
        %v3186 = vunpack.c.h.b16 %v329
        %v3187 = vunpack.c.l.b16 %v330
        %v3188 = vunpack.c.h.b16 %v330
        %v3189 = vunpack.c.l.b16 %v331
        %v3190 = vunpack.c.h.b16 %v331
        %v3191 = vunpack.c.l.b16 %v332
        %v3192 = vunpack.c.h.b16 %v332
        %v3193 = vunpack.c.l.b16 %v333
        %v3194 = vunpack.c.h.b16 %v333
        %v3195 = vunpack.c.l.b16 %v334
        %v3196 = vunpack.c.h.b16 %v334
        %v3197 = vunpack.c.l.b16 %v335
        %v3198 = vunpack.c.h.b16 %v335
        %v3199 = vunpack.c.l.b16 %v336
        %v3200 = vunpack.c.h.b16 %v336
        %v3201 = vunpack.c.l.b16 %v337
        %v3202 = vunpack.c.h.b16 %v337
        %v3203 = vunpack.c.l.b16 %v338
        %v3204 = vunpack.c.l.b16 %v339
        %v3205 = vunpack.c.h.b16 %v339
        %v3206 = vunpack.c.l.b16 %v340
        %v3207 = vunpack.c.h.b16 %v340
        %v3208 = vunpack.c.l.b16 %v341
        %v3209 = vunpack.c.h.b16 %v341
        %v3210 = vunpack.c.l.b16 %v342
        %v3211 = vunpack.c.h.b16 %v342
        %v3212 = vunpack.c.l.b16 %v343
        %v3213 = vunpack.c.h.b16 %v343
        %v3214 = vunpack.c.l.b16 %v344
        %v3215 = vunpack.c.h.b16 %v344
        %v3216 = vunpack.c.l.b16 %v345
        %v3217 = vunpack.c.h.b16 %v345
        %v3218 = vunpack.c.l.b16 %v346
        %v3219 = vunpack.c.h.b16 %v346
        %v3220 = vunpack.c.l.b16 %v347
        %v3221 = vunpack.c.h.b16 %v347
        %v3222 = vunpack.c.l.b16 %v348
        %v3223 = vunpack.c.h.b16 %v348
        %v3224 = vunpack.c.l.b16 %v349
        %v3225 = vunpack.c.h.b16 %v349
        %v3226 = vunpack.c.l.b16 %v350
        %v3227 = vunpack.c.h.b16 %v350
        %v3228 = vunpack.c.l.b16 %v351
        %v3229 = vunpack.c.h.b16 %v351
        %v3230 = vunpack.c.l.b16 %v352
        %v3231 = vunpack.c.l.b16 %v353
        %v3232 = vunpack.c.h.b16 %v353
        %v3233 = vunpack.c.l.b16 %v354
        %v3234 = vunpack.c.h.b16 %v354
        %v3235 = vunpack.c.l.b16 %v355
        %v3236 = vunpack.c.h.b16 %v355
        %v3237 = vunpack.c.l.b16 %v356
        %v3238 = vunpack.c.h.b16 %v356
        %v3239 = vunpack.c.l.b16 %v357
        %v3240 = vunpack.c.h.b16 %v357
        %v3241 = vunpack.c.l.b16 %v358
        %v3242 = vunpack.c.h.b16 %v358
        %v3243 = vunpack.c.l.b16 %v359
        %v3244 = vunpack.c.h.b16 %v359
        %v3245 = vunpack.c.l.b16 %v360
        %v3246 = vunpack.c.h.b16 %v360
        %v3247 = vunpack.c.l.b16 %v361
        %v3248 = vunpack.c.h.b16 %v361
        %v3249 = vunpack.c.l.b16 %v362
        %v3250 = vunpack.c.h.b16 %v362
        %v3251 = vunpack.c.l.b16 %v363
        %v3252 = vunpack.c.h.b16 %v363
        %v3253 = vunpack.c.l.b16 %v364
        %v3254 = vunpack.c.h.b16 %v364
        %v3255 = vunpack.c.l.b16 %v365
        %v3256 = vunpack.c.h.b16 %v365
        %v3257 = vunpack.c.l.b16 %v366
        %v3258 = vunpack.c.l.b16 %v367
        %v3259 = vunpack.c.h.b16 %v367
        %v3260 = vunpack.c.l.b16 %v368
        %v3261 = vunpack.c.h.b16 %v368
        %v3262 = vunpack.c.l.b16 %v369
        %v3263 = vunpack.c.h.b16 %v369
        %v3264 = vunpack.c.l.b16 %v370
        %v3265 = vunpack.c.h.b16 %v370
        %v3266 = vunpack.c.l.b16 %v371
        %v3267 = vunpack.c.h.b16 %v371
        %v3268 = vunpack.c.l.b16 %v372
        %v3269 = vunpack.c.h.b16 %v372
        %v3270 = vunpack.c.l.b16 %v373
        %v3271 = vunpack.c.h.b16 %v373
        %v3272 = vunpack.c.l.b16 %v374
        %v3273 = vunpack.c.h.b16 %v374
        %v3274 = vunpack.c.l.b16 %v375
        %v3275 = vunpack.c.h.b16 %v375
        %v3276 = vunpack.c.l.b16 %v376
        %v3277 = vunpack.c.h.b16 %v376
        %v3278 = vunpack.c.l.b16 %v377
        %v3279 = vunpack.c.h.b16 %v377
        %v3280 = vunpack.c.l.b16 %v378
        %v3281 = vunpack.c.h.b16 %v378
        %v3282 = vunpack.c.l.b16 %v379
        %v3283 = vunpack.c.h.b16 %v379
        %v3284 = vunpack.c.l.b16 %v380
        %v3285 = vunpack.c.l.b16 %v381
        %v3286 = vunpack.c.h.b16 %v381
        %v3287 = vunpack.c.l.b16 %v382
        %v3288 = vunpack.c.h.b16 %v382
        %v3289 = vunpack.c.l.b16 %v383
        %v3290 = vunpack.c.h.b16 %v383
        %v3291 = vunpack.c.l.b16 %v384
        %v3292 = vunpack.c.h.b16 %v384
        %v3293 = vunpack.c.l.b16 %v385
        %v3294 = vunpack.c.h.b16 %v385
        %v3295 = vunpack.c.l.b16 %v386
        %v3296 = vunpack.c.h.b16 %v386
        %v3297 = vunpack.c.l.b16 %v387
        %v3298 = vunpack.c.h.b16 %v387
        %v3299 = vunpack.c.l.b16 %v388
        %v3300 = vunpack.c.h.b16 %v388
        %v3301 = vunpack.c.l.b16 %v389
        %v3302 = vunpack.c.h.b16 %v389
        %v3303 = vunpack.c.l.b16 %v390
        %v3304 = vunpack.c.h.b16 %v390
        %v3305 = vunpack.c.l.b16 %v391
        %v3306 = vunpack.c.h.b16 %v391
        %v3307 = vunpack.c.l.b16 %v392
        %v3308 = vunpack.c.h.b16 %v392
        %v3309 = vunpack.c.l.b16 %v393
        %v3310 = vunpack.c.h.b16 %v393
        %v3311 = vunpack.c.l.b16 %v394
        %v3312 = vunpack.c.l.b16 %v395
        %v3313 = vunpack.c.h.b16 %v395
        %v3314 = vunpack.c.l.b16 %v396
        %v3315 = vunpack.c.h.b16 %v396
        %v3316 = vunpack.c.l.b16 %v397
        %v3317 = vunpack.c.h.b16 %v397
        %v3318 = vunpack.c.l.b16 %v398
        %v3319 = vunpack.c.h.b16 %v398
        %v3320 = vunpack.c.l.b16 %v399
        %v3321 = vunpack.c.h.b16 %v399
        %v3322 = vunpack.c.l.b16 %v400
        %v3323 = vunpack.c.h.b16 %v400
        %v3324 = vunpack.c.l.b16 %v401
        %v3325 = vunpack.c.h.b16 %v401
        %v3326 = vunpack.c.l.b16 %v402
        %v3327 = vunpack.c.h.b16 %v402
        %v3328 = vunpack.c.l.b16 %v403
        %v3329 = vunpack.c.h.b16 %v403
        %v3330 = vunpack.c.l.b16 %v404
        %v3331 = vunpack.c.h.b16 %v404
        %v3332 = vunpack.c.l.b16 %v405
        %v3333 = vunpack.c.h.b16 %v405
        %v3334 = vunpack.c.l.b16 %v406
        %v3335 = vunpack.c.h.b16 %v406
        %v3336 = vunpack.c.l.b16 %v407
        %v3337 = vunpack.c.h.b16 %v407
        %v3338 = vunpack.c.l.b16 %v408
        %v3339 = vunpack.c.l.b16 %v409
        %v3340 = vunpack.c.h.b16 %v409
        %v3341 = vunpack.c.l.b16 %v410
        %v3342 = vunpack.c.h.b16 %v410
        %v3343 = vunpack.c.l.b16 %v411
        %v3344 = vunpack.c.h.b16 %v411
        %v3345 = vunpack.c.l.b16 %v412
        %v3346 = vunpack.c.h.b16 %v412
        %v3347 = vunpack.c.l.b16 %v413
        %v3348 = vunpack.c.h.b16 %v413
        %v3349 = vunpack.c.l.b16 %v414
        %v3350 = vunpack.c.h.b16 %v414
        %v3351 = vunpack.c.l.b16 %v415
        %v3352 = vunpack.c.h.b16 %v415
        %v3353 = vunpack.c.l.b16 %v416
        %v3354 = vunpack.c.h.b16 %v416
        %v3355 = vunpack.c.l.b16 %v417
        %v3356 = vunpack.c.h.b16 %v417
        %v3357 = vunpack.c.l.b16 %v418
        %v3358 = vunpack.c.h.b16 %v418
        %v3359 = vunpack.c.l.b16 %v419
        %v3360 = vunpack.c.h.b16 %v419
        %v3361 = vunpack.c.l.b16 %v420
        %v3362 = vunpack.c.h.b16 %v420
        %v3363 = vunpack.c.l.b16 %v421
        %v3364 = vunpack.c.h.b16 %v421
        %v3365 = vunpack.c.l.b16 %v422
        %v3366 = vunpack.c.l.b16 %v423
        %v3367 = vunpack.c.h.b16 %v423
        %v3368 = vunpack.c.l.b16 %v424
        %v3369 = vunpack.c.h.b16 %v424
        %v3370 = vunpack.c.l.b16 %v425
        %v3371 = vunpack.c.h.b16 %v425
        %v3372 = vunpack.c.l.b16 %v426
        %v3373 = vunpack.c.h.b16 %v426
        %v3374 = vunpack.c.l.b16 %v427
        %v3375 = vunpack.c.h.b16 %v427
        %v3376 = vunpack.c.l.b16 %v428
        %v3377 = vunpack.c.h.b16 %v428
        %v3378 = vunpack.c.l.b16 %v429
        %v3379 = vunpack.c.h.b16 %v429
        %v3380 = vunpack.c.l.b16 %v430
        %v3381 = vunpack.c.h.b16 %v430
        %v3382 = vunpack.c.l.b16 %v431
        %v3383 = vunpack.c.h.b16 %v431
        %v3384 = vunpack.c.l.b16 %v432
        %v3385 = vunpack.c.h.b16 %v432
        %v3386 = vunpack.c.l.b16 %v433
        %v3387 = vunpack.c.h.b16 %v433
        %v3388 = vunpack.c.l.b16 %v434
        %v3389 = vunpack.c.h.b16 %v434
        %v3390 = vunpack.c.l.b16 %v435
        %v3391 = vunpack.c.h.b16 %v435
        %v3392 = vunpack.c.l.b16 %v436
        %v3393 = vunpack.c.l.b16 %v437
        %v3394 = vunpack.c.h.b16 %v437
        %v3395 = vunpack.c.l.b16 %v438
        %v3396 = vunpack.c.h.b16 %v438
        %v3397 = vunpack.c.l.b16 %v439
        %v3398 = vunpack.c.h.b16 %v439
        %v3399 = vunpack.c.l.b16 %v440
        %v3400 = vunpack.c.h.b16 %v440
        %v3401 = vunpack.c.l.b16 %v441
        %v3402 = vunpack.c.h.b16 %v441
        %v3403 = vunpack.c.l.b16 %v442
        %v3404 = vunpack.c.h.b16 %v442
        %v3405 = vunpack.c.l.b16 %v443
        %v3406 = vunpack.c.h.b16 %v443
        %v3407 = vunpack.c.l.b16 %v444
        %v3408 = vunpack.c.h.b16 %v444
        %v3409 = vunpack.c.l.b16 %v445
        %v3410 = vunpack.c.h.b16 %v445
        %v3411 = vunpack.c.l.b16 %v446
        %v3412 = vunpack.c.h.b16 %v446
        %v3413 = vunpack.c.l.b16 %v447
        %v3414 = vunpack.c.h.b16 %v447
        %v3415 = vunpack.c.l.b16 %v448
        %v3416 = vunpack.c.h.b16 %v448
        %v3417 = vunpack.c.l.b16 %v449
        %v3418 = vunpack.c.h.b16 %v449
        %v3419 = vunpack.c.l.b16 %v450
        %v3420 = vunpack.c.l.b16 %v451
        %v3421 = vunpack.c.h.b16 %v451
        %v3422 = vunpack.c.l.b16 %v452
        %v3423 = vunpack.c.h.b16 %v452
        %v3424 = vunpack.c.l.b16 %v453
        %v3425 = vunpack.c.h.b16 %v453
        %v3426 = vunpack.c.l.b16 %v454
        %v3427 = vunpack.c.h.b16 %v454
        %v3428 = vunpack.c.l.b16 %v455
        %v3429 = vunpack.c.h.b16 %v455
        %v3430 = vunpack.c.l.b16 %v456
        %v3431 = vunpack.c.h.b16 %v456
        %v3432 = vunpack.c.l.b16 %v457
        %v3433 = vunpack.c.h.b16 %v457
        %v3434 = vunpack.c.l.b16 %v458
        %v3435 = vunpack.c.h.b16 %v458
        %v3436 = vunpack.c.l.b16 %v459
        %v3437 = vunpack.c.h.b16 %v459
        %v3438 = vunpack.c.l.b16 %v460
        %v3439 = vunpack.c.h.b16 %v460
        %v3440 = vunpack.c.l.b16 %v461
        %v3441 = vunpack.c.h.b16 %v461
        %v3442 = vunpack.c.l.b16 %v462
        %v3443 = vunpack.c.h.b16 %v462
        %v3444 = vunpack.c.l.b16 %v463
        %v3445 = vunpack.c.h.b16 %v463
        %v3446 = vunpack.c.l.b16 %v464
        %v3447 = vunpack.c.l.b16 %v465
        %v3448 = vunpack.c.h.b16 %v465
        %v3449 = vunpack.c.l.b16 %v466
        %v3450 = vunpack.c.h.b16 %v466
        %v3451 = vunpack.c.l.b16 %v467
        %v3452 = vunpack.c.h.b16 %v467
        %v3453 = vunpack.c.l.b16 %v468
        %v3454 = vunpack.c.h.b16 %v468
        %v3455 = vunpack.c.l.b16 %v469
        %v3456 = vunpack.c.h.b16 %v469
        %v3457 = vunpack.c.l.b16 %v470
        %v3458 = vunpack.c.h.b16 %v470
        %v3459 = vunpack.c.l.b16 %v471
        %v3460 = vunpack.c.h.b16 %v471
        %v3461 = vunpack.c.l.b16 %v472
        %v3462 = vunpack.c.h.b16 %v472
        %v3463 = vunpack.c.l.b16 %v473
        %v3464 = vunpack.c.h.b16 %v473
        %v3465 = vunpack.c.l.b16 %v474
        %v3466 = vunpack.c.h.b16 %v474
        %v3467 = vunpack.c.l.b16 %v475
        %v3468 = vunpack.c.h.b16 %v475
        %v3469 = vunpack.c.l.b16 %v476
        %v3470 = vunpack.c.h.b16 %v476
        %v3471 = vunpack.c.l.b16 %v477
        %v3472 = vunpack.c.h.b16 %v477
        %v3473 = vunpack.c.l.b16 %v478
        %v3474 = vunpack.c.l.b16 %v479
        %v3475 = vunpack.c.h.b16 %v479
        %v3476 = vunpack.c.l.b16 %v480
        %v3477 = vunpack.c.h.b16 %v480
        %v3478 = vunpack.c.l.b16 %v481
        %v3479 = vunpack.c.h.b16 %v481
        %v3480 = vunpack.c.l.b16 %v482
        %v3481 = vunpack.c.h.b16 %v482
        %v3482 = vunpack.c.l.b16 %v483
        %v3483 = vunpack.c.h.b16 %v483
        %v3484 = vunpack.c.l.b16 %v484
        %v3485 = vunpack.c.h.b16 %v484
        %v3486 = vunpack.c.l.b16 %v485
        %v3487 = vunpack.c.h.b16 %v485
        %v3488 = vunpack.c.l.b16 %v486
        %v3489 = vunpack.c.h.b16 %v486
        %v3490 = vunpack.c.l.b16 %v487
        %v3491 = vunpack.c.h.b16 %v487
        %v3492 = vunpack.c.l.b16 %v488
        %v3493 = vunpack.c.h.b16 %v488
        %v3494 = vunpack.c.l.b16 %v489
        %v3495 = vunpack.c.h.b16 %v489
        %v3496 = vunpack.c.l.b16 %v490
        %v3497 = vunpack.c.h.b16 %v490
        %v3498 = vunpack.c.l.b16 %v491
        %v3499 = vunpack.c.h.b16 %v491
        %v3500 = vunpack.c.l.b16 %v492
        %v3501 = vunpack.c.l.b16 %v493
        %v3502 = vunpack.c.h.b16 %v493
        %v3503 = vunpack.c.l.b16 %v494
        %v3504 = vunpack.c.h.b16 %v494
        %v3505 = vunpack.c.l.b16 %v495
        %v3506 = vunpack.c.h.b16 %v495
        %v3507 = vunpack.c.l.b16 %v496
        %v3508 = vunpack.c.h.b16 %v496
        %v3509 = vunpack.c.l.b16 %v497
        %v3510 = vunpack.c.h.b16 %v497
        %v3511 = vunpack.c.l.b16 %v498
        %v3512 = vunpack.c.h.b16 %v498
        %v3513 = vunpack.c.l.b16 %v499
        %v3514 = vunpack.c.h.b16 %v499
        %v3515 = vunpack.c.l.b16 %v500
        %v3516 = vunpack.c.h.b16 %v500
        %v3517 = vunpack.c.l.b16 %v501
        %v3518 = vunpack.c.h.b16 %v501
        %v3519 = vunpack.c.l.b16 %v502
        %v3520 = vunpack.c.h.b16 %v502
        %v3521 = vunpack.c.l.b16 %v503
        %v3522 = vunpack.c.h.b16 %v503
        %v3523 = vunpack.c.l.b16 %v504
        %v3524 = vunpack.c.h.b16 %v504
        %v3525 = vunpack.c.l.b16 %v505
        %v3526 = vunpack.c.h.b16 %v505
        %v3527 = vunpack.c.l.b16 %v506
        %v3528 = vunpack.c.l.b16 %v507
        %v3529 = vunpack.c.h.b16 %v507
        %v3530 = vunpack.c.l.b16 %v508
        %v3531 = vunpack.c.h.b16 %v508
        %v3532 = vunpack.c.l.b16 %v509
        %v3533 = vunpack.c.h.b16 %v509
        %v3534 = vunpack.c.l.b16 %v510
        %v3535 = vunpack.c.h.b16 %v510
        %v3536 = vunpack.c.l.b16 %v511
        %v3537 = vunpack.c.h.b16 %v511
        %v3538 = vunpack.c.l.b16 %v512
        %v3539 = vunpack.c.h.b16 %v512
        %v3540 = vunpack.c.l.b16 %v513
        %v3541 = vunpack.c.h.b16 %v513
        %v3542 = vunpack.c.l.b16 %v514
        %v3543 = vunpack.c.h.b16 %v514
        %v3544 = vunpack.c.l.b16 %v515
        %v3545 = vunpack.c.h.b16 %v515
        %v3546 = vunpack.c.l.b16 %v516
        %v3547 = vunpack.c.h.b16 %v516
        %v3548 = vunpack.c.l.b16 %v517
        %v3549 = vunpack.c.h.b16 %v517
        %v3550 = vunpack.c.l.b16 %v518
        %v3551 = vunpack.c.h.b16 %v518
        %v3552 = vunpack.c.l.b16 %v519
        %v3553 = vunpack.c.h.b16 %v519
        %v3554 = vunpack.c.l.b16 %v520
        %v3555 = vunpack.c.l.b16 %v521
        %v3556 = vunpack.c.h.b16 %v521
        %v3557 = vunpack.c.l.b16 %v522
        %v3558 = vunpack.c.h.b16 %v522
        %v3559 = vunpack.c.l.b16 %v523
        %v3560 = vunpack.c.h.b16 %v523
        %v3561 = vunpack.c.l.b16 %v524
        %v3562 = vunpack.c.h.b16 %v524
        %v3563 = vunpack.c.l.b16 %v525
        %v3564 = vunpack.c.h.b16 %v525
        %v3565 = vunpack.c.l.b16 %v526
        %v3566 = vunpack.c.h.b16 %v526
        %v3567 = vunpack.c.l.b16 %v527
        %v3568 = vunpack.c.h.b16 %v527
        %v3569 = vunpack.c.l.b16 %v528
        %v3570 = vunpack.c.h.b16 %v528
        %v3571 = vunpack.c.l.b16 %v529
        %v3572 = vunpack.c.h.b16 %v529
        %v3573 = vunpack.c.l.b16 %v530
        %v3574 = vunpack.c.h.b16 %v530
        %v3575 = vunpack.c.l.b16 %v531
        %v3576 = vunpack.c.h.b16 %v531
        %v3577 = vunpack.c.l.b16 %v532
        %v3578 = vunpack.c.h.b16 %v532
        %v3579 = vunpack.c.l.b16 %v533
        %v3580 = vunpack.c.h.b16 %v533
        %v3581 = vunpack.c.l.b16 %v534
        %v3582 = vunpack.c.l.b16 %v535
        %v3583 = vunpack.c.h.b16 %v535
        %v3584 = vunpack.c.l.b16 %v536
        %v3585 = vunpack.c.h.b16 %v536
        %v3586 = vunpack.c.l.b16 %v537
        %v3587 = vunpack.c.h.b16 %v537
        %v3588 = vunpack.c.l.b16 %v538
        %v3589 = vunpack.c.h.b16 %v538
        %v3590 = vunpack.c.l.b16 %v539
        %v3591 = vunpack.c.h.b16 %v539
        %v3592 = vunpack.c.l.b16 %v540
        %v3593 = vunpack.c.h.b16 %v540
        %v3594 = vunpack.c.l.b16 %v541
        %v3595 = vunpack.c.h.b16 %v541
        %v3596 = vunpack.c.l.b16 %v542
        %v3597 = vunpack.c.h.b16 %v542
        %v3598 = vunpack.c.l.b16 %v543
        %v3599 = vunpack.c.h.b16 %v543
        %v3600 = vunpack.c.l.b16 %v544
        %v3601 = vunpack.c.h.b16 %v544
        %v3602 = vunpack.c.l.b16 %v545
        %v3603 = vunpack.c.h.b16 %v545
        %v3604 = vunpack.c.l.b16 %v546
        %v3605 = vunpack.c.h.b16 %v546
        %v3606 = vunpack.c.l.b16 %v547
        %v3607 = vunpack.c.h.b16 %v547
        %v3608 = vunpack.c.l.b16 %v548
        %v3609 = vunpack.c.l.b16 %v549
        %v3610 = vunpack.c.h.b16 %v549
        %v3611 = vunpack.c.l.b16 %v550
        %v3612 = vunpack.c.h.b16 %v550
        %v3613 = vunpack.c.l.b16 %v551
        %v3614 = vunpack.c.h.b16 %v551
        %v3615 = vunpack.c.l.b16 %v552
        %v3616 = vunpack.c.h.b16 %v552
        %v3617 = vunpack.c.l.b16 %v553
        %v3618 = vunpack.c.h.b16 %v553
        %v3619 = vunpack.c.l.b16 %v554
        %v3620 = vunpack.c.h.b16 %v554
        %v3621 = vunpack.c.l.b16 %v555
        %v3622 = vunpack.c.h.b16 %v555
        %v3623 = vunpack.c.l.b16 %v556
        %v3624 = vunpack.c.h.b16 %v556
        %v3625 = vunpack.c.l.b16 %v557
        %v3626 = vunpack.c.h.b16 %v557
        %v3627 = vunpack.c.l.b16 %v558
        %v3628 = vunpack.c.h.b16 %v558
        %v3629 = vunpack.c.l.b16 %v559
        %v3630 = vunpack.c.h.b16 %v559
        %v3631 = vunpack.c.l.b16 %v560
        %v3632 = vunpack.c.h.b16 %v560
        %v3633 = vunpack.c.l.b16 %v561
        %v3634 = vunpack.c.h.b16 %v561
        %v3635 = vunpack.c.l.b16 %v562
        %v3636 = vunpack.c.l.b16 %v563
        %v3637 = vunpack.c.h.b16 %v563
        %v3638 = vunpack.c.l.b16 %v564
        %v3639 = vunpack.c.h.b16 %v564
        %v3640 = vunpack.c.l.b16 %v565
        %v3641 = vunpack.c.h.b16 %v565
        %v3642 = vunpack.c.l.b16 %v566
        %v3643 = vunpack.c.h.b16 %v566
        %v3644 = vunpack.c.l.b16 %v567
        %v3645 = vunpack.c.h.b16 %v567
        %v3646 = vunpack.c.l.b16 %v568
        %v3647 = vunpack.c.h.b16 %v568
        %v3648 = vunpack.c.l.b16 %v569
        %v3649 = vunpack.c.h.b16 %v569
        %v3650 = vunpack.c.l.b16 %v570
        %v3651 = vunpack.c.h.b16 %v570
        %v3652 = vunpack.c.l.b16 %v571
        %v3653 = vunpack.c.h.b16 %v571
        %v3654 = vunpack.c.l.b16 %v572
        %v3655 = vunpack.c.h.b16 %v572
        %v3656 = vunpack.c.l.b16 %v573
        %v3657 = vunpack.c.h.b16 %v573
        %v3658 = vunpack.c.l.b16 %v574
        %v3659 = vunpack.c.h.b16 %v574
        %v3660 = vunpack.c.l.b16 %v575
        %v3661 = vunpack.c.h.b16 %v575
        %v3662 = vunpack.c.l.b16 %v576
        %v3663 = vunpack.c.l.b16 %v577
        %v3664 = vunpack.c.h.b16 %v577
        %v3665 = vunpack.c.l.b16 %v578
        %v3666 = vunpack.c.h.b16 %v578
        %v3667 = vunpack.c.l.b16 %v579
        %v3668 = vunpack.c.h.b16 %v579
        %v3669 = vunpack.c.l.b16 %v580
        %v3670 = vunpack.c.h.b16 %v580
        %v3671 = vunpack.c.l.b16 %v581
        %v3672 = vunpack.c.h.b16 %v581
        %v3673 = vunpack.c.l.b16 %v582
        %v3674 = vunpack.c.h.b16 %v582
        %v3675 = vunpack.c.l.b16 %v583
        %v3676 = vunpack.c.h.b16 %v583
        %v3677 = vunpack.c.l.b16 %v584
        %v3678 = vunpack.c.h.b16 %v584
        %v3679 = vunpack.c.l.b16 %v585
        %v3680 = vunpack.c.h.b16 %v585
        %v3681 = vunpack.c.l.b16 %v586
        %v3682 = vunpack.c.h.b16 %v586
        %v3683 = vunpack.c.l.b16 %v587
        %v3684 = vunpack.c.h.b16 %v587
        %v3685 = vunpack.c.l.b16 %v588
        %v3686 = vunpack.c.h.b16 %v588
        %v3687 = vunpack.c.l.b16 %v589
        %v3688 = vunpack.c.h.b16 %v589
        %v3689 = vunpack.c.l.b16 %v590
        %v3690 = vunpack.c.l.b16 %v591
        %v3691 = vunpack.c.h.b16 %v591
        %v3692 = vunpack.c.l.b16 %v592
        %v3693 = vunpack.c.h.b16 %v592
        %v3694 = vunpack.c.l.b16 %v593
        %v3695 = vunpack.c.h.b16 %v593
        %v3696 = vunpack.c.l.b16 %v594
        %v3697 = vunpack.c.h.b16 %v594
        %v3698 = vunpack.c.l.b16 %v595
        %v3699 = vunpack.c.h.b16 %v595
        %v3700 = vunpack.c.l.b16 %v596
        %v3701 = vunpack.c.h.b16 %v596
        %v3702 = vunpack.c.l.b16 %v597
        %v3703 = vunpack.c.h.b16 %v597
        %v3704 = vunpack.c.l.b16 %v598
        %v3705 = vunpack.c.h.b16 %v598
        %v3706 = vunpack.c.l.b16 %v599
        %v3707 = vunpack.c.h.b16 %v599
        %v3708 = vunpack.c.l.b16 %v600
        %v3709 = vunpack.c.h.b16 %v600
        %v3710 = vunpack.c.l.b16 %v601
        %v3711 = vunpack.c.h.b16 %v601
        %v3712 = vunpack.c.l.b16 %v602
        %v3713 = vunpack.c.h.b16 %v602
        %v3714 = vunpack.c.l.b16 %v603
        %v3715 = vunpack.c.h.b16 %v603
        %v3716 = vunpack.c.l.b16 %v604
        %v3717 = vunpack.c.l.b16 %v605
        %v3718 = vunpack.c.h.b16 %v605
        %v3719 = vunpack.c.l.b16 %v606
        %v3720 = vunpack.c.h.b16 %v606
        %v3721 = vunpack.c.l.b16 %v607
        %v3722 = vunpack.c.h.b16 %v607
        %v3723 = vunpack.c.l.b16 %v608
        %v3724 = vunpack.c.h.b16 %v608
        %v3725 = vunpack.c.l.b16 %v609
        %v3726 = vunpack.c.h.b16 %v609
        %v3727 = vunpack.c.l.b16 %v610
        %v3728 = vunpack.c.h.b16 %v610
        %v3729 = vunpack.c.l.b16 %v611
        %v3730 = vunpack.c.h.b16 %v611
        %v3731 = vunpack.c.l.b16 %v612
        %v3732 = vunpack.c.h.b16 %v612
        %v3733 = vunpack.c.l.b16 %v613
        %v3734 = vunpack.c.h.b16 %v613
        %v3735 = vunpack.c.l.b16 %v614
        %v3736 = vunpack.c.h.b16 %v614
        %v3737 = vunpack.c.l.b16 %v615
        %v3738 = vunpack.c.h.b16 %v615
        %v3739 = vunpack.c.l.b16 %v616
        %v3740 = vunpack.c.h.b16 %v616
        %v3741 = vunpack.c.l.b16 %v617
        %v3742 = vunpack.c.h.b16 %v617
        %v3743 = vunpack.c.l.b16 %v618
        %v3744 = vunpack.c.l.b16 %v619
        %v3745 = vunpack.c.h.b16 %v619
        %v3746 = vunpack.c.l.b16 %v620
        %v3747 = vunpack.c.h.b16 %v620
        %v3748 = vunpack.c.l.b16 %v621
        %v3749 = vunpack.c.h.b16 %v621
        %v3750 = vunpack.c.l.b16 %v622
        %v3751 = vunpack.c.h.b16 %v622
        %v3752 = vunpack.c.l.b16 %v623
        %v3753 = vunpack.c.h.b16 %v623
        %v3754 = vunpack.c.l.b16 %v624
        %v3755 = vunpack.c.h.b16 %v624
        %v3756 = vunpack.c.l.b16 %v625
        %v3757 = vunpack.c.h.b16 %v625
        %v3758 = vunpack.c.l.b16 %v626
        %v3759 = vunpack.c.h.b16 %v626
        %v3760 = vunpack.c.l.b16 %v627
        %v3761 = vunpack.c.h.b16 %v627
        %v3762 = vunpack.c.l.b16 %v628
        %v3763 = vunpack.c.h.b16 %v628
        %v3764 = vunpack.c.l.b16 %v629
        %v3765 = vunpack.c.h.b16 %v629
        %v3766 = vunpack.c.l.b16 %v630
        %v3767 = vunpack.c.h.b16 %v630
        %v3768 = vunpack.c.l.b16 %v631
        %v3769 = vunpack.c.h.b16 %v631
        %v3770 = vunpack.c.l.b16 %v632
        %v3771 = vunpack.c.l.b16 %v633
        %v3772 = vunpack.c.h.b16 %v633
        %v3773 = vunpack.c.l.b16 %v634
        %v3774 = vunpack.c.h.b16 %v634
        %v3775 = vunpack.c.l.b16 %v635
        %v3776 = vunpack.c.h.b16 %v635
        %v3777 = vunpack.c.l.b16 %v636
        %v3778 = vunpack.c.h.b16 %v636
        %v3779 = vunpack.c.l.b16 %v637
        %v3780 = vunpack.c.h.b16 %v637
        %v3781 = vunpack.c.l.b16 %v638
        %v3782 = vunpack.c.h.b16 %v638
        %v3783 = vunpack.c.l.b16 %v639
        %v3784 = vunpack.c.h.b16 %v639
        %v3785 = vunpack.c.l.b16 %v640
        %v3786 = vunpack.c.h.b16 %v640
        %v3787 = vunpack.c.l.b16 %v641
        %v3788 = vunpack.c.h.b16 %v641
        %v3789 = vunpack.c.l.b16 %v642
        %v3790 = vunpack.c.h.b16 %v642
        %v3791 = vunpack.c.l.b16 %v643
        %v3792 = vunpack.c.h.b16 %v643
        %v3793 = vunpack.c.l.b16 %v644
        %v3794 = vunpack.c.h.b16 %v644
        %v3795 = vunpack.c.l.b16 %v645
        %v3796 = vunpack.c.h.b16 %v645
        %v3797 = vunpack.c.l.b16 %v646
        %v3798 = vunpack.c.l.b16 %v647
        %v3799 = vunpack.c.h.b16 %v647
        %v3800 = vunpack.c.l.b16 %v648
        %v3801 = vunpack.c.h.b16 %v648
        %v3802 = vunpack.c.l.b16 %v649
        %v3803 = vunpack.c.h.b16 %v649
        %v3804 = vunpack.c.l.b16 %v650
        %v3805 = vunpack.c.h.b16 %v650
        %v3806 = vunpack.c.l.b16 %v651
        %v3807 = vunpack.c.h.b16 %v651
        %v3808 = vunpack.c.l.b16 %v652
        %v3809 = vunpack.c.h.b16 %v652
        %v3810 = vunpack.c.l.b16 %v653
        %v3811 = vunpack.c.h.b16 %v653
        %v3812 = vunpack.c.l.b16 %v654
        %v3813 = vunpack.c.h.b16 %v654
        %v3814 = vunpack.c.l.b16 %v655
        %v3815 = vunpack.c.h.b16 %v655
        %v3816 = vunpack.c.l.b16 %v656
        %v3817 = vunpack.c.h.b16 %v656
        %v3818 = vunpack.c.l.b16 %v657
        %v3819 = vunpack.c.h.b16 %v657
        %v3820 = vunpack.c.l.b16 %v658
        %v3821 = vunpack.c.h.b16 %v658
        %v3822 = vunpack.c.l.b16 %v659
        %v3823 = vunpack.c.h.b16 %v659
        %v3824 = vunpack.c.l.b16 %v660
        %v3825 = vunpack.c.l.b16 %v661
        %v3826 = vunpack.c.h.b16 %v661
        %v3827 = vunpack.c.l.b16 %v662
        %v3828 = vunpack.c.h.b16 %v662
        %v3829 = vunpack.c.l.b16 %v663
        %v3830 = vunpack.c.h.b16 %v663
        %v3831 = vunpack.c.l.b16 %v664
        %v3832 = vunpack.c.h.b16 %v664
        %v3833 = vunpack.c.l.b16 %v665
        %v3834 = vunpack.c.h.b16 %v665
        %v3835 = vunpack.c.l.b16 %v666
        %v3836 = vunpack.c.h.b16 %v666
        %v3837 = vunpack.c.l.b16 %v667
        %v3838 = vunpack.c.h.b16 %v667
        %v3839 = vunpack.c.l.b16 %v668
        %v3840 = vunpack.c.h.b16 %v668
        %v3841 = vunpack.c.l.b16 %v669
        %v3842 = vunpack.c.h.b16 %v669
        %v3843 = vunpack.c.l.b16 %v670
        %v3844 = vunpack.c.h.b16 %v670
        %v3845 = vunpack.c.l.b16 %v671
        %v3846 = vunpack.c.h.b16 %v671
        %v3847 = vunpack.c.l.b16 %v672
        %v3848 = vunpack.c.h.b16 %v672
        %v3849 = vunpack.c.l.b16 %v673
        %v3850 = vunpack.c.h.b16 %v673
        %v3851 = vunpack.c.l.b16 %v674
        %v3852 = vunpack.c.l.b16 %v675
        %v3853 = vunpack.c.h.b16 %v675
        %v3854 = vunpack.c.l.b16 %v676
        %v3855 = vunpack.c.h.b16 %v676
        %v3856 = vunpack.c.l.b16 %v677
        %v3857 = vunpack.c.h.b16 %v677
        %v3858 = vunpack.c.l.b16 %v678
        %v3859 = vunpack.c.h.b16 %v678
        %v3860 = vunpack.c.l.b16 %v679
        %v3861 = vunpack.c.h.b16 %v679
        %v3862 = vunpack.c.l.b16 %v680
        %v3863 = vunpack.c.h.b16 %v680
        %v3864 = vunpack.c.l.b16 %v681
        %v3865 = vunpack.c.h.b16 %v681
        %v3866 = vunpack.c.l.b16 %v682
        %v3867 = vunpack.c.h.b16 %v682
        %v3868 = vunpack.c.l.b16 %v683
        %v3869 = vunpack.c.h.b16 %v683
        %v3870 = vunpack.c.l.b16 %v684
        %v3871 = vunpack.c.h.b16 %v684
        %v3872 = vunpack.c.l.b16 %v685
        %v3873 = vunpack.c.h.b16 %v685
        %v3874 = vunpack.c.l.b16 %v686
        %v3875 = vunpack.c.h.b16 %v686
        %v3876 = vunpack.c.l.b16 %v687
        %v3877 = vunpack.c.h.b16 %v687
        %v3878 = vunpack.c.l.b16 %v688
        %v3879 = vunpack.c.l.b16 %v689
        %v3880 = vunpack.c.h.b16 %v689
        %v3881 = vunpack.c.l.b16 %v690
        %v3882 = vunpack.c.h.b16 %v690
        %v3883 = vunpack.c.l.b16 %v691
        %v3884 = vunpack.c.h.b16 %v691
        %v3885 = vunpack.c.l.b16 %v692
        %v3886 = vunpack.c.h.b16 %v692
        %v3887 = vunpack.c.l.b16 %v693
        %v3888 = vunpack.c.h.b16 %v693
        %v3889 = vunpack.c.l.b16 %v694
        %v3890 = vunpack.c.h.b16 %v694
        %v3891 = vunpack.c.l.b16 %v695
        %v3892 = vunpack.c.h.b16 %v695
        %v3893 = vunpack.c.l.b16 %v696
        %v3894 = vunpack.c.h.b16 %v696
        %v3895 = vunpack.c.l.b16 %v697
        %v3896 = vunpack.c.h.b16 %v697
        %v3897 = vunpack.c.l.b16 %v698
        %v3898 = vunpack.c.h.b16 %v698
        %v3899 = vunpack.c.l.b16 %v699
        %v3900 = vunpack.c.h.b16 %v699
        %v3901 = vunpack.c.l.b16 %v700
        %v3902 = vunpack.c.h.b16 %v700
        %v3903 = vunpack.c.l.b16 %v701
        %v3904 = vunpack.c.h.b16 %v701
        %v3905 = vunpack.c.l.b16 %v702
        %v3906 = vunpack.c.l.b16 %v703
        %v3907 = vunpack.c.h.b16 %v703
        %v3908 = vunpack.c.l.b16 %v704
        %v3909 = vunpack.c.h.b16 %v704
        %v3910 = vunpack.c.l.b16 %v705
        %v3911 = vunpack.c.h.b16 %v705
        %v3912 = vunpack.c.l.b16 %v706
        %v3913 = vunpack.c.h.b16 %v706
        %v3914 = vunpack.c.l.b16 %v707
        %v3915 = vunpack.c.h.b16 %v707
        %v3916 = vunpack.c.l.b16 %v708
        %v3917 = vunpack.c.h.b16 %v708
        %v3918 = vunpack.c.l.b16 %v709
        %v3919 = vunpack.c.h.b16 %v709
        %v3920 = vunpack.c.l.b16 %v710
        %v3921 = vunpack.c.h.b16 %v710
        %v3922 = vunpack.c.l.b16 %v711
        %v3923 = vunpack.c.h.b16 %v711
        %v3924 = vunpack.c.l.b16 %v712
        %v3925 = vunpack.c.h.b16 %v712
        %v3926 = vunpack.c.l.b16 %v713
        %v3927 = vunpack.c.h.b16 %v713
        %v3928 = vunpack.c.l.b16 %v714
        %v3929 = vunpack.c.h.b16 %v714
        %v3930 = vunpack.c.l.b16 %v715
        %v3931 = vunpack.c.h.b16 %v715
        %v3932 = vunpack.c.l.b16 %v716
        %v3933 = vunpack.c.l.b16 %v717
        %v3934 = vunpack.c.h.b16 %v717
        %v3935 = vunpack.c.l.b16 %v718
        %v3936 = vunpack.c.h.b16 %v718
        %v3937 = vunpack.c.l.b16 %v719
        %v3938 = vunpack.c.h.b16 %v719
        %v3939 = vunpack.c.l.b16 %v720
        %v3940 = vunpack.c.h.b16 %v720
        %v3941 = vunpack.c.l.b16 %v721
        %v3942 = vunpack.c.h.b16 %v721
        %v3943 = vunpack.c.l.b16 %v722
        %v3944 = vunpack.c.h.b16 %v722
        %v3945 = vunpack.c.l.b16 %v723
        %v3946 = vunpack.c.h.b16 %v723
        %v3947 = vunpack.c.l.b16 %v724
        %v3948 = vunpack.c.h.b16 %v724
        %v3949 = vunpack.c.l.b16 %v725
        %v3950 = vunpack.c.h.b16 %v725
        %v3951 = vunpack.c.l.b16 %v726
        %v3952 = vunpack.c.h.b16 %v726
        %v3953 = vunpack.c.l.b16 %v727
        %v3954 = vunpack.c.h.b16 %v727
        %v3955 = vunpack.c.l.b16 %v728
        %v3956 = vunpack.c.h.b16 %v728
        %v3957 = vunpack.c.l.b16 %v729
        %v3958 = vunpack.c.h.b16 %v729
        %v3959 = vunpack.c.l.b16 %v730
        %v3960 = vunpack.c.l.b16 %v731
        %v3961 = vunpack.c.h.b16 %v731
        %v3962 = vunpack.c.l.b16 %v732
        %v3963 = vunpack.c.h.b16 %v732
        %v3964 = vunpack.c.l.b16 %v733
        %v3965 = vunpack.c.h.b16 %v733
        %v3966 = vunpack.c.l.b16 %v734
        %v3967 = vunpack.c.h.b16 %v734
        %v3968 = vunpack.c.l.b16 %v735
        %v3969 = vunpack.c.h.b16 %v735
        %v3970 = vunpack.c.l.b16 %v736
        %v3971 = vunpack.c.h.b16 %v736
        %v3972 = vunpack.c.l.b16 %v737
        %v3973 = vunpack.c.h.b16 %v737
        %v3974 = vunpack.c.l.b16 %v738
        %v3975 = vunpack.c.h.b16 %v738
        %v3976 = vunpack.c.l.b16 %v739
        %v3977 = vunpack.c.h.b16 %v739
        %v3978 = vunpack.c.l.b16 %v740
        %v3979 = vunpack.c.h.b16 %v740
        %v3980 = vunpack.c.l.b16 %v741
        %v3981 = vunpack.c.h.b16 %v741
        %v3982 = vunpack.c.l.b16 %v742
        %v3983 = vunpack.c.h.b16 %v742
        %v3984 = vunpack.c.l.b16 %v743
        %v3985 = vunpack.c.h.b16 %v743
        %v3986 = vunpack.c.l.b16 %v744
        %v3987 = vunpack.c.l.b16 %v745
        %v3988 = vunpack.c.h.b16 %v745
        %v3989 = vunpack.c.l.b16 %v746
        %v3990 = vunpack.c.h.b16 %v746
        %v3991 = vunpack.c.l.b16 %v747
        %v3992 = vunpack.c.h.b16 %v747
        %v3993 = vunpack.c.l.b16 %v748
        %v3994 = vunpack.c.h.b16 %v748
        %v3995 = vunpack.c.l.b16 %v749
        %v3996 = vunpack.c.h.b16 %v749
        %v3997 = vunpack.c.l.b16 %v750
        %v3998 = vunpack.c.h.b16 %v750
        %v3999 = vunpack.c.l.b16 %v751
        %v4000 = vunpack.c.h.b16 %v751
        %v4001 = vunpack.c.l.b16 %v752
        %v4002 = vunpack.c.h.b16 %v752
        %v4003 = vunpack.c.l.b16 %v753
        %v4004 = vunpack.c.h.b16 %v753
        %v4005 = vunpack.c.l.b16 %v754
        %v4006 = vunpack.c.h.b16 %v754
        %v4007 = vunpack.c.l.b16 %v755
        %v4008 = vunpack.c.h.b16 %v755
        %v4009 = vunpack.c.l.b16 %v756
        %v4010 = vunpack.c.h.b16 %v756
        %v4011 = vunpack.c.l.b16 %v757
        %v4012 = vunpack.c.h.b16 %v757
        %v4013 = vunpack.c.l.b16 %v758
        %v4014 = vunpack.c.l.b16 %v759
        %v4015 = vunpack.c.h.b16 %v759
        %v4016 = vunpack.c.l.b16 %v760
        %v4017 = vunpack.c.h.b16 %v760
        %v4018 = vunpack.c.l.b16 %v761
        %v4019 = vunpack.c.h.b16 %v761
        %v4020 = vunpack.c.l.b16 %v762
        %v4021 = vunpack.c.h.b16 %v762
        %v4022 = vunpack.c.l.b16 %v763
        %v4023 = vunpack.c.h.b16 %v763
        %v4024 = vunpack.c.l.b16 %v764
        %v4025 = vunpack.c.h.b16 %v764
        %v4026 = vunpack.c.l.b16 %v765
        %v4027 = vunpack.c.h.b16 %v765
        %v4028 = vunpack.c.l.b16 %v766
        %v4029 = vunpack.c.h.b16 %v766
        %v4030 = vunpack.c.l.b16 %v767
        %v4031 = vunpack.c.h.b16 %v767
        %v4032 = vunpack.c.l.b16 %v768
        %v4033 = vunpack.c.h.b16 %v768
        %v4034 = vunpack.c.l.b16 %v769
        %v4035 = vunpack.c.h.b16 %v769
        %v4036 = vunpack.c.l.b16 %v770
        %v4037 = vunpack.c.h.b16 %v770
        %v4038 = vunpack.c.l.b16 %v771
        %v4039 = vunpack.c.h.b16 %v771
        %v4040 = vunpack.c.l.b16 %v772
        %v4041 = vunpack.c.l.b16 %v773
        %v4042 = vunpack.c.h.b16 %v773
        %v4043 = vunpack.c.l.b16 %v774
        %v4044 = vunpack.c.h.b16 %v774
        %v4045 = vunpack.c.l.b16 %v775
        %v4046 = vunpack.c.h.b16 %v775
        %v4047 = vunpack.c.l.b16 %v776
        %v4048 = vunpack.c.h.b16 %v776
        %v4049 = vunpack.c.l.b16 %v777
        %v4050 = vunpack.c.h.b16 %v777
        %v4051 = vunpack.c.l.b16 %v778
        %v4052 = vunpack.c.h.b16 %v778
        %v4053 = vunpack.c.l.b16 %v779
        %v4054 = vunpack.c.h.b16 %v779
        %v4055 = vunpack.c.l.b16 %v780
        %v4056 = vunpack.c.h.b16 %v780
        %v4057 = vunpack.c.l.b16 %v781
        %v4058 = vunpack.c.h.b16 %v781
        %v4059 = vunpack.c.l.b16 %v782
        %v4060 = vunpack.c.h.b16 %v782
        %v4061 = vunpack.c.l.b16 %v783
        %v4062 = vunpack.c.h.b16 %v783
        %v4063 = vunpack.c.l.b16 %v784
        %v4064 = vunpack.c.h.b16 %v784
        %v4065 = vunpack.c.l.b16 %v785
        %v4066 = vunpack.c.h.b16 %v785
        %v4067 = vunpack.c.l.b16 %v786
        %v4068 = vunpack.c.l.b16 %v787
        %v4069 = vunpack.c.h.b16 %v787
        %v4070 = vunpack.c.l.b16 %v788
        %v4071 = vunpack.c.h.b16 %v788
        %v4072 = vunpack.c.l.b16 %v789
        %v4073 = vunpack.c.h.b16 %v789
        %v4074 = vunpack.c.l.b16 %v790
        %v4075 = vunpack.c.h.b16 %v790
        %v4076 = vunpack.c.l.b16 %v791
        %v4077 = vunpack.c.h.b16 %v791
        %v4078 = vunpack.c.l.b16 %v792
        %v4079 = vunpack.c.h.b16 %v792
        %v4080 = vunpack.c.l.b16 %v793
        %v4081 = vunpack.c.h.b16 %v793
        %v4082 = vunpack.c.l.b16 %v794
        %v4083 = vunpack.c.h.b16 %v794
        %v4084 = vunpack.c.l.b16 %v795
        %v4085 = vunpack.c.h.b16 %v795
        %v4086 = vunpack.c.l.b16 %v796
        %v4087 = vunpack.c.h.b16 %v796
        %v4088 = vunpack.c.l.b16 %v797
        %v4089 = vunpack.c.h.b16 %v797
        %v4090 = vunpack.c.l.b16 %v798
        %v4091 = vunpack.c.h.b16 %v798
        %v4092 = vunpack.c.l.b16 %v799
        %v4093 = vunpack.c.h.b16 %v799
        %v4094 = vunpack.c.l.b16 %v800
        %v4095 = vunpack.c.l.b16 %v801
        %v4096 = vunpack.c.h.b16 %v801
        %v4097 = vunpack.c.l.b16 %v802
        %v4098 = vunpack.c.h.b16 %v802
        %v4099 = vunpack.c.l.b16 %v803
        %v4100 = vunpack.c.h.b16 %v803
        %v4101 = vunpack.c.l.b16 %v804
        %v4102 = vunpack.c.h.b16 %v804
        %v4103 = vunpack.c.l.b16 %v805
        %v4104 = vunpack.c.h.b16 %v805
        %v4105 = vunpack.c.l.b16 %v806
        %v4106 = vunpack.c.h.b16 %v806
        %v4107 = vunpack.c.l.b16 %v807
        %v4108 = vunpack.c.h.b16 %v807
        %v4109 = vunpack.c.l.b16 %v808
        %v4110 = vunpack.c.h.b16 %v808
        %v4111 = vunpack.c.l.b16 %v809
        %v4112 = vunpack.c.h.b16 %v809
        %v4113 = vunpack.c.l.b16 %v810
        %v4114 = vunpack.c.h.b16 %v810
        %v4115 = vunpack.c.l.b16 %v811
        %v4116 = vunpack.c.h.b16 %v811
        %v4117 = vunpack.c.l.b16 %v812
        %v4118 = vunpack.c.h.b16 %v812
        %v4119 = vunpack.c.l.b16 %v813
        %v4120 = vunpack.c.h.b16 %v813
        %v4121 = vunpack.c.l.b16 %v814
        %v4122 = vunpack.c.l.b16 %v815
        %v4123 = vunpack.c.h.b16 %v815
        %v4124 = vunpack.c.l.b16 %v816
        %v4125 = vunpack.c.h.b16 %v816
        %v4126 = vunpack.c.l.b16 %v817
        %v4127 = vunpack.c.h.b16 %v817
        %v4128 = vunpack.c.l.b16 %v818
        %v4129 = vunpack.c.h.b16 %v818
        %v4130 = vunpack.c.l.b16 %v819
        %v4131 = vunpack.c.h.b16 %v819
        %v4132 = vunpack.c.l.b16 %v820
        %v4133 = vunpack.c.h.b16 %v820
        %v4134 = vunpack.c.l.b16 %v821
        %v4135 = vunpack.c.h.b16 %v821
        %v4136 = vunpack.c.l.b16 %v822
        %v4137 = vunpack.c.h.b16 %v822
        %v4138 = vunpack.c.l.b16 %v823
        %v4139 = vunpack.c.h.b16 %v823
        %v4140 = vunpack.c.l.b16 %v824
        %v4141 = vunpack.c.h.b16 %v824
        %v4142 = vunpack.c.l.b16 %v825
        %v4143 = vunpack.c.h.b16 %v825
        %v4144 = vunpack.c.l.b16 %v826
        %v4145 = vunpack.c.h.b16 %v826
        %v4146 = vunpack.c.l.b16 %v827
        %v4147 = vunpack.c.h.b16 %v827
        %v4148 = vunpack.c.l.b16 %v828
        %v4149 = vunpack.c.l.b16 %v829
        %v4150 = vunpack.c.h.b16 %v829
        %v4151 = vunpack.c.l.b16 %v830
        %v4152 = vunpack.c.h.b16 %v830
        %v4153 = vunpack.c.l.b16 %v831
        %v4154 = vunpack.c.h.b16 %v831
        %v4155 = vunpack.c.l.b16 %v832
        %v4156 = vunpack.c.h.b16 %v832
        %v4157 = vunpack.c.l.b16 %v833
        %v4158 = vunpack.c.h.b16 %v833
        %v4159 = vunpack.c.l.b16 %v834
        %v4160 = vunpack.c.h.b16 %v834
        %v4161 = vunpack.c.l.b16 %v835
        %v4162 = vunpack.c.h.b16 %v835
        %v4163 = vunpack.c.l.b16 %v836
        %v4164 = vunpack.c.h.b16 %v836
        %v4165 = vunpack.c.l.b16 %v837
        %v4166 = vunpack.c.h.b16 %v837
        %v4167 = vunpack.c.l.b16 %v838
        %v4168 = vunpack.c.h.b16 %v838
        %v4169 = vunpack.c.l.b16 %v839
        %v4170 = vunpack.c.h.b16 %v839
        %v4171 = vunpack.c.l.b16 %v840
        %v4172 = vunpack.c.h.b16 %v840
        %v4173 = vunpack.c.l.b16 %v841
        %v4174 = vunpack.c.h.b16 %v841
        %v4175 = vunpack.c.l.b16 %v842
        %v4176 = vunpack.c.l.b16 %v843
        %v4177 = vunpack.c.h.b16 %v843
        %v4178 = vunpack.c.l.b16 %v844
        %v4179 = vunpack.c.h.b16 %v844
        %v4180 = vunpack.c.l.b16 %v845
        %v4181 = vunpack.c.h.b16 %v845
        %v4182 = vunpack.c.l.b16 %v846
        %v4183 = vunpack.c.h.b16 %v846
        %v4184 = vunpack.c.l.b16 %v847
        %v4185 = vunpack.c.h.b16 %v847
        %v4186 = vunpack.c.l.b16 %v848
        %v4187 = vunpack.c.h.b16 %v848
        %v4188 = vunpack.c.l.b16 %v849
        %v4189 = vunpack.c.h.b16 %v849
        %v4190 = vunpack.c.l.b16 %v850
        %v4191 = vunpack.c.h.b16 %v850
        %v4192 = vunpack.c.l.b16 %v851
        %v4193 = vunpack.c.h.b16 %v851
        %v4194 = vunpack.c.l.b16 %v852
        %v4195 = vunpack.c.h.b16 %v852
        %v4196 = vunpack.c.l.b16 %v853
        %v4197 = vunpack.c.h.b16 %v853
        %v4198 = vunpack.c.l.b16 %v854
        %v4199 = vunpack.c.h.b16 %v854
        %v4200 = vunpack.c.l.b16 %v855
        %v4201 = vunpack.c.h.b16 %v855
        %v4202 = vunpack.c.l.b16 %v856
        %v4203 = vunpack.c.l.b16 %v857
        %v4204 = vunpack.c.h.b16 %v857
        %v4205 = vunpack.c.l.b16 %v858
        %v4206 = vunpack.c.h.b16 %v858
        %v4207 = vunpack.c.l.b16 %v859
        %v4208 = vunpack.c.h.b16 %v859
        %v4209 = vunpack.c.l.b16 %v860
        %v4210 = vunpack.c.h.b16 %v860
        %v4211 = vunpack.c.l.b16 %v861
        %v4212 = vunpack.c.h.b16 %v861
        %v4213 = vunpack.c.l.b16 %v862
        %v4214 = vunpack.c.h.b16 %v862
        %v4215 = vunpack.c.l.b16 %v863
        %v4216 = vunpack.c.h.b16 %v863
        %v4217 = vunpack.c.l.b16 %v864
        %v4218 = vunpack.c.h.b16 %v864
        %v4219 = vunpack.c.l.b16 %v865
        %v4220 = vunpack.c.h.b16 %v865
        %v4221 = vunpack.c.l.b16 %v866
        %v4222 = vunpack.c.h.b16 %v866
        %v4223 = vunpack.c.l.b16 %v867
        %v4224 = vunpack.c.h.b16 %v867
        %v4225 = vunpack.c.l.b16 %v868
        %v4226 = vunpack.c.h.b16 %v868
        %v4227 = vunpack.c.l.b16 %v869
        %v4228 = vunpack.c.h.b16 %v869
        %v4229 = vunpack.c.l.b16 %v870
        %v4230 = vunpack.c.l.b16 %v871
        %v4231 = vunpack.c.h.b16 %v871
        %v4232 = vunpack.c.l.b16 %v872
        %v4233 = vunpack.c.h.b16 %v872
        %v4234 = vunpack.c.l.b16 %v873
        %v4235 = vunpack.c.h.b16 %v873
        %v4236 = vunpack.c.l.b16 %v874
        %v4237 = vunpack.c.h.b16 %v874
        %v4238 = vunpack.c.l.b16 %v875
        %v4239 = vunpack.c.h.b16 %v875
        %v4240 = vunpack.c.l.b16 %v876
        %v4241 = vunpack.c.h.b16 %v876
        %v4242 = vunpack.c.l.b16 %v877
        %v4243 = vunpack.c.h.b16 %v877
        %v4244 = vunpack.c.l.b16 %v878
        %v4245 = vunpack.c.h.b16 %v878
        %v4246 = vunpack.c.l.b16 %v879
        %v4247 = vunpack.c.h.b16 %v879
        %v4248 = vunpack.c.l.b16 %v880
        %v4249 = vunpack.c.h.b16 %v880
        %v4250 = vunpack.c.l.b16 %v881
        %v4251 = vunpack.c.h.b16 %v881
        %v4252 = vunpack.c.l.b16 %v882
        %v4253 = vunpack.c.h.b16 %v882
        %v4254 = vunpack.c.l.b16 %v883
        %v4255 = vunpack.c.h.b16 %v883
        %v4256 = vunpack.c.l.b16 %v884
        %v4257 = vunpack.c.l.b16 %v885
        %v4258 = vunpack.c.h.b16 %v885
        %v4259 = vunpack.c.l.b16 %v886
        %v4260 = vunpack.c.h.b16 %v886
        %v4261 = vunpack.c.l.b16 %v887
        %v4262 = vunpack.c.h.b16 %v887
        %v4263 = vunpack.c.l.b16 %v888
        %v4264 = vunpack.c.h.b16 %v888
        %v4265 = vunpack.c.l.b16 %v889
        %v4266 = vunpack.c.h.b16 %v889
        %v4267 = vunpack.c.l.b16 %v890
        %v4268 = vunpack.c.h.b16 %v890
        %v4269 = vunpack.c.l.b16 %v891
        %v4270 = vunpack.c.h.b16 %v891
        %v4271 = vunpack.c.l.b16 %v892
        %v4272 = vunpack.c.h.b16 %v892
        %v4273 = vunpack.c.l.b16 %v893
        %v4274 = vunpack.c.h.b16 %v893
        %v4275 = vunpack.c.l.b16 %v894
        %v4276 = vunpack.c.h.b16 %v894
        %v4277 = vunpack.c.l.b16 %v895
        %v4278 = vunpack.c.h.b16 %v895
        %v4279 = vunpack.c.l.b16 %v896
        %v4280 = vunpack.c.h.b16 %v896
        %v4281 = vunpack.c.l.b16 %v897
        %v4282 = vunpack.c.h.b16 %v897
        %v4283 = vunpack.c.l.b16 %v898
        %v4284 = vunpack.c.l.b16 %v899
        %v4285 = vunpack.c.h.b16 %v899
        %v4286 = vunpack.c.l.b16 %v900
        %v4287 = vunpack.c.h.b16 %v900
        %v4288 = vunpack.c.l.b16 %v901
        %v4289 = vunpack.c.h.b16 %v901
        %v4290 = vunpack.c.l.b16 %v902
        %v4291 = vunpack.c.h.b16 %v902
        %v4292 = vunpack.c.l.b16 %v903
        %v4293 = vunpack.c.h.b16 %v903
        %v4294 = vunpack.c.l.b16 %v904
        %v4295 = vunpack.c.h.b16 %v904
        %v4296 = vunpack.c.l.b16 %v905
        %v4297 = vunpack.c.h.b16 %v905
        %v4298 = vunpack.c.l.b16 %v906
        %v4299 = vunpack.c.h.b16 %v906
        %v4300 = vunpack.c.l.b16 %v907
        %v4301 = vunpack.c.h.b16 %v907
        %v4302 = vunpack.c.l.b16 %v908
        %v4303 = vunpack.c.h.b16 %v908
        %v4304 = vunpack.c.l.b16 %v909
        %v4305 = vunpack.c.h.b16 %v909
        %v4306 = vunpack.c.l.b16 %v910
        %v4307 = vunpack.c.h.b16 %v910
        %v4308 = vunpack.c.l.b16 %v911
        %v4309 = vunpack.c.h.b16 %v911
        %v4310 = vunpack.c.l.b16 %v912
        %v4311 = vunpack.c.l.b16 %v913
        %v4312 = vunpack.c.h.b16 %v913
        %v4313 = vunpack.c.l.b16 %v914
        %v4314 = vunpack.c.h.b16 %v914
        %v4315 = vunpack.c.l.b16 %v915
        %v4316 = vunpack.c.h.b16 %v915
        %v4317 = vunpack.c.l.b16 %v916
        %v4318 = vunpack.c.h.b16 %v916
        %v4319 = vunpack.c.l.b16 %v917
        %v4320 = vunpack.c.h.b16 %v917
        %v4321 = vunpack.c.l.b16 %v918
        %v4322 = vunpack.c.h.b16 %v918
        %v4323 = vunpack.c.l.b16 %v919
        %v4324 = vunpack.c.h.b16 %v919
        %v4325 = vunpack.c.l.b16 %v920
        %v4326 = vunpack.c.h.b16 %v920
        %v4327 = vunpack.c.l.b16 %v921
        %v4328 = vunpack.c.h.b16 %v921
        %v4329 = vunpack.c.l.b16 %v922
        %v4330 = vunpack.c.h.b16 %v922
        %v4331 = vunpack.c.l.b16 %v923
        %v4332 = vunpack.c.h.b16 %v923
        %v4333 = vunpack.c.l.b16 %v924
        %v4334 = vunpack.c.h.b16 %v924
        %v4335 = vunpack.c.l.b16 %v925
        %v4336 = vunpack.c.h.b16 %v925
        %v4337 = vunpack.c.l.b16 %v926
        %v4338 = vunpack.c.l.b16 %v927
        %v4339 = vunpack.c.h.b16 %v927
        %v4340 = vunpack.c.l.b16 %v928
        %v4341 = vunpack.c.h.b16 %v928
        %v4342 = vunpack.c.l.b16 %v929
        %v4343 = vunpack.c.h.b16 %v929
        %v4344 = vunpack.c.l.b16 %v930
        %v4345 = vunpack.c.h.b16 %v930
        %v4346 = vunpack.c.l.b16 %v931
        %v4347 = vunpack.c.h.b16 %v931
        %v4348 = vunpack.c.l.b16 %v932
        %v4349 = vunpack.c.h.b16 %v932
        %v4350 = vunpack.c.l.b16 %v933
        %v4351 = vunpack.c.h.b16 %v933
        %v4352 = vunpack.c.l.b16 %v934
        %v4353 = vunpack.c.h.b16 %v934
        %v4354 = vunpack.c.l.b16 %v935
        %v4355 = vunpack.c.h.b16 %v935
        %v4356 = vunpack.c.l.b16 %v936
        %v4357 = vunpack.c.h.b16 %v936
        %v4358 = vunpack.c.l.b16 %v937
        %v4359 = vunpack.c.h.b16 %v937
        %v4360 = vunpack.c.l.b16 %v938
        %v4361 = vunpack.c.h.b16 %v938
        %v4362 = vunpack.c.l.b16 %v939
        %v4363 = vunpack.c.h.b16 %v939
        %v4364 = vunpack.c.l.b16 %v940
        %v4365 = vunpack.c.l.b16 %v941
        %v4366 = vunpack.c.h.b16 %v941
        %v4367 = vunpack.c.l.b16 %v942
        %v4368 = vunpack.c.h.b16 %v942
        %v4369 = vunpack.c.l.b16 %v943
        %v4370 = vunpack.c.h.b16 %v943
        %v4371 = vunpack.c.l.b16 %v944
        %v4372 = vunpack.c.h.b16 %v944
        %v4373 = vunpack.c.l.b16 %v945
        %v4374 = vunpack.c.h.b16 %v945
        %v4375 = vunpack.c.l.b16 %v946
        %v4376 = vunpack.c.h.b16 %v946
        %v4377 = vunpack.c.l.b16 %v947
        %v4378 = vunpack.c.h.b16 %v947
        %v4379 = vunpack.c.l.b16 %v948
        %v4380 = vunpack.c.h.b16 %v948
        %v4381 = vunpack.c.l.b16 %v949
        %v4382 = vunpack.c.h.b16 %v949
        %v4383 = vunpack.c.l.b16 %v950
        %v4384 = vunpack.c.h.b16 %v950
        %v4385 = vunpack.c.l.b16 %v951
        %v4386 = vunpack.c.h.b16 %v951
        %v4387 = vunpack.c.l.b16 %v952
        %v4388 = vunpack.c.h.b16 %v952
        %v4389 = vunpack.c.l.b16 %v953
        %v4390 = vunpack.c.h.b16 %v953
        %v4391 = vunpack.c.l.b16 %v954
        %v4392 = vunpack.c.l.b16 %v955
        %v4393 = vunpack.c.h.b16 %v955
        %v4394 = vunpack.c.l.b16 %v956
        %v4395 = vunpack.c.h.b16 %v956
        %v4396 = vunpack.c.l.b16 %v957
        %v4397 = vunpack.c.h.b16 %v957
        %v4398 = vunpack.c.l.b16 %v958
        %v4399 = vunpack.c.h.b16 %v958
        %v4400 = vunpack.c.l.b16 %v959
        %v4401 = vunpack.c.h.b16 %v959
        %v4402 = vunpack.c.l.b16 %v960
        %v4403 = vunpack.c.h.b16 %v960
        %v4404 = vunpack.c.l.b16 %v961
        %v4405 = vunpack.c.h.b16 %v961
        %v4406 = vunpack.c.l.b16 %v962
        %v4407 = vunpack.c.h.b16 %v962
        %v4408 = vunpack.c.l.b16 %v963
        %v4409 = vunpack.c.h.b16 %v963
        %v4410 = vunpack.c.l.b16 %v964
        %v4411 = vunpack.c.h.b16 %v964
        %v4412 = vunpack.c.l.b16 %v965
        %v4413 = vunpack.c.h.b16 %v965
        %v4414 = vunpack.c.l.b16 %v966
        %v4415 = vunpack.c.h.b16 %v966
        %v4416 = vunpack.c.l.b16 %v967
        %v4417 = vunpack.c.h.b16 %v967
        %v4418 = vunpack.c.l.b16 %v968
        %v4419 = vunpack.c.l.b16 %v969
        %v4420 = vunpack.c.h.b16 %v969
        %v4421 = vunpack.c.l.b16 %v970
        %v4422 = vunpack.c.h.b16 %v970
        %v4423 = vunpack.c.l.b16 %v971
        %v4424 = vunpack.c.h.b16 %v971
        %v4425 = vunpack.c.l.b16 %v972
        %v4426 = vunpack.c.h.b16 %v972
        %v4427 = vunpack.c.l.b16 %v973
        %v4428 = vunpack.c.h.b16 %v973
        %v4429 = vunpack.c.l.b16 %v974
        %v4430 = vunpack.c.h.b16 %v974
        %v4431 = vunpack.c.l.b16 %v975
        %v4432 = vunpack.c.h.b16 %v975
        %v4433 = vunpack.c.l.b16 %v976
        %v4434 = vunpack.c.h.b16 %v976
        %v4435 = vunpack.c.l.b16 %v977
        %v4436 = vunpack.c.h.b16 %v977
        %v4437 = vunpack.c.l.b16 %v978
        %v4438 = vunpack.c.h.b16 %v978
        %v4439 = vunpack.c.l.b16 %v979
        %v4440 = vunpack.c.h.b16 %v979
        %v4441 = vunpack.c.l.b16 %v980
        %v4442 = vunpack.c.h.b16 %v980
        %v4443 = vunpack.c.l.b16 %v981
        %v4444 = vunpack.c.h.b16 %v981
        %v4445 = vunpack.c.l.b16 %v982
        %v4446 = vunpack.c.l.b16 %v983
        %v4447 = vunpack.c.h.b16 %v983
        %v4448 = vunpack.c.l.b16 %v984
        %v4449 = vunpack.c.h.b16 %v984
        %v4450 = vunpack.c.l.b16 %v985
        %v4451 = vunpack.c.h.b16 %v985
        %v4452 = vunpack.c.l.b16 %v986
        %v4453 = vunpack.c.h.b16 %v986
        %v4454 = vunpack.c.l.b16 %v987
        %v4455 = vunpack.c.h.b16 %v987
        %v4456 = vunpack.c.l.b16 %v988
        %v4457 = vunpack.c.h.b16 %v988
        %v4458 = vunpack.c.l.b16 %v989
        %v4459 = vunpack.c.h.b16 %v989
        %v4460 = vunpack.c.l.b16 %v990
        %v4461 = vunpack.c.h.b16 %v990
        %v4462 = vunpack.c.l.b16 %v991
        %v4463 = vunpack.c.h.b16 %v991
        %v4464 = vunpack.c.l.b16 %v992
        %v4465 = vunpack.c.h.b16 %v992
        %v4466 = vunpack.c.l.b16 %v993
        %v4467 = vunpack.c.h.b16 %v993
        %v4468 = vunpack.c.l.b16 %v994
        %v4469 = vunpack.c.h.b16 %v994
        %v4470 = vunpack.c.l.b16 %v995
        %v4471 = vunpack.c.h.b16 %v995
        %v4472 = vunpack.c.l.b16 %v996
        %v4473 = vunpack.c.l.b16 %v997
        %v4474 = vunpack.c.h.b16 %v997
        %v4475 = vunpack.c.l.b16 %v998
        %v4476 = vunpack.c.h.b16 %v998
        %v4477 = vunpack.c.l.b16 %v999
        %v4478 = vunpack.c.h.b16 %v999
        %v4479 = vunpack.c.l.b16 %v1000
        %v4480 = vunpack.c.h.b16 %v1000
        %v4481 = vunpack.c.l.b16 %v1001
        %v4482 = vunpack.c.h.b16 %v1001
        %v4483 = vunpack.c.l.b16 %v1002
        %v4484 = vunpack.c.h.b16 %v1002
        %v4485 = vunpack.c.l.b16 %v1003
        %v4486 = vunpack.c.h.b16 %v1003
        %v4487 = vunpack.c.l.b16 %v1004
        %v4488 = vunpack.c.h.b16 %v1004
        %v4489 = vunpack.c.l.b16 %v1005
        %v4490 = vunpack.c.h.b16 %v1005
        %v4491 = vunpack.c.l.b16 %v1006
        %v4492 = vunpack.c.h.b16 %v1006
        %v4493 = vunpack.c.l.b16 %v1007
        %v4494 = vunpack.c.h.b16 %v1007
        %v4495 = vunpack.c.l.b16 %v1008
        %v4496 = vunpack.c.h.b16 %v1008
        %v4497 = vunpack.c.l.b16 %v1009
        %v4498 = vunpack.c.h.b16 %v1009
        %v4499 = vunpack.c.l.b16 %v1010
        %v4500 = vunpack.c.l.b16 %v1011
        %v4501 = vunpack.c.h.b16 %v1011
        %v4502 = vunpack.c.l.b16 %v1012
        %v4503 = vunpack.c.h.b16 %v1012
        %v4504 = vunpack.c.l.b16 %v1013
        %v4505 = vunpack.c.h.b16 %v1013
        %v4506 = vunpack.c.l.b16 %v1014
        %v4507 = vunpack.c.h.b16 %v1014
        %v4508 = vunpack.c.l.b16 %v1015
        %v4509 = vunpack.c.h.b16 %v1015
        %v4510 = vunpack.c.l.b16 %v1016
        %v4511 = vunpack.c.h.b16 %v1016
        %v4512 = vunpack.c.l.b16 %v1017
        %v4513 = vunpack.c.h.b16 %v1017
        %v4514 = vunpack.c.l.b16 %v1018
        %v4515 = vunpack.c.h.b16 %v1018
        %v4516 = vunpack.c.l.b16 %v1019
        %v4517 = vunpack.c.h.b16 %v1019
        %v4518 = vunpack.c.l.b16 %v1020
        %v4519 = vunpack.c.h.b16 %v1020
        %v4520 = vunpack.c.l.b16 %v1021
        %v4521 = vunpack.c.h.b16 %v1021
        %v4522 = vunpack.c.l.b16 %v1022
        %v4523 = vunpack.c.h.b16 %v1022
        %v4524 = vunpack.c.l.b16 %v1023
        %v4525 = vunpack.c.h.b16 %v1023
        %v4526 = vunpack.c.l.b16 %v1024
        %v4527 = vunpack.c.l.b16 %v1025
        %v4528 = vunpack.c.h.b16 %v1025
        %v4529 = vunpack.c.l.b16 %v1026
        %v4530 = vunpack.c.h.b16 %v1026
        %v4531 = vunpack.c.l.b16 %v1027
        %v4532 = vunpack.c.h.b16 %v1027
        %v4533 = vunpack.c.l.b16 %v1028
        %v4534 = vunpack.c.h.b16 %v1028
        %v4535 = vunpack.c.l.b16 %v1029
        %v4536 = vunpack.c.h.b16 %v1029
        %v4537 = vunpack.c.l.b16 %v1030
        %v4538 = vunpack.c.h.b16 %v1030
        %v4539 = vunpack.c.l.b16 %v1031
        %v4540 = vunpack.c.h.b16 %v1031
        %v4541 = vunpack.c.l.b16 %v1032
        %v4542 = vunpack.c.h.b16 %v1032
        %v4543 = vunpack.c.l.b16 %v1033
        %v4544 = vunpack.c.h.b16 %v1033
        %v4545 = vunpack.c.l.b16 %v1034
        %v4546 = vunpack.c.h.b16 %v1034
        %v4547 = vunpack.c.l.b16 %v1035
        %v4548 = vunpack.c.h.b16 %v1035
        %v4549 = vunpack.c.l.b16 %v1036
        %v4550 = vunpack.c.h.b16 %v1036
        %v4551 = vunpack.c.l.b16 %v1037
        %v4552 = vunpack.c.h.b16 %v1037
        %v4553 = vunpack.c.l.b16 %v1038
        %v4554 = vunpack.c.l.b16 %v1039
        %v4555 = vunpack.c.h.b16 %v1039
        %v4556 = vunpack.c.l.b16 %v1040
        %v4557 = vunpack.c.h.b16 %v1040
        %v4558 = vunpack.c.l.b16 %v1041
        %v4559 = vunpack.c.h.b16 %v1041
        %v4560 = vunpack.c.l.b16 %v1042
        %v4561 = vunpack.c.h.b16 %v1042
        %v4562 = vunpack.c.l.b16 %v1043
        %v4563 = vunpack.c.h.b16 %v1043
        %v4564 = vunpack.c.l.b16 %v1044
        %v4565 = vunpack.c.h.b16 %v1044
        %v4566 = vunpack.c.l.b16 %v1045
        %v4567 = vunpack.c.h.b16 %v1045
        %v4568 = vunpack.c.l.b16 %v1046
        %v4569 = vunpack.c.h.b16 %v1046
        %v4570 = vunpack.c.l.b16 %v1047
        %v4571 = vunpack.c.h.b16 %v1047
        %v4572 = vunpack.c.l.b16 %v1048
        %v4573 = vunpack.c.h.b16 %v1048
        %v4574 = vunpack.c.l.b16 %v1049
        %v4575 = vunpack.c.h.b16 %v1049
        %v4576 = vunpack.c.l.b16 %v1050
        %v4577 = vunpack.c.h.b16 %v1050
        %v4578 = vunpack.c.l.b16 %v1051
        %v4579 = vunpack.c.h.b16 %v1051
        %v4580 = vunpack.c.l.b16 %v1052
        %v4581 = vunpack.c.l.b16 %v1053
        %v4582 = vunpack.c.h.b16 %v1053
        %v4583 = vunpack.c.l.b16 %v1054
        %v4584 = vunpack.c.h.b16 %v1054
        %v4585 = vunpack.c.l.b16 %v1055
        %v4586 = vunpack.c.h.b16 %v1055
        %v4587 = vunpack.c.l.b16 %v1056
        %v4588 = vunpack.c.h.b16 %v1056
        %v4589 = vunpack.c.l.b16 %v1057
        %v4590 = vunpack.c.h.b16 %v1057
        %v4591 = vunpack.c.l.b16 %v1058
        %v4592 = vunpack.c.h.b16 %v1058
        %v4593 = vunpack.c.l.b16 %v1059
        %v4594 = vunpack.c.h.b16 %v1059
        %v4595 = vunpack.c.l.b16 %v1060
        %v4596 = vunpack.c.h.b16 %v1060
        %v4597 = vunpack.c.l.b16 %v1061
        %v4598 = vunpack.c.h.b16 %v1061
        %v4599 = vunpack.c.l.b16 %v1062
        %v4600 = vunpack.c.h.b16 %v1062
        %v4601 = vunpack.c.l.b16 %v1063
        %v4602 = vunpack.c.h.b16 %v1063
        %v4603 = vunpack.c.l.b16 %v1064
        %v4604 = vunpack.c.h.b16 %v1064
        %v4605 = vunpack.c.l.b16 %v1065
        %v4606 = vunpack.c.h.b16 %v1065
        %v4607 = vunpack.c.l.b16 %v1066
        %v4608 = vunpack.c.l.b16 %v1067
        %v4609 = vunpack.c.h.b16 %v1067
        %v4610 = vunpack.c.l.b16 %v1068
        %v4611 = vunpack.c.h.b16 %v1068
        %v4612 = vunpack.c.l.b16 %v1069
        %v4613 = vunpack.c.h.b16 %v1069
        %v4614 = vunpack.c.l.b16 %v1070
        %v4615 = vunpack.c.h.b16 %v1070
        %v4616 = vunpack.c.l.b16 %v1071
        %v4617 = vunpack.c.h.b16 %v1071
        %v4618 = vunpack.c.l.b16 %v1072
        %v4619 = vunpack.c.h.b16 %v1072
        %v4620 = vunpack.c.l.b16 %v1073
        %v4621 = vunpack.c.h.b16 %v1073
        %v4622 = vunpack.c.l.b16 %v1074
        %v4623 = vunpack.c.h.b16 %v1074
        %v4624 = vunpack.c.l.b16 %v1075
        %v4625 = vunpack.c.h.b16 %v1075
        %v4626 = vunpack.c.l.b16 %v1076
        %v4627 = vunpack.c.h.b16 %v1076
        %v4628 = vunpack.c.l.b16 %v1077
        %v4629 = vunpack.c.h.b16 %v1077
        %v4630 = vunpack.c.l.b16 %v1078
        %v4631 = vunpack.c.h.b16 %v1078
        %v4632 = vunpack.c.l.b16 %v1079
        %v4633 = vunpack.c.h.b16 %v1079
        %v4634 = vunpack.c.l.b16 %v1080
        %v4635 = vunpack.c.l.b16 %v1081
        %v4636 = vunpack.c.h.b16 %v1081
        %v4637 = vunpack.c.l.b16 %v1082
        %v4638 = vunpack.c.h.b16 %v1082
        %v4639 = vunpack.c.l.b16 %v1083
        %v4640 = vunpack.c.h.b16 %v1083
        %v4641 = vunpack.c.l.b16 %v1084
        %v4642 = vunpack.c.h.b16 %v1084
        %v4643 = vunpack.c.l.b16 %v1085
        %v4644 = vunpack.c.h.b16 %v1085
        %v4645 = vunpack.c.l.b16 %v1086
        %v4646 = vunpack.c.h.b16 %v1086
        %v4647 = vunpack.c.l.b16 %v1087
        %v4648 = vunpack.c.h.b16 %v1087
        %v4649 = vunpack.c.l.b16 %v1088
        %v4650 = vunpack.c.h.b16 %v1088
        %v4651 = vunpack.c.l.b16 %v1089
        %v4652 = vunpack.c.h.b16 %v1089
        %v4653 = vunpack.c.l.b16 %v1090
        %v4654 = vunpack.c.h.b16 %v1090
        %v4655 = vunpack.c.l.b16 %v1091
        %v4656 = vunpack.c.h.b16 %v1091
        %v4657 = vunpack.c.l.b16 %v1092
        %v4658 = vunpack.c.h.b16 %v1092
        %v4659 = vunpack.c.l.b16 %v1093
        %v4660 = vunpack.c.h.b16 %v1093
        %v4661 = vunpack.c.l.b16 %v1094
        %v4662 = vunpack.c.l.b16 %v1095
        %v4663 = vunpack.c.h.b16 %v1095
        %v4664 = vunpack.c.l.b16 %v1096
        %v4665 = vunpack.c.h.b16 %v1096
        %v4666 = vunpack.c.l.b16 %v1097
        %v4667 = vunpack.c.h.b16 %v1097
        %v4668 = vunpack.c.l.b16 %v1098
        %v4669 = vunpack.c.h.b16 %v1098
        %v4670 = vunpack.c.l.b16 %v1099
        %v4671 = vunpack.c.h.b16 %v1099
        %v4672 = vunpack.c.l.b16 %v1100
        %v4673 = vunpack.c.h.b16 %v1100
        %v4674 = vunpack.c.l.b16 %v1101
        %v4675 = vunpack.c.h.b16 %v1101
        %v4676 = vunpack.c.l.b16 %v1102
        %v4677 = vunpack.c.h.b16 %v1102
        %v4678 = vunpack.c.l.b16 %v1103
        %v4679 = vunpack.c.h.b16 %v1103
        %v4680 = vunpack.c.l.b16 %v1104
        %v4681 = vunpack.c.h.b16 %v1104
        %v4682 = vunpack.c.l.b16 %v1105
        %v4683 = vunpack.c.h.b16 %v1105
        %v4684 = vunpack.c.l.b16 %v1106
        %v4685 = vunpack.c.h.b16 %v1106
        %v4686 = vunpack.c.l.b16 %v1107
        %v4687 = vunpack.c.h.b16 %v1107
        %v4688 = vunpack.c.l.b16 %v1108
        %v4689 = vunpack.c.l.b16 %v1109
        %v4690 = vunpack.c.h.b16 %v1109
        %v4691 = vunpack.c.l.b16 %v1110
        %v4692 = vunpack.c.h.b16 %v1110
        %v4693 = vunpack.c.l.b16 %v1111
        %v4694 = vunpack.c.h.b16 %v1111
        %v4695 = vunpack.c.l.b16 %v1112
        %v4696 = vunpack.c.h.b16 %v1112
        %v4697 = vunpack.c.l.b16 %v1113
        %v4698 = vunpack.c.h.b16 %v1113
        %v4699 = vunpack.c.l.b16 %v1114
        %v4700 = vunpack.c.h.b16 %v1114
        %v4701 = vunpack.c.l.b16 %v1115
        %v4702 = vunpack.c.h.b16 %v1115
        %v4703 = vunpack.c.l.b16 %v1116
        %v4704 = vunpack.c.h.b16 %v1116
        %v4705 = vunpack.c.l.b16 %v1117
        %v4706 = vunpack.c.h.b16 %v1117
        %v4707 = vunpack.c.l.b16 %v1118
        %v4708 = vunpack.c.h.b16 %v1118
        %v4709 = vunpack.c.l.b16 %v1119
        %v4710 = vunpack.c.h.b16 %v1119
        %v4711 = vunpack.c.l.b16 %v1120
        %v4712 = vunpack.c.h.b16 %v1120
        %v4713 = vunpack.c.l.b16 %v1121
        %v4714 = vunpack.c.h.b16 %v1121
        %v4715 = vunpack.c.l.b16 %v1122
        %v4716 = vunpack.c.l.b16 %v1123
        %v4717 = vunpack.c.h.b16 %v1123
        %v4718 = vunpack.c.l.b16 %v1124
        %v4719 = vunpack.c.h.b16 %v1124
        %v4720 = vunpack.c.l.b16 %v1125
        %v4721 = vunpack.c.h.b16 %v1125
        %v4722 = vunpack.c.l.b16 %v1126
        %v4723 = vunpack.c.h.b16 %v1126
        %v4724 = vunpack.c.l.b16 %v1127
        %v4725 = vunpack.c.h.b16 %v1127
        %v4726 = vunpack.c.l.b16 %v1128
        %v4727 = vunpack.c.h.b16 %v1128
        %v4728 = vunpack.c.l.b16 %v1129
        %v4729 = vunpack.c.h.b16 %v1129
        %v4730 = vunpack.c.l.b16 %v1130
        %v4731 = vunpack.c.h.b16 %v1130
        %v4732 = vunpack.c.l.b16 %v1131
        %v4733 = vunpack.c.h.b16 %v1131
        %v4734 = vunpack.c.l.b16 %v1132
        %v4735 = vunpack.c.h.b16 %v1132
        %v4736 = vunpack.c.l.b16 %v1133
        %v4737 = vunpack.c.h.b16 %v1133
        %v4738 = vunpack.c.l.b16 %v1134
        %v4739 = vunpack.c.h.b16 %v1134
        %v4740 = vunpack.c.l.b16 %v1135
        %v4741 = vunpack.c.h.b16 %v1135
        %v4742 = vunpack.c.l.b16 %v1136
        %v4743 = vunpack.c.l.b16 %v1137
        %v4744 = vunpack.c.h.b16 %v1137
        %v4745 = vunpack.c.l.b16 %v1138
        %v4746 = vunpack.c.h.b16 %v1138
        %v4747 = vunpack.c.l.b16 %v1139
        %v4748 = vunpack.c.h.b16 %v1139
        %v4749 = vunpack.c.l.b16 %v1140
        %v4750 = vunpack.c.h.b16 %v1140
        %v4751 = vunpack.c.l.b16 %v1141
        %v4752 = vunpack.c.h.b16 %v1141
        %v4753 = vunpack.c.l.b16 %v1142
        %v4754 = vunpack.c.h.b16 %v1142
        %v4755 = vunpack.c.l.b16 %v1143
        %v4756 = vunpack.c.h.b16 %v1143
        %v4757 = vunpack.c.l.b16 %v1144
        %v4758 = vunpack.c.h.b16 %v1144
        %v4759 = vunpack.c.l.b16 %v1145
        %v4760 = vunpack.c.h.b16 %v1145
        %v4761 = vunpack.c.l.b16 %v1146
        %v4762 = vunpack.c.h.b16 %v1146
        %v4763 = vunpack.c.l.b16 %v1147
        %v4764 = vunpack.c.h.b16 %v1147
        %v4765 = vunpack.c.l.b16 %v1148
        %v4766 = vunpack.c.h.b16 %v1148
        %v4767 = vunpack.c.l.b16 %v1149
        %v4768 = vunpack.c.h.b16 %v1149
        %v4769 = vunpack.c.l.b16 %v1150
        %v4770 = vunpack.c.l.b16 %v1151
        %v4771 = vunpack.c.h.b16 %v1151
        %v4772 = vunpack.c.l.b16 %v1152
        %v4773 = vunpack.c.h.b16 %v1152
        %v4774 = vunpack.c.l.b16 %v1153
        %v4775 = vunpack.c.h.b16 %v1153
        %v4776 = vunpack.c.l.b16 %v1154
        %v4777 = vunpack.c.h.b16 %v1154
        %v4778 = vunpack.c.l.b16 %v1155
        %v4779 = vunpack.c.h.b16 %v1155
        %v4780 = vunpack.c.l.b16 %v1156
        %v4781 = vunpack.c.h.b16 %v1156
        %v4782 = vunpack.c.l.b16 %v1157
        %v4783 = vunpack.c.h.b16 %v1157
        %v4784 = vunpack.c.l.b16 %v1158
        %v4785 = vunpack.c.h.b16 %v1158
        %v4786 = vunpack.c.l.b16 %v1159
        %v4787 = vunpack.c.h.b16 %v1159
        %v4788 = vunpack.c.l.b16 %v1160
        %v4789 = vunpack.c.h.b16 %v1160
        %v4790 = vunpack.c.l.b16 %v1161
        %v4791 = vunpack.c.h.b16 %v1161
        %v4792 = vunpack.c.l.b16 %v1162
        %v4793 = vunpack.c.h.b16 %v1162
        %v4794 = vunpack.c.l.b16 %v1163
        %v4795 = vunpack.c.h.b16 %v1163
        %v4796 = vunpack.c.l.b16 %v1164
        %v4797 = vunpack.c.l.b16 %v1165
        %v4798 = vunpack.c.h.b16 %v1165
        %v4799 = vunpack.c.l.b16 %v1166
        %v4800 = vunpack.c.h.b16 %v1166
        %v4801 = vunpack.c.l.b16 %v1167
        %v4802 = vunpack.c.h.b16 %v1167
        %v4803 = vunpack.c.l.b16 %v1168
        %v4804 = vunpack.c.h.b16 %v1168
        %v4805 = vunpack.c.l.b16 %v1169
        %v4806 = vunpack.c.h.b16 %v1169
        %v4807 = vunpack.c.l.b16 %v1170
        %v4808 = vunpack.c.h.b16 %v1170
        %v4809 = vunpack.c.l.b16 %v1171
        %v4810 = vunpack.c.h.b16 %v1171
        %v4811 = vunpack.c.l.b16 %v1172
        %v4812 = vunpack.c.h.b16 %v1172
        %v4813 = vunpack.c.l.b16 %v1173
        %v4814 = vunpack.c.h.b16 %v1173
        %v4815 = vunpack.c.l.b16 %v1174
        %v4816 = vunpack.c.h.b16 %v1174
        %v4817 = vunpack.c.l.b16 %v1175
        %v4818 = vunpack.c.h.b16 %v1175
        %v4819 = vunpack.c.l.b16 %v1176
        %v4820 = vunpack.c.h.b16 %v1176
        %v4821 = vunpack.c.l.b16 %v1177
        %v4822 = vunpack.c.h.b16 %v1177
        %v4823 = vunpack.c.l.b16 %v1178
        %v4824 = vunpack.c.l.b16 %v1179
        %v4825 = vunpack.c.h.b16 %v1179
        %v4826 = vunpack.c.l.b16 %v1180
        %v4827 = vunpack.c.h.b16 %v1180
        %v4828 = vunpack.c.l.b16 %v1181
        %v4829 = vunpack.c.h.b16 %v1181
        %v4830 = vunpack.c.l.b16 %v1182
        %v4831 = vunpack.c.h.b16 %v1182
        %v4832 = vunpack.c.l.b16 %v1183
        %v4833 = vunpack.c.h.b16 %v1183
        %v4834 = vunpack.c.l.b16 %v1184
        %v4835 = vunpack.c.h.b16 %v1184
        %v4836 = vunpack.c.l.b16 %v1185
        %v4837 = vunpack.c.h.b16 %v1185
        %v4838 = vunpack.c.l.b16 %v1186
        %v4839 = vunpack.c.h.b16 %v1186
        %v4840 = vunpack.c.l.b16 %v1187
        %v4841 = vunpack.c.h.b16 %v1187
        %v4842 = vunpack.c.l.b16 %v1188
        %v4843 = vunpack.c.h.b16 %v1188
        %v4844 = vunpack.c.l.b16 %v1189
        %v4845 = vunpack.c.h.b16 %v1189
        %v4846 = vunpack.c.l.b16 %v1190
        %v4847 = vunpack.c.h.b16 %v1190
        %v4848 = vunpack.c.l.b16 %v1191
        %v4849 = vunpack.c.h.b16 %v1191
        %v4850 = vunpack.c.l.b16 %v1192
        %v4851 = vunpack.c.l.b16 %v1193
        %v4852 = vunpack.c.h.b16 %v1193
        %v4853 = vunpack.c.l.b16 %v1194
        %v4854 = vunpack.c.h.b16 %v1194
        %v4855 = vunpack.c.l.b16 %v1195
        %v4856 = vunpack.c.h.b16 %v1195
        %v4857 = vunpack.c.l.b16 %v1196
        %v4858 = vunpack.c.h.b16 %v1196
        %v4859 = vunpack.c.l.b16 %v1197
        %v4860 = vunpack.c.h.b16 %v1197
        %v4861 = vunpack.c.l.b16 %v1198
        %v4862 = vunpack.c.h.b16 %v1198
        %v4863 = vunpack.c.l.b16 %v1199
        %v4864 = vunpack.c.h.b16 %v1199
        %v4865 = vunpack.c.l.b16 %v1200
        %v4866 = vunpack.c.h.b16 %v1200
        %v4867 = vunpack.c.l.b16 %v1201
        %v4868 = vunpack.c.h.b16 %v1201
        %v4869 = vunpack.c.l.b16 %v1202
        %v4870 = vunpack.c.h.b16 %v1202
        %v4871 = vunpack.c.l.b16 %v1203
        %v4872 = vunpack.c.h.b16 %v1203
        %v4873 = vunpack.c.l.b16 %v1204
        %v4874 = vunpack.c.h.b16 %v1204
        %v4875 = vunpack.c.l.b16 %v1205
        %v4876 = vunpack.c.h.b16 %v1205
        %v4877 = vunpack.c.l.b16 %v1206
        %v4878 = vunpack.c.l.b16 %v1207
        %v4879 = vunpack.c.h.b16 %v1207
        %v4880 = vunpack.c.l.b16 %v1208
        %v4881 = vunpack.c.h.b16 %v1208
        %v4882 = vunpack.c.l.b16 %v1209
        %v4883 = vunpack.c.h.b16 %v1209
        %v4884 = vunpack.c.l.b16 %v1210
        %v4885 = vunpack.c.h.b16 %v1210
        %v4886 = vunpack.c.l.b16 %v1211
        %v4887 = vunpack.c.h.b16 %v1211
        %v4888 = vunpack.c.l.b16 %v1212
        %v4889 = vunpack.c.h.b16 %v1212
        %v4890 = vunpack.c.l.b16 %v1213
        %v4891 = vunpack.c.h.b16 %v1213
        %v4892 = vunpack.c.l.b16 %v1214
        %v4893 = vunpack.c.h.b16 %v1214
        %v4894 = vunpack.c.l.b16 %v1215
        %v4895 = vunpack.c.h.b16 %v1215
        %v4896 = vunpack.c.l.b16 %v1216
        %v4897 = vunpack.c.h.b16 %v1216
        %v4898 = vunpack.c.l.b16 %v1217
        %v4899 = vunpack.c.h.b16 %v1217
        %v4900 = vunpack.c.l.b16 %v1218
        %v4901 = vunpack.c.h.b16 %v1218
        %v4902 = vunpack.c.l.b16 %v1219
        %v4903 = vunpack.c.h.b16 %v1219
        %v4904 = vunpack.c.l.b16 %v1220
        %v4905 = vunpack.c.l.b16 %v1221
        %v4906 = vunpack.c.h.b16 %v1221
        %v4907 = vunpack.c.l.b16 %v1222
        %v4908 = vunpack.c.h.b16 %v1222
        %v4909 = vunpack.c.l.b16 %v1223
        %v4910 = vunpack.c.h.b16 %v1223
        %v4911 = vunpack.c.l.b16 %v1224
        %v4912 = vunpack.c.h.b16 %v1224
        %v4913 = vunpack.c.l.b16 %v1225
        %v4914 = vunpack.c.h.b16 %v1225
        %v4915 = vunpack.c.l.b16 %v1226
        %v4916 = vunpack.c.h.b16 %v1226
        %v4917 = vunpack.c.l.b16 %v1227
        %v4918 = vunpack.c.h.b16 %v1227
        %v4919 = vunpack.c.l.b16 %v1228
        %v4920 = vunpack.c.h.b16 %v1228
        %v4921 = vunpack.c.l.b16 %v1229
        %v4922 = vunpack.c.h.b16 %v1229
        %v4923 = vunpack.c.l.b16 %v1230
        %v4924 = vunpack.c.h.b16 %v1230
        %v4925 = vunpack.c.l.b16 %v1231
        %v4926 = vunpack.c.h.b16 %v1231
        %v4927 = vunpack.c.l.b16 %v1232
        %v4928 = vunpack.c.h.b16 %v1232
        %v4929 = vunpack.c.l.b16 %v1233
        %v4930 = vunpack.c.h.b16 %v1233
        %v4931 = vunpack.c.l.b16 %v1234
        %v4932 = vunpack.c.l.b16 %v1235
        %v4933 = vunpack.c.h.b16 %v1235
        %v4934 = vunpack.c.l.b16 %v1236
        %v4935 = vunpack.c.h.b16 %v1236
        %v4936 = vunpack.c.l.b16 %v1237
        %v4937 = vunpack.c.h.b16 %v1237
        %v4938 = vunpack.c.l.b16 %v1238
        %v4939 = vunpack.c.h.b16 %v1238
        %v4940 = vunpack.c.l.b16 %v1239
        %v4941 = vunpack.c.h.b16 %v1239
        %v4942 = vunpack.c.l.b16 %v1240
        %v4943 = vunpack.c.h.b16 %v1240
        %v4944 = vunpack.c.l.b16 %v1241
        %v4945 = vunpack.c.h.b16 %v1241
        %v4946 = vunpack.c.l.b16 %v1242
        %v4947 = vunpack.c.h.b16 %v1242
        %v4948 = vunpack.c.l.b16 %v1243
        %v4949 = vunpack.c.h.b16 %v1243
        %v4950 = vunpack.c.l.b16 %v1244
        %v4951 = vunpack.c.h.b16 %v1244
        %v4952 = vunpack.c.l.b16 %v1245
        %v4953 = vunpack.c.h.b16 %v1245
        %v4954 = vunpack.c.l.b16 %v1246
        %v4955 = vunpack.c.h.b16 %v1246
        %v4956 = vunpack.c.l.b16 %v1247
        %v4957 = vunpack.c.h.b16 %v1247
        %v4958 = vunpack.c.l.b16 %v1248
        %v4959 = vunpack.c.l.b16 %v1249
        %v4960 = vunpack.c.h.b16 %v1249
        %v4961 = vunpack.c.l.b16 %v1250
        %v4962 = vunpack.c.h.b16 %v1250
        %v4963 = vunpack.c.l.b16 %v1251
        %v4964 = vunpack.c.h.b16 %v1251
        %v4965 = vunpack.c.l.b16 %v1252
        %v4966 = vunpack.c.h.b16 %v1252
        %v4967 = vunpack.c.l.b16 %v1253
        %v4968 = vunpack.c.h.b16 %v1253
        %v4969 = vunpack.c.l.b16 %v1254
        %v4970 = vunpack.c.h.b16 %v1254
        %v4971 = vunpack.c.l.b16 %v1255
        %v4972 = vunpack.c.h.b16 %v1255
        %v4973 = vunpack.c.l.b16 %v1256
        %v4974 = vunpack.c.h.b16 %v1256
        %v4975 = vunpack.c.l.b16 %v1257
        %v4976 = vunpack.c.h.b16 %v1257
        %v4977 = vunpack.c.l.b16 %v1258
        %v4978 = vunpack.c.h.b16 %v1258
        %v4979 = vunpack.c.l.b16 %v1259
        %v4980 = vunpack.c.h.b16 %v1259
        %v4981 = vunpack.c.l.b16 %v1260
        %v4982 = vunpack.c.h.b16 %v1260
        %v4983 = vunpack.c.l.b16 %v1261
        %v4984 = vunpack.c.h.b16 %v1261
        %v4985 = vunpack.c.l.b16 %v1262
        %v4986 = vunpack.c.l.b16 %v1263
        %v4987 = vunpack.c.h.b16 %v1263
        %v4988 = vunpack.c.l.b16 %v1264
        %v4989 = vunpack.c.h.b16 %v1264
        %v4990 = vunpack.c.l.b16 %v1265
        %v4991 = vunpack.c.h.b16 %v1265
        %v4992 = vunpack.c.l.b16 %v1266
        %v4993 = vunpack.c.h.b16 %v1266
        %v4994 = vunpack.c.l.b16 %v1267
        %v4995 = vunpack.c.h.b16 %v1267
        %v4996 = vunpack.c.l.b16 %v1268
        %v4997 = vunpack.c.h.b16 %v1268
        %v4998 = vunpack.c.l.b16 %v1269
        %v4999 = vunpack.c.h.b16 %v1269
        %v5000 = vunpack.c.l.b16 %v1270
        %v5001 = vunpack.c.h.b16 %v1270
        %v5002 = vunpack.c.l.b16 %v1271
        %v5003 = vunpack.c.h.b16 %v1271
        %v5004 = vunpack.c.l.b16 %v1272
        %v5005 = vunpack.c.h.b16 %v1272
        %v5006 = vunpack.c.l.b16 %v1273
        %v5007 = vunpack.c.h.b16 %v1273
        %v5008 = vunpack.c.l.b16 %v1274
        %v5009 = vunpack.c.h.b16 %v1274
        %v5010 = vunpack.c.l.b16 %v1275
        %v5011 = vunpack.c.h.b16 %v1275
        %v5012 = vunpack.c.l.b16 %v1276
        %v5013 = vunpack.c.l.b16 %v1277
        %v5014 = vunpack.c.h.b16 %v1277
        %v5015 = vunpack.c.l.b16 %v1278
        %v5016 = vunpack.c.h.b16 %v1278
        %v5017 = vunpack.c.l.b16 %v1279
        %v5018 = vunpack.c.h.b16 %v1279
        %v5019 = vunpack.c.l.b16 %v1280
        %v5020 = vunpack.c.h.b16 %v1280
        %v5021 = vunpack.c.l.b16 %v1281
        %v5022 = vunpack.c.h.b16 %v1281
        %v5023 = vunpack.c.l.b16 %v1282
        %v5024 = vunpack.c.h.b16 %v1282
        %v5025 = vunpack.c.l.b16 %v1283
        %v5026 = vunpack.c.h.b16 %v1283
        %v5027 = vunpack.c.l.b16 %v1284
        %v5028 = vunpack.c.h.b16 %v1284
        %v5029 = vunpack.c.l.b16 %v1285
        %v5030 = vunpack.c.h.b16 %v1285
        %v5031 = vunpack.c.l.b16 %v1286
        %v5032 = vunpack.c.h.b16 %v1286
        %v5033 = vunpack.c.l.b16 %v1287
        %v5034 = vunpack.c.h.b16 %v1287
        %v5035 = vunpack.c.l.b16 %v1288
        %v5036 = vunpack.c.h.b16 %v1288
        %v5037 = vunpack.c.l.b16 %v1289
        %v5038 = vunpack.c.h.b16 %v1289
        %v5039 = vunpack.c.l.b16 %v1290
        %v5040 = vunpack.c.l.b16 %v1291
        %v5041 = vunpack.c.h.b16 %v1291
        %v5042 = vunpack.c.l.b16 %v1292
        %v5043 = vunpack.c.h.b16 %v1292
        %v5044 = vunpack.c.l.b16 %v1293
        %v5045 = vunpack.c.h.b16 %v1293
        %v5046 = vunpack.c.l.b16 %v1294
        %v5047 = vunpack.c.h.b16 %v1294
        %v5048 = vunpack.c.l.b16 %v1295
        %v5049 = vunpack.c.h.b16 %v1295
        %v5050 = vunpack.c.l.b16 %v1296
        %v5051 = vunpack.c.h.b16 %v1296
        %v5052 = vunpack.c.l.b16 %v1297
        %v5053 = vunpack.c.h.b16 %v1297
        %v5054 = vunpack.c.l.b16 %v1298
        %v5055 = vunpack.c.h.b16 %v1298
        %v5056 = vunpack.c.l.b16 %v1299
        %v5057 = vunpack.c.h.b16 %v1299
        %v5058 = vunpack.c.l.b16 %v1300
        %v5059 = vunpack.c.h.b16 %v1300
        %v5060 = vunpack.c.l.b16 %v1301
        %v5061 = vunpack.c.h.b16 %v1301
        %v5062 = vunpack.c.l.b16 %v1302
        %v5063 = vunpack.c.h.b16 %v1302
        %v5064 = vunpack.c.l.b16 %v1303
        %v5065 = vunpack.c.h.b16 %v1303
        %v5066 = vunpack.c.l.b16 %v1304
        %v5067 = vunpack.c.l.b16 %v1305
        %v5068 = vunpack.c.h.b16 %v1305
        %v5069 = vunpack.c.l.b16 %v1306
        %v5070 = vunpack.c.h.b16 %v1306
        %v5071 = vunpack.c.l.b16 %v1307
        %v5072 = vunpack.c.h.b16 %v1307
        %v5073 = vunpack.c.l.b16 %v1308
        %v5074 = vunpack.c.h.b16 %v1308
        %v5075 = vunpack.c.l.b16 %v1309
        %v5076 = vunpack.c.h.b16 %v1309
        %v5077 = vunpack.c.l.b16 %v1310
        %v5078 = vunpack.c.h.b16 %v1310
        %v5079 = vunpack.c.l.b16 %v1311
        %v5080 = vunpack.c.h.b16 %v1311
        %v5081 = vunpack.c.l.b16 %v1312
        %v5082 = vunpack.c.h.b16 %v1312
        %v5083 = vunpack.c.l.b16 %v1313
        %v5084 = vunpack.c.h.b16 %v1313
        %v5085 = vunpack.c.l.b16 %v1314
        %v5086 = vunpack.c.h.b16 %v1314
        %v5087 = vunpack.c.l.b16 %v1315
        %v5088 = vunpack.c.h.b16 %v1315
        %v5089 = vunpack.c.l.b16 %v1316
        %v5090 = vunpack.c.h.b16 %v1316
        %v5091 = vunpack.c.l.b16 %v1317
        %v5092 = vunpack.c.h.b16 %v1317
        %v5093 = vunpack.c.l.b16 %v1318
        %v5094 = vunpack.c.l.b16 %v1319
        %v5095 = vunpack.c.h.b16 %v1319
        %v5096 = vunpack.c.l.b16 %v1320
        %v5097 = vunpack.c.h.b16 %v1320
        %v5098 = vunpack.c.l.b16 %v1321
        %v5099 = vunpack.c.h.b16 %v1321
        %v5100 = vunpack.c.l.b16 %v1322
        %v5101 = vunpack.c.h.b16 %v1322
        %v5102 = vunpack.c.l.b16 %v1323
        %v5103 = vunpack.c.h.b16 %v1323
        %v5104 = vunpack.c.l.b16 %v1324
        %v5105 = vunpack.c.h.b16 %v1324
        %v5106 = vunpack.c.l.b16 %v1325
        %v5107 = vunpack.c.h.b16 %v1325
        %v5108 = vunpack.c.l.b16 %v1326
        %v5109 = vunpack.c.h.b16 %v1326
        %v5110 = vunpack.c.l.b16 %v1327
        %v5111 = vunpack.c.h.b16 %v1327
        %v5112 = vunpack.c.l.b16 %v1328
        %v5113 = vunpack.c.h.b16 %v1328
        %v5114 = vunpack.c.l.b16 %v1329
        %v5115 = vunpack.c.h.b16 %v1329
        %v5116 = vunpack.c.l.b16 %v1330
        %v5117 = vunpack.c.h.b16 %v1330
        %v5118 = vunpack.c.l.b16 %v1331
        %v5119 = vunpack.c.h.b16 %v1331
        %v5120 = vunpack.c.l.b16 %v1332
        %v5121 = vunpack.c.l.b16 %v1333
        %v5122 = vunpack.c.h.b16 %v1333
        %v5123 = vunpack.c.l.b16 %v1334
        %v5124 = vunpack.c.h.b16 %v1334
        %v5125 = vunpack.c.l.b16 %v1335
        %v5126 = vunpack.c.h.b16 %v1335
        %v5127 = vunpack.c.l.b16 %v1336
        %v5128 = vunpack.c.h.b16 %v1336
        %v5129 = vunpack.c.l.b16 %v1337
        %v5130 = vunpack.c.h.b16 %v1337
        %v5131 = vunpack.c.l.b16 %v1338
        %v5132 = vunpack.c.h.b16 %v1338
        %v5133 = vunpack.c.l.b16 %v1339
        %v5134 = vunpack.c.h.b16 %v1339
        %v5135 = vunpack.c.l.b16 %v1340
        %v5136 = vunpack.c.h.b16 %v1340
        %v5137 = vunpack.c.l.b16 %v1341
        %v5138 = vunpack.c.h.b16 %v1341
        %v5139 = vunpack.c.l.b16 %v1342
        %v5140 = vunpack.c.h.b16 %v1342
        %v5141 = vunpack.c.l.b16 %v1343
        %v5142 = vunpack.c.h.b16 %v1343
        %v5143 = vunpack.c.l.b16 %v1344
        %v5144 = vunpack.c.h.b16 %v1344
        %v5145 = vunpack.c.l.b16 %v1345
        %v5146 = vunpack.c.h.b16 %v1345
        %v5147 = vunpack.c.l.b16 %v1346
        %v5148 = vunpack.c.l.b16 %v1347
        %v5149 = vunpack.c.h.b16 %v1347
        %v5150 = vunpack.c.l.b16 %v1348
        %v5151 = vunpack.c.h.b16 %v1348
        %v5152 = vunpack.c.l.b16 %v1349
        %v5153 = vunpack.c.h.b16 %v1349
        %v5154 = vunpack.c.l.b16 %v1350
        %v5155 = vunpack.c.h.b16 %v1350
        %v5156 = vunpack.c.l.b16 %v1351
        %v5157 = vunpack.c.h.b16 %v1351
        %v5158 = vunpack.c.l.b16 %v1352
        %v5159 = vunpack.c.h.b16 %v1352
        %v5160 = vunpack.c.l.b16 %v1353
        %v5161 = vunpack.c.h.b16 %v1353
        %v5162 = vunpack.c.l.b16 %v1354
        %v5163 = vunpack.c.h.b16 %v1354
        %v5164 = vunpack.c.l.b16 %v1355
        %v5165 = vunpack.c.h.b16 %v1355
        %v5166 = vunpack.c.l.b16 %v1356
        %v5167 = vunpack.c.h.b16 %v1356
        %v5168 = vunpack.c.l.b16 %v1357
        %v5169 = vunpack.c.h.b16 %v1357
        %v5170 = vunpack.c.l.b16 %v1358
        %v5171 = vunpack.c.h.b16 %v1358
        %v5172 = vunpack.c.l.b16 %v1359
        %v5173 = vunpack.c.h.b16 %v1359
        %v5174 = vunpack.c.l.b16 %v1360
        %v5175 = vunpack.c.l.b16 %v1361
        %v5176 = vunpack.c.h.b16 %v1361
        %v5177 = vunpack.c.l.b16 %v1362
        %v5178 = vunpack.c.h.b16 %v1362
        %v5179 = vunpack.c.l.b16 %v1363
        %v5180 = vunpack.c.h.b16 %v1363
        %v5181 = vunpack.c.l.b16 %v1364
        %v5182 = vunpack.c.h.b16 %v1364
        %v5183 = vunpack.c.l.b16 %v1365
        %v5184 = vunpack.c.h.b16 %v1365
        %v5185 = vunpack.c.l.b16 %v1366
        %v5186 = vunpack.c.h.b16 %v1366
        %v5187 = vunpack.c.l.b16 %v1367
        %v5188 = vunpack.c.h.b16 %v1367
        %v5189 = vunpack.c.l.b16 %v1368
        %v5190 = vunpack.c.h.b16 %v1368
        %v5191 = vunpack.c.l.b16 %v1369
        %v5192 = vunpack.c.h.b16 %v1369
        %v5193 = vunpack.c.l.b16 %v1370
        %v5194 = vunpack.c.h.b16 %v1370
        %v5195 = vunpack.c.l.b16 %v1371
        %v5196 = vunpack.c.h.b16 %v1371
        %v5197 = vunpack.c.l.b16 %v1372
        %v5198 = vunpack.c.h.b16 %v1372
        %v5199 = vunpack.c.l.b16 %v1373
        %v5200 = vunpack.c.h.b16 %v1373
        %v5201 = vunpack.c.l.b16 %v1374
        %v5202 = vunpack.c.l.b16 %v1375
        %v5203 = vunpack.c.h.b16 %v1375
        %v5204 = vunpack.c.l.b16 %v1376
        %v5205 = vunpack.c.h.b16 %v1376
        %v5206 = vunpack.c.l.b16 %v1377
        %v5207 = vunpack.c.h.b16 %v1377
        %v5208 = vunpack.c.l.b16 %v1378
        %v5209 = vunpack.c.h.b16 %v1378
        %v5210 = vunpack.c.l.b16 %v1379
        %v5211 = vunpack.c.h.b16 %v1379
        %v5212 = vunpack.c.l.b16 %v1380
        %v5213 = vunpack.c.h.b16 %v1380
        %v5214 = vunpack.c.l.b16 %v1381
        %v5215 = vunpack.c.h.b16 %v1381
        %v5216 = vunpack.c.l.b16 %v1382
        %v5217 = vunpack.c.h.b16 %v1382
        %v5218 = vunpack.c.l.b16 %v1383
        %v5219 = vunpack.c.h.b16 %v1383
        %v5220 = vunpack.c.l.b16 %v1384
        %v5221 = vunpack.c.h.b16 %v1384
        %v5222 = vunpack.c.l.b16 %v1385
        %v5223 = vunpack.c.h.b16 %v1385
        %v5224 = vunpack.c.l.b16 %v1386
        %v5225 = vunpack.c.h.b16 %v1386
        %v5226 = vunpack.c.l.b16 %v1387
        %v5227 = vunpack.c.h.b16 %v1387
        %v5228 = vunpack.c.l.b16 %v1388
        %v5229 = vunpack.c.l.b16 %v1389
        %v5230 = vunpack.c.h.b16 %v1389
        %v5231 = vunpack.c.l.b16 %v1390
        %v5232 = vunpack.c.h.b16 %v1390
        %v5233 = vunpack.c.l.b16 %v1391
        %v5234 = vunpack.c.h.b16 %v1391
        %v5235 = vunpack.c.l.b16 %v1392
        %v5236 = vunpack.c.h.b16 %v1392
        %v5237 = vunpack.c.l.b16 %v1393
        %v5238 = vunpack.c.h.b16 %v1393
        %v5239 = vunpack.c.l.b16 %v1394
        %v5240 = vunpack.c.h.b16 %v1394
        %v5241 = vunpack.c.l.b16 %v1395
        %v5242 = vunpack.c.h.b16 %v1395
        %v5243 = vunpack.c.l.b16 %v1396
        %v5244 = vunpack.c.h.b16 %v1396
        %v5245 = vunpack.c.l.b16 %v1397
        %v5246 = vunpack.c.h.b16 %v1397
        %v5247 = vunpack.c.l.b16 %v1398
        %v5248 = vunpack.c.h.b16 %v1398
        %v5249 = vunpack.c.l.b16 %v1399
        %v5250 = vunpack.c.h.b16 %v1399
        %v5251 = vunpack.c.l.b16 %v1400
        %v5252 = vunpack.c.h.b16 %v1400
        %v5253 = vunpack.c.l.b16 %v1401
        %v5254 = vunpack.c.h.b16 %v1401
        %v5255 = vunpack.c.l.b16 %v1402
        %v5256 = vunpack.c.l.b16 %v1403
        %v5257 = vunpack.c.h.b16 %v1403
        %v5258 = vunpack.c.l.b16 %v1404
        %v5259 = vunpack.c.h.b16 %v1404
        %v5260 = vunpack.c.l.b16 %v1405
        %v5261 = vunpack.c.h.b16 %v1405
        %v5262 = vunpack.c.l.b16 %v1406
        %v5263 = vunpack.c.h.b16 %v1406
        %v5264 = vunpack.c.l.b16 %v1407
        %v5265 = vunpack.c.h.b16 %v1407
        %v5266 = vunpack.c.l.b16 %v1408
        %v5267 = vunpack.c.h.b16 %v1408
        %v5268 = vunpack.c.l.b16 %v1409
        %v5269 = vunpack.c.h.b16 %v1409
        %v5270 = vunpack.c.l.b16 %v1410
        %v5271 = vunpack.c.h.b16 %v1410
        %v5272 = vunpack.c.l.b16 %v1411
        %v5273 = vunpack.c.h.b16 %v1411
        %v5274 = vunpack.c.l.b16 %v1412
        %v5275 = vunpack.c.h.b16 %v1412
        %v5276 = vunpack.c.l.b16 %v1413
        %v5277 = vunpack.c.h.b16 %v1413
        %v5278 = vunpack.c.l.b16 %v1414
        %v5279 = vunpack.c.h.b16 %v1414
        %v5280 = vunpack.c.l.b16 %v1415
        %v5281 = vunpack.c.h.b16 %v1415
        %v5282 = vunpack.c.l.b16 %v1416
        %v5283 = vunpack.c.l.b16 %v1417
        %v5284 = vunpack.c.h.b16 %v1417
        %v5285 = vunpack.c.l.b16 %v1418
        %v5286 = vunpack.c.h.b16 %v1418
        %v5287 = vunpack.c.l.b16 %v1419
        %v5288 = vunpack.c.h.b16 %v1419
        %v5289 = vunpack.c.l.b16 %v1420
        %v5290 = vunpack.c.h.b16 %v1420
        %v5291 = vunpack.c.l.b16 %v1421
        %v5292 = vunpack.c.h.b16 %v1421
        %v5293 = vunpack.c.l.b16 %v1422
        %v5294 = vunpack.c.h.b16 %v1422
        %v5295 = vunpack.c.l.b16 %v1423
        %v5296 = vunpack.c.h.b16 %v1423
        %v5297 = vunpack.c.l.b16 %v1424
        %v5298 = vunpack.c.h.b16 %v1424
        %v5299 = vunpack.c.l.b16 %v1425
        %v5300 = vunpack.c.h.b16 %v1425
        %v5301 = vunpack.c.l.b16 %v1426
        %v5302 = vunpack.c.h.b16 %v1426
        %v5303 = vunpack.c.l.b16 %v1427
        %v5304 = vunpack.c.h.b16 %v1427
        %v5305 = vunpack.c.l.b16 %v1428
        %v5306 = vunpack.c.h.b16 %v1428
        %v5307 = vunpack.c.l.b16 %v1429
        %v5308 = vunpack.c.h.b16 %v1429
        %v5309 = vunpack.c.l.b16 %v1430
        %v5310 = vunpack.c.l.b16 %v1431
        %v5311 = vunpack.c.h.b16 %v1431
        %v5312 = vunpack.c.l.b16 %v1432
        %v5313 = vunpack.c.h.b16 %v1432
        %v5314 = vunpack.c.l.b16 %v1433
        %v5315 = vunpack.c.h.b16 %v1433
        %v5316 = vunpack.c.l.b16 %v1434
        %v5317 = vunpack.c.h.b16 %v1434
        %v5318 = vunpack.c.l.b16 %v1435
        %v5319 = vunpack.c.h.b16 %v1435
        %v5320 = vunpack.c.l.b16 %v1436
        %v5321 = vunpack.c.h.b16 %v1436
        %v5322 = vunpack.c.l.b16 %v1437
        %v5323 = vunpack.c.h.b16 %v1437
        %v5324 = vunpack.c.l.b16 %v1438
        %v5325 = vunpack.c.h.b16 %v1438
        %v5326 = vunpack.c.l.b16 %v1439
        %v5327 = vunpack.c.h.b16 %v1439
        %v5328 = vunpack.c.l.b16 %v1440
        %v5329 = vunpack.c.h.b16 %v1440
        %v5330 = vunpack.c.l.b16 %v1441
        %v5331 = vunpack.c.h.b16 %v1441
        %v5332 = vunpack.c.l.b16 %v1442
        %v5333 = vunpack.c.h.b16 %v1442
        %v5334 = vunpack.c.l.b16 %v1443
        %v5335 = vunpack.c.h.b16 %v1443
        %v5336 = vunpack.c.l.b16 %v1444
        %v5337 = vunpack.c.l.b16 %v1445
        %v5338 = vunpack.c.h.b16 %v1445
        %v5339 = vunpack.c.l.b16 %v1446
        %v5340 = vunpack.c.h.b16 %v1446
        %v5341 = vunpack.c.l.b16 %v1447
        %v5342 = vunpack.c.h.b16 %v1447
        %v5343 = vunpack.c.l.b16 %v1448
        %v5344 = vunpack.c.h.b16 %v1448
        %v5345 = vunpack.c.l.b16 %v1449
        %v5346 = vunpack.c.h.b16 %v1449
        %v5347 = vunpack.c.l.b16 %v1450
        %v5348 = vunpack.c.h.b16 %v1450
        %v5349 = vunpack.c.l.b16 %v1451
        %v5350 = vunpack.c.h.b16 %v1451
        %v5351 = vunpack.c.l.b16 %v1452
        %v5352 = vunpack.c.h.b16 %v1452
        %v5353 = vunpack.c.l.b16 %v1453
        %v5354 = vunpack.c.h.b16 %v1453
        %v5355 = vunpack.c.l.b16 %v1454
        %v5356 = vunpack.c.h.b16 %v1454
        %v5357 = vunpack.c.l.b16 %v1455
        %v5358 = vunpack.c.h.b16 %v1455
        %v5359 = vunpack.c.l.b16 %v1456
        %v5360 = vunpack.c.h.b16 %v1456
        %v5361 = vunpack.c.l.b16 %v1457
        %v5362 = vunpack.c.h.b16 %v1457
        %v5363 = vunpack.c.l.b16 %v1458
        %v5364 = vunpack.c.l.b16 %v1459
        %v5365 = vunpack.c.h.b16 %v1459
        %v5366 = vunpack.c.l.b16 %v1460
        %v5367 = vunpack.c.h.b16 %v1460
        %v5368 = vunpack.c.l.b16 %v1461
        %v5369 = vunpack.c.h.b16 %v1461
        %v5370 = vunpack.c.l.b16 %v1462
        %v5371 = vunpack.c.h.b16 %v1462
        %v5372 = vunpack.c.l.b16 %v1463
        %v5373 = vunpack.c.h.b16 %v1463
        %v5374 = vunpack.c.l.b16 %v1464
        %v5375 = vunpack.c.h.b16 %v1464
        %v5376 = vunpack.c.l.b16 %v1465
        %v5377 = vunpack.c.h.b16 %v1465
        %v5378 = vunpack.c.l.b16 %v1466
        %v5379 = vunpack.c.h.b16 %v1466
        %v5380 = vunpack.c.l.b16 %v1467
        %v5381 = vunpack.c.h.b16 %v1467
        %v5382 = vunpack.c.l.b16 %v1468
        %v5383 = vunpack.c.h.b16 %v1468
        %v5384 = vunpack.c.l.b16 %v1469
        %v5385 = vunpack.c.h.b16 %v1469
        %v5386 = vunpack.c.l.b16 %v1470
        %v5387 = vunpack.c.h.b16 %v1470
        %v5388 = vunpack.c.l.b16 %v1471
        %v5389 = vunpack.c.h.b16 %v1471
        %v5390 = vunpack.c.l.b16 %v1472
        %v5391 = vunpack.c.l.b16 %v1473
        %v5392 = vunpack.c.h.b16 %v1473
        %v5393 = vunpack.c.l.b16 %v1474
        %v5394 = vunpack.c.h.b16 %v1474
        %v5395 = vunpack.c.l.b16 %v1475
        %v5396 = vunpack.c.h.b16 %v1475
        %v5397 = vunpack.c.l.b16 %v1476
        %v5398 = vunpack.c.h.b16 %v1476
        %v5399 = vunpack.c.l.b16 %v1477
        %v5400 = vunpack.c.h.b16 %v1477
        %v5401 = vunpack.c.l.b16 %v1478
        %v5402 = vunpack.c.h.b16 %v1478
        %v5403 = vunpack.c.l.b16 %v1479
        %v5404 = vunpack.c.h.b16 %v1479
        %v5405 = vunpack.c.l.b16 %v1480
        %v5406 = vunpack.c.h.b16 %v1480
        %v5407 = vunpack.c.l.b16 %v1481
        %v5408 = vunpack.c.h.b16 %v1481
        %v5409 = vunpack.c.l.b16 %v1482
        %v5410 = vunpack.c.h.b16 %v1482
        %v5411 = vunpack.c.l.b16 %v1483
        %v5412 = vunpack.c.h.b16 %v1483
        %v5413 = vunpack.c.l.b16 %v1484
        %v5414 = vunpack.c.h.b16 %v1484
        %v5415 = vunpack.c.l.b16 %v1485
        %v5416 = vunpack.c.h.b16 %v1485
        %v5417 = vunpack.c.l.b16 %v1486
        %v5418 = vunpack.c.l.b16 %v1487
        %v5419 = vunpack.c.h.b16 %v1487
        %v5420 = vunpack.c.l.b16 %v1488
        %v5421 = vunpack.c.h.b16 %v1488
        %v5422 = vunpack.c.l.b16 %v1489
        %v5423 = vunpack.c.h.b16 %v1489
        %v5424 = vunpack.c.l.b16 %v1490
        %v5425 = vunpack.c.h.b16 %v1490
        %v5426 = vunpack.c.l.b16 %v1491
        %v5427 = vunpack.c.h.b16 %v1491
        %v5428 = vunpack.c.l.b16 %v1492
        %v5429 = vunpack.c.h.b16 %v1492
        %v5430 = vunpack.c.l.b16 %v1493
        %v5431 = vunpack.c.h.b16 %v1493
        %v5432 = vunpack.c.l.b16 %v1494
        %v5433 = vunpack.c.h.b16 %v1494
        %v5434 = vunpack.c.l.b16 %v1495
        %v5435 = vunpack.c.h.b16 %v1495
        %v5436 = vunpack.c.l.b16 %v1496
        %v5437 = vunpack.c.h.b16 %v1496
        %v5438 = vunpack.c.l.b16 %v1497
        %v5439 = vunpack.c.h.b16 %v1497
        %v5440 = vunpack.c.l.b16 %v1498
        %v5441 = vunpack.c.h.b16 %v1498
        %v5442 = vunpack.c.l.b16 %v1499
        %v5443 = vunpack.c.h.b16 %v1499
        %v5444 = vunpack.c.l.b16 %v1500
        %v5445 = vunpack.c.l.b16 %v1501
        %v5446 = vunpack.c.h.b16 %v1501
        %v5447 = vunpack.c.l.b16 %v1502
        %v5448 = vunpack.c.h.b16 %v1502
        %v5449 = vunpack.c.l.b16 %v1503
        %v5450 = vunpack.c.h.b16 %v1503
        %v5451 = vunpack.c.l.b16 %v1504
        %v5452 = vunpack.c.h.b16 %v1504
        %v5453 = vunpack.c.l.b16 %v1505
        %v5454 = vunpack.c.h.b16 %v1505
        %v5455 = vunpack.c.l.b16 %v1506
        %v5456 = vunpack.c.h.b16 %v1506
        %v5457 = vunpack.c.l.b16 %v1507
        %v5458 = vunpack.c.h.b16 %v1507
        %v5459 = vunpack.c.l.b16 %v1508
        %v5460 = vunpack.c.h.b16 %v1508
        %v5461 = vunpack.c.l.b16 %v1509
        %v5462 = vunpack.c.h.b16 %v1509
        %v5463 = vunpack.c.l.b16 %v1510
        %v5464 = vunpack.c.h.b16 %v1510
        %v5465 = vunpack.c.l.b16 %v1511
        %v5466 = vunpack.c.h.b16 %v1511
        %v5467 = vunpack.c.l.b16 %v1512
        %v5468 = vunpack.c.h.b16 %v1512
        %v5469 = vunpack.c.l.b16 %v1513
        %v5470 = vunpack.c.h.b16 %v1513
        %v5471 = vunpack.c.l.b16 %v1514
        %v5472 = vpack.c.b16 %v2907, %v2880
        %v5473 = vpack.c.b16 %v2908, %v2881
        %v5474 = vpack.c.b16 %v2909, %v2882
        %v5475 = vpack.c.b16 %v2910, %v2883
        %v5476 = vpack.c.b16 %v2911, %v2884
        %v5477 = vpack.c.b16 %v2912, %v2885
        %v5478 = vpack.c.b16 %v2913, %v2886
        %v5479 = vpack.c.b16 %v2914, %v2887
        %v5480 = vpack.c.b16 %v2915, %v2888
        %v5481 = vpack.c.b16 %v2916, %v2889
        %v5482 = vpack.c.b16 %v2917, %v2890
        %v5483 = vpack.c.b16 %v2918, %v2891
        %v5484 = vpack.c.b16 %v2919, %v2892
        %v5485 = vpack.c.b16 %v2920, %v2893
        %v5486 = vpack.c.b16 %v2921, %v2894
        %v5487 = vpack.c.b16 %v2922, %v2895
        %v5488 = vpack.c.b16 %v2923, %v2896
        %v5489 = vpack.c.b16 %v2924, %v2897
        %v5490 = vpack.c.b16 %v2925, %v2898
        %v5491 = vpack.c.b16 %v2926, %v2899
        %v5492 = vpack.c.b16 %v2927, %v2900
        %v5493 = vpack.c.b16 %v2928, %v2901
        %v5494 = vpack.c.b16 %v2929, %v2902
        %v5495 = vpack.c.b16 %v2930, %v2903
        %v5496 = vpack.c.b16 %v2931, %v2904
        %v5497 = vpack.c.b16 %v2932, %v2905
        %v5498 = vpack.c.b16 %v2933, %v2906
        %v5499 = vpack.c.b16 %v2961, %v2934
        %v5500 = vpack.c.b16 %v2962, %v2935
        %v5501 = vpack.c.b16 %v2963, %v2936
        %v5502 = vpack.c.b16 %v2964, %v2937
        %v5503 = vpack.c.b16 %v2965, %v2938
        %v5504 = vpack.c.b16 %v2966, %v2939
        %v5505 = vpack.c.b16 %v2967, %v2940
        %v5506 = vpack.c.b16 %v2968, %v2941
        %v5507 = vpack.c.b16 %v2969, %v2942
        %v5508 = vpack.c.b16 %v2970, %v2943
        %v5509 = vpack.c.b16 %v2971, %v2944
        %v5510 = vpack.c.b16 %v2972, %v2945
        %v5511 = vpack.c.b16 %v2973, %v2946
        %v5512 = vpack.c.b16 %v2974, %v2947
        %v5513 = vpack.c.b16 %v2975, %v2948
        %v5514 = vpack.c.b16 %v2976, %v2949
        %v5515 = vpack.c.b16 %v2977, %v2950
        %v5516 = vpack.c.b16 %v2978, %v2951
        %v5517 = vpack.c.b16 %v2979, %v2952
        %v5518 = vpack.c.b16 %v2980, %v2953
        %v5519 = vpack.c.b16 %v2981, %v2954
        %v5520 = vpack.c.b16 %v2982, %v2955
        %v5521 = vpack.c.b16 %v2983, %v2956
        %v5522 = vpack.c.b16 %v2984, %v2957
        %v5523 = vpack.c.b16 %v2985, %v2958
        %v5524 = vpack.c.b16 %v2986, %v2959
        %v5525 = vpack.c.b16 %v2987, %v2960
        %v5526 = vpack.c.b16 %v3015, %v2988
        %v5527 = vpack.c.b16 %v3016, %v2989
        %v5528 = vpack.c.b16 %v3017, %v2990
        %v5529 = vpack.c.b16 %v3018, %v2991
        %v5530 = vpack.c.b16 %v3019, %v2992
        %v5531 = vpack.c.b16 %v3020, %v2993
        %v5532 = vpack.c.b16 %v3021, %v2994
        %v5533 = vpack.c.b16 %v3022, %v2995
        %v5534 = vpack.c.b16 %v3023, %v2996
        %v5535 = vpack.c.b16 %v3024, %v2997
        %v5536 = vpack.c.b16 %v3025, %v2998
        %v5537 = vpack.c.b16 %v3026, %v2999
        %v5538 = vpack.c.b16 %v3027, %v3000
        %v5539 = vpack.c.b16 %v3028, %v3001
        %v5540 = vpack.c.b16 %v3029, %v3002
        %v5541 = vpack.c.b16 %v3030, %v3003
        %v5542 = vpack.c.b16 %v3031, %v3004
        %v5543 = vpack.c.b16 %v3032, %v3005
        %v5544 = vpack.c.b16 %v3033, %v3006
        %v5545 = vpack.c.b16 %v3034, %v3007
        %v5546 = vpack.c.b16 %v3035, %v3008
        %v5547 = vpack.c.b16 %v3036, %v3009
        %v5548 = vpack.c.b16 %v3037, %v3010
        %v5549 = vpack.c.b16 %v3038, %v3011
        %v5550 = vpack.c.b16 %v3039, %v3012
        %v5551 = vpack.c.b16 %v3040, %v3013
        %v5552 = vpack.c.b16 %v3041, %v3014
        %v5553 = vpack.c.b16 %v3069, %v3042
        %v5554 = vpack.c.b16 %v3070, %v3043
        %v5555 = vpack.c.b16 %v3071, %v3044
        %v5556 = vpack.c.b16 %v3072, %v3045
        %v5557 = vpack.c.b16 %v3073, %v3046
        %v5558 = vpack.c.b16 %v3074, %v3047
        %v5559 = vpack.c.b16 %v3075, %v3048
        %v5560 = vpack.c.b16 %v3076, %v3049
        %v5561 = vpack.c.b16 %v3077, %v3050
        %v5562 = vpack.c.b16 %v3078, %v3051
        %v5563 = vpack.c.b16 %v3079, %v3052
        %v5564 = vpack.c.b16 %v3080, %v3053
        %v5565 = vpack.c.b16 %v3081, %v3054
        %v5566 = vpack.c.b16 %v3082, %v3055
        %v5567 = vpack.c.b16 %v3083, %v3056
        %v5568 = vpack.c.b16 %v3084, %v3057
        %v5569 = vpack.c.b16 %v3085, %v3058
        %v5570 = vpack.c.b16 %v3086, %v3059
        %v5571 = vpack.c.b16 %v3087, %v3060
        %v5572 = vpack.c.b16 %v3088, %v3061
        %v5573 = vpack.c.b16 %v3089, %v3062
        %v5574 = vpack.c.b16 %v3090, %v3063
        %v5575 = vpack.c.b16 %v3091, %v3064
        %v5576 = vpack.c.b16 %v3092, %v3065
        %v5577 = vpack.c.b16 %v3093, %v3066
        %v5578 = vpack.c.b16 %v3094, %v3067
        %v5579 = vpack.c.b16 %v3095, %v3068
        %v5580 = vpack.c.b16 %v3123, %v3096
        %v5581 = vpack.c.b16 %v3124, %v3097
        %v5582 = vpack.c.b16 %v3125, %v3098
        %v5583 = vpack.c.b16 %v3126, %v3099
        %v5584 = vpack.c.b16 %v3127, %v3100
        %v5585 = vpack.c.b16 %v3128, %v3101
        %v5586 = vpack.c.b16 %v3129, %v3102
        %v5587 = vpack.c.b16 %v3130, %v3103
        %v5588 = vpack.c.b16 %v3131, %v3104
        %v5589 = vpack.c.b16 %v3132, %v3105
        %v5590 = vpack.c.b16 %v3133, %v3106
        %v5591 = vpack.c.b16 %v3134, %v3107
        %v5592 = vpack.c.b16 %v3135, %v3108
        %v5593 = vpack.c.b16 %v3136, %v3109
        %v5594 = vpack.c.b16 %v3137, %v3110
        %v5595 = vpack.c.b16 %v3138, %v3111
        %v5596 = vpack.c.b16 %v3139, %v3112
        %v5597 = vpack.c.b16 %v3140, %v3113
        %v5598 = vpack.c.b16 %v3141, %v3114
        %v5599 = vpack.c.b16 %v3142, %v3115
        %v5600 = vpack.c.b16 %v3143, %v3116
        %v5601 = vpack.c.b16 %v3144, %v3117
        %v5602 = vpack.c.b16 %v3145, %v3118
        %v5603 = vpack.c.b16 %v3146, %v3119
        %v5604 = vpack.c.b16 %v3147, %v3120
        %v5605 = vpack.c.b16 %v3148, %v3121
        %v5606 = vpack.c.b16 %v3149, %v3122
        %v5607 = vpack.c.b16 %v3177, %v3150
        %v5608 = vpack.c.b16 %v3178, %v3151
        %v5609 = vpack.c.b16 %v3179, %v3152
        %v5610 = vpack.c.b16 %v3180, %v3153
        %v5611 = vpack.c.b16 %v3181, %v3154
        %v5612 = vpack.c.b16 %v3182, %v3155
        %v5613 = vpack.c.b16 %v3183, %v3156
        %v5614 = vpack.c.b16 %v3184, %v3157
        %v5615 = vpack.c.b16 %v3185, %v3158
        %v5616 = vpack.c.b16 %v3186, %v3159
        %v5617 = vpack.c.b16 %v3187, %v3160
        %v5618 = vpack.c.b16 %v3188, %v3161
        %v5619 = vpack.c.b16 %v3189, %v3162
        %v5620 = vpack.c.b16 %v3190, %v3163
        %v5621 = vpack.c.b16 %v3191, %v3164
        %v5622 = vpack.c.b16 %v3192, %v3165
        %v5623 = vpack.c.b16 %v3193, %v3166
        %v5624 = vpack.c.b16 %v3194, %v3167
        %v5625 = vpack.c.b16 %v3195, %v3168
        %v5626 = vpack.c.b16 %v3196, %v3169
        %v5627 = vpack.c.b16 %v3197, %v3170
        %v5628 = vpack.c.b16 %v3198, %v3171
        %v5629 = vpack.c.b16 %v3199, %v3172
        %v5630 = vpack.c.b16 %v3200, %v3173
        %v5631 = vpack.c.b16 %v3201, %v3174
        %v5632 = vpack.c.b16 %v3202, %v3175
        %v5633 = vpack.c.b16 %v3203, %v3176
        %v5634 = vpack.c.b16 %v3231, %v3204
        %v5635 = vpack.c.b16 %v3232, %v3205
        %v5636 = vpack.c.b16 %v3233, %v3206
        %v5637 = vpack.c.b16 %v3234, %v3207
        %v5638 = vpack.c.b16 %v3235, %v3208
        %v5639 = vpack.c.b16 %v3236, %v3209
        %v5640 = vpack.c.b16 %v3237, %v3210
        %v5641 = vpack.c.b16 %v3238, %v3211
        %v5642 = vpack.c.b16 %v3239, %v3212
        %v5643 = vpack.c.b16 %v3240, %v3213
        %v5644 = vpack.c.b16 %v3241, %v3214
        %v5645 = vpack.c.b16 %v3242, %v3215
        %v5646 = vpack.c.b16 %v3243, %v3216
        %v5647 = vpack.c.b16 %v3244, %v3217
        %v5648 = vpack.c.b16 %v3245, %v3218
        %v5649 = vpack.c.b16 %v3246, %v3219
        %v5650 = vpack.c.b16 %v3247, %v3220
        %v5651 = vpack.c.b16 %v3248, %v3221
        %v5652 = vpack.c.b16 %v3249, %v3222
        %v5653 = vpack.c.b16 %v3250, %v3223
        %v5654 = vpack.c.b16 %v3251, %v3224
        %v5655 = vpack.c.b16 %v3252, %v3225
        %v5656 = vpack.c.b16 %v3253, %v3226
        %v5657 = vpack.c.b16 %v3254, %v3227
        %v5658 = vpack.c.b16 %v3255, %v3228
        %v5659 = vpack.c.b16 %v3256, %v3229
        %v5660 = vpack.c.b16 %v3257, %v3230
        %v5661 = vpack.c.b16 %v3285, %v3258
        %v5662 = vpack.c.b16 %v3286, %v3259
        %v5663 = vpack.c.b16 %v3287, %v3260
        %v5664 = vpack.c.b16 %v3288, %v3261
        %v5665 = vpack.c.b16 %v3289, %v3262
        %v5666 = vpack.c.b16 %v3290, %v3263
        %v5667 = vpack.c.b16 %v3291, %v3264
        %v5668 = vpack.c.b16 %v3292, %v3265
        %v5669 = vpack.c.b16 %v3293, %v3266
        %v5670 = vpack.c.b16 %v3294, %v3267
        %v5671 = vpack.c.b16 %v3295, %v3268
        %v5672 = vpack.c.b16 %v3296, %v3269
        %v5673 = vpack.c.b16 %v3297, %v3270
        %v5674 = vpack.c.b16 %v3298, %v3271
        %v5675 = vpack.c.b16 %v3299, %v3272
        %v5676 = vpack.c.b16 %v3300, %v3273
        %v5677 = vpack.c.b16 %v3301, %v3274
        %v5678 = vpack.c.b16 %v3302, %v3275
        %v5679 = vpack.c.b16 %v3303, %v3276
        %v5680 = vpack.c.b16 %v3304, %v3277
        %v5681 = vpack.c.b16 %v3305, %v3278
        %v5682 = vpack.c.b16 %v3306, %v3279
        %v5683 = vpack.c.b16 %v3307, %v3280
        %v5684 = vpack.c.b16 %v3308, %v3281
        %v5685 = vpack.c.b16 %v3309, %v3282
        %v5686 = vpack.c.b16 %v3310, %v3283
        %v5687 = vpack.c.b16 %v3311, %v3284
        %v5688 = vpack.c.b16 %v3339, %v3312
        %v5689 = vpack.c.b16 %v3340, %v3313
        %v5690 = vpack.c.b16 %v3341, %v3314
        %v5691 = vpack.c.b16 %v3342, %v3315
        %v5692 = vpack.c.b16 %v3343, %v3316
        %v5693 = vpack.c.b16 %v3344, %v3317
        %v5694 = vpack.c.b16 %v3345, %v3318
        %v5695 = vpack.c.b16 %v3346, %v3319
        %v5696 = vpack.c.b16 %v3347, %v3320
        %v5697 = vpack.c.b16 %v3348, %v3321
        %v5698 = vpack.c.b16 %v3349, %v3322
        %v5699 = vpack.c.b16 %v3350, %v3323
        %v5700 = vpack.c.b16 %v3351, %v3324
        %v5701 = vpack.c.b16 %v3352, %v3325
        %v5702 = vpack.c.b16 %v3353, %v3326
        %v5703 = vpack.c.b16 %v3354, %v3327
        %v5704 = vpack.c.b16 %v3355, %v3328
        %v5705 = vpack.c.b16 %v3356, %v3329
        %v5706 = vpack.c.b16 %v3357, %v3330
        %v5707 = vpack.c.b16 %v3358, %v3331
        %v5708 = vpack.c.b16 %v3359, %v3332
        %v5709 = vpack.c.b16 %v3360, %v3333
        %v5710 = vpack.c.b16 %v3361, %v3334
        %v5711 = vpack.c.b16 %v3362, %v3335
        %v5712 = vpack.c.b16 %v3363, %v3336
        %v5713 = vpack.c.b16 %v3364, %v3337
        %v5714 = vpack.c.b16 %v3365, %v3338
        %v5715 = vpack.c.b16 %v3393, %v3366
        %v5716 = vpack.c.b16 %v3394, %v3367
        %v5717 = vpack.c.b16 %v3395, %v3368
        %v5718 = vpack.c.b16 %v3396, %v3369
        %v5719 = vpack.c.b16 %v3397, %v3370
        %v5720 = vpack.c.b16 %v3398, %v3371
        %v5721 = vpack.c.b16 %v3399, %v3372
        %v5722 = vpack.c.b16 %v3400, %v3373
        %v5723 = vpack.c.b16 %v3401, %v3374
        %v5724 = vpack.c.b16 %v3402, %v3375
        %v5725 = vpack.c.b16 %v3403, %v3376
        %v5726 = vpack.c.b16 %v3404, %v3377
        %v5727 = vpack.c.b16 %v3405, %v3378
        %v5728 = vpack.c.b16 %v3406, %v3379
        %v5729 = vpack.c.b16 %v3407, %v3380
        %v5730 = vpack.c.b16 %v3408, %v3381
        %v5731 = vpack.c.b16 %v3409, %v3382
        %v5732 = vpack.c.b16 %v3410, %v3383
        %v5733 = vpack.c.b16 %v3411, %v3384
        %v5734 = vpack.c.b16 %v3412, %v3385
        %v5735 = vpack.c.b16 %v3413, %v3386
        %v5736 = vpack.c.b16 %v3414, %v3387
        %v5737 = vpack.c.b16 %v3415, %v3388
        %v5738 = vpack.c.b16 %v3416, %v3389
        %v5739 = vpack.c.b16 %v3417, %v3390
        %v5740 = vpack.c.b16 %v3418, %v3391
        %v5741 = vpack.c.b16 %v3419, %v3392
        %v5742 = vpack.c.b16 %v3447, %v3420
        %v5743 = vpack.c.b16 %v3448, %v3421
        %v5744 = vpack.c.b16 %v3449, %v3422
        %v5745 = vpack.c.b16 %v3450, %v3423
        %v5746 = vpack.c.b16 %v3451, %v3424
        %v5747 = vpack.c.b16 %v3452, %v3425
        %v5748 = vpack.c.b16 %v3453, %v3426
        %v5749 = vpack.c.b16 %v3454, %v3427
        %v5750 = vpack.c.b16 %v3455, %v3428
        %v5751 = vpack.c.b16 %v3456, %v3429
        %v5752 = vpack.c.b16 %v3457, %v3430
        %v5753 = vpack.c.b16 %v3458, %v3431
        %v5754 = vpack.c.b16 %v3459, %v3432
        %v5755 = vpack.c.b16 %v3460, %v3433
        %v5756 = vpack.c.b16 %v3461, %v3434
        %v5757 = vpack.c.b16 %v3462, %v3435
        %v5758 = vpack.c.b16 %v3463, %v3436
        %v5759 = vpack.c.b16 %v3464, %v3437
        %v5760 = vpack.c.b16 %v3465, %v3438
        %v5761 = vpack.c.b16 %v3466, %v3439
        %v5762 = vpack.c.b16 %v3467, %v3440
        %v5763 = vpack.c.b16 %v3468, %v3441
        %v5764 = vpack.c.b16 %v3469, %v3442
        %v5765 = vpack.c.b16 %v3470, %v3443
        %v5766 = vpack.c.b16 %v3471, %v3444
        %v5767 = vpack.c.b16 %v3472, %v3445
        %v5768 = vpack.c.b16 %v3473, %v3446
        %v5769 = vpack.c.b16 %v3501, %v3474
        %v5770 = vpack.c.b16 %v3502, %v3475
        %v5771 = vpack.c.b16 %v3503, %v3476
        %v5772 = vpack.c.b16 %v3504, %v3477
        %v5773 = vpack.c.b16 %v3505, %v3478
        %v5774 = vpack.c.b16 %v3506, %v3479
        %v5775 = vpack.c.b16 %v3507, %v3480
        %v5776 = vpack.c.b16 %v3508, %v3481
        %v5777 = vpack.c.b16 %v3509, %v3482
        %v5778 = vpack.c.b16 %v3510, %v3483
        %v5779 = vpack.c.b16 %v3511, %v3484
        %v5780 = vpack.c.b16 %v3512, %v3485
        %v5781 = vpack.c.b16 %v3513, %v3486
        %v5782 = vpack.c.b16 %v3514, %v3487
        %v5783 = vpack.c.b16 %v3515, %v3488
        %v5784 = vpack.c.b16 %v3516, %v3489
        %v5785 = vpack.c.b16 %v3517, %v3490
        %v5786 = vpack.c.b16 %v3518, %v3491
        %v5787 = vpack.c.b16 %v3519, %v3492
        %v5788 = vpack.c.b16 %v3520, %v3493
        %v5789 = vpack.c.b16 %v3521, %v3494
        %v5790 = vpack.c.b16 %v3522, %v3495
        %v5791 = vpack.c.b16 %v3523, %v3496
        %v5792 = vpack.c.b16 %v3524, %v3497
        %v5793 = vpack.c.b16 %v3525, %v3498
        %v5794 = vpack.c.b16 %v3526, %v3499
        %v5795 = vpack.c.b16 %v3527, %v3500
        %v5796 = vpack.c.b16 %v3555, %v3528
        %v5797 = vpack.c.b16 %v3556, %v3529
        %v5798 = vpack.c.b16 %v3557, %v3530
        %v5799 = vpack.c.b16 %v3558, %v3531
        %v5800 = vpack.c.b16 %v3559, %v3532
        %v5801 = vpack.c.b16 %v3560, %v3533
        %v5802 = vpack.c.b16 %v3561, %v3534
        %v5803 = vpack.c.b16 %v3562, %v3535
        %v5804 = vpack.c.b16 %v3563, %v3536
        %v5805 = vpack.c.b16 %v3564, %v3537
        %v5806 = vpack.c.b16 %v3565, %v3538
        %v5807 = vpack.c.b16 %v3566, %v3539
        %v5808 = vpack.c.b16 %v3567, %v3540
        %v5809 = vpack.c.b16 %v3568, %v3541
        %v5810 = vpack.c.b16 %v3569, %v3542
        %v5811 = vpack.c.b16 %v3570, %v3543
        %v5812 = vpack.c.b16 %v3571, %v3544
        %v5813 = vpack.c.b16 %v3572, %v3545
        %v5814 = vpack.c.b16 %v3573, %v3546
        %v5815 = vpack.c.b16 %v3574, %v3547
        %v5816 = vpack.c.b16 %v3575, %v3548
        %v5817 = vpack.c.b16 %v3576, %v3549
        %v5818 = vpack.c.b16 %v3577, %v3550
        %v5819 = vpack.c.b16 %v3578, %v3551
        %v5820 = vpack.c.b16 %v3579, %v3552
        %v5821 = vpack.c.b16 %v3580, %v3553
        %v5822 = vpack.c.b16 %v3581, %v3554
        %v5823 = vpack.c.b16 %v3609, %v3582
        %v5824 = vpack.c.b16 %v3610, %v3583
        %v5825 = vpack.c.b16 %v3611, %v3584
        %v5826 = vpack.c.b16 %v3612, %v3585
        %v5827 = vpack.c.b16 %v3613, %v3586
        %v5828 = vpack.c.b16 %v3614, %v3587
        %v5829 = vpack.c.b16 %v3615, %v3588
        %v5830 = vpack.c.b16 %v3616, %v3589
        %v5831 = vpack.c.b16 %v3617, %v3590
        %v5832 = vpack.c.b16 %v3618, %v3591
        %v5833 = vpack.c.b16 %v3619, %v3592
        %v5834 = vpack.c.b16 %v3620, %v3593
        %v5835 = vpack.c.b16 %v3621, %v3594
        %v5836 = vpack.c.b16 %v3622, %v3595
        %v5837 = vpack.c.b16 %v3623, %v3596
        %v5838 = vpack.c.b16 %v3624, %v3597
        %v5839 = vpack.c.b16 %v3625, %v3598
        %v5840 = vpack.c.b16 %v3626, %v3599
        %v5841 = vpack.c.b16 %v3627, %v3600
        %v5842 = vpack.c.b16 %v3628, %v3601
        %v5843 = vpack.c.b16 %v3629, %v3602
        %v5844 = vpack.c.b16 %v3630, %v3603
        %v5845 = vpack.c.b16 %v3631, %v3604
        %v5846 = vpack.c.b16 %v3632, %v3605
        %v5847 = vpack.c.b16 %v3633, %v3606
        %v5848 = vpack.c.b16 %v3634, %v3607
        %v5849 = vpack.c.b16 %v3635, %v3608
        %v5850 = vpack.c.b16 %v3663, %v3636
        %v5851 = vpack.c.b16 %v3664, %v3637
        %v5852 = vpack.c.b16 %v3665, %v3638
        %v5853 = vpack.c.b16 %v3666, %v3639
        %v5854 = vpack.c.b16 %v3667, %v3640
        %v5855 = vpack.c.b16 %v3668, %v3641
        %v5856 = vpack.c.b16 %v3669, %v3642
        %v5857 = vpack.c.b16 %v3670, %v3643
        %v5858 = vpack.c.b16 %v3671, %v3644
        %v5859 = vpack.c.b16 %v3672, %v3645
        %v5860 = vpack.c.b16 %v3673, %v3646
        %v5861 = vpack.c.b16 %v3674, %v3647
        %v5862 = vpack.c.b16 %v3675, %v3648
        %v5863 = vpack.c.b16 %v3676, %v3649
        %v5864 = vpack.c.b16 %v3677, %v3650
        %v5865 = vpack.c.b16 %v3678, %v3651
        %v5866 = vpack.c.b16 %v3679, %v3652
        %v5867 = vpack.c.b16 %v3680, %v3653
        %v5868 = vpack.c.b16 %v3681, %v3654
        %v5869 = vpack.c.b16 %v3682, %v3655
        %v5870 = vpack.c.b16 %v3683, %v3656
        %v5871 = vpack.c.b16 %v3684, %v3657
        %v5872 = vpack.c.b16 %v3685, %v3658
        %v5873 = vpack.c.b16 %v3686, %v3659
        %v5874 = vpack.c.b16 %v3687, %v3660
        %v5875 = vpack.c.b16 %v3688, %v3661
        %v5876 = vpack.c.b16 %v3689, %v3662
        %v5877 = vpack.c.b16 %v3717, %v3690
        %v5878 = vpack.c.b16 %v3718, %v3691
        %v5879 = vpack.c.b16 %v3719, %v3692
        %v5880 = vpack.c.b16 %v3720, %v3693
        %v5881 = vpack.c.b16 %v3721, %v3694
        %v5882 = vpack.c.b16 %v3722, %v3695
        %v5883 = vpack.c.b16 %v3723, %v3696
        %v5884 = vpack.c.b16 %v3724, %v3697
        %v5885 = vpack.c.b16 %v3725, %v3698
        %v5886 = vpack.c.b16 %v3726, %v3699
        %v5887 = vpack.c.b16 %v3727, %v3700
        %v5888 = vpack.c.b16 %v3728, %v3701
        %v5889 = vpack.c.b16 %v3729, %v3702
        %v5890 = vpack.c.b16 %v3730, %v3703
        %v5891 = vpack.c.b16 %v3731, %v3704
        %v5892 = vpack.c.b16 %v3732, %v3705
        %v5893 = vpack.c.b16 %v3733, %v3706
        %v5894 = vpack.c.b16 %v3734, %v3707
        %v5895 = vpack.c.b16 %v3735, %v3708
        %v5896 = vpack.c.b16 %v3736, %v3709
        %v5897 = vpack.c.b16 %v3737, %v3710
        %v5898 = vpack.c.b16 %v3738, %v3711
        %v5899 = vpack.c.b16 %v3739, %v3712
        %v5900 = vpack.c.b16 %v3740, %v3713
        %v5901 = vpack.c.b16 %v3741, %v3714
        %v5902 = vpack.c.b16 %v3742, %v3715
        %v5903 = vpack.c.b16 %v3743, %v3716
        %v5904 = vpack.c.b16 %v3771, %v3744
        %v5905 = vpack.c.b16 %v3772, %v3745
        %v5906 = vpack.c.b16 %v3773, %v3746
        %v5907 = vpack.c.b16 %v3774, %v3747
        %v5908 = vpack.c.b16 %v3775, %v3748
        %v5909 = vpack.c.b16 %v3776, %v3749
        %v5910 = vpack.c.b16 %v3777, %v3750
        %v5911 = vpack.c.b16 %v3778, %v3751
        %v5912 = vpack.c.b16 %v3779, %v3752
        %v5913 = vpack.c.b16 %v3780, %v3753
        %v5914 = vpack.c.b16 %v3781, %v3754
        %v5915 = vpack.c.b16 %v3782, %v3755
        %v5916 = vpack.c.b16 %v3783, %v3756
        %v5917 = vpack.c.b16 %v3784, %v3757
        %v5918 = vpack.c.b16 %v3785, %v3758
        %v5919 = vpack.c.b16 %v3786, %v3759
        %v5920 = vpack.c.b16 %v3787, %v3760
        %v5921 = vpack.c.b16 %v3788, %v3761
        %v5922 = vpack.c.b16 %v3789, %v3762
        %v5923 = vpack.c.b16 %v3790, %v3763
        %v5924 = vpack.c.b16 %v3791, %v3764
        %v5925 = vpack.c.b16 %v3792, %v3765
        %v5926 = vpack.c.b16 %v3793, %v3766
        %v5927 = vpack.c.b16 %v3794, %v3767
        %v5928 = vpack.c.b16 %v3795, %v3768
        %v5929 = vpack.c.b16 %v3796, %v3769
        %v5930 = vpack.c.b16 %v3797, %v3770
        %v5931 = vpack.c.b16 %v3825, %v3798
        %v5932 = vpack.c.b16 %v3826, %v3799
        %v5933 = vpack.c.b16 %v3827, %v3800
        %v5934 = vpack.c.b16 %v3828, %v3801
        %v5935 = vpack.c.b16 %v3829, %v3802
        %v5936 = vpack.c.b16 %v3830, %v3803
        %v5937 = vpack.c.b16 %v3831, %v3804
        %v5938 = vpack.c.b16 %v3832, %v3805
        %v5939 = vpack.c.b16 %v3833, %v3806
        %v5940 = vpack.c.b16 %v3834, %v3807
        %v5941 = vpack.c.b16 %v3835, %v3808
        %v5942 = vpack.c.b16 %v3836, %v3809
        %v5943 = vpack.c.b16 %v3837, %v3810
        %v5944 = vpack.c.b16 %v3838, %v3811
        %v5945 = vpack.c.b16 %v3839, %v3812
        %v5946 = vpack.c.b16 %v3840, %v3813
        %v5947 = vpack.c.b16 %v3841, %v3814
        %v5948 = vpack.c.b16 %v3842, %v3815
        %v5949 = vpack.c.b16 %v3843, %v3816
        %v5950 = vpack.c.b16 %v3844, %v3817
        %v5951 = vpack.c.b16 %v3845, %v3818
        %v5952 = vpack.c.b16 %v3846, %v3819
        %v5953 = vpack.c.b16 %v3847, %v3820
        %v5954 = vpack.c.b16 %v3848, %v3821
        %v5955 = vpack.c.b16 %v3849, %v3822
        %v5956 = vpack.c.b16 %v3850, %v3823
        %v5957 = vpack.c.b16 %v3851, %v3824
        %v5958 = vpack.c.b16 %v3879, %v3852
        %v5959 = vpack.c.b16 %v3880, %v3853
        %v5960 = vpack.c.b16 %v3881, %v3854
        %v5961 = vpack.c.b16 %v3882, %v3855
        %v5962 = vpack.c.b16 %v3883, %v3856
        %v5963 = vpack.c.b16 %v3884, %v3857
        %v5964 = vpack.c.b16 %v3885, %v3858
        %v5965 = vpack.c.b16 %v3886, %v3859
        %v5966 = vpack.c.b16 %v3887, %v3860
        %v5967 = vpack.c.b16 %v3888, %v3861
        %v5968 = vpack.c.b16 %v3889, %v3862
        %v5969 = vpack.c.b16 %v3890, %v3863
        %v5970 = vpack.c.b16 %v3891, %v3864
        %v5971 = vpack.c.b16 %v3892, %v3865
        %v5972 = vpack.c.b16 %v3893, %v3866
        %v5973 = vpack.c.b16 %v3894, %v3867
        %v5974 = vpack.c.b16 %v3895, %v3868
        %v5975 = vpack.c.b16 %v3896, %v3869
        %v5976 = vpack.c.b16 %v3897, %v3870
        %v5977 = vpack.c.b16 %v3898, %v3871
        %v5978 = vpack.c.b16 %v3899, %v3872
        %v5979 = vpack.c.b16 %v3900, %v3873
        %v5980 = vpack.c.b16 %v3901, %v3874
        %v5981 = vpack.c.b16 %v3902, %v3875
        %v5982 = vpack.c.b16 %v3903, %v3876
        %v5983 = vpack.c.b16 %v3904, %v3877
        %v5984 = vpack.c.b16 %v3905, %v3878
        %v5985 = vpack.c.b16 %v3933, %v3906
        %v5986 = vpack.c.b16 %v3934, %v3907
        %v5987 = vpack.c.b16 %v3935, %v3908
        %v5988 = vpack.c.b16 %v3936, %v3909
        %v5989 = vpack.c.b16 %v3937, %v3910
        %v5990 = vpack.c.b16 %v3938, %v3911
        %v5991 = vpack.c.b16 %v3939, %v3912
        %v5992 = vpack.c.b16 %v3940, %v3913
        %v5993 = vpack.c.b16 %v3941, %v3914
        %v5994 = vpack.c.b16 %v3942, %v3915
        %v5995 = vpack.c.b16 %v3943, %v3916
        %v5996 = vpack.c.b16 %v3944, %v3917
        %v5997 = vpack.c.b16 %v3945, %v3918
        %v5998 = vpack.c.b16 %v3946, %v3919
        %v5999 = vpack.c.b16 %v3947, %v3920
        %v6000 = vpack.c.b16 %v3948, %v3921
        %v6001 = vpack.c.b16 %v3949, %v3922
        %v6002 = vpack.c.b16 %v3950, %v3923
        %v6003 = vpack.c.b16 %v3951, %v3924
        %v6004 = vpack.c.b16 %v3952, %v3925
        %v6005 = vpack.c.b16 %v3953, %v3926
        %v6006 = vpack.c.b16 %v3954, %v3927
        %v6007 = vpack.c.b16 %v3955, %v3928
        %v6008 = vpack.c.b16 %v3956, %v3929
        %v6009 = vpack.c.b16 %v3957, %v3930
        %v6010 = vpack.c.b16 %v3958, %v3931
        %v6011 = vpack.c.b16 %v3959, %v3932
        %v6012 = vpack.c.b16 %v3987, %v3960
        %v6013 = vpack.c.b16 %v3988, %v3961
        %v6014 = vpack.c.b16 %v3989, %v3962
        %v6015 = vpack.c.b16 %v3990, %v3963
        %v6016 = vpack.c.b16 %v3991, %v3964
        %v6017 = vpack.c.b16 %v3992, %v3965
        %v6018 = vpack.c.b16 %v3993, %v3966
        %v6019 = vpack.c.b16 %v3994, %v3967
        %v6020 = vpack.c.b16 %v3995, %v3968
        %v6021 = vpack.c.b16 %v3996, %v3969
        %v6022 = vpack.c.b16 %v3997, %v3970
        %v6023 = vpack.c.b16 %v3998, %v3971
        %v6024 = vpack.c.b16 %v3999, %v3972
        %v6025 = vpack.c.b16 %v4000, %v3973
        %v6026 = vpack.c.b16 %v4001, %v3974
        %v6027 = vpack.c.b16 %v4002, %v3975
        %v6028 = vpack.c.b16 %v4003, %v3976
        %v6029 = vpack.c.b16 %v4004, %v3977
        %v6030 = vpack.c.b16 %v4005, %v3978
        %v6031 = vpack.c.b16 %v4006, %v3979
        %v6032 = vpack.c.b16 %v4007, %v3980
        %v6033 = vpack.c.b16 %v4008, %v3981
        %v6034 = vpack.c.b16 %v4009, %v3982
        %v6035 = vpack.c.b16 %v4010, %v3983
        %v6036 = vpack.c.b16 %v4011, %v3984
        %v6037 = vpack.c.b16 %v4012, %v3985
        %v6038 = vpack.c.b16 %v4013, %v3986
        %v6039 = vpack.c.b16 %v4041, %v4014
        %v6040 = vpack.c.b16 %v4042, %v4015
        %v6041 = vpack.c.b16 %v4043, %v4016
        %v6042 = vpack.c.b16 %v4044, %v4017
        %v6043 = vpack.c.b16 %v4045, %v4018
        %v6044 = vpack.c.b16 %v4046, %v4019
        %v6045 = vpack.c.b16 %v4047, %v4020
        %v6046 = vpack.c.b16 %v4048, %v4021
        %v6047 = vpack.c.b16 %v4049, %v4022
        %v6048 = vpack.c.b16 %v4050, %v4023
        %v6049 = vpack.c.b16 %v4051, %v4024
        %v6050 = vpack.c.b16 %v4052, %v4025
        %v6051 = vpack.c.b16 %v4053, %v4026
        %v6052 = vpack.c.b16 %v4054, %v4027
        %v6053 = vpack.c.b16 %v4055, %v4028
        %v6054 = vpack.c.b16 %v4056, %v4029
        %v6055 = vpack.c.b16 %v4057, %v4030
        %v6056 = vpack.c.b16 %v4058, %v4031
        %v6057 = vpack.c.b16 %v4059, %v4032
        %v6058 = vpack.c.b16 %v4060, %v4033
        %v6059 = vpack.c.b16 %v4061, %v4034
        %v6060 = vpack.c.b16 %v4062, %v4035
        %v6061 = vpack.c.b16 %v4063, %v4036
        %v6062 = vpack.c.b16 %v4064, %v4037
        %v6063 = vpack.c.b16 %v4065, %v4038
        %v6064 = vpack.c.b16 %v4066, %v4039
        %v6065 = vpack.c.b16 %v4067, %v4040
        %v6066 = vpack.c.b16 %v4095, %v4068
        %v6067 = vpack.c.b16 %v4096, %v4069
        %v6068 = vpack.c.b16 %v4097, %v4070
        %v6069 = vpack.c.b16 %v4098, %v4071
        %v6070 = vpack.c.b16 %v4099, %v4072
        %v6071 = vpack.c.b16 %v4100, %v4073
        %v6072 = vpack.c.b16 %v4101, %v4074
        %v6073 = vpack.c.b16 %v4102, %v4075
        %v6074 = vpack.c.b16 %v4103, %v4076
        %v6075 = vpack.c.b16 %v4104, %v4077
        %v6076 = vpack.c.b16 %v4105, %v4078
        %v6077 = vpack.c.b16 %v4106, %v4079
        %v6078 = vpack.c.b16 %v4107, %v4080
        %v6079 = vpack.c.b16 %v4108, %v4081
        %v6080 = vpack.c.b16 %v4109, %v4082
        %v6081 = vpack.c.b16 %v4110, %v4083
        %v6082 = vpack.c.b16 %v4111, %v4084
        %v6083 = vpack.c.b16 %v4112, %v4085
        %v6084 = vpack.c.b16 %v4113, %v4086
        %v6085 = vpack.c.b16 %v4114, %v4087
        %v6086 = vpack.c.b16 %v4115, %v4088
        %v6087 = vpack.c.b16 %v4116, %v4089
        %v6088 = vpack.c.b16 %v4117, %v4090
        %v6089 = vpack.c.b16 %v4118, %v4091
        %v6090 = vpack.c.b16 %v4119, %v4092
        %v6091 = vpack.c.b16 %v4120, %v4093
        %v6092 = vpack.c.b16 %v4121, %v4094
        %v6093 = vpack.c.b16 %v4149, %v4122
        %v6094 = vpack.c.b16 %v4150, %v4123
        %v6095 = vpack.c.b16 %v4151, %v4124
        %v6096 = vpack.c.b16 %v4152, %v4125
        %v6097 = vpack.c.b16 %v4153, %v4126
        %v6098 = vpack.c.b16 %v4154, %v4127
        %v6099 = vpack.c.b16 %v4155, %v4128
        %v6100 = vpack.c.b16 %v4156, %v4129
        %v6101 = vpack.c.b16 %v4157, %v4130
        %v6102 = vpack.c.b16 %v4158, %v4131
        %v6103 = vpack.c.b16 %v4159, %v4132
        %v6104 = vpack.c.b16 %v4160, %v4133
        %v6105 = vpack.c.b16 %v4161, %v4134
        %v6106 = vpack.c.b16 %v4162, %v4135
        %v6107 = vpack.c.b16 %v4163, %v4136
        %v6108 = vpack.c.b16 %v4164, %v4137
        %v6109 = vpack.c.b16 %v4165, %v4138
        %v6110 = vpack.c.b16 %v4166, %v4139
        %v6111 = vpack.c.b16 %v4167, %v4140
        %v6112 = vpack.c.b16 %v4168, %v4141
        %v6113 = vpack.c.b16 %v4169, %v4142
        %v6114 = vpack.c.b16 %v4170, %v4143
        %v6115 = vpack.c.b16 %v4171, %v4144
        %v6116 = vpack.c.b16 %v4172, %v4145
        %v6117 = vpack.c.b16 %v4173, %v4146
        %v6118 = vpack.c.b16 %v4174, %v4147
        %v6119 = vpack.c.b16 %v4175, %v4148
        %v6120 = vpack.c.b16 %v4203, %v4176
        %v6121 = vpack.c.b16 %v4204, %v4177
        %v6122 = vpack.c.b16 %v4205, %v4178
        %v6123 = vpack.c.b16 %v4206, %v4179
        %v6124 = vpack.c.b16 %v4207, %v4180
        %v6125 = vpack.c.b16 %v4208, %v4181
        %v6126 = vpack.c.b16 %v4209, %v4182
        %v6127 = vpack.c.b16 %v4210, %v4183
        %v6128 = vpack.c.b16 %v4211, %v4184
        %v6129 = vpack.c.b16 %v4212, %v4185
        %v6130 = vpack.c.b16 %v4213, %v4186
        %v6131 = vpack.c.b16 %v4214, %v4187
        %v6132 = vpack.c.b16 %v4215, %v4188
        %v6133 = vpack.c.b16 %v4216, %v4189
        %v6134 = vpack.c.b16 %v4217, %v4190
        %v6135 = vpack.c.b16 %v4218, %v4191
        %v6136 = vpack.c.b16 %v4219, %v4192
        %v6137 = vpack.c.b16 %v4220, %v4193
        %v6138 = vpack.c.b16 %v4221, %v4194
        %v6139 = vpack.c.b16 %v4222, %v4195
        %v6140 = vpack.c.b16 %v4223, %v4196
        %v6141 = vpack.c.b16 %v4224, %v4197
        %v6142 = vpack.c.b16 %v4225, %v4198
        %v6143 = vpack.c.b16 %v4226, %v4199
        %v6144 = vpack.c.b16 %v4227, %v4200
        %v6145 = vpack.c.b16 %v4228, %v4201
        %v6146 = vpack.c.b16 %v4229, %v4202
        %v6147 = vpack.c.b16 %v4257, %v4230
        %v6148 = vpack.c.b16 %v4258, %v4231
        %v6149 = vpack.c.b16 %v4259, %v4232
        %v6150 = vpack.c.b16 %v4260, %v4233
        %v6151 = vpack.c.b16 %v4261, %v4234
        %v6152 = vpack.c.b16 %v4262, %v4235
        %v6153 = vpack.c.b16 %v4263, %v4236
        %v6154 = vpack.c.b16 %v4264, %v4237
        %v6155 = vpack.c.b16 %v4265, %v4238
        %v6156 = vpack.c.b16 %v4266, %v4239
        %v6157 = vpack.c.b16 %v4267, %v4240
        %v6158 = vpack.c.b16 %v4268, %v4241
        %v6159 = vpack.c.b16 %v4269, %v4242
        %v6160 = vpack.c.b16 %v4270, %v4243
        %v6161 = vpack.c.b16 %v4271, %v4244
        %v6162 = vpack.c.b16 %v4272, %v4245
        %v6163 = vpack.c.b16 %v4273, %v4246
        %v6164 = vpack.c.b16 %v4274, %v4247
        %v6165 = vpack.c.b16 %v4275, %v4248
        %v6166 = vpack.c.b16 %v4276, %v4249
        %v6167 = vpack.c.b16 %v4277, %v4250
        %v6168 = vpack.c.b16 %v4278, %v4251
        %v6169 = vpack.c.b16 %v4279, %v4252
        %v6170 = vpack.c.b16 %v4280, %v4253
        %v6171 = vpack.c.b16 %v4281, %v4254
        %v6172 = vpack.c.b16 %v4282, %v4255
        %v6173 = vpack.c.b16 %v4283, %v4256
        %v6174 = vpack.c.b16 %v4311, %v4284
        %v6175 = vpack.c.b16 %v4312, %v4285
        %v6176 = vpack.c.b16 %v4313, %v4286
        %v6177 = vpack.c.b16 %v4314, %v4287
        %v6178 = vpack.c.b16 %v4315, %v4288
        %v6179 = vpack.c.b16 %v4316, %v4289
        %v6180 = vpack.c.b16 %v4317, %v4290
        %v6181 = vpack.c.b16 %v4318, %v4291
        %v6182 = vpack.c.b16 %v4319, %v4292
        %v6183 = vpack.c.b16 %v4320, %v4293
        %v6184 = vpack.c.b16 %v4321, %v4294
        %v6185 = vpack.c.b16 %v4322, %v4295
        %v6186 = vpack.c.b16 %v4323, %v4296
        %v6187 = vpack.c.b16 %v4324, %v4297
        %v6188 = vpack.c.b16 %v4325, %v4298
        %v6189 = vpack.c.b16 %v4326, %v4299
        %v6190 = vpack.c.b16 %v4327, %v4300
        %v6191 = vpack.c.b16 %v4328, %v4301
        %v6192 = vpack.c.b16 %v4329, %v4302
        %v6193 = vpack.c.b16 %v4330, %v4303
        %v6194 = vpack.c.b16 %v4331, %v4304
        %v6195 = vpack.c.b16 %v4332, %v4305
        %v6196 = vpack.c.b16 %v4333, %v4306
        %v6197 = vpack.c.b16 %v4334, %v4307
        %v6198 = vpack.c.b16 %v4335, %v4308
        %v6199 = vpack.c.b16 %v4336, %v4309
        %v6200 = vpack.c.b16 %v4337, %v4310
        %v6201 = vpack.c.b16 %v4365, %v4338
        %v6202 = vpack.c.b16 %v4366, %v4339
        %v6203 = vpack.c.b16 %v4367, %v4340
        %v6204 = vpack.c.b16 %v4368, %v4341
        %v6205 = vpack.c.b16 %v4369, %v4342
        %v6206 = vpack.c.b16 %v4370, %v4343
        %v6207 = vpack.c.b16 %v4371, %v4344
        %v6208 = vpack.c.b16 %v4372, %v4345
        %v6209 = vpack.c.b16 %v4373, %v4346
        %v6210 = vpack.c.b16 %v4374, %v4347
        %v6211 = vpack.c.b16 %v4375, %v4348
        %v6212 = vpack.c.b16 %v4376, %v4349
        %v6213 = vpack.c.b16 %v4377, %v4350
        %v6214 = vpack.c.b16 %v4378, %v4351
        %v6215 = vpack.c.b16 %v4379, %v4352
        %v6216 = vpack.c.b16 %v4380, %v4353
        %v6217 = vpack.c.b16 %v4381, %v4354
        %v6218 = vpack.c.b16 %v4382, %v4355
        %v6219 = vpack.c.b16 %v4383, %v4356
        %v6220 = vpack.c.b16 %v4384, %v4357
        %v6221 = vpack.c.b16 %v4385, %v4358
        %v6222 = vpack.c.b16 %v4386, %v4359
        %v6223 = vpack.c.b16 %v4387, %v4360
        %v6224 = vpack.c.b16 %v4388, %v4361
        %v6225 = vpack.c.b16 %v4389, %v4362
        %v6226 = vpack.c.b16 %v4390, %v4363
        %v6227 = vpack.c.b16 %v4391, %v4364
        %v6228 = vpack.c.b16 %v4419, %v4392
        %v6229 = vpack.c.b16 %v4420, %v4393
        %v6230 = vpack.c.b16 %v4421, %v4394
        %v6231 = vpack.c.b16 %v4422, %v4395
        %v6232 = vpack.c.b16 %v4423, %v4396
        %v6233 = vpack.c.b16 %v4424, %v4397
        %v6234 = vpack.c.b16 %v4425, %v4398
        %v6235 = vpack.c.b16 %v4426, %v4399
        %v6236 = vpack.c.b16 %v4427, %v4400
        %v6237 = vpack.c.b16 %v4428, %v4401
        %v6238 = vpack.c.b16 %v4429, %v4402
        %v6239 = vpack.c.b16 %v4430, %v4403
        %v6240 = vpack.c.b16 %v4431, %v4404
        %v6241 = vpack.c.b16 %v4432, %v4405
        %v6242 = vpack.c.b16 %v4433, %v4406
        %v6243 = vpack.c.b16 %v4434, %v4407
        %v6244 = vpack.c.b16 %v4435, %v4408
        %v6245 = vpack.c.b16 %v4436, %v4409
        %v6246 = vpack.c.b16 %v4437, %v4410
        %v6247 = vpack.c.b16 %v4438, %v4411
        %v6248 = vpack.c.b16 %v4439, %v4412
        %v6249 = vpack.c.b16 %v4440, %v4413
        %v6250 = vpack.c.b16 %v4441, %v4414
        %v6251 = vpack.c.b16 %v4442, %v4415
        %v6252 = vpack.c.b16 %v4443, %v4416
        %v6253 = vpack.c.b16 %v4444, %v4417
        %v6254 = vpack.c.b16 %v4445, %v4418
        %v6255 = vpack.c.b16 %v4473, %v4446
        %v6256 = vpack.c.b16 %v4474, %v4447
        %v6257 = vpack.c.b16 %v4475, %v4448
        %v6258 = vpack.c.b16 %v4476, %v4449
        %v6259 = vpack.c.b16 %v4477, %v4450
        %v6260 = vpack.c.b16 %v4478, %v4451
        %v6261 = vpack.c.b16 %v4479, %v4452
        %v6262 = vpack.c.b16 %v4480, %v4453
        %v6263 = vpack.c.b16 %v4481, %v4454
        %v6264 = vpack.c.b16 %v4482, %v4455
        %v6265 = vpack.c.b16 %v4483, %v4456
        %v6266 = vpack.c.b16 %v4484, %v4457
        %v6267 = vpack.c.b16 %v4485, %v4458
        %v6268 = vpack.c.b16 %v4486, %v4459
        %v6269 = vpack.c.b16 %v4487, %v4460
        %v6270 = vpack.c.b16 %v4488, %v4461
        %v6271 = vpack.c.b16 %v4489, %v4462
        %v6272 = vpack.c.b16 %v4490, %v4463
        %v6273 = vpack.c.b16 %v4491, %v4464
        %v6274 = vpack.c.b16 %v4492, %v4465
        %v6275 = vpack.c.b16 %v4493, %v4466
        %v6276 = vpack.c.b16 %v4494, %v4467
        %v6277 = vpack.c.b16 %v4495, %v4468
        %v6278 = vpack.c.b16 %v4496, %v4469
        %v6279 = vpack.c.b16 %v4497, %v4470
        %v6280 = vpack.c.b16 %v4498, %v4471
        %v6281 = vpack.c.b16 %v4499, %v4472
        %v6282 = vpack.c.b16 %v4527, %v4500
        %v6283 = vpack.c.b16 %v4528, %v4501
        %v6284 = vpack.c.b16 %v4529, %v4502
        %v6285 = vpack.c.b16 %v4530, %v4503
        %v6286 = vpack.c.b16 %v4531, %v4504
        %v6287 = vpack.c.b16 %v4532, %v4505
        %v6288 = vpack.c.b16 %v4533, %v4506
        %v6289 = vpack.c.b16 %v4534, %v4507
        %v6290 = vpack.c.b16 %v4535, %v4508
        %v6291 = vpack.c.b16 %v4536, %v4509
        %v6292 = vpack.c.b16 %v4537, %v4510
        %v6293 = vpack.c.b16 %v4538, %v4511
        %v6294 = vpack.c.b16 %v4539, %v4512
        %v6295 = vpack.c.b16 %v4540, %v4513
        %v6296 = vpack.c.b16 %v4541, %v4514
        %v6297 = vpack.c.b16 %v4542, %v4515
        %v6298 = vpack.c.b16 %v4543, %v4516
        %v6299 = vpack.c.b16 %v4544, %v4517
        %v6300 = vpack.c.b16 %v4545, %v4518
        %v6301 = vpack.c.b16 %v4546, %v4519
        %v6302 = vpack.c.b16 %v4547, %v4520
        %v6303 = vpack.c.b16 %v4548, %v4521
        %v6304 = vpack.c.b16 %v4549, %v4522
        %v6305 = vpack.c.b16 %v4550, %v4523
        %v6306 = vpack.c.b16 %v4551, %v4524
        %v6307 = vpack.c.b16 %v4552, %v4525
        %v6308 = vpack.c.b16 %v4553, %v4526
        %v6309 = vpack.c.b16 %v4581, %v4554
        %v6310 = vpack.c.b16 %v4582, %v4555
        %v6311 = vpack.c.b16 %v4583, %v4556
        %v6312 = vpack.c.b16 %v4584, %v4557
        %v6313 = vpack.c.b16 %v4585, %v4558
        %v6314 = vpack.c.b16 %v4586, %v4559
        %v6315 = vpack.c.b16 %v4587, %v4560
        %v6316 = vpack.c.b16 %v4588, %v4561
        %v6317 = vpack.c.b16 %v4589, %v4562
        %v6318 = vpack.c.b16 %v4590, %v4563
        %v6319 = vpack.c.b16 %v4591, %v4564
        %v6320 = vpack.c.b16 %v4592, %v4565
        %v6321 = vpack.c.b16 %v4593, %v4566
        %v6322 = vpack.c.b16 %v4594, %v4567
        %v6323 = vpack.c.b16 %v4595, %v4568
        %v6324 = vpack.c.b16 %v4596, %v4569
        %v6325 = vpack.c.b16 %v4597, %v4570
        %v6326 = vpack.c.b16 %v4598, %v4571
        %v6327 = vpack.c.b16 %v4599, %v4572
        %v6328 = vpack.c.b16 %v4600, %v4573
        %v6329 = vpack.c.b16 %v4601, %v4574
        %v6330 = vpack.c.b16 %v4602, %v4575
        %v6331 = vpack.c.b16 %v4603, %v4576
        %v6332 = vpack.c.b16 %v4604, %v4577
        %v6333 = vpack.c.b16 %v4605, %v4578
        %v6334 = vpack.c.b16 %v4606, %v4579
        %v6335 = vpack.c.b16 %v4607, %v4580
        %v6336 = vpack.c.b16 %v4635, %v4608
        %v6337 = vpack.c.b16 %v4636, %v4609
        %v6338 = vpack.c.b16 %v4637, %v4610
        %v6339 = vpack.c.b16 %v4638, %v4611
        %v6340 = vpack.c.b16 %v4639, %v4612
        %v6341 = vpack.c.b16 %v4640, %v4613
        %v6342 = vpack.c.b16 %v4641, %v4614
        %v6343 = vpack.c.b16 %v4642, %v4615
        %v6344 = vpack.c.b16 %v4643, %v4616
        %v6345 = vpack.c.b16 %v4644, %v4617
        %v6346 = vpack.c.b16 %v4645, %v4618
        %v6347 = vpack.c.b16 %v4646, %v4619
        %v6348 = vpack.c.b16 %v4647, %v4620
        %v6349 = vpack.c.b16 %v4648, %v4621
        %v6350 = vpack.c.b16 %v4649, %v4622
        %v6351 = vpack.c.b16 %v4650, %v4623
        %v6352 = vpack.c.b16 %v4651, %v4624
        %v6353 = vpack.c.b16 %v4652, %v4625
        %v6354 = vpack.c.b16 %v4653, %v4626
        %v6355 = vpack.c.b16 %v4654, %v4627
        %v6356 = vpack.c.b16 %v4655, %v4628
        %v6357 = vpack.c.b16 %v4656, %v4629
        %v6358 = vpack.c.b16 %v4657, %v4630
        %v6359 = vpack.c.b16 %v4658, %v4631
        %v6360 = vpack.c.b16 %v4659, %v4632
        %v6361 = vpack.c.b16 %v4660, %v4633
        %v6362 = vpack.c.b16 %v4661, %v4634
        %v6363 = vpack.c.b16 %v4689, %v4662
        %v6364 = vpack.c.b16 %v4690, %v4663
        %v6365 = vpack.c.b16 %v4691, %v4664
        %v6366 = vpack.c.b16 %v4692, %v4665
        %v6367 = vpack.c.b16 %v4693, %v4666
        %v6368 = vpack.c.b16 %v4694, %v4667
        %v6369 = vpack.c.b16 %v4695, %v4668
        %v6370 = vpack.c.b16 %v4696, %v4669
        %v6371 = vpack.c.b16 %v4697, %v4670
        %v6372 = vpack.c.b16 %v4698, %v4671
        %v6373 = vpack.c.b16 %v4699, %v4672
        %v6374 = vpack.c.b16 %v4700, %v4673
        %v6375 = vpack.c.b16 %v4701, %v4674
        %v6376 = vpack.c.b16 %v4702, %v4675
        %v6377 = vpack.c.b16 %v4703, %v4676
        %v6378 = vpack.c.b16 %v4704, %v4677
        %v6379 = vpack.c.b16 %v4705, %v4678
        %v6380 = vpack.c.b16 %v4706, %v4679
        %v6381 = vpack.c.b16 %v4707, %v4680
        %v6382 = vpack.c.b16 %v4708, %v4681
        %v6383 = vpack.c.b16 %v4709, %v4682
        %v6384 = vpack.c.b16 %v4710, %v4683
        %v6385 = vpack.c.b16 %v4711, %v4684
        %v6386 = vpack.c.b16 %v4712, %v4685
        %v6387 = vpack.c.b16 %v4713, %v4686
        %v6388 = vpack.c.b16 %v4714, %v4687
        %v6389 = vpack.c.b16 %v4715, %v4688
        %v6390 = vpack.c.b16 %v4743, %v4716
        %v6391 = vpack.c.b16 %v4744, %v4717
        %v6392 = vpack.c.b16 %v4745, %v4718
        %v6393 = vpack.c.b16 %v4746, %v4719
        %v6394 = vpack.c.b16 %v4747, %v4720
        %v6395 = vpack.c.b16 %v4748, %v4721
        %v6396 = vpack.c.b16 %v4749, %v4722
        %v6397 = vpack.c.b16 %v4750, %v4723
        %v6398 = vpack.c.b16 %v4751, %v4724
        %v6399 = vpack.c.b16 %v4752, %v4725
        %v6400 = vpack.c.b16 %v4753, %v4726
        %v6401 = vpack.c.b16 %v4754, %v4727
        %v6402 = vpack.c.b16 %v4755, %v4728
        %v6403 = vpack.c.b16 %v4756, %v4729
        %v6404 = vpack.c.b16 %v4757, %v4730
        %v6405 = vpack.c.b16 %v4758, %v4731
        %v6406 = vpack.c.b16 %v4759, %v4732
        %v6407 = vpack.c.b16 %v4760, %v4733
        %v6408 = vpack.c.b16 %v4761, %v4734
        %v6409 = vpack.c.b16 %v4762, %v4735
        %v6410 = vpack.c.b16 %v4763, %v4736
        %v6411 = vpack.c.b16 %v4764, %v4737
        %v6412 = vpack.c.b16 %v4765, %v4738
        %v6413 = vpack.c.b16 %v4766, %v4739
        %v6414 = vpack.c.b16 %v4767, %v4740
        %v6415 = vpack.c.b16 %v4768, %v4741
        %v6416 = vpack.c.b16 %v4769, %v4742
        %v6417 = vpack.c.b16 %v4797, %v4770
        %v6418 = vpack.c.b16 %v4798, %v4771
        %v6419 = vpack.c.b16 %v4799, %v4772
        %v6420 = vpack.c.b16 %v4800, %v4773
        %v6421 = vpack.c.b16 %v4801, %v4774
        %v6422 = vpack.c.b16 %v4802, %v4775
        %v6423 = vpack.c.b16 %v4803, %v4776
        %v6424 = vpack.c.b16 %v4804, %v4777
        %v6425 = vpack.c.b16 %v4805, %v4778
        %v6426 = vpack.c.b16 %v4806, %v4779
        %v6427 = vpack.c.b16 %v4807, %v4780
        %v6428 = vpack.c.b16 %v4808, %v4781
        %v6429 = vpack.c.b16 %v4809, %v4782
        %v6430 = vpack.c.b16 %v4810, %v4783
        %v6431 = vpack.c.b16 %v4811, %v4784
        %v6432 = vpack.c.b16 %v4812, %v4785
        %v6433 = vpack.c.b16 %v4813, %v4786
        %v6434 = vpack.c.b16 %v4814, %v4787
        %v6435 = vpack.c.b16 %v4815, %v4788
        %v6436 = vpack.c.b16 %v4816, %v4789
        %v6437 = vpack.c.b16 %v4817, %v4790
        %v6438 = vpack.c.b16 %v4818, %v4791
        %v6439 = vpack.c.b16 %v4819, %v4792
        %v6440 = vpack.c.b16 %v4820, %v4793
        %v6441 = vpack.c.b16 %v4821, %v4794
        %v6442 = vpack.c.b16 %v4822, %v4795
        %v6443 = vpack.c.b16 %v4823, %v4796
        %v6444 = vpack.c.b16 %v4851, %v4824
        %v6445 = vpack.c.b16 %v4852, %v4825
        %v6446 = vpack.c.b16 %v4853, %v4826
        %v6447 = vpack.c.b16 %v4854, %v4827
        %v6448 = vpack.c.b16 %v4855, %v4828
        %v6449 = vpack.c.b16 %v4856, %v4829
        %v6450 = vpack.c.b16 %v4857, %v4830
        %v6451 = vpack.c.b16 %v4858, %v4831
        %v6452 = vpack.c.b16 %v4859, %v4832
        %v6453 = vpack.c.b16 %v4860, %v4833
        %v6454 = vpack.c.b16 %v4861, %v4834
        %v6455 = vpack.c.b16 %v4862, %v4835
        %v6456 = vpack.c.b16 %v4863, %v4836
        %v6457 = vpack.c.b16 %v4864, %v4837
        %v6458 = vpack.c.b16 %v4865, %v4838
        %v6459 = vpack.c.b16 %v4866, %v4839
        %v6460 = vpack.c.b16 %v4867, %v4840
        %v6461 = vpack.c.b16 %v4868, %v4841
        %v6462 = vpack.c.b16 %v4869, %v4842
        %v6463 = vpack.c.b16 %v4870, %v4843
        %v6464 = vpack.c.b16 %v4871, %v4844
        %v6465 = vpack.c.b16 %v4872, %v4845
        %v6466 = vpack.c.b16 %v4873, %v4846
        %v6467 = vpack.c.b16 %v4874, %v4847
        %v6468 = vpack.c.b16 %v4875, %v4848
        %v6469 = vpack.c.b16 %v4876, %v4849
        %v6470 = vpack.c.b16 %v4877, %v4850
        %v6471 = vpack.c.b16 %v4905, %v4878
        %v6472 = vpack.c.b16 %v4906, %v4879
        %v6473 = vpack.c.b16 %v4907, %v4880
        %v6474 = vpack.c.b16 %v4908, %v4881
        %v6475 = vpack.c.b16 %v4909, %v4882
        %v6476 = vpack.c.b16 %v4910, %v4883
        %v6477 = vpack.c.b16 %v4911, %v4884
        %v6478 = vpack.c.b16 %v4912, %v4885
        %v6479 = vpack.c.b16 %v4913, %v4886
        %v6480 = vpack.c.b16 %v4914, %v4887
        %v6481 = vpack.c.b16 %v4915, %v4888
        %v6482 = vpack.c.b16 %v4916, %v4889
        %v6483 = vpack.c.b16 %v4917, %v4890
        %v6484 = vpack.c.b16 %v4918, %v4891
        %v6485 = vpack.c.b16 %v4919, %v4892
        %v6486 = vpack.c.b16 %v4920, %v4893
        %v6487 = vpack.c.b16 %v4921, %v4894
        %v6488 = vpack.c.b16 %v4922, %v4895
        %v6489 = vpack.c.b16 %v4923, %v4896
        %v6490 = vpack.c.b16 %v4924, %v4897
        %v6491 = vpack.c.b16 %v4925, %v4898
        %v6492 = vpack.c.b16 %v4926, %v4899
        %v6493 = vpack.c.b16 %v4927, %v4900
        %v6494 = vpack.c.b16 %v4928, %v4901
        %v6495 = vpack.c.b16 %v4929, %v4902
        %v6496 = vpack.c.b16 %v4930, %v4903
        %v6497 = vpack.c.b16 %v4931, %v4904
        %v6498 = vpack.c.b16 %v4959, %v4932
        %v6499 = vpack.c.b16 %v4960, %v4933
        %v6500 = vpack.c.b16 %v4961, %v4934
        %v6501 = vpack.c.b16 %v4962, %v4935
        %v6502 = vpack.c.b16 %v4963, %v4936
        %v6503 = vpack.c.b16 %v4964, %v4937
        %v6504 = vpack.c.b16 %v4965, %v4938
        %v6505 = vpack.c.b16 %v4966, %v4939
        %v6506 = vpack.c.b16 %v4967, %v4940
        %v6507 = vpack.c.b16 %v4968, %v4941
        %v6508 = vpack.c.b16 %v4969, %v4942
        %v6509 = vpack.c.b16 %v4970, %v4943
        %v6510 = vpack.c.b16 %v4971, %v4944
        %v6511 = vpack.c.b16 %v4972, %v4945
        %v6512 = vpack.c.b16 %v4973, %v4946
        %v6513 = vpack.c.b16 %v4974, %v4947
        %v6514 = vpack.c.b16 %v4975, %v4948
        %v6515 = vpack.c.b16 %v4976, %v4949
        %v6516 = vpack.c.b16 %v4977, %v4950
        %v6517 = vpack.c.b16 %v4978, %v4951
        %v6518 = vpack.c.b16 %v4979, %v4952
        %v6519 = vpack.c.b16 %v4980, %v4953
        %v6520 = vpack.c.b16 %v4981, %v4954
        %v6521 = vpack.c.b16 %v4982, %v4955
        %v6522 = vpack.c.b16 %v4983, %v4956
        %v6523 = vpack.c.b16 %v4984, %v4957
        %v6524 = vpack.c.b16 %v4985, %v4958
        %v6525 = vpack.c.b16 %v5013, %v4986
        %v6526 = vpack.c.b16 %v5014, %v4987
        %v6527 = vpack.c.b16 %v5015, %v4988
        %v6528 = vpack.c.b16 %v5016, %v4989
        %v6529 = vpack.c.b16 %v5017, %v4990
        %v6530 = vpack.c.b16 %v5018, %v4991
        %v6531 = vpack.c.b16 %v5019, %v4992
        %v6532 = vpack.c.b16 %v5020, %v4993
        %v6533 = vpack.c.b16 %v5021, %v4994
        %v6534 = vpack.c.b16 %v5022, %v4995
        %v6535 = vpack.c.b16 %v5023, %v4996
        %v6536 = vpack.c.b16 %v5024, %v4997
        %v6537 = vpack.c.b16 %v5025, %v4998
        %v6538 = vpack.c.b16 %v5026, %v4999
        %v6539 = vpack.c.b16 %v5027, %v5000
        %v6540 = vpack.c.b16 %v5028, %v5001
        %v6541 = vpack.c.b16 %v5029, %v5002
        %v6542 = vpack.c.b16 %v5030, %v5003
        %v6543 = vpack.c.b16 %v5031, %v5004
        %v6544 = vpack.c.b16 %v5032, %v5005
        %v6545 = vpack.c.b16 %v5033, %v5006
        %v6546 = vpack.c.b16 %v5034, %v5007
        %v6547 = vpack.c.b16 %v5035, %v5008
        %v6548 = vpack.c.b16 %v5036, %v5009
        %v6549 = vpack.c.b16 %v5037, %v5010
        %v6550 = vpack.c.b16 %v5038, %v5011
        %v6551 = vpack.c.b16 %v5039, %v5012
        %v6552 = vpack.c.b16 %v5067, %v5040
        %v6553 = vpack.c.b16 %v5068, %v5041
        %v6554 = vpack.c.b16 %v5069, %v5042
        %v6555 = vpack.c.b16 %v5070, %v5043
        %v6556 = vpack.c.b16 %v5071, %v5044
        %v6557 = vpack.c.b16 %v5072, %v5045
        %v6558 = vpack.c.b16 %v5073, %v5046
        %v6559 = vpack.c.b16 %v5074, %v5047
        %v6560 = vpack.c.b16 %v5075, %v5048
        %v6561 = vpack.c.b16 %v5076, %v5049
        %v6562 = vpack.c.b16 %v5077, %v5050
        %v6563 = vpack.c.b16 %v5078, %v5051
        %v6564 = vpack.c.b16 %v5079, %v5052
        %v6565 = vpack.c.b16 %v5080, %v5053
        %v6566 = vpack.c.b16 %v5081, %v5054
        %v6567 = vpack.c.b16 %v5082, %v5055
        %v6568 = vpack.c.b16 %v5083, %v5056
        %v6569 = vpack.c.b16 %v5084, %v5057
        %v6570 = vpack.c.b16 %v5085, %v5058
        %v6571 = vpack.c.b16 %v5086, %v5059
        %v6572 = vpack.c.b16 %v5087, %v5060
        %v6573 = vpack.c.b16 %v5088, %v5061
        %v6574 = vpack.c.b16 %v5089, %v5062
        %v6575 = vpack.c.b16 %v5090, %v5063
        %v6576 = vpack.c.b16 %v5091, %v5064
        %v6577 = vpack.c.b16 %v5092, %v5065
        %v6578 = vpack.c.b16 %v5093, %v5066
        %v6579 = vpack.c.b16 %v5121, %v5094
        %v6580 = vpack.c.b16 %v5122, %v5095
        %v6581 = vpack.c.b16 %v5123, %v5096
        %v6582 = vpack.c.b16 %v5124, %v5097
        %v6583 = vpack.c.b16 %v5125, %v5098
        %v6584 = vpack.c.b16 %v5126, %v5099
        %v6585 = vpack.c.b16 %v5127, %v5100
        %v6586 = vpack.c.b16 %v5128, %v5101
        %v6587 = vpack.c.b16 %v5129, %v5102
        %v6588 = vpack.c.b16 %v5130, %v5103
        %v6589 = vpack.c.b16 %v5131, %v5104
        %v6590 = vpack.c.b16 %v5132, %v5105
        %v6591 = vpack.c.b16 %v5133, %v5106
        %v6592 = vpack.c.b16 %v5134, %v5107
        %v6593 = vpack.c.b16 %v5135, %v5108
        %v6594 = vpack.c.b16 %v5136, %v5109
        %v6595 = vpack.c.b16 %v5137, %v5110
        %v6596 = vpack.c.b16 %v5138, %v5111
        %v6597 = vpack.c.b16 %v5139, %v5112
        %v6598 = vpack.c.b16 %v5140, %v5113
        %v6599 = vpack.c.b16 %v5141, %v5114
        %v6600 = vpack.c.b16 %v5142, %v5115
        %v6601 = vpack.c.b16 %v5143, %v5116
        %v6602 = vpack.c.b16 %v5144, %v5117
        %v6603 = vpack.c.b16 %v5145, %v5118
        %v6604 = vpack.c.b16 %v5146, %v5119
        %v6605 = vpack.c.b16 %v5147, %v5120
        %v6606 = vpack.c.b16 %v5175, %v5148
        %v6607 = vpack.c.b16 %v5176, %v5149
        %v6608 = vpack.c.b16 %v5177, %v5150
        %v6609 = vpack.c.b16 %v5178, %v5151
        %v6610 = vpack.c.b16 %v5179, %v5152
        %v6611 = vpack.c.b16 %v5180, %v5153
        %v6612 = vpack.c.b16 %v5181, %v5154
        %v6613 = vpack.c.b16 %v5182, %v5155
        %v6614 = vpack.c.b16 %v5183, %v5156
        %v6615 = vpack.c.b16 %v5184, %v5157
        %v6616 = vpack.c.b16 %v5185, %v5158
        %v6617 = vpack.c.b16 %v5186, %v5159
        %v6618 = vpack.c.b16 %v5187, %v5160
        %v6619 = vpack.c.b16 %v5188, %v5161
        %v6620 = vpack.c.b16 %v5189, %v5162
        %v6621 = vpack.c.b16 %v5190, %v5163
        %v6622 = vpack.c.b16 %v5191, %v5164
        %v6623 = vpack.c.b16 %v5192, %v5165
        %v6624 = vpack.c.b16 %v5193, %v5166
        %v6625 = vpack.c.b16 %v5194, %v5167
        %v6626 = vpack.c.b16 %v5195, %v5168
        %v6627 = vpack.c.b16 %v5196, %v5169
        %v6628 = vpack.c.b16 %v5197, %v5170
        %v6629 = vpack.c.b16 %v5198, %v5171
        %v6630 = vpack.c.b16 %v5199, %v5172
        %v6631 = vpack.c.b16 %v5200, %v5173
        %v6632 = vpack.c.b16 %v5201, %v5174
        %v6633 = vpack.c.b16 %v5229, %v5202
        %v6634 = vpack.c.b16 %v5230, %v5203
        %v6635 = vpack.c.b16 %v5231, %v5204
        %v6636 = vpack.c.b16 %v5232, %v5205
        %v6637 = vpack.c.b16 %v5233, %v5206
        %v6638 = vpack.c.b16 %v5234, %v5207
        %v6639 = vpack.c.b16 %v5235, %v5208
        %v6640 = vpack.c.b16 %v5236, %v5209
        %v6641 = vpack.c.b16 %v5237, %v5210
        %v6642 = vpack.c.b16 %v5238, %v5211
        %v6643 = vpack.c.b16 %v5239, %v5212
        %v6644 = vpack.c.b16 %v5240, %v5213
        %v6645 = vpack.c.b16 %v5241, %v5214
        %v6646 = vpack.c.b16 %v5242, %v5215
        %v6647 = vpack.c.b16 %v5243, %v5216
        %v6648 = vpack.c.b16 %v5244, %v5217
        %v6649 = vpack.c.b16 %v5245, %v5218
        %v6650 = vpack.c.b16 %v5246, %v5219
        %v6651 = vpack.c.b16 %v5247, %v5220
        %v6652 = vpack.c.b16 %v5248, %v5221
        %v6653 = vpack.c.b16 %v5249, %v5222
        %v6654 = vpack.c.b16 %v5250, %v5223
        %v6655 = vpack.c.b16 %v5251, %v5224
        %v6656 = vpack.c.b16 %v5252, %v5225
        %v6657 = vpack.c.b16 %v5253, %v5226
        %v6658 = vpack.c.b16 %v5254, %v5227
        %v6659 = vpack.c.b16 %v5255, %v5228
        %v6660 = vpack.c.b16 %v5283, %v5256
        %v6661 = vpack.c.b16 %v5284, %v5257
        %v6662 = vpack.c.b16 %v5285, %v5258
        %v6663 = vpack.c.b16 %v5286, %v5259
        %v6664 = vpack.c.b16 %v5287, %v5260
        %v6665 = vpack.c.b16 %v5288, %v5261
        %v6666 = vpack.c.b16 %v5289, %v5262
        %v6667 = vpack.c.b16 %v5290, %v5263
        %v6668 = vpack.c.b16 %v5291, %v5264
        %v6669 = vpack.c.b16 %v5292, %v5265
        %v6670 = vpack.c.b16 %v5293, %v5266
        %v6671 = vpack.c.b16 %v5294, %v5267
        %v6672 = vpack.c.b16 %v5295, %v5268
        %v6673 = vpack.c.b16 %v5296, %v5269
        %v6674 = vpack.c.b16 %v5297, %v5270
        %v6675 = vpack.c.b16 %v5298, %v5271
        %v6676 = vpack.c.b16 %v5299, %v5272
        %v6677 = vpack.c.b16 %v5300, %v5273
        %v6678 = vpack.c.b16 %v5301, %v5274
        %v6679 = vpack.c.b16 %v5302, %v5275
        %v6680 = vpack.c.b16 %v5303, %v5276
        %v6681 = vpack.c.b16 %v5304, %v5277
        %v6682 = vpack.c.b16 %v5305, %v5278
        %v6683 = vpack.c.b16 %v5306, %v5279
        %v6684 = vpack.c.b16 %v5307, %v5280
        %v6685 = vpack.c.b16 %v5308, %v5281
        %v6686 = vpack.c.b16 %v5309, %v5282
        %v6687 = vpack.c.b16 %v5337, %v5310
        %v6688 = vpack.c.b16 %v5338, %v5311
        %v6689 = vpack.c.b16 %v5339, %v5312
        %v6690 = vpack.c.b16 %v5340, %v5313
        %v6691 = vpack.c.b16 %v5341, %v5314
        %v6692 = vpack.c.b16 %v5342, %v5315
        %v6693 = vpack.c.b16 %v5343, %v5316
        %v6694 = vpack.c.b16 %v5344, %v5317
        %v6695 = vpack.c.b16 %v5345, %v5318
        %v6696 = vpack.c.b16 %v5346, %v5319
        %v6697 = vpack.c.b16 %v5347, %v5320
        %v6698 = vpack.c.b16 %v5348, %v5321
        %v6699 = vpack.c.b16 %v5349, %v5322
        %v6700 = vpack.c.b16 %v5350, %v5323
        %v6701 = vpack.c.b16 %v5351, %v5324
        %v6702 = vpack.c.b16 %v5352, %v5325
        %v6703 = vpack.c.b16 %v5353, %v5326
        %v6704 = vpack.c.b16 %v5354, %v5327
        %v6705 = vpack.c.b16 %v5355, %v5328
        %v6706 = vpack.c.b16 %v5356, %v5329
        %v6707 = vpack.c.b16 %v5357, %v5330
        %v6708 = vpack.c.b16 %v5358, %v5331
        %v6709 = vpack.c.b16 %v5359, %v5332
        %v6710 = vpack.c.b16 %v5360, %v5333
        %v6711 = vpack.c.b16 %v5361, %v5334
        %v6712 = vpack.c.b16 %v5362, %v5335
        %v6713 = vpack.c.b16 %v5363, %v5336
        %v6714 = vpack.c.b16 %v5391, %v5364
        %v6715 = vpack.c.b16 %v5392, %v5365
        %v6716 = vpack.c.b16 %v5393, %v5366
        %v6717 = vpack.c.b16 %v5394, %v5367
        %v6718 = vpack.c.b16 %v5395, %v5368
        %v6719 = vpack.c.b16 %v5396, %v5369
        %v6720 = vpack.c.b16 %v5397, %v5370
        %v6721 = vpack.c.b16 %v5398, %v5371
        %v6722 = vpack.c.b16 %v5399, %v5372
        %v6723 = vpack.c.b16 %v5400, %v5373
        %v6724 = vpack.c.b16 %v5401, %v5374
        %v6725 = vpack.c.b16 %v5402, %v5375
        %v6726 = vpack.c.b16 %v5403, %v5376
        %v6727 = vpack.c.b16 %v5404, %v5377
        %v6728 = vpack.c.b16 %v5405, %v5378
        %v6729 = vpack.c.b16 %v5406, %v5379
        %v6730 = vpack.c.b16 %v5407, %v5380
        %v6731 = vpack.c.b16 %v5408, %v5381
        %v6732 = vpack.c.b16 %v5409, %v5382
        %v6733 = vpack.c.b16 %v5410, %v5383
        %v6734 = vpack.c.b16 %v5411, %v5384
        %v6735 = vpack.c.b16 %v5412, %v5385
        %v6736 = vpack.c.b16 %v5413, %v5386
        %v6737 = vpack.c.b16 %v5414, %v5387
        %v6738 = vpack.c.b16 %v5415, %v5388
        %v6739 = vpack.c.b16 %v5416, %v5389
        %v6740 = vpack.c.b16 %v5417, %v5390
        %v6741 = vpack.c.b16 %v5445, %v5418
        %v6742 = vpack.c.b16 %v5446, %v5419
        %v6743 = vpack.c.b16 %v5447, %v5420
        %v6744 = vpack.c.b16 %v5448, %v5421
        %v6745 = vpack.c.b16 %v5449, %v5422
        %v6746 = vpack.c.b16 %v5450, %v5423
        %v6747 = vpack.c.b16 %v5451, %v5424
        %v6748 = vpack.c.b16 %v5452, %v5425
        %v6749 = vpack.c.b16 %v5453, %v5426
        %v6750 = vpack.c.b16 %v5454, %v5427
        %v6751 = vpack.c.b16 %v5455, %v5428
        %v6752 = vpack.c.b16 %v5456, %v5429
        %v6753 = vpack.c.b16 %v5457, %v5430
        %v6754 = vpack.c.b16 %v5458, %v5431
        %v6755 = vpack.c.b16 %v5459, %v5432
        %v6756 = vpack.c.b16 %v5460, %v5433
        %v6757 = vpack.c.b16 %v5461, %v5434
        %v6758 = vpack.c.b16 %v5462, %v5435
        %v6759 = vpack.c.b16 %v5463, %v5436
        %v6760 = vpack.c.b16 %v5464, %v5437
        %v6761 = vpack.c.b16 %v5465, %v5438
        %v6762 = vpack.c.b16 %v5466, %v5439
        %v6763 = vpack.c.b16 %v5467, %v5440
        %v6764 = vpack.c.b16 %v5468, %v5441
        %v6765 = vpack.c.b16 %v5469, %v5442
        %v6766 = vpack.c.b16 %v5470, %v5443
        %v6767 = vpack.c.b16 %v5471, %v5444
        %8064 = vmatpush.bf16.msra.mxu0 %v5661
        %8065 = vmatpush.bf16.msra.mxu0 %v5634
        %8066 = vmatpush.bf16.msra.mxu0 %v5607
        %8067 = vmatpush.bf16.msra.mxu0 %v5580
        %8068 = vmatpush.bf16.msra.mxu0 %v5553
        %8069 = vmatpush.bf16.msra.mxu0 %v5526
        %8070 = vmatpush.bf16.msra.mxu0 %v5499
        %8071 = vmatpush.bf16.msra.mxu0 %v5472
        %8072 = vmatmul.bf16.gmra.mxu0 %v1524
        %v8073 = vpop.f32.mrf.mxu0
        %v8074 = vadd.f32 0.0, %v8073
        %v8075 = vpop.f32.mrf.mxu0
        %8076 = vdwg.mxu0
        %8077 = vmatpush.bf16.msra.mxu0 %v5877
        %8078 = vmatpush.bf16.msra.mxu0 %v5850
        %8079 = vmatpush.bf16.msra.mxu0 %v5823
        %8080 = vmatpush.bf16.msra.mxu0 %v5796
        %8081 = vmatpush.bf16.msra.mxu0 %v5769
        %8082 = vmatpush.bf16.msra.mxu0 %v5742
        %8083 = vmatpush.bf16.msra.mxu0 %v5715
        %8084 = vmatpush.bf16.msra.mxu0 %v5688
        %8085 = vmatmul.bf16.gmra.mxu0 %v1525
        %v8086 = vpop.f32.mrf.mxu0
        %v8087 = vadd.f32 %v8074, %v8086
        %v8088 = vpop.f32.mrf.mxu0
        %8089 = vdwg.mxu0
        %8090 = vmatpush.bf16.msra.mxu0 %v6093
        %8091 = vmatpush.bf16.msra.mxu0 %v6066
        %8092 = vmatpush.bf16.msra.mxu0 %v6039
        %8093 = vmatpush.bf16.msra.mxu0 %v6012
        %8094 = vmatpush.bf16.msra.mxu0 %v5985
        %8095 = vmatpush.bf16.msra.mxu0 %v5958
        %8096 = vmatpush.bf16.msra.mxu0 %v5931
        %8097 = vmatpush.bf16.msra.mxu0 %v5904
        %8098 = vmatmul.bf16.gmra.mxu0 %v1526
        %v8099 = vpop.f32.mrf.mxu0
        %v8100 = vadd.f32 %v8087, %v8099
        %v8101 = vpop.f32.mrf.mxu0
        %8102 = vdwg.mxu0
        %8103 = vmatpush.bf16.msra.mxu0 %v6309
        %8104 = vmatpush.bf16.msra.mxu0 %v6282
        %8105 = vmatpush.bf16.msra.mxu0 %v6255
        %8106 = vmatpush.bf16.msra.mxu0 %v6228
        %8107 = vmatpush.bf16.msra.mxu0 %v6201
        %8108 = vmatpush.bf16.msra.mxu0 %v6174
        %8109 = vmatpush.bf16.msra.mxu0 %v6147
        %8110 = vmatpush.bf16.msra.mxu0 %v6120
        %8111 = vmatmul.bf16.gmra.mxu0 %v1527
        %v8112 = vpop.f32.mrf.mxu0
        %v8113 = vadd.f32 %v8100, %v8112
        %v8114 = vpop.f32.mrf.mxu0
        %8115 = vdwg.mxu0
        %8116 = vmatpush.bf16.msra.mxu0 %v6525
        %8117 = vmatpush.bf16.msra.mxu0 %v6498
        %8118 = vmatpush.bf16.msra.mxu0 %v6471
        %8119 = vmatpush.bf16.msra.mxu0 %v6444
        %8120 = vmatpush.bf16.msra.mxu0 %v6417
        %8121 = vmatpush.bf16.msra.mxu0 %v6390
        %8122 = vmatpush.bf16.msra.mxu0 %v6363
        %8123 = vmatpush.bf16.msra.mxu0 %v6336
        %8124 = vmatmul.bf16.gmra.mxu0 %v1528
        %v8125 = vpop.f32.mrf.mxu0
        %v8126 = vadd.f32 %v8113, %v8125
        %v8127 = vpop.f32.mrf.mxu0
        %8128 = vdwg.mxu0
        %8129 = vmatpush.bf16.msra.mxu0 %v6741
        %8130 = vmatpush.bf16.msra.mxu0 %v6714
        %8131 = vmatpush.bf16.msra.mxu0 %v6687
        %8132 = vmatpush.bf16.msra.mxu0 %v6660
        %8133 = vmatpush.bf16.msra.mxu0 %v6633
        %8134 = vmatpush.bf16.msra.mxu0 %v6606
        %8135 = vmatpush.bf16.msra.mxu0 %v6579
        %8136 = vmatpush.bf16.msra.mxu0 %v6552
        %8137 = vmatmul.bf16.gmra.mxu0 %v1529
        %v8138 = vpop.f32.mrf.mxu0
        %v8139 = vadd.f32 %v8126, %v8138
        %v8140 = vpop.f32.mrf.mxu0
        %8141 = vdwg.mxu0
        %8142 = vmatpush.bf16.msra.mxu0 %v5662
        %8143 = vmatpush.bf16.msra.mxu0 %v5635
        %8144 = vmatpush.bf16.msra.mxu0 %v5608
        %8145 = vmatpush.bf16.msra.mxu0 %v5581
        %8146 = vmatpush.bf16.msra.mxu0 %v5554
        %8147 = vmatpush.bf16.msra.mxu0 %v5527
        %8148 = vmatpush.bf16.msra.mxu0 %v5500
        %8149 = vmatpush.bf16.msra.mxu0 %v5473
        %8150 = vmatmul.bf16.gmra.mxu0 %v1524
        %v8151 = vpop.f32.mrf.mxu0
        %v8152 = vadd.f32 0.0, %v8151
        %v8153 = vpop.f32.mrf.mxu0
        %8154 = vdwg.mxu0
        %8155 = vmatpush.bf16.msra.mxu0 %v5878
        %8156 = vmatpush.bf16.msra.mxu0 %v5851
        %8157 = vmatpush.bf16.msra.mxu0 %v5824
        %8158 = vmatpush.bf16.msra.mxu0 %v5797
        %8159 = vmatpush.bf16.msra.mxu0 %v5770
        %8160 = vmatpush.bf16.msra.mxu0 %v5743
        %8161 = vmatpush.bf16.msra.mxu0 %v5716
        %8162 = vmatpush.bf16.msra.mxu0 %v5689
        %8163 = vmatmul.bf16.gmra.mxu0 %v1525
        %v8164 = vpop.f32.mrf.mxu0
        %v8165 = vadd.f32 %v8152, %v8164
        %v8166 = vpop.f32.mrf.mxu0
        %8167 = vdwg.mxu0
        %8168 = vmatpush.bf16.msra.mxu0 %v6094
        %8169 = vmatpush.bf16.msra.mxu0 %v6067
        %8170 = vmatpush.bf16.msra.mxu0 %v6040
        %8171 = vmatpush.bf16.msra.mxu0 %v6013
        %8172 = vmatpush.bf16.msra.mxu0 %v5986
        %8173 = vmatpush.bf16.msra.mxu0 %v5959
        %8174 = vmatpush.bf16.msra.mxu0 %v5932
        %8175 = vmatpush.bf16.msra.mxu0 %v5905
        %8176 = vmatmul.bf16.gmra.mxu0 %v1526
        %v8177 = vpop.f32.mrf.mxu0
        %v8178 = vadd.f32 %v8165, %v8177
        %v8179 = vpop.f32.mrf.mxu0
        %8180 = vdwg.mxu0
        %8181 = vmatpush.bf16.msra.mxu0 %v6310
        %8182 = vmatpush.bf16.msra.mxu0 %v6283
        %8183 = vmatpush.bf16.msra.mxu0 %v6256
        %8184 = vmatpush.bf16.msra.mxu0 %v6229
        %8185 = vmatpush.bf16.msra.mxu0 %v6202
        %8186 = vmatpush.bf16.msra.mxu0 %v6175
        %8187 = vmatpush.bf16.msra.mxu0 %v6148
        %8188 = vmatpush.bf16.msra.mxu0 %v6121
        %8189 = vmatmul.bf16.gmra.mxu0 %v1527
        %v8190 = vpop.f32.mrf.mxu0
        %v8191 = vadd.f32 %v8178, %v8190
        %v8192 = vpop.f32.mrf.mxu0
        %8193 = vdwg.mxu0
        %8194 = vmatpush.bf16.msra.mxu0 %v6526
        %8195 = vmatpush.bf16.msra.mxu0 %v6499
        %8196 = vmatpush.bf16.msra.mxu0 %v6472
        %8197 = vmatpush.bf16.msra.mxu0 %v6445
        %8198 = vmatpush.bf16.msra.mxu0 %v6418
        %8199 = vmatpush.bf16.msra.mxu0 %v6391
        %8200 = vmatpush.bf16.msra.mxu0 %v6364
        %8201 = vmatpush.bf16.msra.mxu0 %v6337
        %8202 = vmatmul.bf16.gmra.mxu0 %v1528
        %v8203 = vpop.f32.mrf.mxu0
        %v8204 = vadd.f32 %v8191, %v8203
        %v8205 = vpop.f32.mrf.mxu0
        %8206 = vdwg.mxu0
        %8207 = vmatpush.bf16.msra.mxu0 %v6742
        %8208 = vmatpush.bf16.msra.mxu0 %v6715
        %8209 = vmatpush.bf16.msra.mxu0 %v6688
        %8210 = vmatpush.bf16.msra.mxu0 %v6661
        %8211 = vmatpush.bf16.msra.mxu0 %v6634
        %8212 = vmatpush.bf16.msra.mxu0 %v6607
        %8213 = vmatpush.bf16.msra.mxu0 %v6580
        %8214 = vmatpush.bf16.msra.mxu0 %v6553
        %8215 = vmatmul.bf16.gmra.mxu0 %v1529
        %v8216 = vpop.f32.mrf.mxu0
        %v8217 = vadd.f32 %v8204, %v8216
        %v8218 = vpop.f32.mrf.mxu0
        %8219 = vdwg.mxu0
        %8220 = vmatpush.bf16.msra.mxu0 %v5663
        %8221 = vmatpush.bf16.msra.mxu0 %v5636
        %8222 = vmatpush.bf16.msra.mxu0 %v5609
        %8223 = vmatpush.bf16.msra.mxu0 %v5582
        %8224 = vmatpush.bf16.msra.mxu0 %v5555
        %8225 = vmatpush.bf16.msra.mxu0 %v5528
        %8226 = vmatpush.bf16.msra.mxu0 %v5501
        %8227 = vmatpush.bf16.msra.mxu0 %v5474
        %8228 = vmatmul.bf16.gmra.mxu0 %v1524
        %v8229 = vpop.f32.mrf.mxu0
        %v8230 = vadd.f32 0.0, %v8229
        %v8231 = vpop.f32.mrf.mxu0
        %8232 = vdwg.mxu0
        %8233 = vmatpush.bf16.msra.mxu0 %v5879
        %8234 = vmatpush.bf16.msra.mxu0 %v5852
        %8235 = vmatpush.bf16.msra.mxu0 %v5825
        %8236 = vmatpush.bf16.msra.mxu0 %v5798
        %8237 = vmatpush.bf16.msra.mxu0 %v5771
        %8238 = vmatpush.bf16.msra.mxu0 %v5744
        %8239 = vmatpush.bf16.msra.mxu0 %v5717
        %8240 = vmatpush.bf16.msra.mxu0 %v5690
        %8241 = vmatmul.bf16.gmra.mxu0 %v1525
        %v8242 = vpop.f32.mrf.mxu0
        %v8243 = vadd.f32 %v8230, %v8242
        %v8244 = vpop.f32.mrf.mxu0
        %8245 = vdwg.mxu0
        %8246 = vmatpush.bf16.msra.mxu0 %v6095
        %8247 = vmatpush.bf16.msra.mxu0 %v6068
        %8248 = vmatpush.bf16.msra.mxu0 %v6041
        %8249 = vmatpush.bf16.msra.mxu0 %v6014
        %8250 = vmatpush.bf16.msra.mxu0 %v5987
        %8251 = vmatpush.bf16.msra.mxu0 %v5960
        %8252 = vmatpush.bf16.msra.mxu0 %v5933
        %8253 = vmatpush.bf16.msra.mxu0 %v5906
        %8254 = vmatmul.bf16.gmra.mxu0 %v1526
        %v8255 = vpop.f32.mrf.mxu0
        %v8256 = vadd.f32 %v8243, %v8255
        %v8257 = vpop.f32.mrf.mxu0
        %8258 = vdwg.mxu0
        %8259 = vmatpush.bf16.msra.mxu0 %v6311
        %8260 = vmatpush.bf16.msra.mxu0 %v6284
        %8261 = vmatpush.bf16.msra.mxu0 %v6257
        %8262 = vmatpush.bf16.msra.mxu0 %v6230
        %8263 = vmatpush.bf16.msra.mxu0 %v6203
        %8264 = vmatpush.bf16.msra.mxu0 %v6176
        %8265 = vmatpush.bf16.msra.mxu0 %v6149
        %8266 = vmatpush.bf16.msra.mxu0 %v6122
        %8267 = vmatmul.bf16.gmra.mxu0 %v1527
        %v8268 = vpop.f32.mrf.mxu0
        %v8269 = vadd.f32 %v8256, %v8268
        %v8270 = vpop.f32.mrf.mxu0
        %8271 = vdwg.mxu0
        %8272 = vmatpush.bf16.msra.mxu0 %v6527
        %8273 = vmatpush.bf16.msra.mxu0 %v6500
        %8274 = vmatpush.bf16.msra.mxu0 %v6473
        %8275 = vmatpush.bf16.msra.mxu0 %v6446
        %8276 = vmatpush.bf16.msra.mxu0 %v6419
        %8277 = vmatpush.bf16.msra.mxu0 %v6392
        %8278 = vmatpush.bf16.msra.mxu0 %v6365
        %8279 = vmatpush.bf16.msra.mxu0 %v6338
        %8280 = vmatmul.bf16.gmra.mxu0 %v1528
        %v8281 = vpop.f32.mrf.mxu0
        %v8282 = vadd.f32 %v8269, %v8281
        %v8283 = vpop.f32.mrf.mxu0
        %8284 = vdwg.mxu0
        %8285 = vmatpush.bf16.msra.mxu0 %v6743
        %8286 = vmatpush.bf16.msra.mxu0 %v6716
        %8287 = vmatpush.bf16.msra.mxu0 %v6689
        %8288 = vmatpush.bf16.msra.mxu0 %v6662
        %8289 = vmatpush.bf16.msra.mxu0 %v6635
        %8290 = vmatpush.bf16.msra.mxu0 %v6608
        %8291 = vmatpush.bf16.msra.mxu0 %v6581
        %8292 = vmatpush.bf16.msra.mxu0 %v6554
        %8293 = vmatmul.bf16.gmra.mxu0 %v1529
        %v8294 = vpop.f32.mrf.mxu0
        %v8295 = vadd.f32 %v8282, %v8294
        %v8296 = vpop.f32.mrf.mxu0
        %8297 = vdwg.mxu0
        %8298 = vmatpush.bf16.msra.mxu0 %v5664
        %8299 = vmatpush.bf16.msra.mxu0 %v5637
        %8300 = vmatpush.bf16.msra.mxu0 %v5610
        %8301 = vmatpush.bf16.msra.mxu0 %v5583
        %8302 = vmatpush.bf16.msra.mxu0 %v5556
        %8303 = vmatpush.bf16.msra.mxu0 %v5529
        %8304 = vmatpush.bf16.msra.mxu0 %v5502
        %8305 = vmatpush.bf16.msra.mxu0 %v5475
        %8306 = vmatmul.bf16.gmra.mxu0 %v1524
        %v8307 = vpop.f32.mrf.mxu0
        %v8308 = vadd.f32 0.0, %v8307
        %v8309 = vpop.f32.mrf.mxu0
        %8310 = vdwg.mxu0
        %8311 = vmatpush.bf16.msra.mxu0 %v5880
        %8312 = vmatpush.bf16.msra.mxu0 %v5853
        %8313 = vmatpush.bf16.msra.mxu0 %v5826
        %8314 = vmatpush.bf16.msra.mxu0 %v5799
        %8315 = vmatpush.bf16.msra.mxu0 %v5772
        %8316 = vmatpush.bf16.msra.mxu0 %v5745
        %8317 = vmatpush.bf16.msra.mxu0 %v5718
        %8318 = vmatpush.bf16.msra.mxu0 %v5691
        %8319 = vmatmul.bf16.gmra.mxu0 %v1525
        %v8320 = vpop.f32.mrf.mxu0
        %v8321 = vadd.f32 %v8308, %v8320
        %v8322 = vpop.f32.mrf.mxu0
        %8323 = vdwg.mxu0
        %8324 = vmatpush.bf16.msra.mxu0 %v6096
        %8325 = vmatpush.bf16.msra.mxu0 %v6069
        %8326 = vmatpush.bf16.msra.mxu0 %v6042
        %8327 = vmatpush.bf16.msra.mxu0 %v6015
        %8328 = vmatpush.bf16.msra.mxu0 %v5988
        %8329 = vmatpush.bf16.msra.mxu0 %v5961
        %8330 = vmatpush.bf16.msra.mxu0 %v5934
        %8331 = vmatpush.bf16.msra.mxu0 %v5907
        %8332 = vmatmul.bf16.gmra.mxu0 %v1526
        %v8333 = vpop.f32.mrf.mxu0
        %v8334 = vadd.f32 %v8321, %v8333
        %v8335 = vpop.f32.mrf.mxu0
        %8336 = vdwg.mxu0
        %8337 = vmatpush.bf16.msra.mxu0 %v6312
        %8338 = vmatpush.bf16.msra.mxu0 %v6285
        %8339 = vmatpush.bf16.msra.mxu0 %v6258
        %8340 = vmatpush.bf16.msra.mxu0 %v6231
        %8341 = vmatpush.bf16.msra.mxu0 %v6204
        %8342 = vmatpush.bf16.msra.mxu0 %v6177
        %8343 = vmatpush.bf16.msra.mxu0 %v6150
        %8344 = vmatpush.bf16.msra.mxu0 %v6123
        %8345 = vmatmul.bf16.gmra.mxu0 %v1527
        %v8346 = vpop.f32.mrf.mxu0
        %v8347 = vadd.f32 %v8334, %v8346
        %v8348 = vpop.f32.mrf.mxu0
        %8349 = vdwg.mxu0
        %8350 = vmatpush.bf16.msra.mxu0 %v6528
        %8351 = vmatpush.bf16.msra.mxu0 %v6501
        %8352 = vmatpush.bf16.msra.mxu0 %v6474
        %8353 = vmatpush.bf16.msra.mxu0 %v6447
        %8354 = vmatpush.bf16.msra.mxu0 %v6420
        %8355 = vmatpush.bf16.msra.mxu0 %v6393
        %8356 = vmatpush.bf16.msra.mxu0 %v6366
        %8357 = vmatpush.bf16.msra.mxu0 %v6339
        %8358 = vmatmul.bf16.gmra.mxu0 %v1528
        %v8359 = vpop.f32.mrf.mxu0
        %v8360 = vadd.f32 %v8347, %v8359
        %v8361 = vpop.f32.mrf.mxu0
        %8362 = vdwg.mxu0
        %8363 = vmatpush.bf16.msra.mxu0 %v6744
        %8364 = vmatpush.bf16.msra.mxu0 %v6717
        %8365 = vmatpush.bf16.msra.mxu0 %v6690
        %8366 = vmatpush.bf16.msra.mxu0 %v6663
        %8367 = vmatpush.bf16.msra.mxu0 %v6636
        %8368 = vmatpush.bf16.msra.mxu0 %v6609
        %8369 = vmatpush.bf16.msra.mxu0 %v6582
        %8370 = vmatpush.bf16.msra.mxu0 %v6555
        %8371 = vmatmul.bf16.gmra.mxu0 %v1529
        %v8372 = vpop.f32.mrf.mxu0
        %v8373 = vadd.f32 %v8360, %v8372
        %v8374 = vpop.f32.mrf.mxu0
        %8375 = vdwg.mxu0
        %8376 = vmatpush.bf16.msra.mxu0 %v5665
        %8377 = vmatpush.bf16.msra.mxu0 %v5638
        %8378 = vmatpush.bf16.msra.mxu0 %v5611
        %8379 = vmatpush.bf16.msra.mxu0 %v5584
        %8380 = vmatpush.bf16.msra.mxu0 %v5557
        %8381 = vmatpush.bf16.msra.mxu0 %v5530
        %8382 = vmatpush.bf16.msra.mxu0 %v5503
        %8383 = vmatpush.bf16.msra.mxu0 %v5476
        %8384 = vmatmul.bf16.gmra.mxu0 %v1524
        %v8385 = vpop.f32.mrf.mxu0
        %v8386 = vadd.f32 0.0, %v8385
        %v8387 = vpop.f32.mrf.mxu0
        %8388 = vdwg.mxu0
        %8389 = vmatpush.bf16.msra.mxu0 %v5881
        %8390 = vmatpush.bf16.msra.mxu0 %v5854
        %8391 = vmatpush.bf16.msra.mxu0 %v5827
        %8392 = vmatpush.bf16.msra.mxu0 %v5800
        %8393 = vmatpush.bf16.msra.mxu0 %v5773
        %8394 = vmatpush.bf16.msra.mxu0 %v5746
        %8395 = vmatpush.bf16.msra.mxu0 %v5719
        %8396 = vmatpush.bf16.msra.mxu0 %v5692
        %8397 = vmatmul.bf16.gmra.mxu0 %v1525
        %v8398 = vpop.f32.mrf.mxu0
        %v8399 = vadd.f32 %v8386, %v8398
        %v8400 = vpop.f32.mrf.mxu0
        %8401 = vdwg.mxu0
        %8402 = vmatpush.bf16.msra.mxu0 %v6097
        %8403 = vmatpush.bf16.msra.mxu0 %v6070
        %8404 = vmatpush.bf16.msra.mxu0 %v6043
        %8405 = vmatpush.bf16.msra.mxu0 %v6016
        %8406 = vmatpush.bf16.msra.mxu0 %v5989
        %8407 = vmatpush.bf16.msra.mxu0 %v5962
        %8408 = vmatpush.bf16.msra.mxu0 %v5935
        %8409 = vmatpush.bf16.msra.mxu0 %v5908
        %8410 = vmatmul.bf16.gmra.mxu0 %v1526
        %v8411 = vpop.f32.mrf.mxu0
        %v8412 = vadd.f32 %v8399, %v8411
        %v8413 = vpop.f32.mrf.mxu0
        %8414 = vdwg.mxu0
        %8415 = vmatpush.bf16.msra.mxu0 %v6313
        %8416 = vmatpush.bf16.msra.mxu0 %v6286
        %8417 = vmatpush.bf16.msra.mxu0 %v6259
        %8418 = vmatpush.bf16.msra.mxu0 %v6232
        %8419 = vmatpush.bf16.msra.mxu0 %v6205
        %8420 = vmatpush.bf16.msra.mxu0 %v6178
        %8421 = vmatpush.bf16.msra.mxu0 %v6151
        %8422 = vmatpush.bf16.msra.mxu0 %v6124
        %8423 = vmatmul.bf16.gmra.mxu0 %v1527
        %v8424 = vpop.f32.mrf.mxu0
        %v8425 = vadd.f32 %v8412, %v8424
        %v8426 = vpop.f32.mrf.mxu0
        %8427 = vdwg.mxu0
        %8428 = vmatpush.bf16.msra.mxu0 %v6529
        %8429 = vmatpush.bf16.msra.mxu0 %v6502
        %8430 = vmatpush.bf16.msra.mxu0 %v6475
        %8431 = vmatpush.bf16.msra.mxu0 %v6448
        %8432 = vmatpush.bf16.msra.mxu0 %v6421
        %8433 = vmatpush.bf16.msra.mxu0 %v6394
        %8434 = vmatpush.bf16.msra.mxu0 %v6367
        %8435 = vmatpush.bf16.msra.mxu0 %v6340
        %8436 = vmatmul.bf16.gmra.mxu0 %v1528
        %v8437 = vpop.f32.mrf.mxu0
        %v8438 = vadd.f32 %v8425, %v8437
        %v8439 = vpop.f32.mrf.mxu0
        %8440 = vdwg.mxu0
        %8441 = vmatpush.bf16.msra.mxu0 %v6745
        %8442 = vmatpush.bf16.msra.mxu0 %v6718
        %8443 = vmatpush.bf16.msra.mxu0 %v6691
        %8444 = vmatpush.bf16.msra.mxu0 %v6664
        %8445 = vmatpush.bf16.msra.mxu0 %v6637
        %8446 = vmatpush.bf16.msra.mxu0 %v6610
        %8447 = vmatpush.bf16.msra.mxu0 %v6583
        %8448 = vmatpush.bf16.msra.mxu0 %v6556
        %8449 = vmatmul.bf16.gmra.mxu0 %v1529
        %v8450 = vpop.f32.mrf.mxu0
        %v8451 = vadd.f32 %v8438, %v8450
        %v8452 = vpop.f32.mrf.mxu0
        %8453 = vdwg.mxu0
        %8454 = vmatpush.bf16.msra.mxu0 %v5666
        %8455 = vmatpush.bf16.msra.mxu0 %v5639
        %8456 = vmatpush.bf16.msra.mxu0 %v5612
        %8457 = vmatpush.bf16.msra.mxu0 %v5585
        %8458 = vmatpush.bf16.msra.mxu0 %v5558
        %8459 = vmatpush.bf16.msra.mxu0 %v5531
        %8460 = vmatpush.bf16.msra.mxu0 %v5504
        %8461 = vmatpush.bf16.msra.mxu0 %v5477
        %8462 = vmatmul.bf16.gmra.mxu0 %v1524
        %v8463 = vpop.f32.mrf.mxu0
        %v8464 = vadd.f32 0.0, %v8463
        %v8465 = vpop.f32.mrf.mxu0
        %8466 = vdwg.mxu0
        %8467 = vmatpush.bf16.msra.mxu0 %v5882
        %8468 = vmatpush.bf16.msra.mxu0 %v5855
        %8469 = vmatpush.bf16.msra.mxu0 %v5828
        %8470 = vmatpush.bf16.msra.mxu0 %v5801
        %8471 = vmatpush.bf16.msra.mxu0 %v5774
        %8472 = vmatpush.bf16.msra.mxu0 %v5747
        %8473 = vmatpush.bf16.msra.mxu0 %v5720
        %8474 = vmatpush.bf16.msra.mxu0 %v5693
        %8475 = vmatmul.bf16.gmra.mxu0 %v1525
        %v8476 = vpop.f32.mrf.mxu0
        %v8477 = vadd.f32 %v8464, %v8476
        %v8478 = vpop.f32.mrf.mxu0
        %8479 = vdwg.mxu0
        %8480 = vmatpush.bf16.msra.mxu0 %v6098
        %8481 = vmatpush.bf16.msra.mxu0 %v6071
        %8482 = vmatpush.bf16.msra.mxu0 %v6044
        %8483 = vmatpush.bf16.msra.mxu0 %v6017
        %8484 = vmatpush.bf16.msra.mxu0 %v5990
        %8485 = vmatpush.bf16.msra.mxu0 %v5963
        %8486 = vmatpush.bf16.msra.mxu0 %v5936
        %8487 = vmatpush.bf16.msra.mxu0 %v5909
        %8488 = vmatmul.bf16.gmra.mxu0 %v1526
        %v8489 = vpop.f32.mrf.mxu0
        %v8490 = vadd.f32 %v8477, %v8489
        %v8491 = vpop.f32.mrf.mxu0
        %8492 = vdwg.mxu0
        %8493 = vmatpush.bf16.msra.mxu0 %v6314
        %8494 = vmatpush.bf16.msra.mxu0 %v6287
        %8495 = vmatpush.bf16.msra.mxu0 %v6260
        %8496 = vmatpush.bf16.msra.mxu0 %v6233
        %8497 = vmatpush.bf16.msra.mxu0 %v6206
        %8498 = vmatpush.bf16.msra.mxu0 %v6179
        %8499 = vmatpush.bf16.msra.mxu0 %v6152
        %8500 = vmatpush.bf16.msra.mxu0 %v6125
        %8501 = vmatmul.bf16.gmra.mxu0 %v1527
        %v8502 = vpop.f32.mrf.mxu0
        %v8503 = vadd.f32 %v8490, %v8502
        %v8504 = vpop.f32.mrf.mxu0
        %8505 = vdwg.mxu0
        %8506 = vmatpush.bf16.msra.mxu0 %v6530
        %8507 = vmatpush.bf16.msra.mxu0 %v6503
        %8508 = vmatpush.bf16.msra.mxu0 %v6476
        %8509 = vmatpush.bf16.msra.mxu0 %v6449
        %8510 = vmatpush.bf16.msra.mxu0 %v6422
        %8511 = vmatpush.bf16.msra.mxu0 %v6395
        %8512 = vmatpush.bf16.msra.mxu0 %v6368
        %8513 = vmatpush.bf16.msra.mxu0 %v6341
        %8514 = vmatmul.bf16.gmra.mxu0 %v1528
        %v8515 = vpop.f32.mrf.mxu0
        %v8516 = vadd.f32 %v8503, %v8515
        %v8517 = vpop.f32.mrf.mxu0
        %8518 = vdwg.mxu0
        %8519 = vmatpush.bf16.msra.mxu0 %v6746
        %8520 = vmatpush.bf16.msra.mxu0 %v6719
        %8521 = vmatpush.bf16.msra.mxu0 %v6692
        %8522 = vmatpush.bf16.msra.mxu0 %v6665
        %8523 = vmatpush.bf16.msra.mxu0 %v6638
        %8524 = vmatpush.bf16.msra.mxu0 %v6611
        %8525 = vmatpush.bf16.msra.mxu0 %v6584
        %8526 = vmatpush.bf16.msra.mxu0 %v6557
        %8527 = vmatmul.bf16.gmra.mxu0 %v1529
        %v8528 = vpop.f32.mrf.mxu0
        %v8529 = vadd.f32 %v8516, %v8528
        %v8530 = vpop.f32.mrf.mxu0
        %8531 = vdwg.mxu0
        %8532 = vmatpush.bf16.msra.mxu0 %v5667
        %8533 = vmatpush.bf16.msra.mxu0 %v5640
        %8534 = vmatpush.bf16.msra.mxu0 %v5613
        %8535 = vmatpush.bf16.msra.mxu0 %v5586
        %8536 = vmatpush.bf16.msra.mxu0 %v5559
        %8537 = vmatpush.bf16.msra.mxu0 %v5532
        %8538 = vmatpush.bf16.msra.mxu0 %v5505
        %8539 = vmatpush.bf16.msra.mxu0 %v5478
        %8540 = vmatmul.bf16.gmra.mxu0 %v1524
        %v8541 = vpop.f32.mrf.mxu0
        %v8542 = vadd.f32 0.0, %v8541
        %v8543 = vpop.f32.mrf.mxu0
        %8544 = vdwg.mxu0
        %8545 = vmatpush.bf16.msra.mxu0 %v5883
        %8546 = vmatpush.bf16.msra.mxu0 %v5856
        %8547 = vmatpush.bf16.msra.mxu0 %v5829
        %8548 = vmatpush.bf16.msra.mxu0 %v5802
        %8549 = vmatpush.bf16.msra.mxu0 %v5775
        %8550 = vmatpush.bf16.msra.mxu0 %v5748
        %8551 = vmatpush.bf16.msra.mxu0 %v5721
        %8552 = vmatpush.bf16.msra.mxu0 %v5694
        %8553 = vmatmul.bf16.gmra.mxu0 %v1525
        %v8554 = vpop.f32.mrf.mxu0
        %v8555 = vadd.f32 %v8542, %v8554
        %v8556 = vpop.f32.mrf.mxu0
        %8557 = vdwg.mxu0
        %8558 = vmatpush.bf16.msra.mxu0 %v6099
        %8559 = vmatpush.bf16.msra.mxu0 %v6072
        %8560 = vmatpush.bf16.msra.mxu0 %v6045
        %8561 = vmatpush.bf16.msra.mxu0 %v6018
        %8562 = vmatpush.bf16.msra.mxu0 %v5991
        %8563 = vmatpush.bf16.msra.mxu0 %v5964
        %8564 = vmatpush.bf16.msra.mxu0 %v5937
        %8565 = vmatpush.bf16.msra.mxu0 %v5910
        %8566 = vmatmul.bf16.gmra.mxu0 %v1526
        %v8567 = vpop.f32.mrf.mxu0
        %v8568 = vadd.f32 %v8555, %v8567
        %v8569 = vpop.f32.mrf.mxu0
        %8570 = vdwg.mxu0
        %8571 = vmatpush.bf16.msra.mxu0 %v6315
        %8572 = vmatpush.bf16.msra.mxu0 %v6288
        %8573 = vmatpush.bf16.msra.mxu0 %v6261
        %8574 = vmatpush.bf16.msra.mxu0 %v6234
        %8575 = vmatpush.bf16.msra.mxu0 %v6207
        %8576 = vmatpush.bf16.msra.mxu0 %v6180
        %8577 = vmatpush.bf16.msra.mxu0 %v6153
        %8578 = vmatpush.bf16.msra.mxu0 %v6126
        %8579 = vmatmul.bf16.gmra.mxu0 %v1527
        %v8580 = vpop.f32.mrf.mxu0
        %v8581 = vadd.f32 %v8568, %v8580
        %v8582 = vpop.f32.mrf.mxu0
        %8583 = vdwg.mxu0
        %8584 = vmatpush.bf16.msra.mxu0 %v6531
        %8585 = vmatpush.bf16.msra.mxu0 %v6504
        %8586 = vmatpush.bf16.msra.mxu0 %v6477
        %8587 = vmatpush.bf16.msra.mxu0 %v6450
        %8588 = vmatpush.bf16.msra.mxu0 %v6423
        %8589 = vmatpush.bf16.msra.mxu0 %v6396
        %8590 = vmatpush.bf16.msra.mxu0 %v6369
        %8591 = vmatpush.bf16.msra.mxu0 %v6342
        %8592 = vmatmul.bf16.gmra.mxu0 %v1528
        %v8593 = vpop.f32.mrf.mxu0
        %v8594 = vadd.f32 %v8581, %v8593
        %v8595 = vpop.f32.mrf.mxu0
        %8596 = vdwg.mxu0
        %8597 = vmatpush.bf16.msra.mxu0 %v6747
        %8598 = vmatpush.bf16.msra.mxu0 %v6720
        %8599 = vmatpush.bf16.msra.mxu0 %v6693
        %8600 = vmatpush.bf16.msra.mxu0 %v6666
        %8601 = vmatpush.bf16.msra.mxu0 %v6639
        %8602 = vmatpush.bf16.msra.mxu0 %v6612
        %8603 = vmatpush.bf16.msra.mxu0 %v6585
        %8604 = vmatpush.bf16.msra.mxu0 %v6558
        %8605 = vmatmul.bf16.gmra.mxu0 %v1529
        %v8606 = vpop.f32.mrf.mxu0
        %v8607 = vadd.f32 %v8594, %v8606
        %v8608 = vpop.f32.mrf.mxu0
        %8609 = vdwg.mxu0
        %8610 = vmatpush.bf16.msra.mxu0 %v5668
        %8611 = vmatpush.bf16.msra.mxu0 %v5641
        %8612 = vmatpush.bf16.msra.mxu0 %v5614
        %8613 = vmatpush.bf16.msra.mxu0 %v5587
        %8614 = vmatpush.bf16.msra.mxu0 %v5560
        %8615 = vmatpush.bf16.msra.mxu0 %v5533
        %8616 = vmatpush.bf16.msra.mxu0 %v5506
        %8617 = vmatpush.bf16.msra.mxu0 %v5479
        %8618 = vmatmul.bf16.gmra.mxu0 %v1524
        %v8619 = vpop.f32.mrf.mxu0
        %v8620 = vadd.f32 0.0, %v8619
        %v8621 = vpop.f32.mrf.mxu0
        %8622 = vdwg.mxu0
        %8623 = vmatpush.bf16.msra.mxu0 %v5884
        %8624 = vmatpush.bf16.msra.mxu0 %v5857
        %8625 = vmatpush.bf16.msra.mxu0 %v5830
        %8626 = vmatpush.bf16.msra.mxu0 %v5803
        %8627 = vmatpush.bf16.msra.mxu0 %v5776
        %8628 = vmatpush.bf16.msra.mxu0 %v5749
        %8629 = vmatpush.bf16.msra.mxu0 %v5722
        %8630 = vmatpush.bf16.msra.mxu0 %v5695
        %8631 = vmatmul.bf16.gmra.mxu0 %v1525
        %v8632 = vpop.f32.mrf.mxu0
        %v8633 = vadd.f32 %v8620, %v8632
        %v8634 = vpop.f32.mrf.mxu0
        %8635 = vdwg.mxu0
        %8636 = vmatpush.bf16.msra.mxu0 %v6100
        %8637 = vmatpush.bf16.msra.mxu0 %v6073
        %8638 = vmatpush.bf16.msra.mxu0 %v6046
        %8639 = vmatpush.bf16.msra.mxu0 %v6019
        %8640 = vmatpush.bf16.msra.mxu0 %v5992
        %8641 = vmatpush.bf16.msra.mxu0 %v5965
        %8642 = vmatpush.bf16.msra.mxu0 %v5938
        %8643 = vmatpush.bf16.msra.mxu0 %v5911
        %8644 = vmatmul.bf16.gmra.mxu0 %v1526
        %v8645 = vpop.f32.mrf.mxu0
        %v8646 = vadd.f32 %v8633, %v8645
        %v8647 = vpop.f32.mrf.mxu0
        %8648 = vdwg.mxu0
        %8649 = vmatpush.bf16.msra.mxu0 %v6316
        %8650 = vmatpush.bf16.msra.mxu0 %v6289
        %8651 = vmatpush.bf16.msra.mxu0 %v6262
        %8652 = vmatpush.bf16.msra.mxu0 %v6235
        %8653 = vmatpush.bf16.msra.mxu0 %v6208
        %8654 = vmatpush.bf16.msra.mxu0 %v6181
        %8655 = vmatpush.bf16.msra.mxu0 %v6154
        %8656 = vmatpush.bf16.msra.mxu0 %v6127
        %8657 = vmatmul.bf16.gmra.mxu0 %v1527
        %v8658 = vpop.f32.mrf.mxu0
        %v8659 = vadd.f32 %v8646, %v8658
        %v8660 = vpop.f32.mrf.mxu0
        %8661 = vdwg.mxu0
        %8662 = vmatpush.bf16.msra.mxu0 %v6532
        %8663 = vmatpush.bf16.msra.mxu0 %v6505
        %8664 = vmatpush.bf16.msra.mxu0 %v6478
        %8665 = vmatpush.bf16.msra.mxu0 %v6451
        %8666 = vmatpush.bf16.msra.mxu0 %v6424
        %8667 = vmatpush.bf16.msra.mxu0 %v6397
        %8668 = vmatpush.bf16.msra.mxu0 %v6370
        %8669 = vmatpush.bf16.msra.mxu0 %v6343
        %8670 = vmatmul.bf16.gmra.mxu0 %v1528
        %v8671 = vpop.f32.mrf.mxu0
        %v8672 = vadd.f32 %v8659, %v8671
        %v8673 = vpop.f32.mrf.mxu0
        %8674 = vdwg.mxu0
        %8675 = vmatpush.bf16.msra.mxu0 %v6748
        %8676 = vmatpush.bf16.msra.mxu0 %v6721
        %8677 = vmatpush.bf16.msra.mxu0 %v6694
        %8678 = vmatpush.bf16.msra.mxu0 %v6667
        %8679 = vmatpush.bf16.msra.mxu0 %v6640
        %8680 = vmatpush.bf16.msra.mxu0 %v6613
        %8681 = vmatpush.bf16.msra.mxu0 %v6586
        %8682 = vmatpush.bf16.msra.mxu0 %v6559
        %8683 = vmatmul.bf16.gmra.mxu0 %v1529
        %v8684 = vpop.f32.mrf.mxu0
        %v8685 = vadd.f32 %v8672, %v8684
        %v8686 = vpop.f32.mrf.mxu0
        %8687 = vdwg.mxu0
        %8688 = vmatpush.bf16.msra.mxu0 %v5669
        %8689 = vmatpush.bf16.msra.mxu0 %v5642
        %8690 = vmatpush.bf16.msra.mxu0 %v5615
        %8691 = vmatpush.bf16.msra.mxu0 %v5588
        %8692 = vmatpush.bf16.msra.mxu0 %v5561
        %8693 = vmatpush.bf16.msra.mxu0 %v5534
        %8694 = vmatpush.bf16.msra.mxu0 %v5507
        %8695 = vmatpush.bf16.msra.mxu0 %v5480
        %8696 = vmatmul.bf16.gmra.mxu0 %v1524
        %v8697 = vpop.f32.mrf.mxu0
        %v8698 = vadd.f32 0.0, %v8697
        %v8699 = vpop.f32.mrf.mxu0
        %8700 = vdwg.mxu0
        %8701 = vmatpush.bf16.msra.mxu0 %v5885
        %8702 = vmatpush.bf16.msra.mxu0 %v5858
        %8703 = vmatpush.bf16.msra.mxu0 %v5831
        %8704 = vmatpush.bf16.msra.mxu0 %v5804
        %8705 = vmatpush.bf16.msra.mxu0 %v5777
        %8706 = vmatpush.bf16.msra.mxu0 %v5750
        %8707 = vmatpush.bf16.msra.mxu0 %v5723
        %8708 = vmatpush.bf16.msra.mxu0 %v5696
        %8709 = vmatmul.bf16.gmra.mxu0 %v1525
        %v8710 = vpop.f32.mrf.mxu0
        %v8711 = vadd.f32 %v8698, %v8710
        %v8712 = vpop.f32.mrf.mxu0
        %8713 = vdwg.mxu0
        %8714 = vmatpush.bf16.msra.mxu0 %v6101
        %8715 = vmatpush.bf16.msra.mxu0 %v6074
        %8716 = vmatpush.bf16.msra.mxu0 %v6047
        %8717 = vmatpush.bf16.msra.mxu0 %v6020
        %8718 = vmatpush.bf16.msra.mxu0 %v5993
        %8719 = vmatpush.bf16.msra.mxu0 %v5966
        %8720 = vmatpush.bf16.msra.mxu0 %v5939
        %8721 = vmatpush.bf16.msra.mxu0 %v5912
        %8722 = vmatmul.bf16.gmra.mxu0 %v1526
        %v8723 = vpop.f32.mrf.mxu0
        %v8724 = vadd.f32 %v8711, %v8723
        %v8725 = vpop.f32.mrf.mxu0
        %8726 = vdwg.mxu0
        %8727 = vmatpush.bf16.msra.mxu0 %v6317
        %8728 = vmatpush.bf16.msra.mxu0 %v6290
        %8729 = vmatpush.bf16.msra.mxu0 %v6263
        %8730 = vmatpush.bf16.msra.mxu0 %v6236
        %8731 = vmatpush.bf16.msra.mxu0 %v6209
        %8732 = vmatpush.bf16.msra.mxu0 %v6182
        %8733 = vmatpush.bf16.msra.mxu0 %v6155
        %8734 = vmatpush.bf16.msra.mxu0 %v6128
        %8735 = vmatmul.bf16.gmra.mxu0 %v1527
        %v8736 = vpop.f32.mrf.mxu0
        %v8737 = vadd.f32 %v8724, %v8736
        %v8738 = vpop.f32.mrf.mxu0
        %8739 = vdwg.mxu0
        %8740 = vmatpush.bf16.msra.mxu0 %v6533
        %8741 = vmatpush.bf16.msra.mxu0 %v6506
        %8742 = vmatpush.bf16.msra.mxu0 %v6479
        %8743 = vmatpush.bf16.msra.mxu0 %v6452
        %8744 = vmatpush.bf16.msra.mxu0 %v6425
        %8745 = vmatpush.bf16.msra.mxu0 %v6398
        %8746 = vmatpush.bf16.msra.mxu0 %v6371
        %8747 = vmatpush.bf16.msra.mxu0 %v6344
        %8748 = vmatmul.bf16.gmra.mxu0 %v1528
        %v8749 = vpop.f32.mrf.mxu0
        %v8750 = vadd.f32 %v8737, %v8749
        %v8751 = vpop.f32.mrf.mxu0
        %8752 = vdwg.mxu0
        %8753 = vmatpush.bf16.msra.mxu0 %v6749
        %8754 = vmatpush.bf16.msra.mxu0 %v6722
        %8755 = vmatpush.bf16.msra.mxu0 %v6695
        %8756 = vmatpush.bf16.msra.mxu0 %v6668
        %8757 = vmatpush.bf16.msra.mxu0 %v6641
        %8758 = vmatpush.bf16.msra.mxu0 %v6614
        %8759 = vmatpush.bf16.msra.mxu0 %v6587
        %8760 = vmatpush.bf16.msra.mxu0 %v6560
        %8761 = vmatmul.bf16.gmra.mxu0 %v1529
        %v8762 = vpop.f32.mrf.mxu0
        %v8763 = vadd.f32 %v8750, %v8762
        %v8764 = vpop.f32.mrf.mxu0
        %8765 = vdwg.mxu0
        %8766 = vmatpush.bf16.msra.mxu0 %v5670
        %8767 = vmatpush.bf16.msra.mxu0 %v5643
        %8768 = vmatpush.bf16.msra.mxu0 %v5616
        %8769 = vmatpush.bf16.msra.mxu0 %v5589
        %8770 = vmatpush.bf16.msra.mxu0 %v5562
        %8771 = vmatpush.bf16.msra.mxu0 %v5535
        %8772 = vmatpush.bf16.msra.mxu0 %v5508
        %8773 = vmatpush.bf16.msra.mxu0 %v5481
        %8774 = vmatmul.bf16.gmra.mxu0 %v1524
        %v8775 = vpop.f32.mrf.mxu0
        %v8776 = vadd.f32 0.0, %v8775
        %v8777 = vpop.f32.mrf.mxu0
        %8778 = vdwg.mxu0
        %8779 = vmatpush.bf16.msra.mxu0 %v5886
        %8780 = vmatpush.bf16.msra.mxu0 %v5859
        %8781 = vmatpush.bf16.msra.mxu0 %v5832
        %8782 = vmatpush.bf16.msra.mxu0 %v5805
        %8783 = vmatpush.bf16.msra.mxu0 %v5778
        %8784 = vmatpush.bf16.msra.mxu0 %v5751
        %8785 = vmatpush.bf16.msra.mxu0 %v5724
        %8786 = vmatpush.bf16.msra.mxu0 %v5697
        %8787 = vmatmul.bf16.gmra.mxu0 %v1525
        %v8788 = vpop.f32.mrf.mxu0
        %v8789 = vadd.f32 %v8776, %v8788
        %v8790 = vpop.f32.mrf.mxu0
        %8791 = vdwg.mxu0
        %8792 = vmatpush.bf16.msra.mxu0 %v6102
        %8793 = vmatpush.bf16.msra.mxu0 %v6075
        %8794 = vmatpush.bf16.msra.mxu0 %v6048
        %8795 = vmatpush.bf16.msra.mxu0 %v6021
        %8796 = vmatpush.bf16.msra.mxu0 %v5994
        %8797 = vmatpush.bf16.msra.mxu0 %v5967
        %8798 = vmatpush.bf16.msra.mxu0 %v5940
        %8799 = vmatpush.bf16.msra.mxu0 %v5913
        %8800 = vmatmul.bf16.gmra.mxu0 %v1526
        %v8801 = vpop.f32.mrf.mxu0
        %v8802 = vadd.f32 %v8789, %v8801
        %v8803 = vpop.f32.mrf.mxu0
        %8804 = vdwg.mxu0
        %8805 = vmatpush.bf16.msra.mxu0 %v6318
        %8806 = vmatpush.bf16.msra.mxu0 %v6291
        %8807 = vmatpush.bf16.msra.mxu0 %v6264
        %8808 = vmatpush.bf16.msra.mxu0 %v6237
        %8809 = vmatpush.bf16.msra.mxu0 %v6210
        %8810 = vmatpush.bf16.msra.mxu0 %v6183
        %8811 = vmatpush.bf16.msra.mxu0 %v6156
        %8812 = vmatpush.bf16.msra.mxu0 %v6129
        %8813 = vmatmul.bf16.gmra.mxu0 %v1527
        %v8814 = vpop.f32.mrf.mxu0
        %v8815 = vadd.f32 %v8802, %v8814
        %v8816 = vpop.f32.mrf.mxu0
        %8817 = vdwg.mxu0
        %8818 = vmatpush.bf16.msra.mxu0 %v6534
        %8819 = vmatpush.bf16.msra.mxu0 %v6507
        %8820 = vmatpush.bf16.msra.mxu0 %v6480
        %8821 = vmatpush.bf16.msra.mxu0 %v6453
        %8822 = vmatpush.bf16.msra.mxu0 %v6426
        %8823 = vmatpush.bf16.msra.mxu0 %v6399
        %8824 = vmatpush.bf16.msra.mxu0 %v6372
        %8825 = vmatpush.bf16.msra.mxu0 %v6345
        %8826 = vmatmul.bf16.gmra.mxu0 %v1528
        %v8827 = vpop.f32.mrf.mxu0
        %v8828 = vadd.f32 %v8815, %v8827
        %v8829 = vpop.f32.mrf.mxu0
        %8830 = vdwg.mxu0
        %8831 = vmatpush.bf16.msra.mxu0 %v6750
        %8832 = vmatpush.bf16.msra.mxu0 %v6723
        %8833 = vmatpush.bf16.msra.mxu0 %v6696
        %8834 = vmatpush.bf16.msra.mxu0 %v6669
        %8835 = vmatpush.bf16.msra.mxu0 %v6642
        %8836 = vmatpush.bf16.msra.mxu0 %v6615
        %8837 = vmatpush.bf16.msra.mxu0 %v6588
        %8838 = vmatpush.bf16.msra.mxu0 %v6561
        %8839 = vmatmul.bf16.gmra.mxu0 %v1529
        %v8840 = vpop.f32.mrf.mxu0
        %v8841 = vadd.f32 %v8828, %v8840
        %v8842 = vpop.f32.mrf.mxu0
        %8843 = vdwg.mxu0
        %8844 = vmatpush.bf16.msra.mxu0 %v5671
        %8845 = vmatpush.bf16.msra.mxu0 %v5644
        %8846 = vmatpush.bf16.msra.mxu0 %v5617
        %8847 = vmatpush.bf16.msra.mxu0 %v5590
        %8848 = vmatpush.bf16.msra.mxu0 %v5563
        %8849 = vmatpush.bf16.msra.mxu0 %v5536
        %8850 = vmatpush.bf16.msra.mxu0 %v5509
        %8851 = vmatpush.bf16.msra.mxu0 %v5482
        %8852 = vmatmul.bf16.gmra.mxu0 %v1524
        %v8853 = vpop.f32.mrf.mxu0
        %v8854 = vadd.f32 0.0, %v8853
        %v8855 = vpop.f32.mrf.mxu0
        %8856 = vdwg.mxu0
        %8857 = vmatpush.bf16.msra.mxu0 %v5887
        %8858 = vmatpush.bf16.msra.mxu0 %v5860
        %8859 = vmatpush.bf16.msra.mxu0 %v5833
        %8860 = vmatpush.bf16.msra.mxu0 %v5806
        %8861 = vmatpush.bf16.msra.mxu0 %v5779
        %8862 = vmatpush.bf16.msra.mxu0 %v5752
        %8863 = vmatpush.bf16.msra.mxu0 %v5725
        %8864 = vmatpush.bf16.msra.mxu0 %v5698
        %8865 = vmatmul.bf16.gmra.mxu0 %v1525
        %v8866 = vpop.f32.mrf.mxu0
        %v8867 = vadd.f32 %v8854, %v8866
        %v8868 = vpop.f32.mrf.mxu0
        %8869 = vdwg.mxu0
        %8870 = vmatpush.bf16.msra.mxu0 %v6103
        %8871 = vmatpush.bf16.msra.mxu0 %v6076
        %8872 = vmatpush.bf16.msra.mxu0 %v6049
        %8873 = vmatpush.bf16.msra.mxu0 %v6022
        %8874 = vmatpush.bf16.msra.mxu0 %v5995
        %8875 = vmatpush.bf16.msra.mxu0 %v5968
        %8876 = vmatpush.bf16.msra.mxu0 %v5941
        %8877 = vmatpush.bf16.msra.mxu0 %v5914
        %8878 = vmatmul.bf16.gmra.mxu0 %v1526
        %v8879 = vpop.f32.mrf.mxu0
        %v8880 = vadd.f32 %v8867, %v8879
        %v8881 = vpop.f32.mrf.mxu0
        %8882 = vdwg.mxu0
        %8883 = vmatpush.bf16.msra.mxu0 %v6319
        %8884 = vmatpush.bf16.msra.mxu0 %v6292
        %8885 = vmatpush.bf16.msra.mxu0 %v6265
        %8886 = vmatpush.bf16.msra.mxu0 %v6238
        %8887 = vmatpush.bf16.msra.mxu0 %v6211
        %8888 = vmatpush.bf16.msra.mxu0 %v6184
        %8889 = vmatpush.bf16.msra.mxu0 %v6157
        %8890 = vmatpush.bf16.msra.mxu0 %v6130
        %8891 = vmatmul.bf16.gmra.mxu0 %v1527
        %v8892 = vpop.f32.mrf.mxu0
        %v8893 = vadd.f32 %v8880, %v8892
        %v8894 = vpop.f32.mrf.mxu0
        %8895 = vdwg.mxu0
        %8896 = vmatpush.bf16.msra.mxu0 %v6535
        %8897 = vmatpush.bf16.msra.mxu0 %v6508
        %8898 = vmatpush.bf16.msra.mxu0 %v6481
        %8899 = vmatpush.bf16.msra.mxu0 %v6454
        %8900 = vmatpush.bf16.msra.mxu0 %v6427
        %8901 = vmatpush.bf16.msra.mxu0 %v6400
        %8902 = vmatpush.bf16.msra.mxu0 %v6373
        %8903 = vmatpush.bf16.msra.mxu0 %v6346
        %8904 = vmatmul.bf16.gmra.mxu0 %v1528
        %v8905 = vpop.f32.mrf.mxu0
        %v8906 = vadd.f32 %v8893, %v8905
        %v8907 = vpop.f32.mrf.mxu0
        %8908 = vdwg.mxu0
        %8909 = vmatpush.bf16.msra.mxu0 %v6751
        %8910 = vmatpush.bf16.msra.mxu0 %v6724
        %8911 = vmatpush.bf16.msra.mxu0 %v6697
        %8912 = vmatpush.bf16.msra.mxu0 %v6670
        %8913 = vmatpush.bf16.msra.mxu0 %v6643
        %8914 = vmatpush.bf16.msra.mxu0 %v6616
        %8915 = vmatpush.bf16.msra.mxu0 %v6589
        %8916 = vmatpush.bf16.msra.mxu0 %v6562
        %8917 = vmatmul.bf16.gmra.mxu0 %v1529
        %v8918 = vpop.f32.mrf.mxu0
        %v8919 = vadd.f32 %v8906, %v8918
        %v8920 = vpop.f32.mrf.mxu0
        %8921 = vdwg.mxu0
        %8922 = vmatpush.bf16.msra.mxu0 %v5672
        %8923 = vmatpush.bf16.msra.mxu0 %v5645
        %8924 = vmatpush.bf16.msra.mxu0 %v5618
        %8925 = vmatpush.bf16.msra.mxu0 %v5591
        %8926 = vmatpush.bf16.msra.mxu0 %v5564
        %8927 = vmatpush.bf16.msra.mxu0 %v5537
        %8928 = vmatpush.bf16.msra.mxu0 %v5510
        %8929 = vmatpush.bf16.msra.mxu0 %v5483
        %8930 = vmatmul.bf16.gmra.mxu0 %v1524
        %v8931 = vpop.f32.mrf.mxu0
        %v8932 = vadd.f32 0.0, %v8931
        %v8933 = vpop.f32.mrf.mxu0
        %8934 = vdwg.mxu0
        %8935 = vmatpush.bf16.msra.mxu0 %v5888
        %8936 = vmatpush.bf16.msra.mxu0 %v5861
        %8937 = vmatpush.bf16.msra.mxu0 %v5834
        %8938 = vmatpush.bf16.msra.mxu0 %v5807
        %8939 = vmatpush.bf16.msra.mxu0 %v5780
        %8940 = vmatpush.bf16.msra.mxu0 %v5753
        %8941 = vmatpush.bf16.msra.mxu0 %v5726
        %8942 = vmatpush.bf16.msra.mxu0 %v5699
        %8943 = vmatmul.bf16.gmra.mxu0 %v1525
        %v8944 = vpop.f32.mrf.mxu0
        %v8945 = vadd.f32 %v8932, %v8944
        %v8946 = vpop.f32.mrf.mxu0
        %8947 = vdwg.mxu0
        %8948 = vmatpush.bf16.msra.mxu0 %v6104
        %8949 = vmatpush.bf16.msra.mxu0 %v6077
        %8950 = vmatpush.bf16.msra.mxu0 %v6050
        %8951 = vmatpush.bf16.msra.mxu0 %v6023
        %8952 = vmatpush.bf16.msra.mxu0 %v5996
        %8953 = vmatpush.bf16.msra.mxu0 %v5969
        %8954 = vmatpush.bf16.msra.mxu0 %v5942
        %8955 = vmatpush.bf16.msra.mxu0 %v5915
        %8956 = vmatmul.bf16.gmra.mxu0 %v1526
        %v8957 = vpop.f32.mrf.mxu0
        %v8958 = vadd.f32 %v8945, %v8957
        %v8959 = vpop.f32.mrf.mxu0
        %8960 = vdwg.mxu0
        %8961 = vmatpush.bf16.msra.mxu0 %v6320
        %8962 = vmatpush.bf16.msra.mxu0 %v6293
        %8963 = vmatpush.bf16.msra.mxu0 %v6266
        %8964 = vmatpush.bf16.msra.mxu0 %v6239
        %8965 = vmatpush.bf16.msra.mxu0 %v6212
        %8966 = vmatpush.bf16.msra.mxu0 %v6185
        %8967 = vmatpush.bf16.msra.mxu0 %v6158
        %8968 = vmatpush.bf16.msra.mxu0 %v6131
        %8969 = vmatmul.bf16.gmra.mxu0 %v1527
        %v8970 = vpop.f32.mrf.mxu0
        %v8971 = vadd.f32 %v8958, %v8970
        %v8972 = vpop.f32.mrf.mxu0
        %8973 = vdwg.mxu0
        %8974 = vmatpush.bf16.msra.mxu0 %v6536
        %8975 = vmatpush.bf16.msra.mxu0 %v6509
        %8976 = vmatpush.bf16.msra.mxu0 %v6482
        %8977 = vmatpush.bf16.msra.mxu0 %v6455
        %8978 = vmatpush.bf16.msra.mxu0 %v6428
        %8979 = vmatpush.bf16.msra.mxu0 %v6401
        %8980 = vmatpush.bf16.msra.mxu0 %v6374
        %8981 = vmatpush.bf16.msra.mxu0 %v6347
        %8982 = vmatmul.bf16.gmra.mxu0 %v1528
        %v8983 = vpop.f32.mrf.mxu0
        %v8984 = vadd.f32 %v8971, %v8983
        %v8985 = vpop.f32.mrf.mxu0
        %8986 = vdwg.mxu0
        %8987 = vmatpush.bf16.msra.mxu0 %v6752
        %8988 = vmatpush.bf16.msra.mxu0 %v6725
        %8989 = vmatpush.bf16.msra.mxu0 %v6698
        %8990 = vmatpush.bf16.msra.mxu0 %v6671
        %8991 = vmatpush.bf16.msra.mxu0 %v6644
        %8992 = vmatpush.bf16.msra.mxu0 %v6617
        %8993 = vmatpush.bf16.msra.mxu0 %v6590
        %8994 = vmatpush.bf16.msra.mxu0 %v6563
        %8995 = vmatmul.bf16.gmra.mxu0 %v1529
        %v8996 = vpop.f32.mrf.mxu0
        %v8997 = vadd.f32 %v8984, %v8996
        %v8998 = vpop.f32.mrf.mxu0
        %8999 = vdwg.mxu0
        %9000 = vmatpush.bf16.msra.mxu0 %v5673
        %9001 = vmatpush.bf16.msra.mxu0 %v5646
        %9002 = vmatpush.bf16.msra.mxu0 %v5619
        %9003 = vmatpush.bf16.msra.mxu0 %v5592
        %9004 = vmatpush.bf16.msra.mxu0 %v5565
        %9005 = vmatpush.bf16.msra.mxu0 %v5538
        %9006 = vmatpush.bf16.msra.mxu0 %v5511
        %9007 = vmatpush.bf16.msra.mxu0 %v5484
        %9008 = vmatmul.bf16.gmra.mxu0 %v1524
        %v9009 = vpop.f32.mrf.mxu0
        %v9010 = vadd.f32 0.0, %v9009
        %v9011 = vpop.f32.mrf.mxu0
        %9012 = vdwg.mxu0
        %9013 = vmatpush.bf16.msra.mxu0 %v5889
        %9014 = vmatpush.bf16.msra.mxu0 %v5862
        %9015 = vmatpush.bf16.msra.mxu0 %v5835
        %9016 = vmatpush.bf16.msra.mxu0 %v5808
        %9017 = vmatpush.bf16.msra.mxu0 %v5781
        %9018 = vmatpush.bf16.msra.mxu0 %v5754
        %9019 = vmatpush.bf16.msra.mxu0 %v5727
        %9020 = vmatpush.bf16.msra.mxu0 %v5700
        %9021 = vmatmul.bf16.gmra.mxu0 %v1525
        %v9022 = vpop.f32.mrf.mxu0
        %v9023 = vadd.f32 %v9010, %v9022
        %v9024 = vpop.f32.mrf.mxu0
        %9025 = vdwg.mxu0
        %9026 = vmatpush.bf16.msra.mxu0 %v6105
        %9027 = vmatpush.bf16.msra.mxu0 %v6078
        %9028 = vmatpush.bf16.msra.mxu0 %v6051
        %9029 = vmatpush.bf16.msra.mxu0 %v6024
        %9030 = vmatpush.bf16.msra.mxu0 %v5997
        %9031 = vmatpush.bf16.msra.mxu0 %v5970
        %9032 = vmatpush.bf16.msra.mxu0 %v5943
        %9033 = vmatpush.bf16.msra.mxu0 %v5916
        %9034 = vmatmul.bf16.gmra.mxu0 %v1526
        %v9035 = vpop.f32.mrf.mxu0
        %v9036 = vadd.f32 %v9023, %v9035
        %v9037 = vpop.f32.mrf.mxu0
        %9038 = vdwg.mxu0
        %9039 = vmatpush.bf16.msra.mxu0 %v6321
        %9040 = vmatpush.bf16.msra.mxu0 %v6294
        %9041 = vmatpush.bf16.msra.mxu0 %v6267
        %9042 = vmatpush.bf16.msra.mxu0 %v6240
        %9043 = vmatpush.bf16.msra.mxu0 %v6213
        %9044 = vmatpush.bf16.msra.mxu0 %v6186
        %9045 = vmatpush.bf16.msra.mxu0 %v6159
        %9046 = vmatpush.bf16.msra.mxu0 %v6132
        %9047 = vmatmul.bf16.gmra.mxu0 %v1527
        %v9048 = vpop.f32.mrf.mxu0
        %v9049 = vadd.f32 %v9036, %v9048
        %v9050 = vpop.f32.mrf.mxu0
        %9051 = vdwg.mxu0
        %9052 = vmatpush.bf16.msra.mxu0 %v6537
        %9053 = vmatpush.bf16.msra.mxu0 %v6510
        %9054 = vmatpush.bf16.msra.mxu0 %v6483
        %9055 = vmatpush.bf16.msra.mxu0 %v6456
        %9056 = vmatpush.bf16.msra.mxu0 %v6429
        %9057 = vmatpush.bf16.msra.mxu0 %v6402
        %9058 = vmatpush.bf16.msra.mxu0 %v6375
        %9059 = vmatpush.bf16.msra.mxu0 %v6348
        %9060 = vmatmul.bf16.gmra.mxu0 %v1528
        %v9061 = vpop.f32.mrf.mxu0
        %v9062 = vadd.f32 %v9049, %v9061
        %v9063 = vpop.f32.mrf.mxu0
        %9064 = vdwg.mxu0
        %9065 = vmatpush.bf16.msra.mxu0 %v6753
        %9066 = vmatpush.bf16.msra.mxu0 %v6726
        %9067 = vmatpush.bf16.msra.mxu0 %v6699
        %9068 = vmatpush.bf16.msra.mxu0 %v6672
        %9069 = vmatpush.bf16.msra.mxu0 %v6645
        %9070 = vmatpush.bf16.msra.mxu0 %v6618
        %9071 = vmatpush.bf16.msra.mxu0 %v6591
        %9072 = vmatpush.bf16.msra.mxu0 %v6564
        %9073 = vmatmul.bf16.gmra.mxu0 %v1529
        %v9074 = vpop.f32.mrf.mxu0
        %v9075 = vadd.f32 %v9062, %v9074
        %v9076 = vpop.f32.mrf.mxu0
        %9077 = vdwg.mxu0
        %9078 = vmatpush.bf16.msra.mxu0 %v5674
        %9079 = vmatpush.bf16.msra.mxu0 %v5647
        %9080 = vmatpush.bf16.msra.mxu0 %v5620
        %9081 = vmatpush.bf16.msra.mxu0 %v5593
        %9082 = vmatpush.bf16.msra.mxu0 %v5566
        %9083 = vmatpush.bf16.msra.mxu0 %v5539
        %9084 = vmatpush.bf16.msra.mxu0 %v5512
        %9085 = vmatpush.bf16.msra.mxu0 %v5485
        %9086 = vmatmul.bf16.gmra.mxu0 %v1524
        %v9087 = vpop.f32.mrf.mxu0
        %v9088 = vadd.f32 0.0, %v9087
        %v9089 = vpop.f32.mrf.mxu0
        %9090 = vdwg.mxu0
        %9091 = vmatpush.bf16.msra.mxu0 %v5890
        %9092 = vmatpush.bf16.msra.mxu0 %v5863
        %9093 = vmatpush.bf16.msra.mxu0 %v5836
        %9094 = vmatpush.bf16.msra.mxu0 %v5809
        %9095 = vmatpush.bf16.msra.mxu0 %v5782
        %9096 = vmatpush.bf16.msra.mxu0 %v5755
        %9097 = vmatpush.bf16.msra.mxu0 %v5728
        %9098 = vmatpush.bf16.msra.mxu0 %v5701
        %9099 = vmatmul.bf16.gmra.mxu0 %v1525
        %v9100 = vpop.f32.mrf.mxu0
        %v9101 = vadd.f32 %v9088, %v9100
        %v9102 = vpop.f32.mrf.mxu0
        %9103 = vdwg.mxu0
        %9104 = vmatpush.bf16.msra.mxu0 %v6106
        %9105 = vmatpush.bf16.msra.mxu0 %v6079
        %9106 = vmatpush.bf16.msra.mxu0 %v6052
        %9107 = vmatpush.bf16.msra.mxu0 %v6025
        %9108 = vmatpush.bf16.msra.mxu0 %v5998
        %9109 = vmatpush.bf16.msra.mxu0 %v5971
        %9110 = vmatpush.bf16.msra.mxu0 %v5944
        %9111 = vmatpush.bf16.msra.mxu0 %v5917
        %9112 = vmatmul.bf16.gmra.mxu0 %v1526
        %v9113 = vpop.f32.mrf.mxu0
        %v9114 = vadd.f32 %v9101, %v9113
        %v9115 = vpop.f32.mrf.mxu0
        %9116 = vdwg.mxu0
        %9117 = vmatpush.bf16.msra.mxu0 %v6322
        %9118 = vmatpush.bf16.msra.mxu0 %v6295
        %9119 = vmatpush.bf16.msra.mxu0 %v6268
        %9120 = vmatpush.bf16.msra.mxu0 %v6241
        %9121 = vmatpush.bf16.msra.mxu0 %v6214
        %9122 = vmatpush.bf16.msra.mxu0 %v6187
        %9123 = vmatpush.bf16.msra.mxu0 %v6160
        %9124 = vmatpush.bf16.msra.mxu0 %v6133
        %9125 = vmatmul.bf16.gmra.mxu0 %v1527
        %v9126 = vpop.f32.mrf.mxu0
        %v9127 = vadd.f32 %v9114, %v9126
        %v9128 = vpop.f32.mrf.mxu0
        %9129 = vdwg.mxu0
        %9130 = vmatpush.bf16.msra.mxu0 %v6538
        %9131 = vmatpush.bf16.msra.mxu0 %v6511
        %9132 = vmatpush.bf16.msra.mxu0 %v6484
        %9133 = vmatpush.bf16.msra.mxu0 %v6457
        %9134 = vmatpush.bf16.msra.mxu0 %v6430
        %9135 = vmatpush.bf16.msra.mxu0 %v6403
        %9136 = vmatpush.bf16.msra.mxu0 %v6376
        %9137 = vmatpush.bf16.msra.mxu0 %v6349
        %9138 = vmatmul.bf16.gmra.mxu0 %v1528
        %v9139 = vpop.f32.mrf.mxu0
        %v9140 = vadd.f32 %v9127, %v9139
        %v9141 = vpop.f32.mrf.mxu0
        %9142 = vdwg.mxu0
        %9143 = vmatpush.bf16.msra.mxu0 %v6754
        %9144 = vmatpush.bf16.msra.mxu0 %v6727
        %9145 = vmatpush.bf16.msra.mxu0 %v6700
        %9146 = vmatpush.bf16.msra.mxu0 %v6673
        %9147 = vmatpush.bf16.msra.mxu0 %v6646
        %9148 = vmatpush.bf16.msra.mxu0 %v6619
        %9149 = vmatpush.bf16.msra.mxu0 %v6592
        %9150 = vmatpush.bf16.msra.mxu0 %v6565
        %9151 = vmatmul.bf16.gmra.mxu0 %v1529
        %v9152 = vpop.f32.mrf.mxu0
        %v9153 = vadd.f32 %v9140, %v9152
        %v9154 = vpop.f32.mrf.mxu0
        %9155 = vdwg.mxu0
        %9156 = vmatpush.bf16.msra.mxu0 %v5675
        %9157 = vmatpush.bf16.msra.mxu0 %v5648
        %9158 = vmatpush.bf16.msra.mxu0 %v5621
        %9159 = vmatpush.bf16.msra.mxu0 %v5594
        %9160 = vmatpush.bf16.msra.mxu0 %v5567
        %9161 = vmatpush.bf16.msra.mxu0 %v5540
        %9162 = vmatpush.bf16.msra.mxu0 %v5513
        %9163 = vmatpush.bf16.msra.mxu0 %v5486
        %9164 = vmatmul.bf16.gmra.mxu0 %v1524
        %v9165 = vpop.f32.mrf.mxu0
        %v9166 = vadd.f32 0.0, %v9165
        %v9167 = vpop.f32.mrf.mxu0
        %9168 = vdwg.mxu0
        %9169 = vmatpush.bf16.msra.mxu0 %v5891
        %9170 = vmatpush.bf16.msra.mxu0 %v5864
        %9171 = vmatpush.bf16.msra.mxu0 %v5837
        %9172 = vmatpush.bf16.msra.mxu0 %v5810
        %9173 = vmatpush.bf16.msra.mxu0 %v5783
        %9174 = vmatpush.bf16.msra.mxu0 %v5756
        %9175 = vmatpush.bf16.msra.mxu0 %v5729
        %9176 = vmatpush.bf16.msra.mxu0 %v5702
        %9177 = vmatmul.bf16.gmra.mxu0 %v1525
        %v9178 = vpop.f32.mrf.mxu0
        %v9179 = vadd.f32 %v9166, %v9178
        %v9180 = vpop.f32.mrf.mxu0
        %9181 = vdwg.mxu0
        %9182 = vmatpush.bf16.msra.mxu0 %v6107
        %9183 = vmatpush.bf16.msra.mxu0 %v6080
        %9184 = vmatpush.bf16.msra.mxu0 %v6053
        %9185 = vmatpush.bf16.msra.mxu0 %v6026
        %9186 = vmatpush.bf16.msra.mxu0 %v5999
        %9187 = vmatpush.bf16.msra.mxu0 %v5972
        %9188 = vmatpush.bf16.msra.mxu0 %v5945
        %9189 = vmatpush.bf16.msra.mxu0 %v5918
        %9190 = vmatmul.bf16.gmra.mxu0 %v1526
        %v9191 = vpop.f32.mrf.mxu0
        %v9192 = vadd.f32 %v9179, %v9191
        %v9193 = vpop.f32.mrf.mxu0
        %9194 = vdwg.mxu0
        %9195 = vmatpush.bf16.msra.mxu0 %v6323
        %9196 = vmatpush.bf16.msra.mxu0 %v6296
        %9197 = vmatpush.bf16.msra.mxu0 %v6269
        %9198 = vmatpush.bf16.msra.mxu0 %v6242
        %9199 = vmatpush.bf16.msra.mxu0 %v6215
        %9200 = vmatpush.bf16.msra.mxu0 %v6188
        %9201 = vmatpush.bf16.msra.mxu0 %v6161
        %9202 = vmatpush.bf16.msra.mxu0 %v6134
        %9203 = vmatmul.bf16.gmra.mxu0 %v1527
        %v9204 = vpop.f32.mrf.mxu0
        %v9205 = vadd.f32 %v9192, %v9204
        %v9206 = vpop.f32.mrf.mxu0
        %9207 = vdwg.mxu0
        %9208 = vmatpush.bf16.msra.mxu0 %v6539
        %9209 = vmatpush.bf16.msra.mxu0 %v6512
        %9210 = vmatpush.bf16.msra.mxu0 %v6485
        %9211 = vmatpush.bf16.msra.mxu0 %v6458
        %9212 = vmatpush.bf16.msra.mxu0 %v6431
        %9213 = vmatpush.bf16.msra.mxu0 %v6404
        %9214 = vmatpush.bf16.msra.mxu0 %v6377
        %9215 = vmatpush.bf16.msra.mxu0 %v6350
        %9216 = vmatmul.bf16.gmra.mxu0 %v1528
        %v9217 = vpop.f32.mrf.mxu0
        %v9218 = vadd.f32 %v9205, %v9217
        %v9219 = vpop.f32.mrf.mxu0
        %9220 = vdwg.mxu0
        %9221 = vmatpush.bf16.msra.mxu0 %v6755
        %9222 = vmatpush.bf16.msra.mxu0 %v6728
        %9223 = vmatpush.bf16.msra.mxu0 %v6701
        %9224 = vmatpush.bf16.msra.mxu0 %v6674
        %9225 = vmatpush.bf16.msra.mxu0 %v6647
        %9226 = vmatpush.bf16.msra.mxu0 %v6620
        %9227 = vmatpush.bf16.msra.mxu0 %v6593
        %9228 = vmatpush.bf16.msra.mxu0 %v6566
        %9229 = vmatmul.bf16.gmra.mxu0 %v1529
        %v9230 = vpop.f32.mrf.mxu0
        %v9231 = vadd.f32 %v9218, %v9230
        %v9232 = vpop.f32.mrf.mxu0
        %9233 = vdwg.mxu0
        %9234 = vmatpush.bf16.msra.mxu0 %v5676
        %9235 = vmatpush.bf16.msra.mxu0 %v5649
        %9236 = vmatpush.bf16.msra.mxu0 %v5622
        %9237 = vmatpush.bf16.msra.mxu0 %v5595
        %9238 = vmatpush.bf16.msra.mxu0 %v5568
        %9239 = vmatpush.bf16.msra.mxu0 %v5541
        %9240 = vmatpush.bf16.msra.mxu0 %v5514
        %9241 = vmatpush.bf16.msra.mxu0 %v5487
        %9242 = vmatmul.bf16.gmra.mxu0 %v1524
        %v9243 = vpop.f32.mrf.mxu0
        %v9244 = vadd.f32 0.0, %v9243
        %v9245 = vpop.f32.mrf.mxu0
        %9246 = vdwg.mxu0
        %9247 = vmatpush.bf16.msra.mxu0 %v5892
        %9248 = vmatpush.bf16.msra.mxu0 %v5865
        %9249 = vmatpush.bf16.msra.mxu0 %v5838
        %9250 = vmatpush.bf16.msra.mxu0 %v5811
        %9251 = vmatpush.bf16.msra.mxu0 %v5784
        %9252 = vmatpush.bf16.msra.mxu0 %v5757
        %9253 = vmatpush.bf16.msra.mxu0 %v5730
        %9254 = vmatpush.bf16.msra.mxu0 %v5703
        %9255 = vmatmul.bf16.gmra.mxu0 %v1525
        %v9256 = vpop.f32.mrf.mxu0
        %v9257 = vadd.f32 %v9244, %v9256
        %v9258 = vpop.f32.mrf.mxu0
        %9259 = vdwg.mxu0
        %9260 = vmatpush.bf16.msra.mxu0 %v6108
        %9261 = vmatpush.bf16.msra.mxu0 %v6081
        %9262 = vmatpush.bf16.msra.mxu0 %v6054
        %9263 = vmatpush.bf16.msra.mxu0 %v6027
        %9264 = vmatpush.bf16.msra.mxu0 %v6000
        %9265 = vmatpush.bf16.msra.mxu0 %v5973
        %9266 = vmatpush.bf16.msra.mxu0 %v5946
        %9267 = vmatpush.bf16.msra.mxu0 %v5919
        %9268 = vmatmul.bf16.gmra.mxu0 %v1526
        %v9269 = vpop.f32.mrf.mxu0
        %v9270 = vadd.f32 %v9257, %v9269
        %v9271 = vpop.f32.mrf.mxu0
        %9272 = vdwg.mxu0
        %9273 = vmatpush.bf16.msra.mxu0 %v6324
        %9274 = vmatpush.bf16.msra.mxu0 %v6297
        %9275 = vmatpush.bf16.msra.mxu0 %v6270
        %9276 = vmatpush.bf16.msra.mxu0 %v6243
        %9277 = vmatpush.bf16.msra.mxu0 %v6216
        %9278 = vmatpush.bf16.msra.mxu0 %v6189
        %9279 = vmatpush.bf16.msra.mxu0 %v6162
        %9280 = vmatpush.bf16.msra.mxu0 %v6135
        %9281 = vmatmul.bf16.gmra.mxu0 %v1527
        %v9282 = vpop.f32.mrf.mxu0
        %v9283 = vadd.f32 %v9270, %v9282
        %v9284 = vpop.f32.mrf.mxu0
        %9285 = vdwg.mxu0
        %9286 = vmatpush.bf16.msra.mxu0 %v6540
        %9287 = vmatpush.bf16.msra.mxu0 %v6513
        %9288 = vmatpush.bf16.msra.mxu0 %v6486
        %9289 = vmatpush.bf16.msra.mxu0 %v6459
        %9290 = vmatpush.bf16.msra.mxu0 %v6432
        %9291 = vmatpush.bf16.msra.mxu0 %v6405
        %9292 = vmatpush.bf16.msra.mxu0 %v6378
        %9293 = vmatpush.bf16.msra.mxu0 %v6351
        %9294 = vmatmul.bf16.gmra.mxu0 %v1528
        %v9295 = vpop.f32.mrf.mxu0
        %v9296 = vadd.f32 %v9283, %v9295
        %v9297 = vpop.f32.mrf.mxu0
        %9298 = vdwg.mxu0
        %9299 = vmatpush.bf16.msra.mxu0 %v6756
        %9300 = vmatpush.bf16.msra.mxu0 %v6729
        %9301 = vmatpush.bf16.msra.mxu0 %v6702
        %9302 = vmatpush.bf16.msra.mxu0 %v6675
        %9303 = vmatpush.bf16.msra.mxu0 %v6648
        %9304 = vmatpush.bf16.msra.mxu0 %v6621
        %9305 = vmatpush.bf16.msra.mxu0 %v6594
        %9306 = vmatpush.bf16.msra.mxu0 %v6567
        %9307 = vmatmul.bf16.gmra.mxu0 %v1529
        %v9308 = vpop.f32.mrf.mxu0
        %v9309 = vadd.f32 %v9296, %v9308
        %v9310 = vpop.f32.mrf.mxu0
        %9311 = vdwg.mxu0
        %9312 = vmatpush.bf16.msra.mxu0 %v5677
        %9313 = vmatpush.bf16.msra.mxu0 %v5650
        %9314 = vmatpush.bf16.msra.mxu0 %v5623
        %9315 = vmatpush.bf16.msra.mxu0 %v5596
        %9316 = vmatpush.bf16.msra.mxu0 %v5569
        %9317 = vmatpush.bf16.msra.mxu0 %v5542
        %9318 = vmatpush.bf16.msra.mxu0 %v5515
        %9319 = vmatpush.bf16.msra.mxu0 %v5488
        %9320 = vmatmul.bf16.gmra.mxu0 %v1524
        %v9321 = vpop.f32.mrf.mxu0
        %v9322 = vadd.f32 0.0, %v9321
        %v9323 = vpop.f32.mrf.mxu0
        %9324 = vdwg.mxu0
        %9325 = vmatpush.bf16.msra.mxu0 %v5893
        %9326 = vmatpush.bf16.msra.mxu0 %v5866
        %9327 = vmatpush.bf16.msra.mxu0 %v5839
        %9328 = vmatpush.bf16.msra.mxu0 %v5812
        %9329 = vmatpush.bf16.msra.mxu0 %v5785
        %9330 = vmatpush.bf16.msra.mxu0 %v5758
        %9331 = vmatpush.bf16.msra.mxu0 %v5731
        %9332 = vmatpush.bf16.msra.mxu0 %v5704
        %9333 = vmatmul.bf16.gmra.mxu0 %v1525
        %v9334 = vpop.f32.mrf.mxu0
        %v9335 = vadd.f32 %v9322, %v9334
        %v9336 = vpop.f32.mrf.mxu0
        %9337 = vdwg.mxu0
        %9338 = vmatpush.bf16.msra.mxu0 %v6109
        %9339 = vmatpush.bf16.msra.mxu0 %v6082
        %9340 = vmatpush.bf16.msra.mxu0 %v6055
        %9341 = vmatpush.bf16.msra.mxu0 %v6028
        %9342 = vmatpush.bf16.msra.mxu0 %v6001
        %9343 = vmatpush.bf16.msra.mxu0 %v5974
        %9344 = vmatpush.bf16.msra.mxu0 %v5947
        %9345 = vmatpush.bf16.msra.mxu0 %v5920
        %9346 = vmatmul.bf16.gmra.mxu0 %v1526
        %v9347 = vpop.f32.mrf.mxu0
        %v9348 = vadd.f32 %v9335, %v9347
        %v9349 = vpop.f32.mrf.mxu0
        %9350 = vdwg.mxu0
        %9351 = vmatpush.bf16.msra.mxu0 %v6325
        %9352 = vmatpush.bf16.msra.mxu0 %v6298
        %9353 = vmatpush.bf16.msra.mxu0 %v6271
        %9354 = vmatpush.bf16.msra.mxu0 %v6244
        %9355 = vmatpush.bf16.msra.mxu0 %v6217
        %9356 = vmatpush.bf16.msra.mxu0 %v6190
        %9357 = vmatpush.bf16.msra.mxu0 %v6163
        %9358 = vmatpush.bf16.msra.mxu0 %v6136
        %9359 = vmatmul.bf16.gmra.mxu0 %v1527
        %v9360 = vpop.f32.mrf.mxu0
        %v9361 = vadd.f32 %v9348, %v9360
        %v9362 = vpop.f32.mrf.mxu0
        %9363 = vdwg.mxu0
        %9364 = vmatpush.bf16.msra.mxu0 %v6541
        %9365 = vmatpush.bf16.msra.mxu0 %v6514
        %9366 = vmatpush.bf16.msra.mxu0 %v6487
        %9367 = vmatpush.bf16.msra.mxu0 %v6460
        %9368 = vmatpush.bf16.msra.mxu0 %v6433
        %9369 = vmatpush.bf16.msra.mxu0 %v6406
        %9370 = vmatpush.bf16.msra.mxu0 %v6379
        %9371 = vmatpush.bf16.msra.mxu0 %v6352
        %9372 = vmatmul.bf16.gmra.mxu0 %v1528
        %v9373 = vpop.f32.mrf.mxu0
        %v9374 = vadd.f32 %v9361, %v9373
        %v9375 = vpop.f32.mrf.mxu0
        %9376 = vdwg.mxu0
        %9377 = vmatpush.bf16.msra.mxu0 %v6757
        %9378 = vmatpush.bf16.msra.mxu0 %v6730
        %9379 = vmatpush.bf16.msra.mxu0 %v6703
        %9380 = vmatpush.bf16.msra.mxu0 %v6676
        %9381 = vmatpush.bf16.msra.mxu0 %v6649
        %9382 = vmatpush.bf16.msra.mxu0 %v6622
        %9383 = vmatpush.bf16.msra.mxu0 %v6595
        %9384 = vmatpush.bf16.msra.mxu0 %v6568
        %9385 = vmatmul.bf16.gmra.mxu0 %v1529
        %v9386 = vpop.f32.mrf.mxu0
        %v9387 = vadd.f32 %v9374, %v9386
        %v9388 = vpop.f32.mrf.mxu0
        %9389 = vdwg.mxu0
        %9390 = vmatpush.bf16.msra.mxu0 %v5678
        %9391 = vmatpush.bf16.msra.mxu0 %v5651
        %9392 = vmatpush.bf16.msra.mxu0 %v5624
        %9393 = vmatpush.bf16.msra.mxu0 %v5597
        %9394 = vmatpush.bf16.msra.mxu0 %v5570
        %9395 = vmatpush.bf16.msra.mxu0 %v5543
        %9396 = vmatpush.bf16.msra.mxu0 %v5516
        %9397 = vmatpush.bf16.msra.mxu0 %v5489
        %9398 = vmatmul.bf16.gmra.mxu0 %v1524
        %v9399 = vpop.f32.mrf.mxu0
        %v9400 = vadd.f32 0.0, %v9399
        %v9401 = vpop.f32.mrf.mxu0
        %9402 = vdwg.mxu0
        %9403 = vmatpush.bf16.msra.mxu0 %v5894
        %9404 = vmatpush.bf16.msra.mxu0 %v5867
        %9405 = vmatpush.bf16.msra.mxu0 %v5840
        %9406 = vmatpush.bf16.msra.mxu0 %v5813
        %9407 = vmatpush.bf16.msra.mxu0 %v5786
        %9408 = vmatpush.bf16.msra.mxu0 %v5759
        %9409 = vmatpush.bf16.msra.mxu0 %v5732
        %9410 = vmatpush.bf16.msra.mxu0 %v5705
        %9411 = vmatmul.bf16.gmra.mxu0 %v1525
        %v9412 = vpop.f32.mrf.mxu0
        %v9413 = vadd.f32 %v9400, %v9412
        %v9414 = vpop.f32.mrf.mxu0
        %9415 = vdwg.mxu0
        %9416 = vmatpush.bf16.msra.mxu0 %v6110
        %9417 = vmatpush.bf16.msra.mxu0 %v6083
        %9418 = vmatpush.bf16.msra.mxu0 %v6056
        %9419 = vmatpush.bf16.msra.mxu0 %v6029
        %9420 = vmatpush.bf16.msra.mxu0 %v6002
        %9421 = vmatpush.bf16.msra.mxu0 %v5975
        %9422 = vmatpush.bf16.msra.mxu0 %v5948
        %9423 = vmatpush.bf16.msra.mxu0 %v5921
        %9424 = vmatmul.bf16.gmra.mxu0 %v1526
        %v9425 = vpop.f32.mrf.mxu0
        %v9426 = vadd.f32 %v9413, %v9425
        %v9427 = vpop.f32.mrf.mxu0
        %9428 = vdwg.mxu0
        %9429 = vmatpush.bf16.msra.mxu0 %v6326
        %9430 = vmatpush.bf16.msra.mxu0 %v6299
        %9431 = vmatpush.bf16.msra.mxu0 %v6272
        %9432 = vmatpush.bf16.msra.mxu0 %v6245
        %9433 = vmatpush.bf16.msra.mxu0 %v6218
        %9434 = vmatpush.bf16.msra.mxu0 %v6191
        %9435 = vmatpush.bf16.msra.mxu0 %v6164
        %9436 = vmatpush.bf16.msra.mxu0 %v6137
        %9437 = vmatmul.bf16.gmra.mxu0 %v1527
        %v9438 = vpop.f32.mrf.mxu0
        %v9439 = vadd.f32 %v9426, %v9438
        %v9440 = vpop.f32.mrf.mxu0
        %9441 = vdwg.mxu0
        %9442 = vmatpush.bf16.msra.mxu0 %v6542
        %9443 = vmatpush.bf16.msra.mxu0 %v6515
        %9444 = vmatpush.bf16.msra.mxu0 %v6488
        %9445 = vmatpush.bf16.msra.mxu0 %v6461
        %9446 = vmatpush.bf16.msra.mxu0 %v6434
        %9447 = vmatpush.bf16.msra.mxu0 %v6407
        %9448 = vmatpush.bf16.msra.mxu0 %v6380
        %9449 = vmatpush.bf16.msra.mxu0 %v6353
        %9450 = vmatmul.bf16.gmra.mxu0 %v1528
        %v9451 = vpop.f32.mrf.mxu0
        %v9452 = vadd.f32 %v9439, %v9451
        %v9453 = vpop.f32.mrf.mxu0
        %9454 = vdwg.mxu0
        %9455 = vmatpush.bf16.msra.mxu0 %v6758
        %9456 = vmatpush.bf16.msra.mxu0 %v6731
        %9457 = vmatpush.bf16.msra.mxu0 %v6704
        %9458 = vmatpush.bf16.msra.mxu0 %v6677
        %9459 = vmatpush.bf16.msra.mxu0 %v6650
        %9460 = vmatpush.bf16.msra.mxu0 %v6623
        %9461 = vmatpush.bf16.msra.mxu0 %v6596
        %9462 = vmatpush.bf16.msra.mxu0 %v6569
        %9463 = vmatmul.bf16.gmra.mxu0 %v1529
        %v9464 = vpop.f32.mrf.mxu0
        %v9465 = vadd.f32 %v9452, %v9464
        %v9466 = vpop.f32.mrf.mxu0
        %9467 = vdwg.mxu0
        %9468 = vmatpush.bf16.msra.mxu0 %v5679
        %9469 = vmatpush.bf16.msra.mxu0 %v5652
        %9470 = vmatpush.bf16.msra.mxu0 %v5625
        %9471 = vmatpush.bf16.msra.mxu0 %v5598
        %9472 = vmatpush.bf16.msra.mxu0 %v5571
        %9473 = vmatpush.bf16.msra.mxu0 %v5544
        %9474 = vmatpush.bf16.msra.mxu0 %v5517
        %9475 = vmatpush.bf16.msra.mxu0 %v5490
        %9476 = vmatmul.bf16.gmra.mxu0 %v1524
        %v9477 = vpop.f32.mrf.mxu0
        %v9478 = vadd.f32 0.0, %v9477
        %v9479 = vpop.f32.mrf.mxu0
        %9480 = vdwg.mxu0
        %9481 = vmatpush.bf16.msra.mxu0 %v5895
        %9482 = vmatpush.bf16.msra.mxu0 %v5868
        %9483 = vmatpush.bf16.msra.mxu0 %v5841
        %9484 = vmatpush.bf16.msra.mxu0 %v5814
        %9485 = vmatpush.bf16.msra.mxu0 %v5787
        %9486 = vmatpush.bf16.msra.mxu0 %v5760
        %9487 = vmatpush.bf16.msra.mxu0 %v5733
        %9488 = vmatpush.bf16.msra.mxu0 %v5706
        %9489 = vmatmul.bf16.gmra.mxu0 %v1525
        %v9490 = vpop.f32.mrf.mxu0
        %v9491 = vadd.f32 %v9478, %v9490
        %v9492 = vpop.f32.mrf.mxu0
        %9493 = vdwg.mxu0
        %9494 = vmatpush.bf16.msra.mxu0 %v6111
        %9495 = vmatpush.bf16.msra.mxu0 %v6084
        %9496 = vmatpush.bf16.msra.mxu0 %v6057
        %9497 = vmatpush.bf16.msra.mxu0 %v6030
        %9498 = vmatpush.bf16.msra.mxu0 %v6003
        %9499 = vmatpush.bf16.msra.mxu0 %v5976
        %9500 = vmatpush.bf16.msra.mxu0 %v5949
        %9501 = vmatpush.bf16.msra.mxu0 %v5922
        %9502 = vmatmul.bf16.gmra.mxu0 %v1526
        %v9503 = vpop.f32.mrf.mxu0
        %v9504 = vadd.f32 %v9491, %v9503
        %v9505 = vpop.f32.mrf.mxu0
        %9506 = vdwg.mxu0
        %9507 = vmatpush.bf16.msra.mxu0 %v6327
        %9508 = vmatpush.bf16.msra.mxu0 %v6300
        %9509 = vmatpush.bf16.msra.mxu0 %v6273
        %9510 = vmatpush.bf16.msra.mxu0 %v6246
        %9511 = vmatpush.bf16.msra.mxu0 %v6219
        %9512 = vmatpush.bf16.msra.mxu0 %v6192
        %9513 = vmatpush.bf16.msra.mxu0 %v6165
        %9514 = vmatpush.bf16.msra.mxu0 %v6138
        %9515 = vmatmul.bf16.gmra.mxu0 %v1527
        %v9516 = vpop.f32.mrf.mxu0
        %v9517 = vadd.f32 %v9504, %v9516
        %v9518 = vpop.f32.mrf.mxu0
        %9519 = vdwg.mxu0
        %9520 = vmatpush.bf16.msra.mxu0 %v6543
        %9521 = vmatpush.bf16.msra.mxu0 %v6516
        %9522 = vmatpush.bf16.msra.mxu0 %v6489
        %9523 = vmatpush.bf16.msra.mxu0 %v6462
        %9524 = vmatpush.bf16.msra.mxu0 %v6435
        %9525 = vmatpush.bf16.msra.mxu0 %v6408
        %9526 = vmatpush.bf16.msra.mxu0 %v6381
        %9527 = vmatpush.bf16.msra.mxu0 %v6354
        %9528 = vmatmul.bf16.gmra.mxu0 %v1528
        %v9529 = vpop.f32.mrf.mxu0
        %v9530 = vadd.f32 %v9517, %v9529
        %v9531 = vpop.f32.mrf.mxu0
        %9532 = vdwg.mxu0
        %9533 = vmatpush.bf16.msra.mxu0 %v6759
        %9534 = vmatpush.bf16.msra.mxu0 %v6732
        %9535 = vmatpush.bf16.msra.mxu0 %v6705
        %9536 = vmatpush.bf16.msra.mxu0 %v6678
        %9537 = vmatpush.bf16.msra.mxu0 %v6651
        %9538 = vmatpush.bf16.msra.mxu0 %v6624
        %9539 = vmatpush.bf16.msra.mxu0 %v6597
        %9540 = vmatpush.bf16.msra.mxu0 %v6570
        %9541 = vmatmul.bf16.gmra.mxu0 %v1529
        %v9542 = vpop.f32.mrf.mxu0
        %v9543 = vadd.f32 %v9530, %v9542
        %v9544 = vpop.f32.mrf.mxu0
        %9545 = vdwg.mxu0
        %9546 = vmatpush.bf16.msra.mxu0 %v5680
        %9547 = vmatpush.bf16.msra.mxu0 %v5653
        %9548 = vmatpush.bf16.msra.mxu0 %v5626
        %9549 = vmatpush.bf16.msra.mxu0 %v5599
        %9550 = vmatpush.bf16.msra.mxu0 %v5572
        %9551 = vmatpush.bf16.msra.mxu0 %v5545
        %9552 = vmatpush.bf16.msra.mxu0 %v5518
        %9553 = vmatpush.bf16.msra.mxu0 %v5491
        %9554 = vmatmul.bf16.gmra.mxu0 %v1524
        %v9555 = vpop.f32.mrf.mxu0
        %v9556 = vadd.f32 0.0, %v9555
        %v9557 = vpop.f32.mrf.mxu0
        %9558 = vdwg.mxu0
        %9559 = vmatpush.bf16.msra.mxu0 %v5896
        %9560 = vmatpush.bf16.msra.mxu0 %v5869
        %9561 = vmatpush.bf16.msra.mxu0 %v5842
        %9562 = vmatpush.bf16.msra.mxu0 %v5815
        %9563 = vmatpush.bf16.msra.mxu0 %v5788
        %9564 = vmatpush.bf16.msra.mxu0 %v5761
        %9565 = vmatpush.bf16.msra.mxu0 %v5734
        %9566 = vmatpush.bf16.msra.mxu0 %v5707
        %9567 = vmatmul.bf16.gmra.mxu0 %v1525
        %v9568 = vpop.f32.mrf.mxu0
        %v9569 = vadd.f32 %v9556, %v9568
        %v9570 = vpop.f32.mrf.mxu0
        %9571 = vdwg.mxu0
        %9572 = vmatpush.bf16.msra.mxu0 %v6112
        %9573 = vmatpush.bf16.msra.mxu0 %v6085
        %9574 = vmatpush.bf16.msra.mxu0 %v6058
        %9575 = vmatpush.bf16.msra.mxu0 %v6031
        %9576 = vmatpush.bf16.msra.mxu0 %v6004
        %9577 = vmatpush.bf16.msra.mxu0 %v5977
        %9578 = vmatpush.bf16.msra.mxu0 %v5950
        %9579 = vmatpush.bf16.msra.mxu0 %v5923
        %9580 = vmatmul.bf16.gmra.mxu0 %v1526
        %v9581 = vpop.f32.mrf.mxu0
        %v9582 = vadd.f32 %v9569, %v9581
        %v9583 = vpop.f32.mrf.mxu0
        %9584 = vdwg.mxu0
        %9585 = vmatpush.bf16.msra.mxu0 %v6328
        %9586 = vmatpush.bf16.msra.mxu0 %v6301
        %9587 = vmatpush.bf16.msra.mxu0 %v6274
        %9588 = vmatpush.bf16.msra.mxu0 %v6247
        %9589 = vmatpush.bf16.msra.mxu0 %v6220
        %9590 = vmatpush.bf16.msra.mxu0 %v6193
        %9591 = vmatpush.bf16.msra.mxu0 %v6166
        %9592 = vmatpush.bf16.msra.mxu0 %v6139
        %9593 = vmatmul.bf16.gmra.mxu0 %v1527
        %v9594 = vpop.f32.mrf.mxu0
        %v9595 = vadd.f32 %v9582, %v9594
        %v9596 = vpop.f32.mrf.mxu0
        %9597 = vdwg.mxu0
        %9598 = vmatpush.bf16.msra.mxu0 %v6544
        %9599 = vmatpush.bf16.msra.mxu0 %v6517
        %9600 = vmatpush.bf16.msra.mxu0 %v6490
        %9601 = vmatpush.bf16.msra.mxu0 %v6463
        %9602 = vmatpush.bf16.msra.mxu0 %v6436
        %9603 = vmatpush.bf16.msra.mxu0 %v6409
        %9604 = vmatpush.bf16.msra.mxu0 %v6382
        %9605 = vmatpush.bf16.msra.mxu0 %v6355
        %9606 = vmatmul.bf16.gmra.mxu0 %v1528
        %v9607 = vpop.f32.mrf.mxu0
        %v9608 = vadd.f32 %v9595, %v9607
        %v9609 = vpop.f32.mrf.mxu0
        %9610 = vdwg.mxu0
        %9611 = vmatpush.bf16.msra.mxu0 %v6760
        %9612 = vmatpush.bf16.msra.mxu0 %v6733
        %9613 = vmatpush.bf16.msra.mxu0 %v6706
        %9614 = vmatpush.bf16.msra.mxu0 %v6679
        %9615 = vmatpush.bf16.msra.mxu0 %v6652
        %9616 = vmatpush.bf16.msra.mxu0 %v6625
        %9617 = vmatpush.bf16.msra.mxu0 %v6598
        %9618 = vmatpush.bf16.msra.mxu0 %v6571
        %9619 = vmatmul.bf16.gmra.mxu0 %v1529
        %v9620 = vpop.f32.mrf.mxu0
        %v9621 = vadd.f32 %v9608, %v9620
        %v9622 = vpop.f32.mrf.mxu0
        %9623 = vdwg.mxu0
        %9624 = vmatpush.bf16.msra.mxu0 %v5681
        %9625 = vmatpush.bf16.msra.mxu0 %v5654
        %9626 = vmatpush.bf16.msra.mxu0 %v5627
        %9627 = vmatpush.bf16.msra.mxu0 %v5600
        %9628 = vmatpush.bf16.msra.mxu0 %v5573
        %9629 = vmatpush.bf16.msra.mxu0 %v5546
        %9630 = vmatpush.bf16.msra.mxu0 %v5519
        %9631 = vmatpush.bf16.msra.mxu0 %v5492
        %9632 = vmatmul.bf16.gmra.mxu0 %v1524
        %v9633 = vpop.f32.mrf.mxu0
        %v9634 = vadd.f32 0.0, %v9633
        %v9635 = vpop.f32.mrf.mxu0
        %9636 = vdwg.mxu0
        %9637 = vmatpush.bf16.msra.mxu0 %v5897
        %9638 = vmatpush.bf16.msra.mxu0 %v5870
        %9639 = vmatpush.bf16.msra.mxu0 %v5843
        %9640 = vmatpush.bf16.msra.mxu0 %v5816
        %9641 = vmatpush.bf16.msra.mxu0 %v5789
        %9642 = vmatpush.bf16.msra.mxu0 %v5762
        %9643 = vmatpush.bf16.msra.mxu0 %v5735
        %9644 = vmatpush.bf16.msra.mxu0 %v5708
        %9645 = vmatmul.bf16.gmra.mxu0 %v1525
        %v9646 = vpop.f32.mrf.mxu0
        %v9647 = vadd.f32 %v9634, %v9646
        %v9648 = vpop.f32.mrf.mxu0
        %9649 = vdwg.mxu0
        %9650 = vmatpush.bf16.msra.mxu0 %v6113
        %9651 = vmatpush.bf16.msra.mxu0 %v6086
        %9652 = vmatpush.bf16.msra.mxu0 %v6059
        %9653 = vmatpush.bf16.msra.mxu0 %v6032
        %9654 = vmatpush.bf16.msra.mxu0 %v6005
        %9655 = vmatpush.bf16.msra.mxu0 %v5978
        %9656 = vmatpush.bf16.msra.mxu0 %v5951
        %9657 = vmatpush.bf16.msra.mxu0 %v5924
        %9658 = vmatmul.bf16.gmra.mxu0 %v1526
        %v9659 = vpop.f32.mrf.mxu0
        %v9660 = vadd.f32 %v9647, %v9659
        %v9661 = vpop.f32.mrf.mxu0
        %9662 = vdwg.mxu0
        %9663 = vmatpush.bf16.msra.mxu0 %v6329
        %9664 = vmatpush.bf16.msra.mxu0 %v6302
        %9665 = vmatpush.bf16.msra.mxu0 %v6275
        %9666 = vmatpush.bf16.msra.mxu0 %v6248
        %9667 = vmatpush.bf16.msra.mxu0 %v6221
        %9668 = vmatpush.bf16.msra.mxu0 %v6194
        %9669 = vmatpush.bf16.msra.mxu0 %v6167
        %9670 = vmatpush.bf16.msra.mxu0 %v6140
        %9671 = vmatmul.bf16.gmra.mxu0 %v1527
        %v9672 = vpop.f32.mrf.mxu0
        %v9673 = vadd.f32 %v9660, %v9672
        %v9674 = vpop.f32.mrf.mxu0
        %9675 = vdwg.mxu0
        %9676 = vmatpush.bf16.msra.mxu0 %v6545
        %9677 = vmatpush.bf16.msra.mxu0 %v6518
        %9678 = vmatpush.bf16.msra.mxu0 %v6491
        %9679 = vmatpush.bf16.msra.mxu0 %v6464
        %9680 = vmatpush.bf16.msra.mxu0 %v6437
        %9681 = vmatpush.bf16.msra.mxu0 %v6410
        %9682 = vmatpush.bf16.msra.mxu0 %v6383
        %9683 = vmatpush.bf16.msra.mxu0 %v6356
        %9684 = vmatmul.bf16.gmra.mxu0 %v1528
        %v9685 = vpop.f32.mrf.mxu0
        %v9686 = vadd.f32 %v9673, %v9685
        %v9687 = vpop.f32.mrf.mxu0
        %9688 = vdwg.mxu0
        %9689 = vmatpush.bf16.msra.mxu0 %v6761
        %9690 = vmatpush.bf16.msra.mxu0 %v6734
        %9691 = vmatpush.bf16.msra.mxu0 %v6707
        %9692 = vmatpush.bf16.msra.mxu0 %v6680
        %9693 = vmatpush.bf16.msra.mxu0 %v6653
        %9694 = vmatpush.bf16.msra.mxu0 %v6626
        %9695 = vmatpush.bf16.msra.mxu0 %v6599
        %9696 = vmatpush.bf16.msra.mxu0 %v6572
        %9697 = vmatmul.bf16.gmra.mxu0 %v1529
        %v9698 = vpop.f32.mrf.mxu0
        %v9699 = vadd.f32 %v9686, %v9698
        %v9700 = vpop.f32.mrf.mxu0
        %9701 = vdwg.mxu0
        %9702 = vmatpush.bf16.msra.mxu0 %v5682
        %9703 = vmatpush.bf16.msra.mxu0 %v5655
        %9704 = vmatpush.bf16.msra.mxu0 %v5628
        %9705 = vmatpush.bf16.msra.mxu0 %v5601
        %9706 = vmatpush.bf16.msra.mxu0 %v5574
        %9707 = vmatpush.bf16.msra.mxu0 %v5547
        %9708 = vmatpush.bf16.msra.mxu0 %v5520
        %9709 = vmatpush.bf16.msra.mxu0 %v5493
        %9710 = vmatmul.bf16.gmra.mxu0 %v1524
        %v9711 = vpop.f32.mrf.mxu0
        %v9712 = vadd.f32 0.0, %v9711
        %v9713 = vpop.f32.mrf.mxu0
        %9714 = vdwg.mxu0
        %9715 = vmatpush.bf16.msra.mxu0 %v5898
        %9716 = vmatpush.bf16.msra.mxu0 %v5871
        %9717 = vmatpush.bf16.msra.mxu0 %v5844
        %9718 = vmatpush.bf16.msra.mxu0 %v5817
        %9719 = vmatpush.bf16.msra.mxu0 %v5790
        %9720 = vmatpush.bf16.msra.mxu0 %v5763
        %9721 = vmatpush.bf16.msra.mxu0 %v5736
        %9722 = vmatpush.bf16.msra.mxu0 %v5709
        %9723 = vmatmul.bf16.gmra.mxu0 %v1525
        %v9724 = vpop.f32.mrf.mxu0
        %v9725 = vadd.f32 %v9712, %v9724
        %v9726 = vpop.f32.mrf.mxu0
        %9727 = vdwg.mxu0
        %9728 = vmatpush.bf16.msra.mxu0 %v6114
        %9729 = vmatpush.bf16.msra.mxu0 %v6087
        %9730 = vmatpush.bf16.msra.mxu0 %v6060
        %9731 = vmatpush.bf16.msra.mxu0 %v6033
        %9732 = vmatpush.bf16.msra.mxu0 %v6006
        %9733 = vmatpush.bf16.msra.mxu0 %v5979
        %9734 = vmatpush.bf16.msra.mxu0 %v5952
        %9735 = vmatpush.bf16.msra.mxu0 %v5925
        %9736 = vmatmul.bf16.gmra.mxu0 %v1526
        %v9737 = vpop.f32.mrf.mxu0
        %v9738 = vadd.f32 %v9725, %v9737
        %v9739 = vpop.f32.mrf.mxu0
        %9740 = vdwg.mxu0
        %9741 = vmatpush.bf16.msra.mxu0 %v6330
        %9742 = vmatpush.bf16.msra.mxu0 %v6303
        %9743 = vmatpush.bf16.msra.mxu0 %v6276
        %9744 = vmatpush.bf16.msra.mxu0 %v6249
        %9745 = vmatpush.bf16.msra.mxu0 %v6222
        %9746 = vmatpush.bf16.msra.mxu0 %v6195
        %9747 = vmatpush.bf16.msra.mxu0 %v6168
        %9748 = vmatpush.bf16.msra.mxu0 %v6141
        %9749 = vmatmul.bf16.gmra.mxu0 %v1527
        %v9750 = vpop.f32.mrf.mxu0
        %v9751 = vadd.f32 %v9738, %v9750
        %v9752 = vpop.f32.mrf.mxu0
        %9753 = vdwg.mxu0
        %9754 = vmatpush.bf16.msra.mxu0 %v6546
        %9755 = vmatpush.bf16.msra.mxu0 %v6519
        %9756 = vmatpush.bf16.msra.mxu0 %v6492
        %9757 = vmatpush.bf16.msra.mxu0 %v6465
        %9758 = vmatpush.bf16.msra.mxu0 %v6438
        %9759 = vmatpush.bf16.msra.mxu0 %v6411
        %9760 = vmatpush.bf16.msra.mxu0 %v6384
        %9761 = vmatpush.bf16.msra.mxu0 %v6357
        %9762 = vmatmul.bf16.gmra.mxu0 %v1528
        %v9763 = vpop.f32.mrf.mxu0
        %v9764 = vadd.f32 %v9751, %v9763
        %v9765 = vpop.f32.mrf.mxu0
        %9766 = vdwg.mxu0
        %9767 = vmatpush.bf16.msra.mxu0 %v6762
        %9768 = vmatpush.bf16.msra.mxu0 %v6735
        %9769 = vmatpush.bf16.msra.mxu0 %v6708
        %9770 = vmatpush.bf16.msra.mxu0 %v6681
        %9771 = vmatpush.bf16.msra.mxu0 %v6654
        %9772 = vmatpush.bf16.msra.mxu0 %v6627
        %9773 = vmatpush.bf16.msra.mxu0 %v6600
        %9774 = vmatpush.bf16.msra.mxu0 %v6573
        %9775 = vmatmul.bf16.gmra.mxu0 %v1529
        %v9776 = vpop.f32.mrf.mxu0
        %v9777 = vadd.f32 %v9764, %v9776
        %v9778 = vpop.f32.mrf.mxu0
        %9779 = vdwg.mxu0
        %9780 = vmatpush.bf16.msra.mxu0 %v5683
        %9781 = vmatpush.bf16.msra.mxu0 %v5656
        %9782 = vmatpush.bf16.msra.mxu0 %v5629
        %9783 = vmatpush.bf16.msra.mxu0 %v5602
        %9784 = vmatpush.bf16.msra.mxu0 %v5575
        %9785 = vmatpush.bf16.msra.mxu0 %v5548
        %9786 = vmatpush.bf16.msra.mxu0 %v5521
        %9787 = vmatpush.bf16.msra.mxu0 %v5494
        %9788 = vmatmul.bf16.gmra.mxu0 %v1524
        %v9789 = vpop.f32.mrf.mxu0
        %v9790 = vadd.f32 0.0, %v9789
        %v9791 = vpop.f32.mrf.mxu0
        %9792 = vdwg.mxu0
        %9793 = vmatpush.bf16.msra.mxu0 %v5899
        %9794 = vmatpush.bf16.msra.mxu0 %v5872
        %9795 = vmatpush.bf16.msra.mxu0 %v5845
        %9796 = vmatpush.bf16.msra.mxu0 %v5818
        %9797 = vmatpush.bf16.msra.mxu0 %v5791
        %9798 = vmatpush.bf16.msra.mxu0 %v5764
        %9799 = vmatpush.bf16.msra.mxu0 %v5737
        %9800 = vmatpush.bf16.msra.mxu0 %v5710
        %9801 = vmatmul.bf16.gmra.mxu0 %v1525
        %v9802 = vpop.f32.mrf.mxu0
        %v9803 = vadd.f32 %v9790, %v9802
        %v9804 = vpop.f32.mrf.mxu0
        %9805 = vdwg.mxu0
        %9806 = vmatpush.bf16.msra.mxu0 %v6115
        %9807 = vmatpush.bf16.msra.mxu0 %v6088
        %9808 = vmatpush.bf16.msra.mxu0 %v6061
        %9809 = vmatpush.bf16.msra.mxu0 %v6034
        %9810 = vmatpush.bf16.msra.mxu0 %v6007
        %9811 = vmatpush.bf16.msra.mxu0 %v5980
        %9812 = vmatpush.bf16.msra.mxu0 %v5953
        %9813 = vmatpush.bf16.msra.mxu0 %v5926
        %9814 = vmatmul.bf16.gmra.mxu0 %v1526
        %v9815 = vpop.f32.mrf.mxu0
        %v9816 = vadd.f32 %v9803, %v9815
        %v9817 = vpop.f32.mrf.mxu0
        %9818 = vdwg.mxu0
        %9819 = vmatpush.bf16.msra.mxu0 %v6331
        %9820 = vmatpush.bf16.msra.mxu0 %v6304
        %9821 = vmatpush.bf16.msra.mxu0 %v6277
        %9822 = vmatpush.bf16.msra.mxu0 %v6250
        %9823 = vmatpush.bf16.msra.mxu0 %v6223
        %9824 = vmatpush.bf16.msra.mxu0 %v6196
        %9825 = vmatpush.bf16.msra.mxu0 %v6169
        %9826 = vmatpush.bf16.msra.mxu0 %v6142
        %9827 = vmatmul.bf16.gmra.mxu0 %v1527
        %v9828 = vpop.f32.mrf.mxu0
        %v9829 = vadd.f32 %v9816, %v9828
        %v9830 = vpop.f32.mrf.mxu0
        %9831 = vdwg.mxu0
        %9832 = vmatpush.bf16.msra.mxu0 %v6547
        %9833 = vmatpush.bf16.msra.mxu0 %v6520
        %9834 = vmatpush.bf16.msra.mxu0 %v6493
        %9835 = vmatpush.bf16.msra.mxu0 %v6466
        %9836 = vmatpush.bf16.msra.mxu0 %v6439
        %9837 = vmatpush.bf16.msra.mxu0 %v6412
        %9838 = vmatpush.bf16.msra.mxu0 %v6385
        %9839 = vmatpush.bf16.msra.mxu0 %v6358
        %9840 = vmatmul.bf16.gmra.mxu0 %v1528
        %v9841 = vpop.f32.mrf.mxu0
        %v9842 = vadd.f32 %v9829, %v9841
        %v9843 = vpop.f32.mrf.mxu0
        %9844 = vdwg.mxu0
        %9845 = vmatpush.bf16.msra.mxu0 %v6763
        %9846 = vmatpush.bf16.msra.mxu0 %v6736
        %9847 = vmatpush.bf16.msra.mxu0 %v6709
        %9848 = vmatpush.bf16.msra.mxu0 %v6682
        %9849 = vmatpush.bf16.msra.mxu0 %v6655
        %9850 = vmatpush.bf16.msra.mxu0 %v6628
        %9851 = vmatpush.bf16.msra.mxu0 %v6601
        %9852 = vmatpush.bf16.msra.mxu0 %v6574
        %9853 = vmatmul.bf16.gmra.mxu0 %v1529
        %v9854 = vpop.f32.mrf.mxu0
        %v9855 = vadd.f32 %v9842, %v9854
        %v9856 = vpop.f32.mrf.mxu0
        %9857 = vdwg.mxu0
        %9858 = vmatpush.bf16.msra.mxu0 %v5684
        %9859 = vmatpush.bf16.msra.mxu0 %v5657
        %9860 = vmatpush.bf16.msra.mxu0 %v5630
        %9861 = vmatpush.bf16.msra.mxu0 %v5603
        %9862 = vmatpush.bf16.msra.mxu0 %v5576
        %9863 = vmatpush.bf16.msra.mxu0 %v5549
        %9864 = vmatpush.bf16.msra.mxu0 %v5522
        %9865 = vmatpush.bf16.msra.mxu0 %v5495
        %9866 = vmatmul.bf16.gmra.mxu0 %v1524
        %v9867 = vpop.f32.mrf.mxu0
        %v9868 = vadd.f32 0.0, %v9867
        %v9869 = vpop.f32.mrf.mxu0
        %9870 = vdwg.mxu0
        %9871 = vmatpush.bf16.msra.mxu0 %v5900
        %9872 = vmatpush.bf16.msra.mxu0 %v5873
        %9873 = vmatpush.bf16.msra.mxu0 %v5846
        %9874 = vmatpush.bf16.msra.mxu0 %v5819
        %9875 = vmatpush.bf16.msra.mxu0 %v5792
        %9876 = vmatpush.bf16.msra.mxu0 %v5765
        %9877 = vmatpush.bf16.msra.mxu0 %v5738
        %9878 = vmatpush.bf16.msra.mxu0 %v5711
        %9879 = vmatmul.bf16.gmra.mxu0 %v1525
        %v9880 = vpop.f32.mrf.mxu0
        %v9881 = vadd.f32 %v9868, %v9880
        %v9882 = vpop.f32.mrf.mxu0
        %9883 = vdwg.mxu0
        %9884 = vmatpush.bf16.msra.mxu0 %v6116
        %9885 = vmatpush.bf16.msra.mxu0 %v6089
        %9886 = vmatpush.bf16.msra.mxu0 %v6062
        %9887 = vmatpush.bf16.msra.mxu0 %v6035
        %9888 = vmatpush.bf16.msra.mxu0 %v6008
        %9889 = vmatpush.bf16.msra.mxu0 %v5981
        %9890 = vmatpush.bf16.msra.mxu0 %v5954
        %9891 = vmatpush.bf16.msra.mxu0 %v5927
        %9892 = vmatmul.bf16.gmra.mxu0 %v1526
        %v9893 = vpop.f32.mrf.mxu0
        %v9894 = vadd.f32 %v9881, %v9893
        %v9895 = vpop.f32.mrf.mxu0
        %9896 = vdwg.mxu0
        %9897 = vmatpush.bf16.msra.mxu0 %v6332
        %9898 = vmatpush.bf16.msra.mxu0 %v6305
        %9899 = vmatpush.bf16.msra.mxu0 %v6278
        %9900 = vmatpush.bf16.msra.mxu0 %v6251
        %9901 = vmatpush.bf16.msra.mxu0 %v6224
        %9902 = vmatpush.bf16.msra.mxu0 %v6197
        %9903 = vmatpush.bf16.msra.mxu0 %v6170
        %9904 = vmatpush.bf16.msra.mxu0 %v6143
        %9905 = vmatmul.bf16.gmra.mxu0 %v1527
        %v9906 = vpop.f32.mrf.mxu0
        %v9907 = vadd.f32 %v9894, %v9906
        %v9908 = vpop.f32.mrf.mxu0
        %9909 = vdwg.mxu0
        %9910 = vmatpush.bf16.msra.mxu0 %v6548
        %9911 = vmatpush.bf16.msra.mxu0 %v6521
        %9912 = vmatpush.bf16.msra.mxu0 %v6494
        %9913 = vmatpush.bf16.msra.mxu0 %v6467
        %9914 = vmatpush.bf16.msra.mxu0 %v6440
        %9915 = vmatpush.bf16.msra.mxu0 %v6413
        %9916 = vmatpush.bf16.msra.mxu0 %v6386
        %9917 = vmatpush.bf16.msra.mxu0 %v6359
        %9918 = vmatmul.bf16.gmra.mxu0 %v1528
        %v9919 = vpop.f32.mrf.mxu0
        %v9920 = vadd.f32 %v9907, %v9919
        %v9921 = vpop.f32.mrf.mxu0
        %9922 = vdwg.mxu0
        %9923 = vmatpush.bf16.msra.mxu0 %v6764
        %9924 = vmatpush.bf16.msra.mxu0 %v6737
        %9925 = vmatpush.bf16.msra.mxu0 %v6710
        %9926 = vmatpush.bf16.msra.mxu0 %v6683
        %9927 = vmatpush.bf16.msra.mxu0 %v6656
        %9928 = vmatpush.bf16.msra.mxu0 %v6629
        %9929 = vmatpush.bf16.msra.mxu0 %v6602
        %9930 = vmatpush.bf16.msra.mxu0 %v6575
        %9931 = vmatmul.bf16.gmra.mxu0 %v1529
        %v9932 = vpop.f32.mrf.mxu0
        %v9933 = vadd.f32 %v9920, %v9932
        %v9934 = vpop.f32.mrf.mxu0
        %9935 = vdwg.mxu0
        %9936 = vmatpush.bf16.msra.mxu0 %v5685
        %9937 = vmatpush.bf16.msra.mxu0 %v5658
        %9938 = vmatpush.bf16.msra.mxu0 %v5631
        %9939 = vmatpush.bf16.msra.mxu0 %v5604
        %9940 = vmatpush.bf16.msra.mxu0 %v5577
        %9941 = vmatpush.bf16.msra.mxu0 %v5550
        %9942 = vmatpush.bf16.msra.mxu0 %v5523
        %9943 = vmatpush.bf16.msra.mxu0 %v5496
        %9944 = vmatmul.bf16.gmra.mxu0 %v1524
        %v9945 = vpop.f32.mrf.mxu0
        %v9946 = vadd.f32 0.0, %v9945
        %v9947 = vpop.f32.mrf.mxu0
        %9948 = vdwg.mxu0
        %9949 = vmatpush.bf16.msra.mxu0 %v5901
        %9950 = vmatpush.bf16.msra.mxu0 %v5874
        %9951 = vmatpush.bf16.msra.mxu0 %v5847
        %9952 = vmatpush.bf16.msra.mxu0 %v5820
        %9953 = vmatpush.bf16.msra.mxu0 %v5793
        %9954 = vmatpush.bf16.msra.mxu0 %v5766
        %9955 = vmatpush.bf16.msra.mxu0 %v5739
        %9956 = vmatpush.bf16.msra.mxu0 %v5712
        %9957 = vmatmul.bf16.gmra.mxu0 %v1525
        %v9958 = vpop.f32.mrf.mxu0
        %v9959 = vadd.f32 %v9946, %v9958
        %v9960 = vpop.f32.mrf.mxu0
        %9961 = vdwg.mxu0
        %9962 = vmatpush.bf16.msra.mxu0 %v6117
        %9963 = vmatpush.bf16.msra.mxu0 %v6090
        %9964 = vmatpush.bf16.msra.mxu0 %v6063
        %9965 = vmatpush.bf16.msra.mxu0 %v6036
        %9966 = vmatpush.bf16.msra.mxu0 %v6009
        %9967 = vmatpush.bf16.msra.mxu0 %v5982
        %9968 = vmatpush.bf16.msra.mxu0 %v5955
        %9969 = vmatpush.bf16.msra.mxu0 %v5928
        %9970 = vmatmul.bf16.gmra.mxu0 %v1526
        %v9971 = vpop.f32.mrf.mxu0
        %v9972 = vadd.f32 %v9959, %v9971
        %v9973 = vpop.f32.mrf.mxu0
        %9974 = vdwg.mxu0
        %9975 = vmatpush.bf16.msra.mxu0 %v6333
        %9976 = vmatpush.bf16.msra.mxu0 %v6306
        %9977 = vmatpush.bf16.msra.mxu0 %v6279
        %9978 = vmatpush.bf16.msra.mxu0 %v6252
        %9979 = vmatpush.bf16.msra.mxu0 %v6225
        %9980 = vmatpush.bf16.msra.mxu0 %v6198
        %9981 = vmatpush.bf16.msra.mxu0 %v6171
        %9982 = vmatpush.bf16.msra.mxu0 %v6144
        %9983 = vmatmul.bf16.gmra.mxu0 %v1527
        %v9984 = vpop.f32.mrf.mxu0
        %v9985 = vadd.f32 %v9972, %v9984
        %v9986 = vpop.f32.mrf.mxu0
        %9987 = vdwg.mxu0
        %9988 = vmatpush.bf16.msra.mxu0 %v6549
        %9989 = vmatpush.bf16.msra.mxu0 %v6522
        %9990 = vmatpush.bf16.msra.mxu0 %v6495
        %9991 = vmatpush.bf16.msra.mxu0 %v6468
        %9992 = vmatpush.bf16.msra.mxu0 %v6441
        %9993 = vmatpush.bf16.msra.mxu0 %v6414
        %9994 = vmatpush.bf16.msra.mxu0 %v6387
        %9995 = vmatpush.bf16.msra.mxu0 %v6360
        %9996 = vmatmul.bf16.gmra.mxu0 %v1528
        %v9997 = vpop.f32.mrf.mxu0
        %v9998 = vadd.f32 %v9985, %v9997
        %v9999 = vpop.f32.mrf.mxu0
        %10000 = vdwg.mxu0
        %10001 = vmatpush.bf16.msra.mxu0 %v6765
        %10002 = vmatpush.bf16.msra.mxu0 %v6738
        %10003 = vmatpush.bf16.msra.mxu0 %v6711
        %10004 = vmatpush.bf16.msra.mxu0 %v6684
        %10005 = vmatpush.bf16.msra.mxu0 %v6657
        %10006 = vmatpush.bf16.msra.mxu0 %v6630
        %10007 = vmatpush.bf16.msra.mxu0 %v6603
        %10008 = vmatpush.bf16.msra.mxu0 %v6576
        %10009 = vmatmul.bf16.gmra.mxu0 %v1529
        %v10010 = vpop.f32.mrf.mxu0
        %v10011 = vadd.f32 %v9998, %v10010
        %v10012 = vpop.f32.mrf.mxu0
        %10013 = vdwg.mxu0
        %10014 = vmatpush.bf16.msra.mxu0 %v5686
        %10015 = vmatpush.bf16.msra.mxu0 %v5659
        %10016 = vmatpush.bf16.msra.mxu0 %v5632
        %10017 = vmatpush.bf16.msra.mxu0 %v5605
        %10018 = vmatpush.bf16.msra.mxu0 %v5578
        %10019 = vmatpush.bf16.msra.mxu0 %v5551
        %10020 = vmatpush.bf16.msra.mxu0 %v5524
        %10021 = vmatpush.bf16.msra.mxu0 %v5497
        %10022 = vmatmul.bf16.gmra.mxu0 %v1524
        %v10023 = vpop.f32.mrf.mxu0
        %v10024 = vadd.f32 0.0, %v10023
        %v10025 = vpop.f32.mrf.mxu0
        %10026 = vdwg.mxu0
        %10027 = vmatpush.bf16.msra.mxu0 %v5902
        %10028 = vmatpush.bf16.msra.mxu0 %v5875
        %10029 = vmatpush.bf16.msra.mxu0 %v5848
        %10030 = vmatpush.bf16.msra.mxu0 %v5821
        %10031 = vmatpush.bf16.msra.mxu0 %v5794
        %10032 = vmatpush.bf16.msra.mxu0 %v5767
        %10033 = vmatpush.bf16.msra.mxu0 %v5740
        %10034 = vmatpush.bf16.msra.mxu0 %v5713
        %10035 = vmatmul.bf16.gmra.mxu0 %v1525
        %v10036 = vpop.f32.mrf.mxu0
        %v10037 = vadd.f32 %v10024, %v10036
        %v10038 = vpop.f32.mrf.mxu0
        %10039 = vdwg.mxu0
        %10040 = vmatpush.bf16.msra.mxu0 %v6118
        %10041 = vmatpush.bf16.msra.mxu0 %v6091
        %10042 = vmatpush.bf16.msra.mxu0 %v6064
        %10043 = vmatpush.bf16.msra.mxu0 %v6037
        %10044 = vmatpush.bf16.msra.mxu0 %v6010
        %10045 = vmatpush.bf16.msra.mxu0 %v5983
        %10046 = vmatpush.bf16.msra.mxu0 %v5956
        %10047 = vmatpush.bf16.msra.mxu0 %v5929
        %10048 = vmatmul.bf16.gmra.mxu0 %v1526
        %v10049 = vpop.f32.mrf.mxu0
        %v10050 = vadd.f32 %v10037, %v10049
        %v10051 = vpop.f32.mrf.mxu0
        %10052 = vdwg.mxu0
        %10053 = vmatpush.bf16.msra.mxu0 %v6334
        %10054 = vmatpush.bf16.msra.mxu0 %v6307
        %10055 = vmatpush.bf16.msra.mxu0 %v6280
        %10056 = vmatpush.bf16.msra.mxu0 %v6253
        %10057 = vmatpush.bf16.msra.mxu0 %v6226
        %10058 = vmatpush.bf16.msra.mxu0 %v6199
        %10059 = vmatpush.bf16.msra.mxu0 %v6172
        %10060 = vmatpush.bf16.msra.mxu0 %v6145
        %10061 = vmatmul.bf16.gmra.mxu0 %v1527
        %v10062 = vpop.f32.mrf.mxu0
        %v10063 = vadd.f32 %v10050, %v10062
        %v10064 = vpop.f32.mrf.mxu0
        %10065 = vdwg.mxu0
        %10066 = vmatpush.bf16.msra.mxu0 %v6550
        %10067 = vmatpush.bf16.msra.mxu0 %v6523
        %10068 = vmatpush.bf16.msra.mxu0 %v6496
        %10069 = vmatpush.bf16.msra.mxu0 %v6469
        %10070 = vmatpush.bf16.msra.mxu0 %v6442
        %10071 = vmatpush.bf16.msra.mxu0 %v6415
        %10072 = vmatpush.bf16.msra.mxu0 %v6388
        %10073 = vmatpush.bf16.msra.mxu0 %v6361
        %10074 = vmatmul.bf16.gmra.mxu0 %v1528
        %v10075 = vpop.f32.mrf.mxu0
        %v10076 = vadd.f32 %v10063, %v10075
        %v10077 = vpop.f32.mrf.mxu0
        %10078 = vdwg.mxu0
        %10079 = vmatpush.bf16.msra.mxu0 %v6766
        %10080 = vmatpush.bf16.msra.mxu0 %v6739
        %10081 = vmatpush.bf16.msra.mxu0 %v6712
        %10082 = vmatpush.bf16.msra.mxu0 %v6685
        %10083 = vmatpush.bf16.msra.mxu0 %v6658
        %10084 = vmatpush.bf16.msra.mxu0 %v6631
        %10085 = vmatpush.bf16.msra.mxu0 %v6604
        %10086 = vmatpush.bf16.msra.mxu0 %v6577
        %10087 = vmatmul.bf16.gmra.mxu0 %v1529
        %v10088 = vpop.f32.mrf.mxu0
        %v10089 = vadd.f32 %v10076, %v10088
        %v10090 = vpop.f32.mrf.mxu0
        %10091 = vdwg.mxu0
        %10092 = vmatpush.bf16.msra.mxu0 %v5687
        %10093 = vmatpush.bf16.msra.mxu0 %v5660
        %10094 = vmatpush.bf16.msra.mxu0 %v5633
        %10095 = vmatpush.bf16.msra.mxu0 %v5606
        %10096 = vmatpush.bf16.msra.mxu0 %v5579
        %10097 = vmatpush.bf16.msra.mxu0 %v5552
        %10098 = vmatpush.bf16.msra.mxu0 %v5525
        %10099 = vmatpush.bf16.msra.mxu0 %v5498
        %10100 = vmatmul.bf16.gmra.mxu0 %v1524
        %v10101 = vpop.f32.mrf.mxu0
        %v10102 = vadd.f32 0.0, %v10101
        %v10103 = vpop.f32.mrf.mxu0
        %10104 = vdwg.mxu0
        %10105 = vmatpush.bf16.msra.mxu0 %v5903
        %10106 = vmatpush.bf16.msra.mxu0 %v5876
        %10107 = vmatpush.bf16.msra.mxu0 %v5849
        %10108 = vmatpush.bf16.msra.mxu0 %v5822
        %10109 = vmatpush.bf16.msra.mxu0 %v5795
        %10110 = vmatpush.bf16.msra.mxu0 %v5768
        %10111 = vmatpush.bf16.msra.mxu0 %v5741
        %10112 = vmatpush.bf16.msra.mxu0 %v5714
        %10113 = vmatmul.bf16.gmra.mxu0 %v1525
        %v10114 = vpop.f32.mrf.mxu0
        %v10115 = vadd.f32 %v10102, %v10114
        %v10116 = vpop.f32.mrf.mxu0
        %10117 = vdwg.mxu0
        %10118 = vmatpush.bf16.msra.mxu0 %v6119
        %10119 = vmatpush.bf16.msra.mxu0 %v6092
        %10120 = vmatpush.bf16.msra.mxu0 %v6065
        %10121 = vmatpush.bf16.msra.mxu0 %v6038
        %10122 = vmatpush.bf16.msra.mxu0 %v6011
        %10123 = vmatpush.bf16.msra.mxu0 %v5984
        %10124 = vmatpush.bf16.msra.mxu0 %v5957
        %10125 = vmatpush.bf16.msra.mxu0 %v5930
        %10126 = vmatmul.bf16.gmra.mxu0 %v1526
        %v10127 = vpop.f32.mrf.mxu0
        %v10128 = vadd.f32 %v10115, %v10127
        %v10129 = vpop.f32.mrf.mxu0
        %10130 = vdwg.mxu0
        %10131 = vmatpush.bf16.msra.mxu0 %v6335
        %10132 = vmatpush.bf16.msra.mxu0 %v6308
        %10133 = vmatpush.bf16.msra.mxu0 %v6281
        %10134 = vmatpush.bf16.msra.mxu0 %v6254
        %10135 = vmatpush.bf16.msra.mxu0 %v6227
        %10136 = vmatpush.bf16.msra.mxu0 %v6200
        %10137 = vmatpush.bf16.msra.mxu0 %v6173
        %10138 = vmatpush.bf16.msra.mxu0 %v6146
        %10139 = vmatmul.bf16.gmra.mxu0 %v1527
        %v10140 = vpop.f32.mrf.mxu0
        %v10141 = vadd.f32 %v10128, %v10140
        %v10142 = vpop.f32.mrf.mxu0
        %10143 = vdwg.mxu0
        %10144 = vmatpush.bf16.msra.mxu0 %v6551
        %10145 = vmatpush.bf16.msra.mxu0 %v6524
        %10146 = vmatpush.bf16.msra.mxu0 %v6497
        %10147 = vmatpush.bf16.msra.mxu0 %v6470
        %10148 = vmatpush.bf16.msra.mxu0 %v6443
        %10149 = vmatpush.bf16.msra.mxu0 %v6416
        %10150 = vmatpush.bf16.msra.mxu0 %v6389
        %10151 = vmatpush.bf16.msra.mxu0 %v6362
        %10152 = vmatmul.bf16.gmra.mxu0 %v1528
        %v10153 = vpop.f32.mrf.mxu0
        %v10154 = vadd.f32 %v10141, %v10153
        %v10155 = vpop.f32.mrf.mxu0
        %10156 = vdwg.mxu0
        %10157 = vmatpush.bf16.msra.mxu0 %v6767
        %10158 = vmatpush.bf16.msra.mxu0 %v6740
        %10159 = vmatpush.bf16.msra.mxu0 %v6713
        %10160 = vmatpush.bf16.msra.mxu0 %v6686
        %10161 = vmatpush.bf16.msra.mxu0 %v6659
        %10162 = vmatpush.bf16.msra.mxu0 %v6632
        %10163 = vmatpush.bf16.msra.mxu0 %v6605
        %10164 = vmatpush.bf16.msra.mxu0 %v6578
        %10165 = vmatmul.bf16.gmra.mxu0 %v1529
        %v10166 = vpop.f32.mrf.mxu0
        %v10167 = vadd.f32 %v10154, %v10166
        %v10168 = vpop.f32.mrf.mxu0
        %10169 = vdwg.mxu0
        %10170 = vst [vmem:[%s166] sm:$0xff] %v8139
        %10171 = vst [vmem:[%s166 + $0x8] sm:$0xff] %v8217
        %10172 = vst [vmem:[%s166 + $0x10] sm:$0xff] %v8295
        %10173 = vst [vmem:[%s166 + $0x18] sm:$0xff] %v8373
        %10174 = vst [vmem:[%s166 + $0x20] sm:$0xff] %v8451
        %10175 = vst [vmem:[%s166 + $0x28] sm:$0xff] %v8529
        %10176 = vst [vmem:[%s166 + $0x30] sm:$0xff] %v8607
        %10177 = vst [vmem:[%s166 + $0x38] sm:$0xff] %v8685
        %10178 = vst [vmem:[%s166 + $0x40] sm:$0xff] %v8763
        %10179 = vst [vmem:[%s166 + $0x48] sm:$0xff] %v8841
        %10180 = vst [vmem:[%s166 + $0x50] sm:$0xff] %v8919
        %10181 = vst [vmem:[%s166 + $0x58] sm:$0xff] %v8997
        %10182 = vst [vmem:[%s166 + $0x60] sm:$0xff] %v9075
        %10183 = vst [vmem:[%s166 + $0x68] sm:$0xff] %v9153
        %10184 = vst [vmem:[%s166 + $0x70] sm:$0xff] %v9231
        %10185 = vst [vmem:[%s166 + $0x78] sm:$0xff] %v9309
        %10186 = vst [vmem:[%s166 + $0x80] sm:$0xff] %v9387
        %10187 = vst [vmem:[%s166 + $0x88] sm:$0xff] %v9465
        %10188 = vst [vmem:[%s166 + $0x90] sm:$0xff] %v9543
        %10189 = vst [vmem:[%s166 + $0x98] sm:$0xff] %v9621
        %10190 = vst [vmem:[%s166 + $0xa0] sm:$0xff] %v9699
        %10191 = vst [vmem:[%s166 + $0xa8] sm:$0xff] %v9777
        %10192 = vst [vmem:[%s166 + $0xb0] sm:$0xff] %v9855
        %10193 = vst [vmem:[%s166 + $0xb8] sm:$0xff] %v9933
        %10194 = vst [vmem:[%s166 + $0xc0] sm:$0xff] %v10011
        %10195 = vst [vmem:[%s166 + $0xc8] sm:$0xff] %v10089
        %10196 = vst [vmem:[%s166 + $0xd0] sm:$0xff] %v10167
        %s10197 = smul.u32 27, %s16
        %p10198 = scmp.lt.s32.totalorder %s10197, 242
        %s10199 = scalar_select %p10198, %s10197, 242
        %s10200 = smul.addr %s10199, 8
        %s10201 = scalar_lea.vmem %s2, %s10200
        // Predicated region
        $region33: #{net_forward.2} parent=27 // pred_check
          %p10202 = pneg %p81
        $region34: #{net_forward.2} parent=27 // pred_check_branch
          %10204 = sbr.rel (%p10202) target = $region36
        $region35: #{net_forward.2} parent=27 // pred_region
          %s10205 = smul.u32 27, %s16
        $region36: #{net_forward.2} parent=27 // pred_fallthru
          _
      $region28: #{net_forward.2} parent=5 // pred_fallthru
        _
      %p10206 = scmp.le.s32.totalorder 2, %s11
      // Predicated region
      $region37: #{net_forward.2} parent=5 // pred_check
        %p10207 = pneg %p10206
      $region38: #{net_forward.2} parent=5 // pred_check_branch
        %10209 = sbr.rel (%p10207) target = $region40
      $region39: #{net_forward.2} parent=5 // pred_region
        %s10210 = ssub.s32 %s11, 2
        // Predicated region
        $region41: #{net_forward.2} parent=39 // pred_check
          %p10211 = pneg %p87
        $region42: #{net_forward.2} parent=39 // pred_check_branch
          %10213 = sbr.rel (%p10211) target = $region44
        $region43: #{net_forward.2} parent=39 // pred_region
          %s10214 = smul.u32 27, %s17
          %p10215 = scmp.lt.s32.totalorder %s10214, 242
          %s10216 = scalar_select %p10215, %s10214, 242
          %s10217 = smul.addr %s10216, 8
          %s10218 = scalar_lea.vmem %s2, %s10217
        $region44: #{net_forward.2} parent=39 // pred_fallthru
          _
      $region40: #{net_forward.2} parent=5 // pred_fallthru
        _
    $region6: #{net_forward.2} parent=1 // loop_footer
      %s15 = sadd.s32 1, %s11
    $region7: #{net_forward.2} parent=1 // loop_footer_branch
      %10 = sbr.rel target = $region3
    $region8: #{net_forward.2} parent=1 // loop_exit
      _
    %10219 = vsyncpa [#allocation3], 1
    %s10220 = scalar_lea.sflag [#allocation3], 1
    %10221 = vsyncpa %s10220, 1

// kernel: net_forward.3
$region0: #{net_forward.3}
  #allocation0 [shape = 'u32[]', space=smem, size = 0x4, offset = 0x4, fixed_abs, tag = 'smem constant byte address 0x4 - core index']
  #allocation1 [shape = 'u32[72,128]{1,0:T(1,128)}', space=vmem, size = 0x9000, scoped, tag = 'internal scratch']
  %s0 = inlined_call_operand.vmem [shape: bf16[200,384], index: 0, kind: input, shape index: {}]
  %s1 = inlined_call_operand.vmem [shape: bf16[384,256], index: 1, kind: input, shape index: {}]
  %s2 = inlined_call_operand.vmem [shape: f32[1,256], index: 2, kind: input, shape index: {}]
  %s3 = inlined_call_operand.vmem [shape: f32[200,256], index: 3, kind: output, shape index: {}]
  %s4 = sld [smem:[#allocation0]]
  $region22: #{net_forward.3} parent=0
    _
  %s6 = ssub.s32 1, %s4
  %s7 = scalar_select 0, %s6, %s4
  // Predicated region
  $region2: #{net_forward.3} parent=0 // pred_check
    _
  $region3: #{net_forward.3} parent=0 // pred_check_branch
    %9 = sbr.rel (0) target = $region5
  $region4: #{net_forward.3} parent=0 // pred_region
    _
  $region5: #{net_forward.3} parent=0 // pred_fallthru
    _
  // Predicated region
  $region6: #{net_forward.3} parent=0 // pred_check
    _
  $region7: #{net_forward.3} parent=0 // pred_check_branch
    %11 = sbr.rel (0) target = $region9
  $region8: #{net_forward.3} parent=0 // pred_region
    _
  $region9: #{net_forward.3} parent=0 // pred_fallthru
    _
  // Predicated region
  $region10: #{net_forward.3} parent=0 // pred_check
    _
  $region11: #{net_forward.3} parent=0 // pred_check_branch
    %13 = sbr.rel (0) target = $region13
  $region12: #{net_forward.3} parent=0 // pred_region
    _
  $region13: #{net_forward.3} parent=0 // pred_fallthru
    _
  %v14 = vld [vmem:[%s0] sm:$0xff]
  %v15 = vld [vmem:[%s0 + $0x8] sm:$0xf]
  %v16 = vld [vmem:[%s0 + $0xc] sm:$0xff]
  %v17 = vld [vmem:[%s0 + $0x14] sm:$0xf]
  %v18 = vld [vmem:[%s0 + $0x18] sm:$0xff]
  %v19 = vld [vmem:[%s0 + $0x20] sm:$0xf]
  %v20 = vld [vmem:[%s0 + $0x24] sm:$0xff]
  %v21 = vld [vmem:[%s0 + $0x2c] sm:$0xf]
  %v22 = vld [vmem:[%s0 + $0x30] sm:$0xff]
  %v23 = vld [vmem:[%s0 + $0x38] sm:$0xf]
  %v24 = vld [vmem:[%s0 + $0x3c] sm:$0xff]
  %v25 = vld [vmem:[%s0 + $0x44] sm:$0xf]
  %v26 = vld [vmem:[%s0 + $0x48] sm:$0xff]
  %v27 = vld [vmem:[%s0 + $0x50] sm:$0xf]
  %v28 = vld [vmem:[%s0 + $0x54] sm:$0xff]
  %v29 = vld [vmem:[%s0 + $0x5c] sm:$0xf]
  %v30 = vld [vmem:[%s0 + $0x60] sm:$0xff]
  %v31 = vld [vmem:[%s0 + $0x68] sm:$0xf]
  %v32 = vld [vmem:[%s0 + $0x6c] sm:$0xff]
  %v33 = vld [vmem:[%s0 + $0x74] sm:$0xf]
  %v34 = vld [vmem:[%s0 + $0x78] sm:$0xff]
  %v35 = vld [vmem:[%s0 + $0x80] sm:$0xf]
  %v36 = vld [vmem:[%s0 + $0x84] sm:$0xff]
  %v37 = vld [vmem:[%s0 + $0x8c] sm:$0xf]
  %v38 = vld [vmem:[%s0 + $0x90] sm:$0xff]
  %v39 = vld [vmem:[%s0 + $0x98] sm:$0xf]
  %v40 = vld [vmem:[%s0 + $0x9c] sm:$0xff]
  %v41 = vld [vmem:[%s0 + $0xa4] sm:$0xf]
  %v42 = vld [vmem:[%s0 + $0xa8] sm:$0xff]
  %v43 = vld [vmem:[%s0 + $0xb0] sm:$0xf]
  %v44 = vld [vmem:[%s0 + $0xb4] sm:$0xff]
  %v45 = vld [vmem:[%s0 + $0xbc] sm:$0xf]
  %v46 = vld [vmem:[%s0 + $0xc0] sm:$0xff]
  %v47 = vld [vmem:[%s0 + $0xc8] sm:$0xf]
  %v48 = vld [vmem:[%s0 + $0xcc] sm:$0xff]
  %v49 = vld [vmem:[%s0 + $0xd4] sm:$0xf]
  %v50 = vld [vmem:[%s0 + $0xd8] sm:$0xff]
  %v51 = vld [vmem:[%s0 + $0xe0] sm:$0xf]
  %v52 = vld [vmem:[%s0 + $0xe4] sm:$0xff]
  %v53 = vld [vmem:[%s0 + $0xec] sm:$0xf]
  %v54 = vld [vmem:[%s0 + $0xf0] sm:$0xff]
  %v55 = vld [vmem:[%s0 + $0xf8] sm:$0xf]
  %v56 = vld [vmem:[%s0 + $0xfc] sm:$0xff]
  %v57 = vld [vmem:[%s0 + $0x104] sm:$0xf]
  %v58 = vld [vmem:[%s0 + $0x108] sm:$0xff]
  %v59 = vld [vmem:[%s0 + $0x110] sm:$0xf]
  %v60 = vld [vmem:[%s0 + $0x114] sm:$0xff]
  %v61 = vld [vmem:[%s0 + $0x11c] sm:$0xf]
  %v62 = vld [vmem:[%s0 + $0x120] sm:$0xff]
  %v63 = vld [vmem:[%s0 + $0x128] sm:$0xf]
  %v64 = vld [vmem:[%s1] sm:$0xff]
  %v65 = vld [vmem:[%s1 + $0x8] sm:$0xff]
  %v66 = vld [vmem:[%s1 + $0x10] sm:$0xff]
  %v67 = vld [vmem:[%s1 + $0x18] sm:$0xff]
  %v68 = vld [vmem:[%s1 + $0x20] sm:$0xff]
  %v69 = vld [vmem:[%s1 + $0x28] sm:$0xff]
  %v70 = vld [vmem:[%s1 + $0x30] sm:$0xff]
  %v71 = vld [vmem:[%s1 + $0x38] sm:$0xff]
  %v72 = vld [vmem:[%s1 + $0x40] sm:$0xff]
  %v73 = vld [vmem:[%s1 + $0x48] sm:$0xff]
  %v74 = vld [vmem:[%s1 + $0x50] sm:$0xff]
  %v75 = vld [vmem:[%s1 + $0x58] sm:$0xff]
  %v76 = vld [vmem:[%s1 + $0x60] sm:$0xff]
  %v77 = vld [vmem:[%s1 + $0x68] sm:$0xff]
  %v78 = vld [vmem:[%s1 + $0x70] sm:$0xff]
  %v79 = vld [vmem:[%s1 + $0x78] sm:$0xff]
  %v80 = vld [vmem:[%s1 + $0x80] sm:$0xff]
  %v81 = vld [vmem:[%s1 + $0x88] sm:$0xff]
  %v82 = vld [vmem:[%s1 + $0x90] sm:$0xff]
  %v83 = vld [vmem:[%s1 + $0x98] sm:$0xff]
  %v84 = vld [vmem:[%s1 + $0xa0] sm:$0xff]
  %v85 = vld [vmem:[%s1 + $0xa8] sm:$0xff]
  %v86 = vld [vmem:[%s1 + $0xb0] sm:$0xff]
  %v87 = vld [vmem:[%s1 + $0xb8] sm:$0xff]
  %v88 = vld [vmem:[%s1 + $0xc0] sm:$0xff]
  %v89 = vld [vmem:[%s1 + $0xc8] sm:$0xff]
  %v90 = vld [vmem:[%s1 + $0xd0] sm:$0xff]
  %v91 = vld [vmem:[%s1 + $0xd8] sm:$0xff]
  %v92 = vld [vmem:[%s1 + $0xe0] sm:$0xff]
  %v93 = vld [vmem:[%s1 + $0xe8] sm:$0xff]
  %v94 = vld [vmem:[%s1 + $0xf0] sm:$0xff]
  %v95 = vld [vmem:[%s1 + $0xf8] sm:$0xff]
  %v96 = vld [vmem:[%s1 + $0x100] sm:$0xff]
  %v97 = vld [vmem:[%s1 + $0x108] sm:$0xff]
  %v98 = vld [vmem:[%s1 + $0x110] sm:$0xff]
  %v99 = vld [vmem:[%s1 + $0x118] sm:$0xff]
  %v100 = vld [vmem:[%s1 + $0x120] sm:$0xff]
  %v101 = vld [vmem:[%s1 + $0x128] sm:$0xff]
  %v102 = vld [vmem:[%s1 + $0x130] sm:$0xff]
  %v103 = vld [vmem:[%s1 + $0x138] sm:$0xff]
  %v104 = vld [vmem:[%s1 + $0x140] sm:$0xff]
  %v105 = vld [vmem:[%s1 + $0x148] sm:$0xff]
  %v106 = vld [vmem:[%s1 + $0x150] sm:$0xff]
  %v107 = vld [vmem:[%s1 + $0x158] sm:$0xff]
  %v108 = vld [vmem:[%s1 + $0x160] sm:$0xff]
  %v109 = vld [vmem:[%s1 + $0x168] sm:$0xff]
  %v110 = vld [vmem:[%s1 + $0x170] sm:$0xff]
  %v111 = vld [vmem:[%s1 + $0x178] sm:$0xff]
  %v112 = vld [vmem:[%s2] sm:$0x3]
  %v114 = vperm.slane %v112, 0
  %v115 = vperm.slane %v112, 1
  %v168 = vunpack.c.l.b16 %v14
  %v169 = vunpack.c.h.b16 %v14
  %v170 = vunpack.c.l.b16 %v15
  %v171 = vunpack.c.l.b16 %v16
  %v172 = vunpack.c.h.b16 %v16
  %v173 = vunpack.c.l.b16 %v17
  %v174 = vunpack.c.l.b16 %v18
  %v175 = vunpack.c.h.b16 %v18
  %v176 = vunpack.c.l.b16 %v19
  %v177 = vunpack.c.l.b16 %v20
  %v178 = vunpack.c.h.b16 %v20
  %v179 = vunpack.c.l.b16 %v21
  %v180 = vunpack.c.l.b16 %v22
  %v181 = vunpack.c.h.b16 %v22
  %v182 = vunpack.c.l.b16 %v23
  %v183 = vunpack.c.l.b16 %v24
  %v184 = vunpack.c.h.b16 %v24
  %v185 = vunpack.c.l.b16 %v25
  %v186 = vunpack.c.l.b16 %v26
  %v187 = vunpack.c.h.b16 %v26
  %v188 = vunpack.c.l.b16 %v27
  %v189 = vunpack.c.l.b16 %v28
  %v190 = vunpack.c.h.b16 %v28
  %v191 = vunpack.c.l.b16 %v29
  %v192 = vunpack.c.l.b16 %v30
  %v193 = vunpack.c.h.b16 %v30
  %v194 = vunpack.c.l.b16 %v31
  %v195 = vunpack.c.l.b16 %v32
  %v196 = vunpack.c.h.b16 %v32
  %v197 = vunpack.c.l.b16 %v33
  %v198 = vunpack.c.l.b16 %v34
  %v199 = vunpack.c.h.b16 %v34
  %v200 = vunpack.c.l.b16 %v35
  %v201 = vunpack.c.l.b16 %v36
  %v202 = vunpack.c.h.b16 %v36
  %v203 = vunpack.c.l.b16 %v37
  %v204 = vunpack.c.l.b16 %v38
  %v205 = vunpack.c.h.b16 %v38
  %v206 = vunpack.c.l.b16 %v39
  %v207 = vunpack.c.l.b16 %v40
  %v208 = vunpack.c.h.b16 %v40
  %v209 = vunpack.c.l.b16 %v41
  %v210 = vunpack.c.l.b16 %v42
  %v211 = vunpack.c.h.b16 %v42
  %v212 = vunpack.c.l.b16 %v43
  %v213 = vunpack.c.l.b16 %v44
  %v214 = vunpack.c.h.b16 %v44
  %v215 = vunpack.c.l.b16 %v45
  %v216 = vunpack.c.l.b16 %v46
  %v217 = vunpack.c.h.b16 %v46
  %v218 = vunpack.c.l.b16 %v47
  %v219 = vunpack.c.l.b16 %v48
  %v220 = vunpack.c.h.b16 %v48
  %v221 = vunpack.c.l.b16 %v49
  %v222 = vunpack.c.l.b16 %v50
  %v223 = vunpack.c.h.b16 %v50
  %v224 = vunpack.c.l.b16 %v51
  %v225 = vunpack.c.l.b16 %v52
  %v226 = vunpack.c.h.b16 %v52
  %v227 = vunpack.c.l.b16 %v53
  %v228 = vunpack.c.l.b16 %v54
  %v229 = vunpack.c.h.b16 %v54
  %v230 = vunpack.c.l.b16 %v55
  %v231 = vunpack.c.l.b16 %v56
  %v232 = vunpack.c.h.b16 %v56
  %v233 = vunpack.c.l.b16 %v57
  %v234 = vunpack.c.l.b16 %v58
  %v235 = vunpack.c.h.b16 %v58
  %v236 = vunpack.c.l.b16 %v59
  %v237 = vunpack.c.l.b16 %v60
  %v238 = vunpack.c.h.b16 %v60
  %v239 = vunpack.c.l.b16 %v61
  %v240 = vunpack.c.l.b16 %v62
  %v241 = vunpack.c.h.b16 %v62
  %v242 = vunpack.c.l.b16 %v63
  %v243 = vpack.c.b16 %v171, %v168
  %v244 = vpack.c.b16 %v172, %v169
  %v245 = vpack.c.b16 %v173, %v170
  %v246 = vpack.c.b16 %v177, %v174
  %v247 = vpack.c.b16 %v178, %v175
  %v248 = vpack.c.b16 %v179, %v176
  %v249 = vpack.c.b16 %v183, %v180
  %v250 = vpack.c.b16 %v184, %v181
  %v251 = vpack.c.b16 %v185, %v182
  %v252 = vpack.c.b16 %v189, %v186
  %v253 = vpack.c.b16 %v190, %v187
  %v254 = vpack.c.b16 %v191, %v188
  %v255 = vpack.c.b16 %v195, %v192
  %v256 = vpack.c.b16 %v196, %v193
  %v257 = vpack.c.b16 %v197, %v194
  %v258 = vpack.c.b16 %v201, %v198
  %v259 = vpack.c.b16 %v202, %v199
  %v260 = vpack.c.b16 %v203, %v200
  %v261 = vpack.c.b16 %v207, %v204
  %v262 = vpack.c.b16 %v208, %v205
  %v263 = vpack.c.b16 %v209, %v206
  %v264 = vpack.c.b16 %v213, %v210
  %v265 = vpack.c.b16 %v214, %v211
  %v266 = vpack.c.b16 %v215, %v212
  %v267 = vpack.c.b16 %v219, %v216
  %v268 = vpack.c.b16 %v220, %v217
  %v269 = vpack.c.b16 %v221, %v218
  %v270 = vpack.c.b16 %v225, %v222
  %v271 = vpack.c.b16 %v226, %v223
  %v272 = vpack.c.b16 %v227, %v224
  %v273 = vpack.c.b16 %v231, %v228
  %v274 = vpack.c.b16 %v232, %v229
  %v275 = vpack.c.b16 %v233, %v230
  %v276 = vpack.c.b16 %v237, %v234
  %v277 = vpack.c.b16 %v238, %v235
  %v278 = vpack.c.b16 %v239, %v236
  %v279 = vpack.c.b16 %v240, %v240
  %v280 = vpack.c.b16 %v241, %v241
  %v281 = vpack.c.b16 %v242, %v242
  %v369 = vunpack.c.l.b16 %v64
  %v370 = vunpack.c.h.b16 %v64
  %v371 = vunpack.c.l.b16 %v65
  %v372 = vunpack.c.h.b16 %v65
  %v373 = vunpack.c.l.b16 %v66
  %v374 = vunpack.c.h.b16 %v66
  %v375 = vunpack.c.l.b16 %v67
  %v376 = vunpack.c.h.b16 %v67
  %v377 = vunpack.c.l.b16 %v68
  %v378 = vunpack.c.h.b16 %v68
  %v379 = vunpack.c.l.b16 %v69
  %v380 = vunpack.c.h.b16 %v69
  %v381 = vunpack.c.l.b16 %v70
  %v382 = vunpack.c.h.b16 %v70
  %v383 = vunpack.c.l.b16 %v71
  %v384 = vunpack.c.h.b16 %v71
  %v385 = vunpack.c.l.b16 %v72
  %v386 = vunpack.c.h.b16 %v72
  %v387 = vunpack.c.l.b16 %v73
  %v388 = vunpack.c.h.b16 %v73
  %v389 = vunpack.c.l.b16 %v74
  %v390 = vunpack.c.h.b16 %v74
  %v391 = vunpack.c.l.b16 %v75
  %v392 = vunpack.c.h.b16 %v75
  %v393 = vunpack.c.l.b16 %v76
  %v394 = vunpack.c.h.b16 %v76
  %v395 = vunpack.c.l.b16 %v77
  %v396 = vunpack.c.h.b16 %v77
  %v397 = vunpack.c.l.b16 %v78
  %v398 = vunpack.c.h.b16 %v78
  %v399 = vunpack.c.l.b16 %v79
  %v400 = vunpack.c.h.b16 %v79
  %v401 = vunpack.c.l.b16 %v80
  %v402 = vunpack.c.h.b16 %v80
  %v403 = vunpack.c.l.b16 %v81
  %v404 = vunpack.c.h.b16 %v81
  %v405 = vunpack.c.l.b16 %v82
  %v406 = vunpack.c.h.b16 %v82
  %v407 = vunpack.c.l.b16 %v83
  %v408 = vunpack.c.h.b16 %v83
  %v409 = vunpack.c.l.b16 %v84
  %v410 = vunpack.c.h.b16 %v84
  %v411 = vunpack.c.l.b16 %v85
  %v412 = vunpack.c.h.b16 %v85
  %v413 = vunpack.c.l.b16 %v86
  %v414 = vunpack.c.h.b16 %v86
  %v415 = vunpack.c.l.b16 %v87
  %v416 = vunpack.c.h.b16 %v87
  %v417 = vunpack.c.l.b16 %v88
  %v418 = vunpack.c.h.b16 %v88
  %v419 = vunpack.c.l.b16 %v89
  %v420 = vunpack.c.h.b16 %v89
  %v421 = vunpack.c.l.b16 %v90
  %v422 = vunpack.c.h.b16 %v90
  %v423 = vunpack.c.l.b16 %v91
  %v424 = vunpack.c.h.b16 %v91
  %v425 = vunpack.c.l.b16 %v92
  %v426 = vunpack.c.h.b16 %v92
  %v427 = vunpack.c.l.b16 %v93
  %v428 = vunpack.c.h.b16 %v93
  %v429 = vunpack.c.l.b16 %v94
  %v430 = vunpack.c.h.b16 %v94
  %v431 = vunpack.c.l.b16 %v95
  %v432 = vunpack.c.h.b16 %v95
  %v433 = vunpack.c.l.b16 %v96
  %v434 = vunpack.c.h.b16 %v96
  %v435 = vunpack.c.l.b16 %v97
  %v436 = vunpack.c.h.b16 %v97
  %v437 = vunpack.c.l.b16 %v98
  %v438 = vunpack.c.h.b16 %v98
  %v439 = vunpack.c.l.b16 %v99
  %v440 = vunpack.c.h.b16 %v99
  %v441 = vunpack.c.l.b16 %v100
  %v442 = vunpack.c.h.b16 %v100
  %v443 = vunpack.c.l.b16 %v101
  %v444 = vunpack.c.h.b16 %v101
  %v445 = vunpack.c.l.b16 %v102
  %v446 = vunpack.c.h.b16 %v102
  %v447 = vunpack.c.l.b16 %v103
  %v448 = vunpack.c.h.b16 %v103
  %v449 = vunpack.c.l.b16 %v104
  %v450 = vunpack.c.h.b16 %v104
  %v451 = vunpack.c.l.b16 %v105
  %v452 = vunpack.c.h.b16 %v105
  %v453 = vunpack.c.l.b16 %v106
  %v454 = vunpack.c.h.b16 %v106
  %v455 = vunpack.c.l.b16 %v107
  %v456 = vunpack.c.h.b16 %v107
  %v457 = vunpack.c.l.b16 %v108
  %v458 = vunpack.c.h.b16 %v108
  %v459 = vunpack.c.l.b16 %v109
  %v460 = vunpack.c.h.b16 %v109
  %v461 = vunpack.c.l.b16 %v110
  %v462 = vunpack.c.h.b16 %v110
  %v463 = vunpack.c.l.b16 %v111
  %v464 = vunpack.c.h.b16 %v111
  %v465 = vpack.c.b16 %v371, %v369
  %v466 = vpack.c.b16 %v372, %v370
  %v467 = vpack.c.b16 %v375, %v373
  %v468 = vpack.c.b16 %v376, %v374
  %v469 = vpack.c.b16 %v379, %v377
  %v470 = vpack.c.b16 %v380, %v378
  %v471 = vpack.c.b16 %v383, %v381
  %v472 = vpack.c.b16 %v384, %v382
  %v473 = vpack.c.b16 %v387, %v385
  %v474 = vpack.c.b16 %v388, %v386
  %v475 = vpack.c.b16 %v391, %v389
  %v476 = vpack.c.b16 %v392, %v390
  %v477 = vpack.c.b16 %v395, %v393
  %v478 = vpack.c.b16 %v396, %v394
  %v479 = vpack.c.b16 %v399, %v397
  %v480 = vpack.c.b16 %v400, %v398
  %v481 = vpack.c.b16 %v403, %v401
  %v482 = vpack.c.b16 %v404, %v402
  %v483 = vpack.c.b16 %v407, %v405
  %v484 = vpack.c.b16 %v408, %v406
  %v485 = vpack.c.b16 %v411, %v409
  %v486 = vpack.c.b16 %v412, %v410
  %v487 = vpack.c.b16 %v415, %v413
  %v488 = vpack.c.b16 %v416, %v414
  %v489 = vpack.c.b16 %v419, %v417
  %v490 = vpack.c.b16 %v420, %v418
  %v491 = vpack.c.b16 %v423, %v421
  %v492 = vpack.c.b16 %v424, %v422
  %v493 = vpack.c.b16 %v427, %v425
  %v494 = vpack.c.b16 %v428, %v426
  %v495 = vpack.c.b16 %v431, %v429
  %v496 = vpack.c.b16 %v432, %v430
  %v497 = vpack.c.b16 %v435, %v433
  %v498 = vpack.c.b16 %v436, %v434
  %v499 = vpack.c.b16 %v439, %v437
  %v500 = vpack.c.b16 %v440, %v438
  %v501 = vpack.c.b16 %v443, %v441
  %v502 = vpack.c.b16 %v444, %v442
  %v503 = vpack.c.b16 %v447, %v445
  %v504 = vpack.c.b16 %v448, %v446
  %v505 = vpack.c.b16 %v451, %v449
  %v506 = vpack.c.b16 %v452, %v450
  %v507 = vpack.c.b16 %v455, %v453
  %v508 = vpack.c.b16 %v456, %v454
  %v509 = vpack.c.b16 %v459, %v457
  %v510 = vpack.c.b16 %v460, %v458
  %v511 = vpack.c.b16 %v463, %v461
  %v512 = vpack.c.b16 %v464, %v462
  %561 = vmatpush.bf16.msra.mxu0 %v479
  %562 = vmatpush.bf16.msra.mxu0 %v477
  %563 = vmatpush.bf16.msra.mxu0 %v475
  %564 = vmatpush.bf16.msra.mxu0 %v473
  %565 = vmatpush.bf16.msra.mxu0 %v471
  %566 = vmatpush.bf16.msra.mxu0 %v469
  %567 = vmatpush.bf16.msra.mxu0 %v467
  %568 = vmatpush.bf16.msra.mxu0 %v465
  %569 = vmatmul.bf16.gmra.mxu0 %v243
  %v570 = vpop.f32.mrf.mxu0
  %v571 = vadd.f32 %v114, %v570
  %v572 = vpop.f32.mrf.mxu0
  %v573 = vadd.f32 %v114, %v572
  %574 = vmatmul.bf16.gmra.mxu0 %v246
  %v575 = vpop.f32.mrf.mxu0
  %v576 = vadd.f32 %v114, %v575
  %v577 = vpop.f32.mrf.mxu0
  %v578 = vadd.f32 %v114, %v577
  %579 = vmatmul.bf16.gmra.mxu0 %v249
  %v580 = vpop.f32.mrf.mxu0
  %v581 = vadd.f32 %v114, %v580
  %v582 = vpop.f32.mrf.mxu0
  %v583 = vadd.f32 %v114, %v582
  %584 = vmatmul.bf16.gmra.mxu0 %v252
  %v585 = vpop.f32.mrf.mxu0
  %v586 = vadd.f32 %v114, %v585
  %v587 = vpop.f32.mrf.mxu0
  %v588 = vadd.f32 %v114, %v587
  %589 = vmatmul.bf16.gmra.mxu0 %v255
  %v590 = vpop.f32.mrf.mxu0
  %v591 = vadd.f32 %v114, %v590
  %v592 = vpop.f32.mrf.mxu0
  %v593 = vadd.f32 %v114, %v592
  %594 = vmatmul.bf16.gmra.mxu0 %v258
  %v595 = vpop.f32.mrf.mxu0
  %v596 = vadd.f32 %v114, %v595
  %v597 = vpop.f32.mrf.mxu0
  %v598 = vadd.f32 %v114, %v597
  %599 = vmatmul.bf16.gmra.mxu0 %v261
  %v600 = vpop.f32.mrf.mxu0
  %v601 = vadd.f32 %v114, %v600
  %v602 = vpop.f32.mrf.mxu0
  %v603 = vadd.f32 %v114, %v602
  %604 = vmatmul.bf16.gmra.mxu0 %v264
  %v605 = vpop.f32.mrf.mxu0
  %v606 = vadd.f32 %v114, %v605
  %v607 = vpop.f32.mrf.mxu0
  %v608 = vadd.f32 %v114, %v607
  %609 = vmatmul.bf16.gmra.mxu0 %v267
  %v610 = vpop.f32.mrf.mxu0
  %v611 = vadd.f32 %v114, %v610
  %v612 = vpop.f32.mrf.mxu0
  %v613 = vadd.f32 %v114, %v612
  %614 = vmatmul.bf16.gmra.mxu0 %v270
  %v615 = vpop.f32.mrf.mxu0
  %v616 = vadd.f32 %v114, %v615
  %v617 = vpop.f32.mrf.mxu0
  %v618 = vadd.f32 %v114, %v617
  %619 = vmatmul.bf16.gmra.mxu0 %v273
  %v620 = vpop.f32.mrf.mxu0
  %v621 = vadd.f32 %v114, %v620
  %v622 = vpop.f32.mrf.mxu0
  %v623 = vadd.f32 %v114, %v622
  %624 = vmatmul.bf16.gmra.mxu0 %v276
  %v625 = vpop.f32.mrf.mxu0
  %v626 = vadd.f32 %v114, %v625
  %v627 = vpop.f32.mrf.mxu0
  %v628 = vadd.f32 %v114, %v627
  %629 = vmatmul.bf16.gmra.mxu0 %v279
  %v630 = vpop.f32.mrf.mxu0
  %v631 = vadd.f32 %v114, %v630
  %v632 = vpop.f32.mrf.mxu0
  %633 = vdwg.mxu0
  %634 = vmatpush.bf16.msra.mxu0 %v495
  %635 = vmatpush.bf16.msra.mxu0 %v493
  %636 = vmatpush.bf16.msra.mxu0 %v491
  %637 = vmatpush.bf16.msra.mxu0 %v489
  %638 = vmatpush.bf16.msra.mxu0 %v487
  %639 = vmatpush.bf16.msra.mxu0 %v485
  %640 = vmatpush.bf16.msra.mxu0 %v483
  %641 = vmatpush.bf16.msra.mxu0 %v481
  %642 = vmatmul.bf16.gmra.mxu0 %v244
  %v643 = vpop.f32.mrf.mxu0
  %v644 = vadd.f32 %v571, %v643
  %v645 = vpop.f32.mrf.mxu0
  %v646 = vadd.f32 %v573, %v645
  %647 = vmatmul.bf16.gmra.mxu0 %v247
  %v648 = vpop.f32.mrf.mxu0
  %v649 = vadd.f32 %v576, %v648
  %v650 = vpop.f32.mrf.mxu0
  %v651 = vadd.f32 %v578, %v650
  %652 = vmatmul.bf16.gmra.mxu0 %v250
  %v653 = vpop.f32.mrf.mxu0
  %v654 = vadd.f32 %v581, %v653
  %v655 = vpop.f32.mrf.mxu0
  %v656 = vadd.f32 %v583, %v655
  %657 = vmatmul.bf16.gmra.mxu0 %v253
  %v658 = vpop.f32.mrf.mxu0
  %v659 = vadd.f32 %v586, %v658
  %v660 = vpop.f32.mrf.mxu0
  %v661 = vadd.f32 %v588, %v660
  %662 = vmatmul.bf16.gmra.mxu0 %v256
  %v663 = vpop.f32.mrf.mxu0
  %v664 = vadd.f32 %v591, %v663
  %v665 = vpop.f32.mrf.mxu0
  %v666 = vadd.f32 %v593, %v665
  %667 = vmatmul.bf16.gmra.mxu0 %v259
  %v668 = vpop.f32.mrf.mxu0
  %v669 = vadd.f32 %v596, %v668
  %v670 = vpop.f32.mrf.mxu0
  %v671 = vadd.f32 %v598, %v670
  %672 = vmatmul.bf16.gmra.mxu0 %v262
  %v673 = vpop.f32.mrf.mxu0
  %v674 = vadd.f32 %v601, %v673
  %v675 = vpop.f32.mrf.mxu0
  %v676 = vadd.f32 %v603, %v675
  %677 = vmatmul.bf16.gmra.mxu0 %v265
  %v678 = vpop.f32.mrf.mxu0
  %v679 = vadd.f32 %v606, %v678
  %v680 = vpop.f32.mrf.mxu0
  %v681 = vadd.f32 %v608, %v680
  %682 = vmatmul.bf16.gmra.mxu0 %v268
  %v683 = vpop.f32.mrf.mxu0
  %v684 = vadd.f32 %v611, %v683
  %v685 = vpop.f32.mrf.mxu0
  %v686 = vadd.f32 %v613, %v685
  %687 = vmatmul.bf16.gmra.mxu0 %v271
  %v688 = vpop.f32.mrf.mxu0
  %v689 = vadd.f32 %v616, %v688
  %v690 = vpop.f32.mrf.mxu0
  %v691 = vadd.f32 %v618, %v690
  %692 = vmatmul.bf16.gmra.mxu0 %v274
  %v693 = vpop.f32.mrf.mxu0
  %v694 = vadd.f32 %v621, %v693
  %v695 = vpop.f32.mrf.mxu0
  %v696 = vadd.f32 %v623, %v695
  %697 = vmatmul.bf16.gmra.mxu0 %v277
  %v698 = vpop.f32.mrf.mxu0
  %v699 = vadd.f32 %v626, %v698
  %v700 = vpop.f32.mrf.mxu0
  %v701 = vadd.f32 %v628, %v700
  %702 = vmatmul.bf16.gmra.mxu0 %v280
  %v703 = vpop.f32.mrf.mxu0
  %v704 = vadd.f32 %v631, %v703
  %v705 = vpop.f32.mrf.mxu0
  %706 = vdwg.mxu0
  %707 = vmatpush.bf16.msra.mxu0 %v511
  %708 = vmatpush.bf16.msra.mxu0 %v509
  %709 = vmatpush.bf16.msra.mxu0 %v507
  %710 = vmatpush.bf16.msra.mxu0 %v505
  %711 = vmatpush.bf16.msra.mxu0 %v503
  %712 = vmatpush.bf16.msra.mxu0 %v501
  %713 = vmatpush.bf16.msra.mxu0 %v499
  %714 = vmatpush.bf16.msra.mxu0 %v497
  %715 = vmatmul.bf16.gmra.mxu0 %v245
  %v716 = vpop.f32.mrf.mxu0
  %v717 = vadd.f32 %v644, %v716
  %v718 = vpop.f32.mrf.mxu0
  %v719 = vadd.f32 %v646, %v718
  %720 = vmatmul.bf16.gmra.mxu0 %v248
  %v721 = vpop.f32.mrf.mxu0
  %v722 = vadd.f32 %v649, %v721
  %v723 = vpop.f32.mrf.mxu0
  %v724 = vadd.f32 %v651, %v723
  %725 = vmatmul.bf16.gmra.mxu0 %v251
  %v726 = vpop.f32.mrf.mxu0
  %v727 = vadd.f32 %v654, %v726
  %v728 = vpop.f32.mrf.mxu0
  %v729 = vadd.f32 %v656, %v728
  %730 = vmatmul.bf16.gmra.mxu0 %v254
  %v731 = vpop.f32.mrf.mxu0
  %v732 = vadd.f32 %v659, %v731
  %v733 = vpop.f32.mrf.mxu0
  %v734 = vadd.f32 %v661, %v733
  %735 = vmatmul.bf16.gmra.mxu0 %v257
  %v736 = vpop.f32.mrf.mxu0
  %v737 = vadd.f32 %v664, %v736
  %v738 = vpop.f32.mrf.mxu0
  %v739 = vadd.f32 %v666, %v738
  %740 = vmatmul.bf16.gmra.mxu0 %v260
  %v741 = vpop.f32.mrf.mxu0
  %v742 = vadd.f32 %v669, %v741
  %v743 = vpop.f32.mrf.mxu0
  %v744 = vadd.f32 %v671, %v743
  %745 = vmatmul.bf16.gmra.mxu0 %v263
  %v746 = vpop.f32.mrf.mxu0
  %v747 = vadd.f32 %v674, %v746
  %v748 = vpop.f32.mrf.mxu0
  %v749 = vadd.f32 %v676, %v748
  %750 = vmatmul.bf16.gmra.mxu0 %v266
  %v751 = vpop.f32.mrf.mxu0
  %v752 = vadd.f32 %v679, %v751
  %v753 = vpop.f32.mrf.mxu0
  %v754 = vadd.f32 %v681, %v753
  %755 = vmatmul.bf16.gmra.mxu0 %v269
  %v756 = vpop.f32.mrf.mxu0
  %v757 = vadd.f32 %v684, %v756
  %v758 = vpop.f32.mrf.mxu0
  %v759 = vadd.f32 %v686, %v758
  %760 = vmatmul.bf16.gmra.mxu0 %v272
  %v761 = vpop.f32.mrf.mxu0
  %v762 = vadd.f32 %v689, %v761
  %v763 = vpop.f32.mrf.mxu0
  %v764 = vadd.f32 %v691, %v763
  %765 = vmatmul.bf16.gmra.mxu0 %v275
  %v766 = vpop.f32.mrf.mxu0
  %v767 = vadd.f32 %v694, %v766
  %v768 = vpop.f32.mrf.mxu0
  %v769 = vadd.f32 %v696, %v768
  %770 = vmatmul.bf16.gmra.mxu0 %v278
  %v771 = vpop.f32.mrf.mxu0
  %v772 = vadd.f32 %v699, %v771
  %v773 = vpop.f32.mrf.mxu0
  %v774 = vadd.f32 %v701, %v773
  %775 = vmatmul.bf16.gmra.mxu0 %v281
  %v776 = vpop.f32.mrf.mxu0
  %v777 = vadd.f32 %v704, %v776
  %v778 = vpop.f32.mrf.mxu0
  %779 = vdwg.mxu0
  %780 = vmatpush.bf16.msra.mxu0 %v480
  %781 = vmatpush.bf16.msra.mxu0 %v478
  %782 = vmatpush.bf16.msra.mxu0 %v476
  %783 = vmatpush.bf16.msra.mxu0 %v474
  %784 = vmatpush.bf16.msra.mxu0 %v472
  %785 = vmatpush.bf16.msra.mxu0 %v470
  %786 = vmatpush.bf16.msra.mxu0 %v468
  %787 = vmatpush.bf16.msra.mxu0 %v466
  %788 = vmatmul.bf16.gmra.mxu0 %v243
  %v789 = vpop.f32.mrf.mxu0
  %v790 = vadd.f32 %v115, %v789
  %v791 = vpop.f32.mrf.mxu0
  %v792 = vadd.f32 %v115, %v791
  %793 = vmatmul.bf16.gmra.mxu0 %v246
  %v794 = vpop.f32.mrf.mxu0
  %v795 = vadd.f32 %v115, %v794
  %v796 = vpop.f32.mrf.mxu0
  %v797 = vadd.f32 %v115, %v796
  %798 = vmatmul.bf16.gmra.mxu0 %v249
  %v799 = vpop.f32.mrf.mxu0
  %v800 = vadd.f32 %v115, %v799
  %v801 = vpop.f32.mrf.mxu0
  %v802 = vadd.f32 %v115, %v801
  %803 = vmatmul.bf16.gmra.mxu0 %v252
  %v804 = vpop.f32.mrf.mxu0
  %v805 = vadd.f32 %v115, %v804
  %v806 = vpop.f32.mrf.mxu0
  %v807 = vadd.f32 %v115, %v806
  %808 = vmatmul.bf16.gmra.mxu0 %v255
  %v809 = vpop.f32.mrf.mxu0
  %v810 = vadd.f32 %v115, %v809
  %v811 = vpop.f32.mrf.mxu0
  %v812 = vadd.f32 %v115, %v811
  %813 = vmatmul.bf16.gmra.mxu0 %v258
  %v814 = vpop.f32.mrf.mxu0
  %v815 = vadd.f32 %v115, %v814
  %v816 = vpop.f32.mrf.mxu0
  %v817 = vadd.f32 %v115, %v816
  %818 = vmatmul.bf16.gmra.mxu0 %v261
  %v819 = vpop.f32.mrf.mxu0
  %v820 = vadd.f32 %v115, %v819
  %v821 = vpop.f32.mrf.mxu0
  %v822 = vadd.f32 %v115, %v821
  %823 = vmatmul.bf16.gmra.mxu0 %v264
  %v824 = vpop.f32.mrf.mxu0
  %v825 = vadd.f32 %v115, %v824
  %v826 = vpop.f32.mrf.mxu0
  %v827 = vadd.f32 %v115, %v826
  %828 = vmatmul.bf16.gmra.mxu0 %v267
  %v829 = vpop.f32.mrf.mxu0
  %v830 = vadd.f32 %v115, %v829
  %v831 = vpop.f32.mrf.mxu0
  %v832 = vadd.f32 %v115, %v831
  %833 = vmatmul.bf16.gmra.mxu0 %v270
  %v834 = vpop.f32.mrf.mxu0
  %v835 = vadd.f32 %v115, %v834
  %v836 = vpop.f32.mrf.mxu0
  %v837 = vadd.f32 %v115, %v836
  %838 = vmatmul.bf16.gmra.mxu0 %v273
  %v839 = vpop.f32.mrf.mxu0
  %v840 = vadd.f32 %v115, %v839
  %v841 = vpop.f32.mrf.mxu0
  %v842 = vadd.f32 %v115, %v841
  %843 = vmatmul.bf16.gmra.mxu0 %v276
  %v844 = vpop.f32.mrf.mxu0
  %v845 = vadd.f32 %v115, %v844
  %v846 = vpop.f32.mrf.mxu0
  %v847 = vadd.f32 %v115, %v846
  %848 = vmatmul.bf16.gmra.mxu0 %v279
  %v849 = vpop.f32.mrf.mxu0
  %v850 = vadd.f32 %v115, %v849
  %v851 = vpop.f32.mrf.mxu0
  %852 = vdwg.mxu0
  %853 = vmatpush.bf16.msra.mxu0 %v496
  %854 = vmatpush.bf16.msra.mxu0 %v494
  %855 = vmatpush.bf16.msra.mxu0 %v492
  %856 = vmatpush.bf16.msra.mxu0 %v490
  %857 = vmatpush.bf16.msra.mxu0 %v488
  %858 = vmatpush.bf16.msra.mxu0 %v486
  %859 = vmatpush.bf16.msra.mxu0 %v484
  %860 = vmatpush.bf16.msra.mxu0 %v482
  %861 = vmatmul.bf16.gmra.mxu0 %v244
  %v862 = vpop.f32.mrf.mxu0
  %v863 = vadd.f32 %v790, %v862
  %v864 = vpop.f32.mrf.mxu0
  %v865 = vadd.f32 %v792, %v864
  %866 = vmatmul.bf16.gmra.mxu0 %v247
  %v867 = vpop.f32.mrf.mxu0
  %v868 = vadd.f32 %v795, %v867
  %v869 = vpop.f32.mrf.mxu0
  %v870 = vadd.f32 %v797, %v869
  %871 = vmatmul.bf16.gmra.mxu0 %v250
  %v872 = vpop.f32.mrf.mxu0
  %v873 = vadd.f32 %v800, %v872
  %v874 = vpop.f32.mrf.mxu0
  %v875 = vadd.f32 %v802, %v874
  %876 = vmatmul.bf16.gmra.mxu0 %v253
  %v877 = vpop.f32.mrf.mxu0
  %v878 = vadd.f32 %v805, %v877
  %v879 = vpop.f32.mrf.mxu0
  %v880 = vadd.f32 %v807, %v879
  %881 = vmatmul.bf16.gmra.mxu0 %v256
  %v882 = vpop.f32.mrf.mxu0
  %v883 = vadd.f32 %v810, %v882
  %v884 = vpop.f32.mrf.mxu0
  %v885 = vadd.f32 %v812, %v884
  %886 = vmatmul.bf16.gmra.mxu0 %v259
  %v887 = vpop.f32.mrf.mxu0
  %v888 = vadd.f32 %v815, %v887
  %v889 = vpop.f32.mrf.mxu0
  %v890 = vadd.f32 %v817, %v889
  %891 = vmatmul.bf16.gmra.mxu0 %v262
  %v892 = vpop.f32.mrf.mxu0
  %v893 = vadd.f32 %v820, %v892
  %v894 = vpop.f32.mrf.mxu0
  %v895 = vadd.f32 %v822, %v894
  %896 = vmatmul.bf16.gmra.mxu0 %v265
  %v897 = vpop.f32.mrf.mxu0
  %v898 = vadd.f32 %v825, %v897
  %v899 = vpop.f32.mrf.mxu0
  %v900 = vadd.f32 %v827, %v899
  %901 = vmatmul.bf16.gmra.mxu0 %v268
  %v902 = vpop.f32.mrf.mxu0
  %v903 = vadd.f32 %v830, %v902
  %v904 = vpop.f32.mrf.mxu0
  %v905 = vadd.f32 %v832, %v904
  %906 = vmatmul.bf16.gmra.mxu0 %v271
  %v907 = vpop.f32.mrf.mxu0
  %v908 = vadd.f32 %v835, %v907
  %v909 = vpop.f32.mrf.mxu0
  %v910 = vadd.f32 %v837, %v909
  %911 = vmatmul.bf16.gmra.mxu0 %v274
  %v912 = vpop.f32.mrf.mxu0
  %v913 = vadd.f32 %v840, %v912
  %v914 = vpop.f32.mrf.mxu0
  %v915 = vadd.f32 %v842, %v914
  %916 = vmatmul.bf16.gmra.mxu0 %v277
  %v917 = vpop.f32.mrf.mxu0
  %v918 = vadd.f32 %v845, %v917
  %v919 = vpop.f32.mrf.mxu0
  %v920 = vadd.f32 %v847, %v919
  %921 = vmatmul.bf16.gmra.mxu0 %v280
  %v922 = vpop.f32.mrf.mxu0
  %v923 = vadd.f32 %v850, %v922
  %v924 = vpop.f32.mrf.mxu0
  %925 = vdwg.mxu0
  %926 = vmatpush.bf16.msra.mxu0 %v512
  %927 = vmatpush.bf16.msra.mxu0 %v510
  %928 = vmatpush.bf16.msra.mxu0 %v508
  %929 = vmatpush.bf16.msra.mxu0 %v506
  %930 = vmatpush.bf16.msra.mxu0 %v504
  %931 = vmatpush.bf16.msra.mxu0 %v502
  %932 = vmatpush.bf16.msra.mxu0 %v500
  %933 = vmatpush.bf16.msra.mxu0 %v498
  %934 = vmatmul.bf16.gmra.mxu0 %v245
  %v935 = vpop.f32.mrf.mxu0
  %v936 = vadd.f32 %v863, %v935
  %v937 = vpop.f32.mrf.mxu0
  %v938 = vadd.f32 %v865, %v937
  %939 = vmatmul.bf16.gmra.mxu0 %v248
  %v940 = vpop.f32.mrf.mxu0
  %v941 = vadd.f32 %v868, %v940
  %v942 = vpop.f32.mrf.mxu0
  %v943 = vadd.f32 %v870, %v942
  %944 = vmatmul.bf16.gmra.mxu0 %v251
  %v945 = vpop.f32.mrf.mxu0
  %v946 = vadd.f32 %v873, %v945
  %v947 = vpop.f32.mrf.mxu0
  %v948 = vadd.f32 %v875, %v947
  %949 = vmatmul.bf16.gmra.mxu0 %v254
  %v950 = vpop.f32.mrf.mxu0
  %v951 = vadd.f32 %v878, %v950
  %v952 = vpop.f32.mrf.mxu0
  %v953 = vadd.f32 %v880, %v952
  %954 = vmatmul.bf16.gmra.mxu0 %v257
  %v955 = vpop.f32.mrf.mxu0
  %v956 = vadd.f32 %v883, %v955
  %v957 = vpop.f32.mrf.mxu0
  %v958 = vadd.f32 %v885, %v957
  %959 = vmatmul.bf16.gmra.mxu0 %v260
  %v960 = vpop.f32.mrf.mxu0
  %v961 = vadd.f32 %v888, %v960
  %v962 = vpop.f32.mrf.mxu0
  %v963 = vadd.f32 %v890, %v962
  %964 = vmatmul.bf16.gmra.mxu0 %v263
  %v965 = vpop.f32.mrf.mxu0
  %v966 = vadd.f32 %v893, %v965
  %v967 = vpop.f32.mrf.mxu0
  %v968 = vadd.f32 %v895, %v967
  %969 = vmatmul.bf16.gmra.mxu0 %v266
  %v970 = vpop.f32.mrf.mxu0
  %v971 = vadd.f32 %v898, %v970
  %v972 = vpop.f32.mrf.mxu0
  %v973 = vadd.f32 %v900, %v972
  %974 = vmatmul.bf16.gmra.mxu0 %v269
  %v975 = vpop.f32.mrf.mxu0
  %v976 = vadd.f32 %v903, %v975
  %v977 = vpop.f32.mrf.mxu0
  %v978 = vadd.f32 %v905, %v977
  %979 = vmatmul.bf16.gmra.mxu0 %v272
  %v980 = vpop.f32.mrf.mxu0
  %v981 = vadd.f32 %v908, %v980
  %v982 = vpop.f32.mrf.mxu0
  %v983 = vadd.f32 %v910, %v982
  %984 = vmatmul.bf16.gmra.mxu0 %v275
  %v985 = vpop.f32.mrf.mxu0
  %v986 = vadd.f32 %v913, %v985
  %v987 = vpop.f32.mrf.mxu0
  %v988 = vadd.f32 %v915, %v987
  %989 = vmatmul.bf16.gmra.mxu0 %v278
  %v990 = vpop.f32.mrf.mxu0
  %v991 = vadd.f32 %v918, %v990
  %v992 = vpop.f32.mrf.mxu0
  %v993 = vadd.f32 %v920, %v992
  %994 = vmatmul.bf16.gmra.mxu0 %v281
  %v995 = vpop.f32.mrf.mxu0
  %v996 = vadd.f32 %v923, %v995
  %v997 = vpop.f32.mrf.mxu0
  %998 = vdwg.mxu0
  %v999 = vmax.f32 %v717, 0.0
  %v1000 = vmax.f32 %v936, 0.0
  %v1001 = vmax.f32 %v719, 0.0
  %v1002 = vmax.f32 %v938, 0.0
  %v1003 = vmax.f32 %v722, 0.0
  %v1004 = vmax.f32 %v941, 0.0
  %v1005 = vmax.f32 %v724, 0.0
  %v1006 = vmax.f32 %v943, 0.0
  %v1007 = vmax.f32 %v727, 0.0
  %v1008 = vmax.f32 %v946, 0.0
  %v1009 = vmax.f32 %v729, 0.0
  %v1010 = vmax.f32 %v948, 0.0
  %v1011 = vmax.f32 %v732, 0.0
  %v1012 = vmax.f32 %v951, 0.0
  %v1013 = vmax.f32 %v734, 0.0
  %v1014 = vmax.f32 %v953, 0.0
  %v1015 = vmax.f32 %v737, 0.0
  %v1016 = vmax.f32 %v956, 0.0
  %v1017 = vmax.f32 %v739, 0.0
  %v1018 = vmax.f32 %v958, 0.0
  %v1019 = vmax.f32 %v742, 0.0
  %v1020 = vmax.f32 %v961, 0.0
  %v1021 = vmax.f32 %v744, 0.0
  %v1022 = vmax.f32 %v963, 0.0
  %v1023 = vmax.f32 %v747, 0.0
  %v1024 = vmax.f32 %v966, 0.0
  %v1025 = vmax.f32 %v749, 0.0
  %v1026 = vmax.f32 %v968, 0.0
  %v1027 = vmax.f32 %v752, 0.0
  %v1028 = vmax.f32 %v971, 0.0
  %v1029 = vmax.f32 %v754, 0.0
  %v1030 = vmax.f32 %v973, 0.0
  %v1031 = vmax.f32 %v757, 0.0
  %v1032 = vmax.f32 %v976, 0.0
  %v1033 = vmax.f32 %v759, 0.0
  %v1034 = vmax.f32 %v978, 0.0
  %v1035 = vmax.f32 %v762, 0.0
  %v1036 = vmax.f32 %v981, 0.0
  %v1037 = vmax.f32 %v764, 0.0
  %v1038 = vmax.f32 %v983, 0.0
  %v1039 = vmax.f32 %v767, 0.0
  %v1040 = vmax.f32 %v986, 0.0
  %v1041 = vmax.f32 %v769, 0.0
  %v1042 = vmax.f32 %v988, 0.0
  %v1043 = vmax.f32 %v772, 0.0
  %v1044 = vmax.f32 %v991, 0.0
  %v1045 = vmax.f32 %v774, 0.0
  %v1046 = vmax.f32 %v993, 0.0
  %v1047 = vmax.f32 %v777, 0.0
  %v1048 = vmax.f32 %v996, 0.0
  %1049 = vst [vmem:[%s3] sm:$0xff] %v999
  %1050 = vst [vmem:[%s3 + $0x8] sm:$0xff] %v1000
  %1051 = vst [vmem:[%s3 + $0x10] sm:$0xff] %v1001
  %1052 = vst [vmem:[%s3 + $0x18] sm:$0xff] %v1002
  %1053 = vst [vmem:[%s3 + $0x20] sm:$0xff] %v1003
  %1054 = vst [vmem:[%s3 + $0x28] sm:$0xff] %v1004
  %1055 = vst [vmem:[%s3 + $0x30] sm:$0xff] %v1005
  %1056 = vst [vmem:[%s3 + $0x38] sm:$0xff] %v1006
  %1057 = vst [vmem:[%s3 + $0x40] sm:$0xff] %v1007
  %1058 = vst [vmem:[%s3 + $0x48] sm:$0xff] %v1008
  %1059 = vst [vmem:[%s3 + $0x50] sm:$0xff] %v1009
  %1060 = vst [vmem:[%s3 + $0x58] sm:$0xff] %v1010
  %1061 = vst [vmem:[%s3 + $0x60] sm:$0xff] %v1011
  %1062 = vst [vmem:[%s3 + $0x68] sm:$0xff] %v1012
  %1063 = vst [vmem:[%s3 + $0x70] sm:$0xff] %v1013
  %1064 = vst [vmem:[%s3 + $0x78] sm:$0xff] %v1014
  %1065 = vst [vmem:[%s3 + $0x80] sm:$0xff] %v1015
  %1066 = vst [vmem:[%s3 + $0x88] sm:$0xff] %v1016
  %1067 = vst [vmem:[%s3 + $0x90] sm:$0xff] %v1017
  %1068 = vst [vmem:[%s3 + $0x98] sm:$0xff] %v1018
  %1069 = vst [vmem:[%s3 + $0xa0] sm:$0xff] %v1019
  %1070 = vst [vmem:[%s3 + $0xa8] sm:$0xff] %v1020
  %1071 = vst [vmem:[%s3 + $0xb0] sm:$0xff] %v1021
  %1072 = vst [vmem:[%s3 + $0xb8] sm:$0xff] %v1022
  %1073 = vst [vmem:[%s3 + $0xc0] sm:$0xff] %v1023
  %1074 = vst [vmem:[%s3 + $0xc8] sm:$0xff] %v1024
  %1075 = vst [vmem:[%s3 + $0xd0] sm:$0xff] %v1025
  %1076 = vst [vmem:[%s3 + $0xd8] sm:$0xff] %v1026
  %1077 = vst [vmem:[%s3 + $0xe0] sm:$0xff] %v1027
  %1078 = vst [vmem:[%s3 + $0xe8] sm:$0xff] %v1028
  %1079 = vst [vmem:[%s3 + $0xf0] sm:$0xff] %v1029
  %1080 = vst [vmem:[%s3 + $0xf8] sm:$0xff] %v1030
  %1081 = vst [vmem:[%s3 + $0x100] sm:$0xff] %v1031
  %1082 = vst [vmem:[%s3 + $0x108] sm:$0xff] %v1032
  %1083 = vst [vmem:[%s3 + $0x110] sm:$0xff] %v1033
  %1084 = vst [vmem:[%s3 + $0x118] sm:$0xff] %v1034
  %1085 = vst [vmem:[%s3 + $0x120] sm:$0xff] %v1035
  %1086 = vst [vmem:[%s3 + $0x128] sm:$0xff] %v1036
  %1087 = vst [vmem:[%s3 + $0x130] sm:$0xff] %v1037
  %1088 = vst [vmem:[%s3 + $0x138] sm:$0xff] %v1038
  %1089 = vst [vmem:[%s3 + $0x140] sm:$0xff] %v1039
  %1090 = vst [vmem:[%s3 + $0x148] sm:$0xff] %v1040
  %1091 = vst [vmem:[%s3 + $0x150] sm:$0xff] %v1041
  %1092 = vst [vmem:[%s3 + $0x158] sm:$0xff] %v1042
  %1093 = vst [vmem:[%s3 + $0x160] sm:$0xff] %v1043
  %1094 = vst [vmem:[%s3 + $0x168] sm:$0xff] %v1044
  %1095 = vst [vmem:[%s3 + $0x170] sm:$0xff] %v1045
  %1096 = vst [vmem:[%s3 + $0x178] sm:$0xff] %v1046
  %1097 = vst [vmem:[%s3 + $0x180] sm:$0xff] %v1047
  %1098 = vst [vmem:[%s3 + $0x188] sm:$0xff] %v1048
  // Predicated region
  $region14: #{net_forward.3} parent=0 // pred_check
    _
  $region15: #{net_forward.3} parent=0 // pred_check_branch
    %1100 = sbr.rel (0) target = $region17
  $region16: #{net_forward.3} parent=0 // pred_region
    _
  $region17: #{net_forward.3} parent=0 // pred_fallthru
    _
  // Predicated region
  $region18: #{net_forward.3} parent=0 // pred_check
    _
  $region19: #{net_forward.3} parent=0 // pred_check_branch
    %1102 = sbr.rel (0) target = $region21
  $region20: #{net_forward.3} parent=0 // pred_region
    _
  $region21: #{net_forward.3} parent=0 // pred_fallthru
    _

</llo_original>
